<compile_context>
chip_gen: v6e
topology: v6e:2x2x1
jax: 0.10.0
libtpu: 0.0.40
codegen_flags: <defaults>
</compile_context>

<pallas_src>
import functools

import jax
import jax.numpy as jnp
import numpy as np
from jax import lax
from jax.experimental import pallas as pl
from jax.experimental.pallas import tpu as pltpu


def _attention_kernel(xr_ref, xp_ref, msk_ref, out_ref, att_ref, *,
                      b_blk, nc, L, H2, Lp_pad):
    # xr_ref : (b_blk, nc, L)       raw feature map, flattened (the 1x1 kernels)
    # xp_ref : (b_blk, nc, Lp_pad)  zero-padded feature map, flattened, lane-padded
    # msk_ref: (4, Lp_pad)          f32 0/1 neighbour-validity masks (l, r, u, d)
    # out_ref: (b_blk*nc, Lp_pad)   K_n @ A over the full padded grid
    # att_ref: (b_blk*L, Lp_pad)    attention scores (kernel l, padded position p)
    #
    # Masks are hoisted out of the (small, unrolled) batch loop.
    m_l = msk_ref[0:1, :]   # contribution from p-1   (c-1 in-grid)
    m_r = msk_ref[1:2, :]   # contribution from p+1   (c+1 in-grid)
    m_u = msk_ref[2:3, :]   # contribution from p-H2  (r-1 in-grid)
    m_d = msk_ref[3:4, :]   # contribution from p+H2  (r+1 in-grid)

    for b in range(b_blk):                                     # small, unrolled
        k_raw = xr_ref[b] + 1e-7                               # (nc, L)
        ssq = jnp.sum(k_raw * k_raw, axis=0, keepdims=True)    # (1, L)
        k_n = k_raw * lax.rsqrt(ssq)                           # (nc, L), EUP rsqrt

        # F.conv2d with 1x1 kernels + zero padding == K_n^T @ X_padded.
        s = lax.dot_general(k_n, xp_ref[b],
                            dimension_numbers=(((0,), (0,)), ((), ())),
                            preferred_element_type=jnp.float32)  # (L, Lp_pad)

        # avg_pool2d(3,1,pad=1)*9 == separable zero-padded 3x3 box sum,
        # implemented with lane rotations + masks (roll(x, k)[p] == x[p-k]).
        t = (s
             + m_l * pltpu.roll(s, 1, 1)                       # s[p-1]
             + m_r * pltpu.roll(s, Lp_pad - 1, 1))             # s[p+1]
        p = (t
             + m_u * pltpu.roll(t, H2, 1)                      # t[p-H2]
             + m_d * pltpu.roll(t, Lp_pad - H2, 1))            # t[p+H2]

        # softmax over the "kernel" (channel) axis == axis 0.
        mx = jnp.max(p, axis=0, keepdims=True)                 # XLU reduce
        e = jnp.exp(p - mx)                                    # EUP
        denom = jnp.sum(e, axis=0, keepdims=True)              # XLU reduce
        a = e * pl.reciprocal(denom, approx=True)              # (L, Lp_pad)
        att_ref[pl.ds(b * L, L), :] = a

        # F.conv_transpose2d(att, K_n, padding=1): full-grid result is K_n @ A
        # (contraction over L). The interior crop happens in the wrapper
        # (layout plumbing only, discards lane-padding garbage too).
        out_ref[pl.ds(b * nc, nc), :] = jnp.dot(
            k_n, a, preferred_element_type=jnp.float32)        # (nc, Lp_pad)


def my_attention_pallas(x, patch_size=3, propagate_size=3, block_bz=2):
    # Mirrors MyAttention.forward for patch_size=3 (1x1 kernels, padding=1)
    # and propagate_size=3 (3x3 box-sum propagation).
    assert patch_size == 3 and propagate_size == 3
    bz, nc, w, h = x.shape
    pad = patch_size // 2
    L = w * h
    W2, H2 = w + 2 * pad, h + 2 * pad
    Lp = W2 * H2
    Lp_pad = ((Lp + 127) // 128) * 128           # lane-dense last dim
    b_blk = block_bz if (block_bz > 0 and bz % block_bz == 0) else 1
    # NOTE: demo shapes give b_blk*nc = 8 and b_blk*L = 512 (sublane-aligned
    # output blocks) with a 2-step "parallel" grid.

    x = x.astype(jnp.float32)
    xr = x.reshape(bz, nc, L)
    xp = jnp.pad(x, ((0, 0), (0, 0), (pad, pad), (pad, pad))).reshape(bz, nc, Lp)
    xp = jnp.pad(xp, ((0, 0), (0, 0), (0, Lp_pad - Lp)))

    # Neighbour-validity masks of the flattened padded grid (built host-side,
    # tiny constant input; avoids in-kernel integer div/mod).
    idx = np.arange(Lp_pad)
    r, c = idx // H2, idx % H2
    valid = idx < Lp
    masks = jnp.asarray(np.stack([
        valid & (c >= 1),         # left   neighbour p-1
        valid & (c <= H2 - 2),    # right  neighbour p+1
        valid & (r >= 1),         # upper  neighbour p-H2
        valid & (r <= W2 - 2),    # lower  neighbour p+H2
    ]).astype(np.float32))        # (4, Lp_pad)

    kernel = functools.partial(_attention_kernel, b_blk=b_blk, nc=nc, L=L,
                               H2=H2, Lp_pad=Lp_pad)

    flops = int(2 * 2 * bz * nc * L * Lp_pad      # two matmuls per batch
                + 10 * bz * L * Lp_pad)           # box sum + softmax VPU work
    transcendentals = int(bz * L * Lp_pad)        # exp
    bytes_accessed = int(4 * (bz * nc * L + bz * nc * Lp_pad + 4 * Lp_pad
                              + bz * nc * Lp_pad + bz * L * Lp_pad))

    out_full, att_full = pl.pallas_call(
        kernel,
        out_shape=(
            jax.ShapeDtypeStruct((bz * nc, Lp_pad), jnp.float32),
            jax.ShapeDtypeStruct((bz * L, Lp_pad), jnp.float32),
        ),
        grid_spec=pltpu.PrefetchScalarGridSpec(
            num_scalar_prefetch=0,
            grid=(bz // b_blk,),
            in_specs=[
                pl.BlockSpec((b_blk, nc, L), lambda s: (s, 0, 0)),
                pl.BlockSpec((b_blk, nc, Lp_pad), lambda s: (s, 0, 0)),
                pl.BlockSpec((4, Lp_pad), lambda s: (0, 0)),
            ],
            out_specs=(
                pl.BlockSpec((b_blk * nc, Lp_pad), lambda s: (s, 0)),
                pl.BlockSpec((b_blk * L, Lp_pad), lambda s: (s, 0)),
            ),
        ),
        compiler_params=pltpu.CompilerParams(
            dimension_semantics=("parallel",),
            vmem_limit_bytes=32 * 1024 * 1024),
        cost_estimate=pl.CostEstimate(
            flops=flops, transcendentals=transcendentals,
            bytes_accessed=bytes_accessed),
    )(xr, xp, masks)

    # Interior crop of the conv_transpose2d result (the "padding=1" crop).
    out = out_full[:, :Lp].reshape(bz, nc, W2, H2)[:, :, pad:pad + w, pad:pad + h]
    # attention_scores.permute(0,2,3,1).view(w*h, -1) per batch, then cat(dim=0).
    att_score = jnp.transpose(att_full[:, :Lp].reshape(bz, L, W2, H2),
                              (0, 2, 3, 1)).reshape(bz * L, Lp)
    return out, att_score


def my_attention_ref(x):
    # Pure-JAX reference of the PyTorch forward (verification only).
    bz, nc, w, h = x.shape
    L = w * h
    W2, H2 = w + 2, h + 2
    outs, atts = [], []
    for i in range(bz):
        X = x[i].astype(jnp.float32)                       # (nc, w, h)
        K = X.reshape(nc, L).T + 1e-07                     # (L, nc)
        Kn = K / jnp.sqrt(jnp.sum(K ** 2, axis=1, keepdims=True))
        Xp = jnp.pad(X, ((0, 0), (1, 1), (1, 1))).reshape(nc, W2 * H2)
        S = (Kn @ Xp).reshape(L, W2, H2)
        Sp = jnp.pad(S, ((0, 0), (1, 1), (1, 1)))
        P = sum(Sp[:, dy:dy + W2, dx:dx + H2] for dy in range(3) for dx in range(3))
        A = jax.nn.softmax(P.reshape(L, W2 * H2), axis=0)
        A3 = A.reshape(L, W2, H2)
        A_int = A3[:, 1:1 + w, 1:1 + h].reshape(L, L)
        outs.append((Kn.T @ A_int).reshape(nc, w, h))
        atts.append(jnp.transpose(A3, (1, 2, 0)).reshape(L, W2 * H2))
    return jnp.stack(outs, 0), jnp.concatenate(atts, 0)


if __name__ == "__main__":
    key = jax.random.PRNGKey(0)
    bz, nc, w, h = 4, 4, 16, 16
    x = jax.random.normal(key, (bz, nc, w, h), dtype=jnp.float32)

    out, att = my_attention_pallas(x)
    jax.block_until_ready((out, att))

    out_ref, att_ref = my_attention_ref(x)
    assert out.shape == (bz, nc, w, h)
    assert att.shape == (bz * w * h, (w + 2) * (h + 2))
    np.testing.assert_allclose(np.asarray(out), np.asarray(out_ref), rtol=1e-2, atol=2e-3)
    np.testing.assert_allclose(np.asarray(att), np.asarray(att_ref), rtol=1e-2, atol=2e-3)
    print("KERNEL_OK")
</pallas_src>

<mosaic_0001>
module attributes {stable_mosaic.version = 11 : i64} {
  func.func @_attention_kernel(%arg0: i32, %arg1: memref<2x4x256xf32, #tpu.memory_space<vmem>>, %arg2: memref<2x4x384xf32, #tpu.memory_space<vmem>>, %arg3: memref<4x384xf32, #tpu.memory_space<vmem>>, %arg4: memref<8x384xf32, #tpu.memory_space<vmem>>, %arg5: memref<512x384xf32, #tpu.memory_space<vmem>>) attributes {dimension_semantics = [#tpu.dimension_semantics<parallel>], iteration_bounds = array<i64: 2>, scalar_prefetch = 0 : i64, scratch_operands = 0 : i64, tpu.core_type = #tpu.core_type<tc>, window_params = [{transform_indices = @transform_0, window_bounds = array<i64: 2, 4, 256>}, {transform_indices = @transform_1, window_bounds = array<i64: 2, 4, 384>}, {pipeline_mode = #tpu.pipeline_mode<synchronous>, transform_indices = @transform_2, window_bounds = array<i64: 4, 384>}, {transform_indices = @transform_3, window_bounds = array<i64: 8, 384>}, {transform_indices = @transform_4, window_bounds = array<i64: 512, 384>}]} {
    %c0 = arith.constant 0 : index
    %c0_0 = arith.constant 0 : index
    %0 = vector.load %arg3[%c0, %c0_0] : memref<4x384xf32, #tpu.memory_space<vmem>>, vector<1x384xf32>
    %c1 = arith.constant 1 : index
    %c0_1 = arith.constant 0 : index
    %1 = vector.load %arg3[%c1, %c0_1] : memref<4x384xf32, #tpu.memory_space<vmem>>, vector<1x384xf32>
    %c2 = arith.constant 2 : index
    %c0_2 = arith.constant 0 : index
    %2 = vector.load %arg3[%c2, %c0_2] : memref<4x384xf32, #tpu.memory_space<vmem>>, vector<1x384xf32>
    %c3 = arith.constant 3 : index
    %c0_3 = arith.constant 0 : index
    %3 = vector.load %arg3[%c3, %c0_3] : memref<4x384xf32, #tpu.memory_space<vmem>>, vector<1x384xf32>
    %c0_4 = arith.constant 0 : index
    %c0_5 = arith.constant 0 : index
    %c0_6 = arith.constant 0 : index
    %4 = vector.load %arg1[%c0_4, %c0_5, %c0_6] : memref<2x4x256xf32, #tpu.memory_space<vmem>>, vector<1x4x256xf32>
    %5 = vector.shape_cast %4 : vector<1x4x256xf32> to vector<4x256xf32>
    %cst = arith.constant 1.000000e-07 : f32
    %6 = vector.broadcast %cst : f32 to vector<4x256xf32>
    %7 = arith.addf %5, %6 : vector<4x256xf32>
    %8 = arith.mulf %7, %7 : vector<4x256xf32>
    %cst_7 = arith.constant dense<0.000000e+00> : vector<256xf32>
    %9 = vector.multi_reduction <add>, %8, %cst_7 [0] : vector<4x256xf32> to vector<256xf32>
    %10 = vector.shape_cast %9 : vector<256xf32> to vector<1x256xf32>
    %11 = math.rsqrt %10 : vector<1x256xf32>
    %12 = vector.broadcast %11 : vector<1x256xf32> to vector<4x256xf32>
    %13 = arith.mulf %7, %12 : vector<4x256xf32>
    %c0_8 = arith.constant 0 : index
    %c0_9 = arith.constant 0 : index
    %c0_10 = arith.constant 0 : index
    %14 = vector.load %arg2[%c0_8, %c0_9, %c0_10] : memref<2x4x384xf32, #tpu.memory_space<vmem>>, vector<1x4x384xf32>
    %15 = vector.shape_cast %14 : vector<1x4x384xf32> to vector<4x384xf32>
    %cst_11 = arith.constant dense<0.000000e+00> : vector<256x384xf32>
    %16 = tpu.matmul %13, %15, %cst_11 {dimension_numbers = #tpu.dot_dimension_numbers<[0], [0], [1], [1], [0, 1, 1, 1], [], []>} : vector<4x256xf32>, vector<4x384xf32>, vector<256x384xf32> -> vector<256x384xf32>
    %c1_i32 = arith.constant 1 : i32
    %17 = tpu.dynamic_rotate %16 by %c1_i32 dim 1 : vector<256x384xf32>, i32 -> vector<256x384xf32>
    %18 = vector.broadcast %0 : vector<1x384xf32> to vector<256x384xf32>
    %19 = arith.mulf %18, %17 : vector<256x384xf32>
    %20 = arith.addf %16, %19 : vector<256x384xf32>
    %c383_i32 = arith.constant 383 : i32
    %21 = tpu.dynamic_rotate %16 by %c383_i32 dim 1 : vector<256x384xf32>, i32 -> vector<256x384xf32>
    %22 = vector.broadcast %1 : vector<1x384xf32> to vector<256x384xf32>
    %23 = arith.mulf %22, %21 : vector<256x384xf32>
    %24 = arith.addf %20, %23 : vector<256x384xf32>
    %c18_i32 = arith.constant 18 : i32
    %25 = tpu.dynamic_rotate %24 by %c18_i32 dim 1 : vector<256x384xf32>, i32 -> vector<256x384xf32>
    %26 = vector.broadcast %2 : vector<1x384xf32> to vector<256x384xf32>
    %27 = arith.mulf %26, %25 : vector<256x384xf32>
    %28 = arith.addf %24, %27 : vector<256x384xf32>
    %c366_i32 = arith.constant 366 : i32
    %29 = tpu.dynamic_rotate %24 by %c366_i32 dim 1 : vector<256x384xf32>, i32 -> vector<256x384xf32>
    %30 = vector.broadcast %3 : vector<1x384xf32> to vector<256x384xf32>
    %31 = arith.mulf %30, %29 : vector<256x384xf32>
    %32 = arith.addf %28, %31 : vector<256x384xf32>
    %cst_12 = arith.constant dense<0xFF800000> : vector<384xf32>
    %33 = vector.multi_reduction <maximumf>, %32, %cst_12 [0] : vector<256x384xf32> to vector<384xf32>
    %34 = vector.shape_cast %33 : vector<384xf32> to vector<1x384xf32>
    %35 = vector.broadcast %34 : vector<1x384xf32> to vector<256x384xf32>
    %36 = arith.subf %32, %35 : vector<256x384xf32>
    %37 = math.exp %36 : vector<256x384xf32>
    %cst_13 = arith.constant dense<0.000000e+00> : vector<384xf32>
    %38 = vector.multi_reduction <add>, %37, %cst_13 [0] : vector<256x384xf32> to vector<384xf32>
    %39 = vector.shape_cast %38 : vector<384xf32> to vector<1x384xf32>
    %40 = tpu.reciprocal %39 {approx = true} : vector<1x384xf32> -> vector<1x384xf32>
    %41 = vector.broadcast %40 : vector<1x384xf32> to vector<256x384xf32>
    %42 = arith.mulf %37, %41 : vector<256x384xf32>
    %c0_14 = arith.constant 0 : index
    %c0_15 = arith.constant 0 : index
    %43 = vector.load %arg5[%c0_14, %c0_15] : memref<512x384xf32, #tpu.memory_space<vmem>>, vector<256x384xf32>
    tpu.vector_store %arg5[%c0_14, %c0_15], %42 {strides = array<i32>} : memref<512x384xf32, #tpu.memory_space<vmem>>, vector<256x384xf32>,
    %cst_16 = arith.constant dense<0.000000e+00> : vector<4x384xf32>
    %44 = tpu.matmul %13, %42, %cst_16 {dimension_numbers = #tpu.dot_dimension_numbers<[1], [0], [0], [1], [0, 0, 1, 1], [], []>} : vector<4x256xf32>, vector<256x384xf32>, vector<4x384xf32> -> vector<4x384xf32>
    %c0_17 = arith.constant 0 : index
    %c0_18 = arith.constant 0 : index
    %45 = vector.load %arg4[%c0_17, %c0_18] : memref<8x384xf32, #tpu.memory_space<vmem>>, vector<4x384xf32>
    tpu.vector_store %arg4[%c0_17, %c0_18], %44 {strides = array<i32>} : memref<8x384xf32, #tpu.memory_space<vmem>>, vector<4x384xf32>,
    %c1_19 = arith.constant 1 : index
    %c0_20 = arith.constant 0 : index
    %c0_21 = arith.constant 0 : index
    %46 = vector.load %arg1[%c1_19, %c0_20, %c0_21] : memref<2x4x256xf32, #tpu.memory_space<vmem>>, vector<1x4x256xf32>
    %47 = vector.shape_cast %46 : vector<1x4x256xf32> to vector<4x256xf32>
    %cst_22 = arith.constant 1.000000e-07 : f32
    %48 = vector.broadcast %cst_22 : f32 to vector<4x256xf32>
    %49 = arith.addf %47, %48 : vector<4x256xf32>
    %50 = arith.mulf %49, %49 : vector<4x256xf32>
    %cst_23 = arith.constant dense<0.000000e+00> : vector<256xf32>
    %51 = vector.multi_reduction <add>, %50, %cst_23 [0] : vector<4x256xf32> to vector<256xf32>
    %52 = vector.shape_cast %51 : vector<256xf32> to vector<1x256xf32>
    %53 = math.rsqrt %52 : vector<1x256xf32>
    %54 = vector.broadcast %53 : vector<1x256xf32> to vector<4x256xf32>
    %55 = arith.mulf %49, %54 : vector<4x256xf32>
    %c1_24 = arith.constant 1 : index
    %c0_25 = arith.constant 0 : index
    %c0_26 = arith.constant 0 : index
    %56 = vector.load %arg2[%c1_24, %c0_25, %c0_26] : memref<2x4x384xf32, #tpu.memory_space<vmem>>, vector<1x4x384xf32>
    %57 = vector.shape_cast %56 : vector<1x4x384xf32> to vector<4x384xf32>
    %cst_27 = arith.constant dense<0.000000e+00> : vector<256x384xf32>
    %58 = tpu.matmul %55, %57, %cst_27 {dimension_numbers = #tpu.dot_dimension_numbers<[0], [0], [1], [1], [0, 1, 1, 1], [], []>} : vector<4x256xf32>, vector<4x384xf32>, vector<256x384xf32> -> vector<256x384xf32>
    %c1_i32_28 = arith.constant 1 : i32
    %59 = tpu.dynamic_rotate %58 by %c1_i32_28 dim 1 : vector<256x384xf32>, i32 -> vector<256x384xf32>
    %60 = vector.broadcast %0 : vector<1x384xf32> to vector<256x384xf32>
    %61 = arith.mulf %60, %59 : vector<256x384xf32>
    %62 = arith.addf %58, %61 : vector<256x384xf32>
    %c383_i32_29 = arith.constant 383 : i32
    %63 = tpu.dynamic_rotate %58 by %c383_i32_29 dim 1 : vector<256x384xf32>, i32 -> vector<256x384xf32>
    %64 = vector.broadcast %1 : vector<1x384xf32> to vector<256x384xf32>
    %65 = arith.mulf %64, %63 : vector<256x384xf32>
    %66 = arith.addf %62, %65 : vector<256x384xf32>
    %c18_i32_30 = arith.constant 18 : i32
    %67 = tpu.dynamic_rotate %66 by %c18_i32_30 dim 1 : vector<256x384xf32>, i32 -> vector<256x384xf32>
    %68 = vector.broadcast %2 : vector<1x384xf32> to vector<256x384xf32>
    %69 = arith.mulf %68, %67 : vector<256x384xf32>
    %70 = arith.addf %66, %69 : vector<256x384xf32>
    %c366_i32_31 = arith.constant 366 : i32
    %71 = tpu.dynamic_rotate %66 by %c366_i32_31 dim 1 : vector<256x384xf32>, i32 -> vector<256x384xf32>
    %72 = vector.broadcast %3 : vector<1x384xf32> to vector<256x384xf32>
    %73 = arith.mulf %72, %71 : vector<256x384xf32>
    %74 = arith.addf %70, %73 : vector<256x384xf32>
    %cst_32 = arith.constant dense<0xFF800000> : vector<384xf32>
    %75 = vector.multi_reduction <maximumf>, %74, %cst_32 [0] : vector<256x384xf32> to vector<384xf32>
    %76 = vector.shape_cast %75 : vector<384xf32> to vector<1x384xf32>
    %77 = vector.broadcast %76 : vector<1x384xf32> to vector<256x384xf32>
    %78 = arith.subf %74, %77 : vector<256x384xf32>
    %79 = math.exp %78 : vector<256x384xf32>
    %cst_33 = arith.constant dense<0.000000e+00> : vector<384xf32>
    %80 = vector.multi_reduction <add>, %79, %cst_33 [0] : vector<256x384xf32> to vector<384xf32>
    %81 = vector.shape_cast %80 : vector<384xf32> to vector<1x384xf32>
    %82 = tpu.reciprocal %81 {approx = true} : vector<1x384xf32> -> vector<1x384xf32>
    %83 = vector.broadcast %82 : vector<1x384xf32> to vector<256x384xf32>
    %84 = arith.mulf %79, %83 : vector<256x384xf32>
    %c256 = arith.constant 256 : index
    %c0_34 = arith.constant 0 : index
    %85 = vector.load %arg5[%c256, %c0_34] : memref<512x384xf32, #tpu.memory_space<vmem>>, vector<256x384xf32>
    tpu.vector_store %arg5[%c256, %c0_34], %84 {strides = array<i32>} : memref<512x384xf32, #tpu.memory_space<vmem>>, vector<256x384xf32>,
    %cst_35 = arith.constant dense<0.000000e+00> : vector<4x384xf32>
    %86 = tpu.matmul %55, %84, %cst_35 {dimension_numbers = #tpu.dot_dimension_numbers<[1], [0], [0], [1], [0, 0, 1, 1], [], []>} : vector<4x256xf32>, vector<256x384xf32>, vector<4x384xf32> -> vector<4x384xf32>
    %c4 = arith.constant 4 : index
    %c0_36 = arith.constant 0 : index
    %87 = vector.load %arg4[%c4, %c0_36] : memref<8x384xf32, #tpu.memory_space<vmem>>, vector<4x384xf32>
    tpu.vector_store %arg4[%c4, %c0_36], %86 {strides = array<i32>} : memref<8x384xf32, #tpu.memory_space<vmem>>, vector<4x384xf32>,
    return
  }
  func.func @transform_0(%arg0: i32) -> (i32, i32, i32) {
    %c0_i32 = arith.constant 0 : i32
    %c0_i32_0 = arith.constant 0 : i32
    %c0_i32_1 = arith.constant 0 : i32
    return %arg0, %c0_i32, %c0_i32_0 : i32, i32, i32
  }
  func.func @transform_1(%arg0: i32) -> (i32, i32, i32) {
    %c0_i32 = arith.constant 0 : i32
    %c0_i32_0 = arith.constant 0 : i32
    %c0_i32_1 = arith.constant 0 : i32
    return %arg0, %c0_i32, %c0_i32_0 : i32, i32, i32
  }
  func.func @transform_2(%arg0: i32) -> (i32, i32) {
    %c0_i32 = arith.constant 0 : i32
    %c0_i32_0 = arith.constant 0 : i32
    %c0_i32_1 = arith.constant 0 : i32
    return %c0_i32, %c0_i32_0 : i32, i32
  }
  func.func @transform_3(%arg0: i32) -> (i32, i32) {
    %c0_i32 = arith.constant 0 : i32
    %c0_i32_0 = arith.constant 0 : i32
    return %arg0, %c0_i32 : i32, i32
  }
  func.func @transform_4(%arg0: i32) -> (i32, i32) {
    %c0_i32 = arith.constant 0 : i32
    %c0_i32_0 = arith.constant 0 : i32
    return %arg0, %c0_i32 : i32, i32
  }
}

</mosaic_0001>

<llo_original>
// kernel: tpu_custom_call.1
$region0: #{tpu_custom_call.1}
  #allocation0 [shape = 'u32[]', space=smem, size = 0x4, offset = 0x4, fixed_abs, tag = 'smem constant byte address 0x4 - core index']
  #allocation1 [shape = 'u32[144,128]{1,0:T(1,128)}', space=vmem, size = 0x12000, scoped, tag = 'internal scratch']
  %s0 = inlined_call_operand.hbm [shape: f32[4,4,256], index: 0, kind: input, shape index: {}]
  %s1 = inlined_call_operand.hbm [shape: f32[4,4,384], index: 1, kind: input, shape index: {}]
  %s2 = inlined_call_operand.hbm [shape: f32[4,384], index: 2, kind: input, shape index: {}]
  %s3 = inlined_call_operand.hbm [shape: f32[16,384], index: 3, kind: output, shape index: {0}]
  %s4 = inlined_call_operand.hbm [shape: f32[1024,384], index: 4, kind: output, shape index: {1}]
  %5 = xla_tuple %s3, %s4
  %s6 = sld [smem:[#allocation0]]
  $region65: #{tpu_custom_call.1} parent=0
    _
  %s8 = ssub.s32 1, %s6
  %s9 = scalar_select 0, %s8, %s6
  $region1: #{tpu_custom_call.1} parent=0
    #allocation2 [shape = 'u8[16384]{0}', space=vmem, size = 0x4000, scoped, tag = 'input window, operand 0']
    #allocation3 [shape = 's32[2]{0}', space=sflag, size = 0x8, scoped, tag = 'scoped memory for tpu_custom_call.1']
    #allocation4 [shape = 's32[2]{0}', space=sflag, size = 0x8, scoped, tag = 'scoped memory for tpu_custom_call.1']
    #allocation5 [shape = 'u8[24576]{0}', space=vmem, size = 0x6000, scoped, tag = 'input window, operand 1']
    #allocation6 [shape = 's32[2]{0}', space=sflag, size = 0x8, scoped, tag = 'scoped memory for tpu_custom_call.1']
    #allocation7 [shape = 'u8[6144]{0}', space=vmem, size = 0x1800, scoped, tag = 'input window, operand 2, single buffered']
    #allocation8 [shape = 'u8[24576]{0}', space=vmem, size = 0x6000, scoped, tag = 'output window, operand 0']
    #allocation9 [shape = 'u8[1572864]{0}', space=vmem, size = 0x180000, scoped, tag = 'output window, operand 1']
    #allocation10 [shape = 's32[2]{0}', space=sflag, size = 0x8, scoped, tag = 'scoped memory for tpu_custom_call.1']
    %10 = vsyncpa [#allocation3], 0
    %s11 = scalar_lea.sflag [#allocation3], 1
    %12 = vsyncpa %s11, 0
    %13 = vsyncpa [#allocation6], 0
    %s14 = scalar_lea.sflag [#allocation6], 1
    %15 = vsyncpa %s14, 0
    %16 = vsyncpa [#allocation4], 0
    %s17 = scalar_lea.sflag [#allocation4], 1
    %18 = vsyncpa %s17, 0
    %19 = vsyncpa [#allocation10], 0
    %s20 = scalar_lea.sflag [#allocation10], 1
    %21 = vsyncpa %s20, 0
    loop: start=0, step=1, limit=4
    $region2: #{tpu_custom_call.1} parent=1 // loop_pre_header
      _
    $region3: #{tpu_custom_call.1} parent=1 // loop_header
      %s23 = sphi 0, %s27
      %p24 = scmp.ge.s32.totalorder %s23, 4
      %s33 = sphi 0, %s35
      %s36 = sphi 0, %s33
      %s37 = sphi 0, %s36
      %s53 = sphi 0, %s37
      %s59 = sphi 0, %s61
      %s62 = sphi 0, %s59
      %s63 = sphi 0, %s62
      %s79 = sphi 0, %s63
      %s83 = sphi 0, %s83
      %s85 = sphi 0, %s83
      %s86 = sphi 0, %s85
      %s100 = sphi 0, %s86
      %s106 = sphi 0, %s108
      %s109 = sphi 0, %s106
      %s110 = sphi 0, %s109
      %s126 = sphi 0, %s110
      %s132 = sphi 0, %s134
      %s135 = sphi 0, %s132
      %s136 = sphi 0, %s135
      %s152 = sphi 0, %s136
    $region4: #{tpu_custom_call.1} parent=1 // loop_header_branch
      %26 = sbr.rel (%p24) target = $region8
    $region5: #{tpu_custom_call.1} parent=1 // loop_body
      %s28 = ssub.s32 %s23, 1
      %s29 = ssub.s32 %s23, 2
      %s30 = sadd.s32 %s23, 1
      %s31 = ssub.s32 %s23, %s30
      %p32 = scmp.eq.s32.totalorder %s31, 0
      %s34 = sadd.s32 %s33, 1
      %s35 = scalar_select %p32, %s33, %s34
      %p38 = pneg %p32
      %p39 = scmp.eq.s32.totalorder %s23, 1
      %p40 = por %p38, %p39
      %p41 = scmp.ne.s32.totalorder %s33, %s36
      %p42 = scmp.eq.s32.totalorder %s23, 0
      %p43 = por %p41, %p42
      %p44 = scmp.ne.s32.totalorder %s33, %s36
      %p45 = scmp.eq.s32.totalorder %s28, 1
      %p46 = por %p44, %p45
      %p47 = scmp.ne.s32.totalorder %s36, %s37
      %p48 = scmp.eq.s32.totalorder %s28, 0
      %p49 = por %p47, %p48
      %p50 = scmp.ne.s32.totalorder %s36, %s37
      %p51 = scmp.eq.s32.totalorder %s29, 1
      %p52 = por %p50, %p51
      %p54 = scmp.ne.s32.totalorder %s37, %s53
      %p55 = scmp.eq.s32.totalorder %s29, 0
      %p56 = por %p54, %p55
      %s57 = ssub.s32 %s23, %s30
      %p58 = scmp.eq.s32.totalorder %s57, 0
      %s60 = sadd.s32 %s59, 1
      %s61 = scalar_select %p58, %s59, %s60
      %p64 = pneg %p58
      %p65 = scmp.eq.s32.totalorder %s23, 1
      %p66 = por %p64, %p65
      %p67 = scmp.ne.s32.totalorder %s59, %s62
      %p68 = scmp.eq.s32.totalorder %s23, 0
      %p69 = por %p67, %p68
      %p70 = scmp.ne.s32.totalorder %s59, %s62
      %p71 = scmp.eq.s32.totalorder %s28, 1
      %p72 = por %p70, %p71
      %p73 = scmp.ne.s32.totalorder %s62, %s63
      %p74 = scmp.eq.s32.totalorder %s28, 0
      %p75 = por %p73, %p74
      %p76 = scmp.ne.s32.totalorder %s62, %s63
      %p77 = scmp.eq.s32.totalorder %s29, 1
      %p78 = por %p76, %p77
      %p80 = scmp.ne.s32.totalorder %s63, %s79
      %p81 = scmp.eq.s32.totalorder %s29, 0
      %p82 = por %p80, %p81
      %s84 = sadd.s32 %s83, 1
      %p87 = scmp.eq.s32.totalorder %s23, 1
      %p88 = scmp.ne.s32.totalorder %s83, %s85
      %p89 = scmp.eq.s32.totalorder %s23, 0
      %p90 = por %p88, %p89
      %p91 = scmp.ne.s32.totalorder %s83, %s85
      %p92 = scmp.eq.s32.totalorder %s28, 1
      %p93 = por %p91, %p92
      %p94 = scmp.ne.s32.totalorder %s85, %s86
      %p95 = scmp.eq.s32.totalorder %s28, 0
      %p96 = por %p94, %p95
      %p97 = scmp.ne.s32.totalorder %s85, %s86
      %p98 = scmp.eq.s32.totalorder %s29, 1
      %p99 = por %p97, %p98
      %p101 = scmp.ne.s32.totalorder %s86, %s100
      %p102 = scmp.eq.s32.totalorder %s29, 0
      %p103 = por %p101, %p102
      %s104 = ssub.s32 %s23, %s30
      %p105 = scmp.eq.s32.totalorder %s104, 0
      %s107 = sadd.s32 %s106, 1
      %s108 = scalar_select %p105, %s106, %s107
      %p111 = pneg %p105
      %p112 = scmp.eq.s32.totalorder %s23, 1
      %p113 = por %p111, %p112
      %p114 = scmp.ne.s32.totalorder %s106, %s109
      %p115 = scmp.eq.s32.totalorder %s23, 0
      %p116 = por %p114, %p115
      %p117 = scmp.ne.s32.totalorder %s106, %s109
      %p118 = scmp.eq.s32.totalorder %s28, 1
      %p119 = por %p117, %p118
      %p120 = scmp.ne.s32.totalorder %s109, %s110
      %p121 = scmp.eq.s32.totalorder %s28, 0
      %p122 = por %p120, %p121
      %p123 = scmp.ne.s32.totalorder %s109, %s110
      %p124 = scmp.eq.s32.totalorder %s29, 1
      %p125 = por %p123, %p124
      %p127 = scmp.ne.s32.totalorder %s110, %s126
      %p128 = scmp.eq.s32.totalorder %s29, 0
      %p129 = por %p127, %p128
      %s130 = ssub.s32 %s23, %s30
      %p131 = scmp.eq.s32.totalorder %s130, 0
      %s133 = sadd.s32 %s132, 1
      %s134 = scalar_select %p131, %s132, %s133
      %p137 = pneg %p131
      %p138 = scmp.eq.s32.totalorder %s23, 1
      %p139 = por %p137, %p138
      %p140 = scmp.ne.s32.totalorder %s132, %s135
      %p141 = scmp.eq.s32.totalorder %s23, 0
      %p142 = por %p140, %p141
      %p143 = scmp.ne.s32.totalorder %s132, %s135
      %p144 = scmp.eq.s32.totalorder %s28, 1
      %p145 = por %p143, %p144
      %p146 = scmp.ne.s32.totalorder %s135, %s136
      %p147 = scmp.eq.s32.totalorder %s28, 0
      %p148 = por %p146, %p147
      %p149 = scmp.ne.s32.totalorder %s135, %s136
      %p150 = scmp.eq.s32.totalorder %s29, 1
      %p151 = por %p149, %p150
      %p153 = scmp.ne.s32.totalorder %s136, %s152
      %p154 = scmp.eq.s32.totalorder %s29, 0
      %p155 = por %p153, %p154
      %p156 = scmp.le.s32.totalorder 1, %s23
      %p157 = scmp.lt.s32.totalorder %s23, 3
      %p158 = pnand %p156, %p157
      %p159 = pneg %p158
      // Predicated region
      $region9: #{tpu_custom_call.1} parent=5 // pred_check
        _
      $region10: #{tpu_custom_call.1} parent=5 // pred_check_branch
        %161 = sbr.rel (%p158) target = $region12
      $region11: #{tpu_custom_call.1} parent=5 // pred_region
        %s162 = ssub.s32 %s23, 1
        // Predicated region
        $region13: #{tpu_custom_call.1} parent=11 // pred_check
          %p163 = pneg %p96
        $region14: #{tpu_custom_call.1} parent=11 // pred_check_branch
          %165 = sbr.rel (%p163) target = $region16
        $region15: #{tpu_custom_call.1} parent=11 // pred_region
          %s167 = ssub.s32 192, 192
          %168 = vsyncadd [#allocation6], %s167
          %s170 = sshll.u32 [#allocation7], 4
          %s171 = int_to_ptr.vmem [resolvable:$true] %s170
          %173 = dma.hbm_to_vmem [thread:$0]  %s2, 192, %s171, [#allocation6]
        $region16: #{tpu_custom_call.1} parent=11 // pred_fallthru
          _
      $region12: #{tpu_custom_call.1} parent=5 // pred_fallthru
        _
      %p174 = scmp.lt.s32.totalorder %s23, 2
      // Predicated region
      $region17: #{tpu_custom_call.1} parent=5 // pred_check
        %p175 = pneg %p174
      $region18: #{tpu_custom_call.1} parent=5 // pred_check_branch
        %177 = sbr.rel (%p175) target = $region20
      $region19: #{tpu_custom_call.1} parent=5 // pred_region
        // Predicated region
        $region21: #{tpu_custom_call.1} parent=19 // pred_check
          %p178 = pneg %p43
        $region22: #{tpu_custom_call.1} parent=19 // pred_check_branch
          %180 = sbr.rel (%p178) target = $region24
        $region23: #{tpu_custom_call.1} parent=19 // pred_region
          %s181 = sand.u32 %s33, 1
          %s182 = scalar_lea.sflag [#allocation3], %s181
          %s183 = sand.u32 %s33, 1
          %s184 = smul.addr %s183, 16
          %s185 = scalar_lea.vmem [#allocation2], %s184
          %s186 = smul.u32 2, %s23
          %s188 = ssub.s32 256, 256
          %189 = vsyncadd %s182, %s188
          %s190 = smul.addr %s186, 2
          %s191 = smul.addr %s190, 64
          %s192 = scalar_lea.hbm %s0, %s191
          %s193 = sshll.u32 %s185, 4
          %s194 = int_to_ptr.vmem [resolvable:$true] %s193
          %199 = dma.hbm_to_vmem [thread:$0]  %s192, 256, %s194, %s182, 128, 128, 8
        $region24: #{tpu_custom_call.1} parent=19 // pred_fallthru
          _
        // Predicated region
        $region25: #{tpu_custom_call.1} parent=19 // pred_check
          %p200 = pneg %p69
        $region26: #{tpu_custom_call.1} parent=19 // pred_check_branch
          %202 = sbr.rel (%p200) target = $region28
        $region27: #{tpu_custom_call.1} parent=19 // pred_region
          %s203 = sand.u32 %s23, 1
          %s204 = scalar_lea.sflag [#allocation6], %s203
          %s205 = sand.u32 %s59, 1
          %s206 = smul.addr %s205, 24
          %s207 = scalar_lea.vmem [#allocation5], %s206
          %s208 = smul.u32 2, %s23
          %s210 = ssub.s32 384, 384
          %211 = vsyncadd %s204, %s210
          %s212 = smul.addr %s208, 3
          %s213 = smul.addr %s212, 64
          %s214 = scalar_lea.hbm %s1, %s213
          %s215 = sshll.u32 %s207, 4
          %s216 = int_to_ptr.vmem [resolvable:$true] %s215
          %221 = dma.hbm_to_vmem [thread:$0]  %s214, 384, %s216, %s204, 192, 192, 12
        $region28: #{tpu_custom_call.1} parent=19 // pred_fallthru
          _
      $region20: #{tpu_custom_call.1} parent=5 // pred_fallthru
        _
      %p222 = scmp.le.s32.totalorder 1, %s23
      %p223 = scmp.lt.s32.totalorder %s23, 3
      %p224 = pnand %p222, %p223
      %p225 = pneg %p224
      // Predicated region
      $region29: #{tpu_custom_call.1} parent=5 // pred_check
        _
      $region30: #{tpu_custom_call.1} parent=5 // pred_check_branch
        %227 = sbr.rel (%p224) target = $region32
      $region31: #{tpu_custom_call.1} parent=5 // pred_region
        %s228 = ssub.s32 %s23, 1
        %s229 = sand.u32 %s36, 1
        %s230 = scalar_lea.sflag [#allocation3], %s229
        %s231 = sand.u32 %s36, 1
        %s232 = smul.addr %s231, 16
        %s233 = scalar_lea.vmem [#allocation2], %s232
        // Predicated region
        $region33: #{tpu_custom_call.1} parent=31 // pred_check
          %p234 = pneg %p49
        $region34: #{tpu_custom_call.1} parent=31 // pred_check_branch
          %236 = sbr.rel (%p234) target = $region36
        $region35: #{tpu_custom_call.1} parent=31 // pred_region
          %237 = dma.done %s230, 256
        $region36: #{tpu_custom_call.1} parent=31 // pred_fallthru
          _
        %s238 = sand.u32 %s28, 1
        %s239 = scalar_lea.sflag [#allocation6], %s238
        %s240 = sand.u32 %s62, 1
        %s241 = smul.addr %s240, 24
        %s242 = scalar_lea.vmem [#allocation5], %s241
        // Predicated region
        $region37: #{tpu_custom_call.1} parent=31 // pred_check
          %p243 = pneg %p75
        $region38: #{tpu_custom_call.1} parent=31 // pred_check_branch
          %245 = sbr.rel (%p243) target = $region40
        $region39: #{tpu_custom_call.1} parent=31 // pred_region
          %246 = dma.done %s239, 384
        $region40: #{tpu_custom_call.1} parent=31 // pred_fallthru
          _
        // Predicated region
        $region41: #{tpu_custom_call.1} parent=31 // pred_check
          %p247 = pneg %p96
        $region42: #{tpu_custom_call.1} parent=31 // pred_check_branch
          %249 = sbr.rel (%p247) target = $region44
        $region43: #{tpu_custom_call.1} parent=31 // pred_region
          %250 = dma.done [#allocation6], 192
        $region44: #{tpu_custom_call.1} parent=31 // pred_fallthru
          _
        %s251 = sand.u32 %s36, 1
        %s252 = scalar_lea.sflag [#allocation3], %s251
        %s253 = sand.u32 %s36, 1
        %s254 = smul.addr %s253, 16
        %s255 = scalar_lea.vmem [#allocation2], %s254
        %p256 = pneg %p49
        %p257 = pneg %p46
        %s258 = sand.u32 %s28, 1
        %s259 = scalar_lea.sflag [#allocation6], %s258
        %s260 = sand.u32 %s62, 1
        %s261 = smul.addr %s260, 24
        %s262 = scalar_lea.vmem [#allocation5], %s261
        %p263 = pneg %p75
        %p264 = pneg %p72
        %p265 = pneg %p96
        %p266 = pneg %p93
        %p267 = pneg %p122
        %p268 = pneg %p119
        %s269 = sand.u32 %s109, 1
        %s270 = scalar_lea.sflag [#allocation4], %s269
        %s271 = sand.u32 %s109, 1
        %s272 = smul.addr %s271, 24
        %s273 = scalar_lea.vmem [#allocation8], %s272
        %p274 = pneg %p148
        %p275 = pneg %p145
        %s276 = sand.u32 %s135, 1
        %s277 = scalar_lea.sflag [#allocation10], %s276
        %s278 = sand.u32 %s135, 1
        %s279 = smul.addr %s278, 1536
        %s280 = scalar_lea.vmem [#allocation9], %s279
        %s281 = smul.u32 2, %s28
        %s282 = smul.u32 2, %s28
        %s283 = smul.u32 64, %s28
        %v284 = vld [vmem:[#allocation7] ss:$4 sm:$0x7]
        %s285 = scalar_lea.vmem [#allocation7], 1
        %v286 = vld [vmem:[%s285] ss:$4 sm:$0x7]
        %s287 = scalar_lea.vmem [#allocation7], 2
        %v288 = vld [vmem:[%s287] ss:$4 sm:$0x7]
        %s289 = scalar_lea.vmem [#allocation7], 3
        %v290 = vld [vmem:[%s289] ss:$4 sm:$0x7]
        %v291 = vld [vmem:[%s233] sm:$0xff]
        %v292 = vadd.f32 %v291, 1e-07
        %v293 = vmul.f32 %v292, %v292
        %v295 = vcombine.high %v293, %v293
        %vm297 = vcmask 1043456
        %v298 = vsel %vm297, %v293, 0.0
        %v299 = vrot.slane %v298, 4
        %v300 = vadd.f32 %v298, %v299
        %v301 = vrot.slane %v300, 2
        %v302 = vadd.f32 %v300, %v301
        %v303 = vrot.slane %v302, 1
        %v304 = vadd.f32 %v302, %v303
        %v305 = vsel %vm297, %v295, 0.0
        %v306 = vrot.slane %v305, 4
        %v307 = vadd.f32 %v305, %v306
        %v308 = vrot.slane %v307, 2
        %v309 = vadd.f32 %v307, %v308
        %v310 = vrot.slane %v309, 1
        %v311 = vadd.f32 %v309, %v310
        %v312 = vrsqrt.pop %v304
        %v313 = vrsqrt.pop %v311
        %v316 = vcombine.low %v312, %v313
        %v318 = vmul.f32 %v292, %v316
        %v319 = vld [vmem:[%s242] sm:$0xff]
        %v320 = vld [vmem:[%s242 + $0x8] sm:$0xf]
        %v322 = vcombine.high %v318, %v318
        %324 = vxpose.xlu0.b32.start [1/16] %v318, 128
        %325 = vxpose.xlu0.b32.cont [2/16] 0.0, 128
        %326 = vxpose.xlu0.b32.cont [3/16] 0.0, 128
        %327 = vxpose.xlu0.b32.cont [4/16] 0.0, 128
        %328 = vxpose.xlu0.b32.cont [5/16] 0.0, 128
        %329 = vxpose.xlu0.b32.cont [6/16] 0.0, 128
        %330 = vxpose.xlu0.b32.cont [7/16] 0.0, 128
        %331 = vxpose.xlu0.b32.cont [8/16] 0.0, 128
        %332 = vxpose.xlu0.b32.cont [9/16] 0.0, 128
        %333 = vxpose.xlu0.b32.cont [10/16] 0.0, 128
        %334 = vxpose.xlu0.b32.cont [11/16] 0.0, 128
        %335 = vxpose.xlu0.b32.cont [12/16] 0.0, 128
        %336 = vxpose.xlu0.b32.cont [13/16] 0.0, 128
        %337 = vxpose.xlu0.b32.cont [14/16] 0.0, 128
        %338 = vxpose.xlu0.b32.cont [15/16] 0.0, 128
        %339 = vxpose.xlu0.b32.end [16/16] 0.0, 128
        %v340 = vpop.trf.xlu0
        %v341 = vpop.trf.xlu0
        %v342 = vpop.trf.xlu0
        %v343 = vpop.trf.xlu0
        %v344 = vpop.trf.xlu0
        %v345 = vpop.trf.xlu0
        %v346 = vpop.trf.xlu0
        %v347 = vpop.trf.xlu0
        %v348 = vpop.trf.xlu0
        %v349 = vpop.trf.xlu0
        %v350 = vpop.trf.xlu0
        %v351 = vpop.trf.xlu0
        %v352 = vpop.trf.xlu0
        %v353 = vpop.trf.xlu0
        %v354 = vpop.trf.xlu0
        %v355 = vpop.trf.xlu0
        %356 = vxpose.xlu0.b32.start [1/16] %v322, 128
        %357 = vxpose.xlu0.b32.cont [2/16] 0.0, 128
        %358 = vxpose.xlu0.b32.cont [3/16] 0.0, 128
        %359 = vxpose.xlu0.b32.cont [4/16] 0.0, 128
        %360 = vxpose.xlu0.b32.cont [5/16] 0.0, 128
        %361 = vxpose.xlu0.b32.cont [6/16] 0.0, 128
        %362 = vxpose.xlu0.b32.cont [7/16] 0.0, 128
        %363 = vxpose.xlu0.b32.cont [8/16] 0.0, 128
        %364 = vxpose.xlu0.b32.cont [9/16] 0.0, 128
        %365 = vxpose.xlu0.b32.cont [10/16] 0.0, 128
        %366 = vxpose.xlu0.b32.cont [11/16] 0.0, 128
        %367 = vxpose.xlu0.b32.cont [12/16] 0.0, 128
        %368 = vxpose.xlu0.b32.cont [13/16] 0.0, 128
        %369 = vxpose.xlu0.b32.cont [14/16] 0.0, 128
        %370 = vxpose.xlu0.b32.cont [15/16] 0.0, 128
        %371 = vxpose.xlu0.b32.end [16/16] 0.0, 128
        %v372 = vpop.trf.xlu0
        %v373 = vpop.trf.xlu0
        %v374 = vpop.trf.xlu0
        %v375 = vpop.trf.xlu0
        %v376 = vpop.trf.xlu0
        %v377 = vpop.trf.xlu0
        %v378 = vpop.trf.xlu0
        %v379 = vpop.trf.xlu0
        %v380 = vpop.trf.xlu0
        %v381 = vpop.trf.xlu0
        %v382 = vpop.trf.xlu0
        %v383 = vpop.trf.xlu0
        %v384 = vpop.trf.xlu0
        %v385 = vpop.trf.xlu0
        %v386 = vpop.trf.xlu0
        %v387 = vpop.trf.xlu0
        %v390 = vcombine.high %v319, %v319
        %vm391 = vcmask 31744
        %v393 = vsel %vm391, %v340, 0
        %v396 = vsel %vm391, %v341, 0
        %v399 = vsel %vm391, %v342, 0
        %v402 = vsel %vm391, %v343, 0
        %v405 = vsel %vm391, %v344, 0
        %v408 = vsel %vm391, %v345, 0
        %v411 = vsel %vm391, %v346, 0
        %v414 = vsel %vm391, %v347, 0
        %v417 = vsel %vm391, %v348, 0
        %v420 = vsel %vm391, %v349, 0
        %v423 = vsel %vm391, %v350, 0
        %v426 = vsel %vm391, %v351, 0
        %v429 = vsel %vm391, %v352, 0
        %v432 = vsel %vm391, %v353, 0
        %v435 = vsel %vm391, %v354, 0
        %v438 = vsel %vm391, %v355, 0
        %v441 = vsel %vm391, %v372, 0
        %v444 = vsel %vm391, %v373, 0
        %v447 = vsel %vm391, %v374, 0
        %v450 = vsel %vm391, %v375, 0
        %v453 = vsel %vm391, %v376, 0
        %v456 = vsel %vm391, %v377, 0
        %v459 = vsel %vm391, %v378, 0
        %v462 = vsel %vm391, %v379, 0
        %v465 = vsel %vm391, %v380, 0
        %v468 = vsel %vm391, %v381, 0
        %v471 = vsel %vm391, %v382, 0
        %v474 = vsel %vm391, %v383, 0
        %v477 = vsel %vm391, %v384, 0
        %v480 = vsel %vm391, %v385, 0
        %v483 = vsel %vm391, %v386, 0
        %v486 = vsel %vm391, %v387, 0
        %v488 = vsel %vm297, %v319, 0
        %v490 = vsel %vm297, %v390, 0
        %v492 = vsel %vm297, %v320, 0
        %494 = vmatprep.subr.mxu0 0.0
        %495 = vmatpush1.msra.mxu0 0.0
        %496 = vmatprep.subr.mxu0 0.0
        %497 = vmatpush1.msra.mxu0 0.0
        %498 = vmatprep.subr.mxu0 0.0
        %499 = vmatpush1.msra.mxu0 0.0
        %500 = vmatprep.subr.mxu0 0.0
        %501 = vmatpush1.msra.mxu0 0.0
        %502 = vmatprep.subr.mxu0 0.0
        %503 = vmatpush1.msra.mxu0 0.0
        %504 = vmatprep.subr.mxu0 0.0
        %505 = vmatpush1.msra.mxu0 0.0
        %506 = vmatprep.subr.mxu0 0.0
        %507 = vmatpush1.msra.mxu0 0.0
        %508 = vmatprep.subr.mxu0 0.0
        %509 = vmatpush1.msra.mxu0 0.0
        %510 = vmatprep.subr.mxu0 0.0
        %511 = vmatpush1.msra.mxu0 0.0
        %512 = vmatprep.subr.mxu0 0.0
        %513 = vmatpush1.msra.mxu0 0.0
        %514 = vmatprep.subr.mxu0 0.0
        %515 = vmatpush1.msra.mxu0 0.0
        %516 = vmatprep.subr.mxu0 0.0
        %517 = vmatpush1.msra.mxu0 0.0
        %518 = vmatprep.subr.mxu0 0.0
        %519 = vmatpush1.msra.mxu0 0.0
        %520 = vmatprep.subr.mxu0 0.0
        %521 = vmatpush1.msra.mxu0 0.0
        %522 = vmatprep.subr.mxu0 0.0
        %523 = vmatpush1.msra.mxu0 0.0
        %524 = vmatprep.subr.mxu0 %v490
        %525 = vmatpush1.msra.mxu0 %v488
        %526 = vmatprep.subr.mxu0 0.0
        %527 = vmatpush2.msra.mxu0 0.0
        %528 = vmatprep.subr.mxu0 0.0
        %529 = vmatpush2.msra.mxu0 0.0
        %530 = vmatprep.subr.mxu0 0.0
        %531 = vmatpush2.msra.mxu0 0.0
        %532 = vmatprep.subr.mxu0 0.0
        %533 = vmatpush2.msra.mxu0 0.0
        %534 = vmatprep.subr.mxu0 0.0
        %535 = vmatpush2.msra.mxu0 0.0
        %536 = vmatprep.subr.mxu0 0.0
        %537 = vmatpush2.msra.mxu0 0.0
        %538 = vmatprep.subr.mxu0 0.0
        %539 = vmatpush2.msra.mxu0 0.0
        %540 = vmatprep.subr.mxu0 0.0
        %541 = vmatpush2.msra.mxu0 0.0
        %542 = vmatprep.subr.mxu0 0.0
        %543 = vmatpush2.msra.mxu0 0.0
        %544 = vmatprep.subr.mxu0 0.0
        %545 = vmatpush2.msra.mxu0 0.0
        %546 = vmatprep.subr.mxu0 0.0
        %547 = vmatpush2.msra.mxu0 0.0
        %548 = vmatprep.subr.mxu0 0.0
        %549 = vmatpush2.msra.mxu0 0.0
        %550 = vmatprep.subr.mxu0 0.0
        %551 = vmatpush2.msra.mxu0 0.0
        %552 = vmatprep.subr.mxu0 0.0
        %553 = vmatpush2.msra.mxu0 0.0
        %554 = vmatprep.subr.mxu0 0.0
        %555 = vmatpush2.msra.mxu0 0.0
        %556 = vmatprep.subr.mxu0 0.0
        %557 = vmatpush2.msra.mxu0 0.0
        %558 = vmatprep.mubr.f32.mxu0 0.0
        %559 = vmatmul.mubr.f32.gmra.mxu0 %v393
        %v560 = vpop.f32.mrf.mxu0
        %v561 = vadd.f32 0.0, %v560
        %v562 = vpop.f32.mrf.mxu0
        %v563 = vadd.f32 0.0, %v562
        %564 = vmatprep.mubr.f32.mxu0 0.0
        %565 = vmatmul.mubr.f32.gmra.mxu0 %v396
        %v566 = vpop.f32.mrf.mxu0
        %v567 = vadd.f32 0.0, %v566
        %v568 = vpop.f32.mrf.mxu0
        %v569 = vadd.f32 0.0, %v568
        %570 = vmatprep.mubr.f32.mxu0 0.0
        %571 = vmatmul.mubr.f32.gmra.mxu0 %v399
        %v572 = vpop.f32.mrf.mxu0
        %v573 = vadd.f32 0.0, %v572
        %v574 = vpop.f32.mrf.mxu0
        %v575 = vadd.f32 0.0, %v574
        %576 = vmatprep.mubr.f32.mxu0 0.0
        %577 = vmatmul.mubr.f32.gmra.mxu0 %v402
        %v578 = vpop.f32.mrf.mxu0
        %v579 = vadd.f32 0.0, %v578
        %v580 = vpop.f32.mrf.mxu0
        %v581 = vadd.f32 0.0, %v580
        %582 = vmatprep.mubr.f32.mxu0 0.0
        %583 = vmatmul.mubr.f32.gmra.mxu0 %v405
        %v584 = vpop.f32.mrf.mxu0
        %v585 = vadd.f32 0.0, %v584
        %v586 = vpop.f32.mrf.mxu0
        %v587 = vadd.f32 0.0, %v586
        %588 = vmatprep.mubr.f32.mxu0 0.0
        %589 = vmatmul.mubr.f32.gmra.mxu0 %v408
        %v590 = vpop.f32.mrf.mxu0
        %v591 = vadd.f32 0.0, %v590
        %v592 = vpop.f32.mrf.mxu0
        %v593 = vadd.f32 0.0, %v592
        %594 = vmatprep.mubr.f32.mxu0 0.0
        %595 = vmatmul.mubr.f32.gmra.mxu0 %v411
        %v596 = vpop.f32.mrf.mxu0
        %v597 = vadd.f32 0.0, %v596
        %v598 = vpop.f32.mrf.mxu0
        %v599 = vadd.f32 0.0, %v598
        %600 = vmatprep.mubr.f32.mxu0 0.0
        %601 = vmatmul.mubr.f32.gmra.mxu0 %v414
        %v602 = vpop.f32.mrf.mxu0
        %v603 = vadd.f32 0.0, %v602
        %v604 = vpop.f32.mrf.mxu0
        %v605 = vadd.f32 0.0, %v604
        %606 = vmatprep.mubr.f32.mxu0 0.0
        %607 = vmatmul.mubr.f32.gmra.mxu0 %v417
        %v608 = vpop.f32.mrf.mxu0
        %v609 = vadd.f32 0.0, %v608
        %v610 = vpop.f32.mrf.mxu0
        %v611 = vadd.f32 0.0, %v610
        %612 = vmatprep.mubr.f32.mxu0 0.0
        %613 = vmatmul.mubr.f32.gmra.mxu0 %v420
        %v614 = vpop.f32.mrf.mxu0
        %v615 = vadd.f32 0.0, %v614
        %v616 = vpop.f32.mrf.mxu0
        %v617 = vadd.f32 0.0, %v616
        %618 = vmatprep.mubr.f32.mxu0 0.0
        %619 = vmatmul.mubr.f32.gmra.mxu0 %v423
        %v620 = vpop.f32.mrf.mxu0
        %v621 = vadd.f32 0.0, %v620
        %v622 = vpop.f32.mrf.mxu0
        %v623 = vadd.f32 0.0, %v622
        %624 = vmatprep.mubr.f32.mxu0 0.0
        %625 = vmatmul.mubr.f32.gmra.mxu0 %v426
        %v626 = vpop.f32.mrf.mxu0
        %v627 = vadd.f32 0.0, %v626
        %v628 = vpop.f32.mrf.mxu0
        %v629 = vadd.f32 0.0, %v628
        %630 = vmatprep.mubr.f32.mxu0 0.0
        %631 = vmatmul.mubr.f32.gmra.mxu0 %v429
        %v632 = vpop.f32.mrf.mxu0
        %v633 = vadd.f32 0.0, %v632
        %v634 = vpop.f32.mrf.mxu0
        %v635 = vadd.f32 0.0, %v634
        %636 = vmatprep.mubr.f32.mxu0 0.0
        %637 = vmatmul.mubr.f32.gmra.mxu0 %v432
        %v638 = vpop.f32.mrf.mxu0
        %v639 = vadd.f32 0.0, %v638
        %v640 = vpop.f32.mrf.mxu0
        %v641 = vadd.f32 0.0, %v640
        %642 = vmatprep.mubr.f32.mxu0 0.0
        %643 = vmatmul.mubr.f32.gmra.mxu0 %v435
        %v644 = vpop.f32.mrf.mxu0
        %v645 = vadd.f32 0.0, %v644
        %v646 = vpop.f32.mrf.mxu0
        %v647 = vadd.f32 0.0, %v646
        %648 = vmatprep.mubr.f32.mxu0 0.0
        %649 = vmatmul.mubr.f32.gmra.mxu0 %v438
        %v650 = vpop.f32.mrf.mxu0
        %v651 = vadd.f32 0.0, %v650
        %v652 = vpop.f32.mrf.mxu0
        %v653 = vadd.f32 0.0, %v652
        %654 = vmatprep.mubr.f32.mxu0 0.0
        %655 = vmatmul.mubr.f32.gmra.mxu0 %v441
        %v656 = vpop.f32.mrf.mxu0
        %v657 = vadd.f32 0.0, %v656
        %v658 = vpop.f32.mrf.mxu0
        %v659 = vadd.f32 0.0, %v658
        %660 = vmatprep.mubr.f32.mxu0 0.0
        %661 = vmatmul.mubr.f32.gmra.mxu0 %v444
        %v662 = vpop.f32.mrf.mxu0
        %v663 = vadd.f32 0.0, %v662
        %v664 = vpop.f32.mrf.mxu0
        %v665 = vadd.f32 0.0, %v664
        %666 = vmatprep.mubr.f32.mxu0 0.0
        %667 = vmatmul.mubr.f32.gmra.mxu0 %v447
        %v668 = vpop.f32.mrf.mxu0
        %v669 = vadd.f32 0.0, %v668
        %v670 = vpop.f32.mrf.mxu0
        %v671 = vadd.f32 0.0, %v670
        %672 = vmatprep.mubr.f32.mxu0 0.0
        %673 = vmatmul.mubr.f32.gmra.mxu0 %v450
        %v674 = vpop.f32.mrf.mxu0
        %v675 = vadd.f32 0.0, %v674
        %v676 = vpop.f32.mrf.mxu0
        %v677 = vadd.f32 0.0, %v676
        %678 = vmatprep.mubr.f32.mxu0 0.0
        %679 = vmatmul.mubr.f32.gmra.mxu0 %v453
        %v680 = vpop.f32.mrf.mxu0
        %v681 = vadd.f32 0.0, %v680
        %v682 = vpop.f32.mrf.mxu0
        %v683 = vadd.f32 0.0, %v682
        %684 = vmatprep.mubr.f32.mxu0 0.0
        %685 = vmatmul.mubr.f32.gmra.mxu0 %v456
        %v686 = vpop.f32.mrf.mxu0
        %v687 = vadd.f32 0.0, %v686
        %v688 = vpop.f32.mrf.mxu0
        %v689 = vadd.f32 0.0, %v688
        %690 = vmatprep.mubr.f32.mxu0 0.0
        %691 = vmatmul.mubr.f32.gmra.mxu0 %v459
        %v692 = vpop.f32.mrf.mxu0
        %v693 = vadd.f32 0.0, %v692
        %v694 = vpop.f32.mrf.mxu0
        %v695 = vadd.f32 0.0, %v694
        %696 = vmatprep.mubr.f32.mxu0 0.0
        %697 = vmatmul.mubr.f32.gmra.mxu0 %v462
        %v698 = vpop.f32.mrf.mxu0
        %v699 = vadd.f32 0.0, %v698
        %v700 = vpop.f32.mrf.mxu0
        %v701 = vadd.f32 0.0, %v700
        %702 = vmatprep.mubr.f32.mxu0 0.0
        %703 = vmatmul.mubr.f32.gmra.mxu0 %v465
        %v704 = vpop.f32.mrf.mxu0
        %v705 = vadd.f32 0.0, %v704
        %v706 = vpop.f32.mrf.mxu0
        %v707 = vadd.f32 0.0, %v706
        %708 = vmatprep.mubr.f32.mxu0 0.0
        %709 = vmatmul.mubr.f32.gmra.mxu0 %v468
        %v710 = vpop.f32.mrf.mxu0
        %v711 = vadd.f32 0.0, %v710
        %v712 = vpop.f32.mrf.mxu0
        %v713 = vadd.f32 0.0, %v712
        %714 = vmatprep.mubr.f32.mxu0 0.0
        %715 = vmatmul.mubr.f32.gmra.mxu0 %v471
        %v716 = vpop.f32.mrf.mxu0
        %v717 = vadd.f32 0.0, %v716
        %v718 = vpop.f32.mrf.mxu0
        %v719 = vadd.f32 0.0, %v718
        %720 = vmatprep.mubr.f32.mxu0 0.0
        %721 = vmatmul.mubr.f32.gmra.mxu0 %v474
        %v722 = vpop.f32.mrf.mxu0
        %v723 = vadd.f32 0.0, %v722
        %v724 = vpop.f32.mrf.mxu0
        %v725 = vadd.f32 0.0, %v724
        %726 = vmatprep.mubr.f32.mxu0 0.0
        %727 = vmatmul.mubr.f32.gmra.mxu0 %v477
        %v728 = vpop.f32.mrf.mxu0
        %v729 = vadd.f32 0.0, %v728
        %v730 = vpop.f32.mrf.mxu0
        %v731 = vadd.f32 0.0, %v730
        %732 = vmatprep.mubr.f32.mxu0 0.0
        %733 = vmatmul.mubr.f32.gmra.mxu0 %v480
        %v734 = vpop.f32.mrf.mxu0
        %v735 = vadd.f32 0.0, %v734
        %v736 = vpop.f32.mrf.mxu0
        %v737 = vadd.f32 0.0, %v736
        %738 = vmatprep.mubr.f32.mxu0 0.0
        %739 = vmatmul.mubr.f32.gmra.mxu0 %v483
        %v740 = vpop.f32.mrf.mxu0
        %v741 = vadd.f32 0.0, %v740
        %v742 = vpop.f32.mrf.mxu0
        %v743 = vadd.f32 0.0, %v742
        %744 = vmatprep.mubr.f32.mxu0 0.0
        %745 = vmatmul.mubr.f32.gmra.mxu0 %v486
        %v746 = vpop.f32.mrf.mxu0
        %v747 = vadd.f32 0.0, %v746
        %v748 = vpop.f32.mrf.mxu0
        %v749 = vadd.f32 0.0, %v748
        %750 = vdwg.mxu0
        %751 = vmatprep.subr.mxu0 0.0
        %752 = vmatpush1.msra.mxu0 0.0
        %753 = vmatprep.subr.mxu0 0.0
        %754 = vmatpush1.msra.mxu0 0.0
        %755 = vmatprep.subr.mxu0 0.0
        %756 = vmatpush1.msra.mxu0 0.0
        %757 = vmatprep.subr.mxu0 0.0
        %758 = vmatpush1.msra.mxu0 0.0
        %759 = vmatprep.subr.mxu0 0.0
        %760 = vmatpush1.msra.mxu0 0.0
        %761 = vmatprep.subr.mxu0 0.0
        %762 = vmatpush1.msra.mxu0 0.0
        %763 = vmatprep.subr.mxu0 0.0
        %764 = vmatpush1.msra.mxu0 0.0
        %765 = vmatprep.subr.mxu0 0.0
        %766 = vmatpush1.msra.mxu0 0.0
        %767 = vmatprep.subr.mxu0 0.0
        %768 = vmatpush1.msra.mxu0 0.0
        %769 = vmatprep.subr.mxu0 0.0
        %770 = vmatpush1.msra.mxu0 0.0
        %771 = vmatprep.subr.mxu0 0.0
        %772 = vmatpush1.msra.mxu0 0.0
        %773 = vmatprep.subr.mxu0 0.0
        %774 = vmatpush1.msra.mxu0 0.0
        %775 = vmatprep.subr.mxu0 0.0
        %776 = vmatpush1.msra.mxu0 0.0
        %777 = vmatprep.subr.mxu0 0.0
        %778 = vmatpush1.msra.mxu0 0.0
        %779 = vmatprep.subr.mxu0 0.0
        %780 = vmatpush1.msra.mxu0 0.0
        %781 = vmatprep.subr.mxu0 0.0
        %782 = vmatpush1.msra.mxu0 %v492
        %783 = vmatprep.subr.mxu0 0.0
        %784 = vmatpush2.msra.mxu0 0.0
        %785 = vmatprep.subr.mxu0 0.0
        %786 = vmatpush2.msra.mxu0 0.0
        %787 = vmatprep.subr.mxu0 0.0
        %788 = vmatpush2.msra.mxu0 0.0
        %789 = vmatprep.subr.mxu0 0.0
        %790 = vmatpush2.msra.mxu0 0.0
        %791 = vmatprep.subr.mxu0 0.0
        %792 = vmatpush2.msra.mxu0 0.0
        %793 = vmatprep.subr.mxu0 0.0
        %794 = vmatpush2.msra.mxu0 0.0
        %795 = vmatprep.subr.mxu0 0.0
        %796 = vmatpush2.msra.mxu0 0.0
        %797 = vmatprep.subr.mxu0 0.0
        %798 = vmatpush2.msra.mxu0 0.0
        %799 = vmatprep.subr.mxu0 0.0
        %800 = vmatpush2.msra.mxu0 0.0
        %801 = vmatprep.subr.mxu0 0.0
        %802 = vmatpush2.msra.mxu0 0.0
        %803 = vmatprep.subr.mxu0 0.0
        %804 = vmatpush2.msra.mxu0 0.0
        %805 = vmatprep.subr.mxu0 0.0
        %806 = vmatpush2.msra.mxu0 0.0
        %807 = vmatprep.subr.mxu0 0.0
        %808 = vmatpush2.msra.mxu0 0.0
        %809 = vmatprep.subr.mxu0 0.0
        %810 = vmatpush2.msra.mxu0 0.0
        %811 = vmatprep.subr.mxu0 0.0
        %812 = vmatpush2.msra.mxu0 0.0
        %813 = vmatprep.subr.mxu0 0.0
        %814 = vmatpush2.msra.mxu0 0.0
        %815 = vmatprep.mubr.f32.mxu0 0.0
        %816 = vmatmul.mubr.f32.gmra.mxu0 %v393
        %v817 = vpop.f32.mrf.mxu0
        %v818 = vadd.f32 0.0, %v817
        %v819 = vpop.f32.mrf.mxu0
        %820 = vmatprep.mubr.f32.mxu0 0.0
        %821 = vmatmul.mubr.f32.gmra.mxu0 %v396
        %v822 = vpop.f32.mrf.mxu0
        %v823 = vadd.f32 0.0, %v822
        %v824 = vpop.f32.mrf.mxu0
        %825 = vmatprep.mubr.f32.mxu0 0.0
        %826 = vmatmul.mubr.f32.gmra.mxu0 %v399
        %v827 = vpop.f32.mrf.mxu0
        %v828 = vadd.f32 0.0, %v827
        %v829 = vpop.f32.mrf.mxu0
        %830 = vmatprep.mubr.f32.mxu0 0.0
        %831 = vmatmul.mubr.f32.gmra.mxu0 %v402
        %v832 = vpop.f32.mrf.mxu0
        %v833 = vadd.f32 0.0, %v832
        %v834 = vpop.f32.mrf.mxu0
        %835 = vmatprep.mubr.f32.mxu0 0.0
        %836 = vmatmul.mubr.f32.gmra.mxu0 %v405
        %v837 = vpop.f32.mrf.mxu0
        %v838 = vadd.f32 0.0, %v837
        %v839 = vpop.f32.mrf.mxu0
        %840 = vmatprep.mubr.f32.mxu0 0.0
        %841 = vmatmul.mubr.f32.gmra.mxu0 %v408
        %v842 = vpop.f32.mrf.mxu0
        %v843 = vadd.f32 0.0, %v842
        %v844 = vpop.f32.mrf.mxu0
        %845 = vmatprep.mubr.f32.mxu0 0.0
        %846 = vmatmul.mubr.f32.gmra.mxu0 %v411
        %v847 = vpop.f32.mrf.mxu0
        %v848 = vadd.f32 0.0, %v847
        %v849 = vpop.f32.mrf.mxu0
        %850 = vmatprep.mubr.f32.mxu0 0.0
        %851 = vmatmul.mubr.f32.gmra.mxu0 %v414
        %v852 = vpop.f32.mrf.mxu0
        %v853 = vadd.f32 0.0, %v852
        %v854 = vpop.f32.mrf.mxu0
        %855 = vmatprep.mubr.f32.mxu0 0.0
        %856 = vmatmul.mubr.f32.gmra.mxu0 %v417
        %v857 = vpop.f32.mrf.mxu0
        %v858 = vadd.f32 0.0, %v857
        %v859 = vpop.f32.mrf.mxu0
        %860 = vmatprep.mubr.f32.mxu0 0.0
        %861 = vmatmul.mubr.f32.gmra.mxu0 %v420
        %v862 = vpop.f32.mrf.mxu0
        %v863 = vadd.f32 0.0, %v862
        %v864 = vpop.f32.mrf.mxu0
        %865 = vmatprep.mubr.f32.mxu0 0.0
        %866 = vmatmul.mubr.f32.gmra.mxu0 %v423
        %v867 = vpop.f32.mrf.mxu0
        %v868 = vadd.f32 0.0, %v867
        %v869 = vpop.f32.mrf.mxu0
        %870 = vmatprep.mubr.f32.mxu0 0.0
        %871 = vmatmul.mubr.f32.gmra.mxu0 %v426
        %v872 = vpop.f32.mrf.mxu0
        %v873 = vadd.f32 0.0, %v872
        %v874 = vpop.f32.mrf.mxu0
        %875 = vmatprep.mubr.f32.mxu0 0.0
        %876 = vmatmul.mubr.f32.gmra.mxu0 %v429
        %v877 = vpop.f32.mrf.mxu0
        %v878 = vadd.f32 0.0, %v877
        %v879 = vpop.f32.mrf.mxu0
        %880 = vmatprep.mubr.f32.mxu0 0.0
        %881 = vmatmul.mubr.f32.gmra.mxu0 %v432
        %v882 = vpop.f32.mrf.mxu0
        %v883 = vadd.f32 0.0, %v882
        %v884 = vpop.f32.mrf.mxu0
        %885 = vmatprep.mubr.f32.mxu0 0.0
        %886 = vmatmul.mubr.f32.gmra.mxu0 %v435
        %v887 = vpop.f32.mrf.mxu0
        %v888 = vadd.f32 0.0, %v887
        %v889 = vpop.f32.mrf.mxu0
        %890 = vmatprep.mubr.f32.mxu0 0.0
        %891 = vmatmul.mubr.f32.gmra.mxu0 %v438
        %v892 = vpop.f32.mrf.mxu0
        %v893 = vadd.f32 0.0, %v892
        %v894 = vpop.f32.mrf.mxu0
        %895 = vmatprep.mubr.f32.mxu0 0.0
        %896 = vmatmul.mubr.f32.gmra.mxu0 %v441
        %v897 = vpop.f32.mrf.mxu0
        %v898 = vadd.f32 0.0, %v897
        %v899 = vpop.f32.mrf.mxu0
        %900 = vmatprep.mubr.f32.mxu0 0.0
        %901 = vmatmul.mubr.f32.gmra.mxu0 %v444
        %v902 = vpop.f32.mrf.mxu0
        %v903 = vadd.f32 0.0, %v902
        %v904 = vpop.f32.mrf.mxu0
        %905 = vmatprep.mubr.f32.mxu0 0.0
        %906 = vmatmul.mubr.f32.gmra.mxu0 %v447
        %v907 = vpop.f32.mrf.mxu0
        %v908 = vadd.f32 0.0, %v907
        %v909 = vpop.f32.mrf.mxu0
        %910 = vmatprep.mubr.f32.mxu0 0.0
        %911 = vmatmul.mubr.f32.gmra.mxu0 %v450
        %v912 = vpop.f32.mrf.mxu0
        %v913 = vadd.f32 0.0, %v912
        %v914 = vpop.f32.mrf.mxu0
        %915 = vmatprep.mubr.f32.mxu0 0.0
        %916 = vmatmul.mubr.f32.gmra.mxu0 %v453
        %v917 = vpop.f32.mrf.mxu0
        %v918 = vadd.f32 0.0, %v917
        %v919 = vpop.f32.mrf.mxu0
        %920 = vmatprep.mubr.f32.mxu0 0.0
        %921 = vmatmul.mubr.f32.gmra.mxu0 %v456
        %v922 = vpop.f32.mrf.mxu0
        %v923 = vadd.f32 0.0, %v922
        %v924 = vpop.f32.mrf.mxu0
        %925 = vmatprep.mubr.f32.mxu0 0.0
        %926 = vmatmul.mubr.f32.gmra.mxu0 %v459
        %v927 = vpop.f32.mrf.mxu0
        %v928 = vadd.f32 0.0, %v927
        %v929 = vpop.f32.mrf.mxu0
        %930 = vmatprep.mubr.f32.mxu0 0.0
        %931 = vmatmul.mubr.f32.gmra.mxu0 %v462
        %v932 = vpop.f32.mrf.mxu0
        %v933 = vadd.f32 0.0, %v932
        %v934 = vpop.f32.mrf.mxu0
        %935 = vmatprep.mubr.f32.mxu0 0.0
        %936 = vmatmul.mubr.f32.gmra.mxu0 %v465
        %v937 = vpop.f32.mrf.mxu0
        %v938 = vadd.f32 0.0, %v937
        %v939 = vpop.f32.mrf.mxu0
        %940 = vmatprep.mubr.f32.mxu0 0.0
        %941 = vmatmul.mubr.f32.gmra.mxu0 %v468
        %v942 = vpop.f32.mrf.mxu0
        %v943 = vadd.f32 0.0, %v942
        %v944 = vpop.f32.mrf.mxu0
        %945 = vmatprep.mubr.f32.mxu0 0.0
        %946 = vmatmul.mubr.f32.gmra.mxu0 %v471
        %v947 = vpop.f32.mrf.mxu0
        %v948 = vadd.f32 0.0, %v947
        %v949 = vpop.f32.mrf.mxu0
        %950 = vmatprep.mubr.f32.mxu0 0.0
        %951 = vmatmul.mubr.f32.gmra.mxu0 %v474
        %v952 = vpop.f32.mrf.mxu0
        %v953 = vadd.f32 0.0, %v952
        %v954 = vpop.f32.mrf.mxu0
        %955 = vmatprep.mubr.f32.mxu0 0.0
        %956 = vmatmul.mubr.f32.gmra.mxu0 %v477
        %v957 = vpop.f32.mrf.mxu0
        %v958 = vadd.f32 0.0, %v957
        %v959 = vpop.f32.mrf.mxu0
        %960 = vmatprep.mubr.f32.mxu0 0.0
        %961 = vmatmul.mubr.f32.gmra.mxu0 %v480
        %v962 = vpop.f32.mrf.mxu0
        %v963 = vadd.f32 0.0, %v962
        %v964 = vpop.f32.mrf.mxu0
        %965 = vmatprep.mubr.f32.mxu0 0.0
        %966 = vmatmul.mubr.f32.gmra.mxu0 %v483
        %v967 = vpop.f32.mrf.mxu0
        %v968 = vadd.f32 0.0, %v967
        %v969 = vpop.f32.mrf.mxu0
        %970 = vmatprep.mubr.f32.mxu0 0.0
        %971 = vmatmul.mubr.f32.gmra.mxu0 %v486
        %v972 = vpop.f32.mrf.mxu0
        %v973 = vadd.f32 0.0, %v972
        %v974 = vpop.f32.mrf.mxu0
        %975 = vdwg.mxu0
        %976 = vrot.lane.b32.xlu0 %v561, 1
        %v977 = vpop.permute.xlu0 %976
        %978 = vrot.lane.b32.xlu0 %v567, 1
        %v979 = vpop.permute.xlu0 %978
        %980 = vrot.lane.b32.xlu0 %v573, 1
        %v981 = vpop.permute.xlu0 %980
        %982 = vrot.lane.b32.xlu0 %v579, 1
        %v983 = vpop.permute.xlu0 %982
        %984 = vrot.lane.b32.xlu0 %v585, 1
        %v985 = vpop.permute.xlu0 %984
        %986 = vrot.lane.b32.xlu0 %v591, 1
        %v987 = vpop.permute.xlu0 %986
        %988 = vrot.lane.b32.xlu0 %v597, 1
        %v989 = vpop.permute.xlu0 %988
        %990 = vrot.lane.b32.xlu0 %v603, 1
        %v991 = vpop.permute.xlu0 %990
        %992 = vrot.lane.b32.xlu0 %v609, 1
        %v993 = vpop.permute.xlu0 %992
        %994 = vrot.lane.b32.xlu0 %v615, 1
        %v995 = vpop.permute.xlu0 %994
        %996 = vrot.lane.b32.xlu0 %v621, 1
        %v997 = vpop.permute.xlu0 %996
        %998 = vrot.lane.b32.xlu0 %v627, 1
        %v999 = vpop.permute.xlu0 %998
        %1000 = vrot.lane.b32.xlu0 %v633, 1
        %v1001 = vpop.permute.xlu0 %1000
        %1002 = vrot.lane.b32.xlu0 %v639, 1
        %v1003 = vpop.permute.xlu0 %1002
        %1004 = vrot.lane.b32.xlu0 %v645, 1
        %v1005 = vpop.permute.xlu0 %1004
        %1006 = vrot.lane.b32.xlu0 %v651, 1
        %v1007 = vpop.permute.xlu0 %1006
        %1008 = vrot.lane.b32.xlu0 %v657, 1
        %v1009 = vpop.permute.xlu0 %1008
        %1010 = vrot.lane.b32.xlu0 %v663, 1
        %v1011 = vpop.permute.xlu0 %1010
        %1012 = vrot.lane.b32.xlu0 %v669, 1
        %v1013 = vpop.permute.xlu0 %1012
        %1014 = vrot.lane.b32.xlu0 %v675, 1
        %v1015 = vpop.permute.xlu0 %1014
        %1016 = vrot.lane.b32.xlu0 %v681, 1
        %v1017 = vpop.permute.xlu0 %1016
        %1018 = vrot.lane.b32.xlu0 %v687, 1
        %v1019 = vpop.permute.xlu0 %1018
        %1020 = vrot.lane.b32.xlu0 %v693, 1
        %v1021 = vpop.permute.xlu0 %1020
        %1022 = vrot.lane.b32.xlu0 %v699, 1
        %v1023 = vpop.permute.xlu0 %1022
        %1024 = vrot.lane.b32.xlu0 %v705, 1
        %v1025 = vpop.permute.xlu0 %1024
        %1026 = vrot.lane.b32.xlu0 %v711, 1
        %v1027 = vpop.permute.xlu0 %1026
        %1028 = vrot.lane.b32.xlu0 %v717, 1
        %v1029 = vpop.permute.xlu0 %1028
        %1030 = vrot.lane.b32.xlu0 %v723, 1
        %v1031 = vpop.permute.xlu0 %1030
        %1032 = vrot.lane.b32.xlu0 %v729, 1
        %v1033 = vpop.permute.xlu0 %1032
        %1034 = vrot.lane.b32.xlu0 %v735, 1
        %v1035 = vpop.permute.xlu0 %1034
        %1036 = vrot.lane.b32.xlu0 %v741, 1
        %v1037 = vpop.permute.xlu0 %1036
        %1038 = vrot.lane.b32.xlu0 %v747, 1
        %v1039 = vpop.permute.xlu0 %1038
        %1040 = vrot.lane.b32.xlu0 %v563, 1
        %v1041 = vpop.permute.xlu0 %1040
        %1042 = vrot.lane.b32.xlu0 %v569, 1
        %v1043 = vpop.permute.xlu0 %1042
        %1044 = vrot.lane.b32.xlu0 %v575, 1
        %v1045 = vpop.permute.xlu0 %1044
        %1046 = vrot.lane.b32.xlu0 %v581, 1
        %v1047 = vpop.permute.xlu0 %1046
        %1048 = vrot.lane.b32.xlu0 %v587, 1
        %v1049 = vpop.permute.xlu0 %1048
        %1050 = vrot.lane.b32.xlu0 %v593, 1
        %v1051 = vpop.permute.xlu0 %1050
        %1052 = vrot.lane.b32.xlu0 %v599, 1
        %v1053 = vpop.permute.xlu0 %1052
        %1054 = vrot.lane.b32.xlu0 %v605, 1
        %v1055 = vpop.permute.xlu0 %1054
        %1056 = vrot.lane.b32.xlu0 %v611, 1
        %v1057 = vpop.permute.xlu0 %1056
        %1058 = vrot.lane.b32.xlu0 %v617, 1
        %v1059 = vpop.permute.xlu0 %1058
        %1060 = vrot.lane.b32.xlu0 %v623, 1
        %v1061 = vpop.permute.xlu0 %1060
        %1062 = vrot.lane.b32.xlu0 %v629, 1
        %v1063 = vpop.permute.xlu0 %1062
        %1064 = vrot.lane.b32.xlu0 %v635, 1
        %v1065 = vpop.permute.xlu0 %1064
        %1066 = vrot.lane.b32.xlu0 %v641, 1
        %v1067 = vpop.permute.xlu0 %1066
        %1068 = vrot.lane.b32.xlu0 %v647, 1
        %v1069 = vpop.permute.xlu0 %1068
        %1070 = vrot.lane.b32.xlu0 %v653, 1
        %v1071 = vpop.permute.xlu0 %1070
        %1072 = vrot.lane.b32.xlu0 %v659, 1
        %v1073 = vpop.permute.xlu0 %1072
        %1074 = vrot.lane.b32.xlu0 %v665, 1
        %v1075 = vpop.permute.xlu0 %1074
        %1076 = vrot.lane.b32.xlu0 %v671, 1
        %v1077 = vpop.permute.xlu0 %1076
        %1078 = vrot.lane.b32.xlu0 %v677, 1
        %v1079 = vpop.permute.xlu0 %1078
        %1080 = vrot.lane.b32.xlu0 %v683, 1
        %v1081 = vpop.permute.xlu0 %1080
        %1082 = vrot.lane.b32.xlu0 %v689, 1
        %v1083 = vpop.permute.xlu0 %1082
        %1084 = vrot.lane.b32.xlu0 %v695, 1
        %v1085 = vpop.permute.xlu0 %1084
        %1086 = vrot.lane.b32.xlu0 %v701, 1
        %v1087 = vpop.permute.xlu0 %1086
        %1088 = vrot.lane.b32.xlu0 %v707, 1
        %v1089 = vpop.permute.xlu0 %1088
        %1090 = vrot.lane.b32.xlu0 %v713, 1
        %v1091 = vpop.permute.xlu0 %1090
        %1092 = vrot.lane.b32.xlu0 %v719, 1
        %v1093 = vpop.permute.xlu0 %1092
        %1094 = vrot.lane.b32.xlu0 %v725, 1
        %v1095 = vpop.permute.xlu0 %1094
        %1096 = vrot.lane.b32.xlu0 %v731, 1
        %v1097 = vpop.permute.xlu0 %1096
        %1098 = vrot.lane.b32.xlu0 %v737, 1
        %v1099 = vpop.permute.xlu0 %1098
        %1100 = vrot.lane.b32.xlu0 %v743, 1
        %v1101 = vpop.permute.xlu0 %1100
        %1102 = vrot.lane.b32.xlu0 %v749, 1
        %v1103 = vpop.permute.xlu0 %1102
        %1104 = vrot.lane.b32.xlu0 %v818, 1
        %v1105 = vpop.permute.xlu0 %1104
        %1106 = vrot.lane.b32.xlu0 %v823, 1
        %v1107 = vpop.permute.xlu0 %1106
        %1108 = vrot.lane.b32.xlu0 %v828, 1
        %v1109 = vpop.permute.xlu0 %1108
        %1110 = vrot.lane.b32.xlu0 %v833, 1
        %v1111 = vpop.permute.xlu0 %1110
        %1112 = vrot.lane.b32.xlu0 %v838, 1
        %v1113 = vpop.permute.xlu0 %1112
        %1114 = vrot.lane.b32.xlu0 %v843, 1
        %v1115 = vpop.permute.xlu0 %1114
        %1116 = vrot.lane.b32.xlu0 %v848, 1
        %v1117 = vpop.permute.xlu0 %1116
        %1118 = vrot.lane.b32.xlu0 %v853, 1
        %v1119 = vpop.permute.xlu0 %1118
        %1120 = vrot.lane.b32.xlu0 %v858, 1
        %v1121 = vpop.permute.xlu0 %1120
        %1122 = vrot.lane.b32.xlu0 %v863, 1
        %v1123 = vpop.permute.xlu0 %1122
        %1124 = vrot.lane.b32.xlu0 %v868, 1
        %v1125 = vpop.permute.xlu0 %1124
        %1126 = vrot.lane.b32.xlu0 %v873, 1
        %v1127 = vpop.permute.xlu0 %1126
        %1128 = vrot.lane.b32.xlu0 %v878, 1
        %v1129 = vpop.permute.xlu0 %1128
        %1130 = vrot.lane.b32.xlu0 %v883, 1
        %v1131 = vpop.permute.xlu0 %1130
        %1132 = vrot.lane.b32.xlu0 %v888, 1
        %v1133 = vpop.permute.xlu0 %1132
        %1134 = vrot.lane.b32.xlu0 %v893, 1
        %v1135 = vpop.permute.xlu0 %1134
        %1136 = vrot.lane.b32.xlu0 %v898, 1
        %v1137 = vpop.permute.xlu0 %1136
        %1138 = vrot.lane.b32.xlu0 %v903, 1
        %v1139 = vpop.permute.xlu0 %1138
        %1140 = vrot.lane.b32.xlu0 %v908, 1
        %v1141 = vpop.permute.xlu0 %1140
        %1142 = vrot.lane.b32.xlu0 %v913, 1
        %v1143 = vpop.permute.xlu0 %1142
        %1144 = vrot.lane.b32.xlu0 %v918, 1
        %v1145 = vpop.permute.xlu0 %1144
        %1146 = vrot.lane.b32.xlu0 %v923, 1
        %v1147 = vpop.permute.xlu0 %1146
        %1148 = vrot.lane.b32.xlu0 %v928, 1
        %v1149 = vpop.permute.xlu0 %1148
        %1150 = vrot.lane.b32.xlu0 %v933, 1
        %v1151 = vpop.permute.xlu0 %1150
        %1152 = vrot.lane.b32.xlu0 %v938, 1
        %v1153 = vpop.permute.xlu0 %1152
        %1154 = vrot.lane.b32.xlu0 %v943, 1
        %v1155 = vpop.permute.xlu0 %1154
        %1156 = vrot.lane.b32.xlu0 %v948, 1
        %v1157 = vpop.permute.xlu0 %1156
        %1158 = vrot.lane.b32.xlu0 %v953, 1
        %v1159 = vpop.permute.xlu0 %1158
        %1160 = vrot.lane.b32.xlu0 %v958, 1
        %v1161 = vpop.permute.xlu0 %1160
        %1162 = vrot.lane.b32.xlu0 %v963, 1
        %v1163 = vpop.permute.xlu0 %1162
        %1164 = vrot.lane.b32.xlu0 %v968, 1
        %v1165 = vpop.permute.xlu0 %1164
        %1166 = vrot.lane.b32.xlu0 %v973, 1
        %v1167 = vpop.permute.xlu0 %1166
        %v1168 = vlaneseq
        %v1169 = vand.u32 %v1168, 127
        %vm1170 = vcmp.lt.s32.totalorder %v1169, 1
        %v1171 = vsel %vm1170, %v1041, %v1105
        %v1172 = vsel %vm1170, %v1043, %v1107
        %v1173 = vsel %vm1170, %v1045, %v1109
        %v1174 = vsel %vm1170, %v1047, %v1111
        %v1175 = vsel %vm1170, %v1049, %v1113
        %v1176 = vsel %vm1170, %v1051, %v1115
        %v1177 = vsel %vm1170, %v1053, %v1117
        %v1178 = vsel %vm1170, %v1055, %v1119
        %v1179 = vsel %vm1170, %v1057, %v1121
        %v1180 = vsel %vm1170, %v1059, %v1123
        %v1181 = vsel %vm1170, %v1061, %v1125
        %v1182 = vsel %vm1170, %v1063, %v1127
        %v1183 = vsel %vm1170, %v1065, %v1129
        %v1184 = vsel %vm1170, %v1067, %v1131
        %v1185 = vsel %vm1170, %v1069, %v1133
        %v1186 = vsel %vm1170, %v1071, %v1135
        %v1187 = vsel %vm1170, %v1073, %v1137
        %v1188 = vsel %vm1170, %v1075, %v1139
        %v1189 = vsel %vm1170, %v1077, %v1141
        %v1190 = vsel %vm1170, %v1079, %v1143
        %v1191 = vsel %vm1170, %v1081, %v1145
        %v1192 = vsel %vm1170, %v1083, %v1147
        %v1193 = vsel %vm1170, %v1085, %v1149
        %v1194 = vsel %vm1170, %v1087, %v1151
        %v1195 = vsel %vm1170, %v1089, %v1153
        %v1196 = vsel %vm1170, %v1091, %v1155
        %v1197 = vsel %vm1170, %v1093, %v1157
        %v1198 = vsel %vm1170, %v1095, %v1159
        %v1199 = vsel %vm1170, %v1097, %v1161
        %v1200 = vsel %vm1170, %v1099, %v1163
        %v1201 = vsel %vm1170, %v1101, %v1165
        %v1202 = vsel %vm1170, %v1103, %v1167
        %v1203 = vsel %vm1170, %v977, %v1041
        %v1204 = vsel %vm1170, %v979, %v1043
        %v1205 = vsel %vm1170, %v981, %v1045
        %v1206 = vsel %vm1170, %v983, %v1047
        %v1207 = vsel %vm1170, %v985, %v1049
        %v1208 = vsel %vm1170, %v987, %v1051
        %v1209 = vsel %vm1170, %v989, %v1053
        %v1210 = vsel %vm1170, %v991, %v1055
        %v1211 = vsel %vm1170, %v993, %v1057
        %v1212 = vsel %vm1170, %v995, %v1059
        %v1213 = vsel %vm1170, %v997, %v1061
        %v1214 = vsel %vm1170, %v999, %v1063
        %v1215 = vsel %vm1170, %v1001, %v1065
        %v1216 = vsel %vm1170, %v1003, %v1067
        %v1217 = vsel %vm1170, %v1005, %v1069
        %v1218 = vsel %vm1170, %v1007, %v1071
        %v1219 = vsel %vm1170, %v1009, %v1073
        %v1220 = vsel %vm1170, %v1011, %v1075
        %v1221 = vsel %vm1170, %v1013, %v1077
        %v1222 = vsel %vm1170, %v1015, %v1079
        %v1223 = vsel %vm1170, %v1017, %v1081
        %v1224 = vsel %vm1170, %v1019, %v1083
        %v1225 = vsel %vm1170, %v1021, %v1085
        %v1226 = vsel %vm1170, %v1023, %v1087
        %v1227 = vsel %vm1170, %v1025, %v1089
        %v1228 = vsel %vm1170, %v1027, %v1091
        %v1229 = vsel %vm1170, %v1029, %v1093
        %v1230 = vsel %vm1170, %v1031, %v1095
        %v1231 = vsel %vm1170, %v1033, %v1097
        %v1232 = vsel %vm1170, %v1035, %v1099
        %v1233 = vsel %vm1170, %v1037, %v1101
        %v1234 = vsel %vm1170, %v1039, %v1103
        %v1235 = vsel %vm1170, %v1105, %v977
        %v1236 = vsel %vm1170, %v1107, %v979
        %v1237 = vsel %vm1170, %v1109, %v981
        %v1238 = vsel %vm1170, %v1111, %v983
        %v1239 = vsel %vm1170, %v1113, %v985
        %v1240 = vsel %vm1170, %v1115, %v987
        %v1241 = vsel %vm1170, %v1117, %v989
        %v1242 = vsel %vm1170, %v1119, %v991
        %v1243 = vsel %vm1170, %v1121, %v993
        %v1244 = vsel %vm1170, %v1123, %v995
        %v1245 = vsel %vm1170, %v1125, %v997
        %v1246 = vsel %vm1170, %v1127, %v999
        %v1247 = vsel %vm1170, %v1129, %v1001
        %v1248 = vsel %vm1170, %v1131, %v1003
        %v1249 = vsel %vm1170, %v1133, %v1005
        %v1250 = vsel %vm1170, %v1135, %v1007
        %v1251 = vsel %vm1170, %v1137, %v1009
        %v1252 = vsel %vm1170, %v1139, %v1011
        %v1253 = vsel %vm1170, %v1141, %v1013
        %v1254 = vsel %vm1170, %v1143, %v1015
        %v1255 = vsel %vm1170, %v1145, %v1017
        %v1256 = vsel %vm1170, %v1147, %v1019
        %v1257 = vsel %vm1170, %v1149, %v1021
        %v1258 = vsel %vm1170, %v1151, %v1023
        %v1259 = vsel %vm1170, %v1153, %v1025
        %v1260 = vsel %vm1170, %v1155, %v1027
        %v1261 = vsel %vm1170, %v1157, %v1029
        %v1262 = vsel %vm1170, %v1159, %v1031
        %v1263 = vsel %vm1170, %v1161, %v1033
        %v1264 = vsel %vm1170, %v1163, %v1035
        %v1265 = vsel %vm1170, %v1165, %v1037
        %v1266 = vsel %vm1170, %v1167, %v1039
        %v1268 = vlaneseq
        %v1269 = vshrl.u32 %v1268, 7
        %v1270 = vsub.s32 0, %v1269
        %v1271 = vrot.slane %v284, %v1270
        %v1272 = vlaneseq
        %v1273 = vshrl.u32 %v1272, 7
        %v1274 = vsub.s32 1, %v1273
        %v1275 = vrot.slane %v284, %v1274
        %v1276 = vlaneseq
        %v1277 = vshrl.u32 %v1276, 7
        %v1278 = vsub.s32 2, %v1277
        %v1279 = vrot.slane %v284, %v1278
        %v1283 = vmul.f32 %v1271, %v1235
        %v1284 = vmul.f32 %v1275, %v1203
        %v1285 = vmul.f32 %v1279, %v1171
        %v1286 = vmul.f32 %v1271, %v1236
        %v1287 = vmul.f32 %v1275, %v1204
        %v1288 = vmul.f32 %v1279, %v1172
        %v1289 = vmul.f32 %v1271, %v1237
        %v1290 = vmul.f32 %v1275, %v1205
        %v1291 = vmul.f32 %v1279, %v1173
        %v1292 = vmul.f32 %v1271, %v1238
        %v1293 = vmul.f32 %v1275, %v1206
        %v1294 = vmul.f32 %v1279, %v1174
        %v1295 = vmul.f32 %v1271, %v1239
        %v1296 = vmul.f32 %v1275, %v1207
        %v1297 = vmul.f32 %v1279, %v1175
        %v1298 = vmul.f32 %v1271, %v1240
        %v1299 = vmul.f32 %v1275, %v1208
        %v1300 = vmul.f32 %v1279, %v1176
        %v1301 = vmul.f32 %v1271, %v1241
        %v1302 = vmul.f32 %v1275, %v1209
        %v1303 = vmul.f32 %v1279, %v1177
        %v1304 = vmul.f32 %v1271, %v1242
        %v1305 = vmul.f32 %v1275, %v1210
        %v1306 = vmul.f32 %v1279, %v1178
        %v1307 = vmul.f32 %v1271, %v1243
        %v1308 = vmul.f32 %v1275, %v1211
        %v1309 = vmul.f32 %v1279, %v1179
        %v1310 = vmul.f32 %v1271, %v1244
        %v1311 = vmul.f32 %v1275, %v1212
        %v1312 = vmul.f32 %v1279, %v1180
        %v1313 = vmul.f32 %v1271, %v1245
        %v1314 = vmul.f32 %v1275, %v1213
        %v1315 = vmul.f32 %v1279, %v1181
        %v1316 = vmul.f32 %v1271, %v1246
        %v1317 = vmul.f32 %v1275, %v1214
        %v1318 = vmul.f32 %v1279, %v1182
        %v1319 = vmul.f32 %v1271, %v1247
        %v1320 = vmul.f32 %v1275, %v1215
        %v1321 = vmul.f32 %v1279, %v1183
        %v1322 = vmul.f32 %v1271, %v1248
        %v1323 = vmul.f32 %v1275, %v1216
        %v1324 = vmul.f32 %v1279, %v1184
        %v1325 = vmul.f32 %v1271, %v1249
        %v1326 = vmul.f32 %v1275, %v1217
        %v1327 = vmul.f32 %v1279, %v1185
        %v1328 = vmul.f32 %v1271, %v1250
        %v1329 = vmul.f32 %v1275, %v1218
        %v1330 = vmul.f32 %v1279, %v1186
        %v1331 = vmul.f32 %v1271, %v1251
        %v1332 = vmul.f32 %v1275, %v1219
        %v1333 = vmul.f32 %v1279, %v1187
        %v1334 = vmul.f32 %v1271, %v1252
        %v1335 = vmul.f32 %v1275, %v1220
        %v1336 = vmul.f32 %v1279, %v1188
        %v1337 = vmul.f32 %v1271, %v1253
        %v1338 = vmul.f32 %v1275, %v1221
        %v1339 = vmul.f32 %v1279, %v1189
        %v1340 = vmul.f32 %v1271, %v1254
        %v1341 = vmul.f32 %v1275, %v1222
        %v1342 = vmul.f32 %v1279, %v1190
        %v1343 = vmul.f32 %v1271, %v1255
        %v1344 = vmul.f32 %v1275, %v1223
        %v1345 = vmul.f32 %v1279, %v1191
        %v1346 = vmul.f32 %v1271, %v1256
        %v1347 = vmul.f32 %v1275, %v1224
        %v1348 = vmul.f32 %v1279, %v1192
        %v1349 = vmul.f32 %v1271, %v1257
        %v1350 = vmul.f32 %v1275, %v1225
        %v1351 = vmul.f32 %v1279, %v1193
        %v1352 = vmul.f32 %v1271, %v1258
        %v1353 = vmul.f32 %v1275, %v1226
        %v1354 = vmul.f32 %v1279, %v1194
        %v1355 = vmul.f32 %v1271, %v1259
        %v1356 = vmul.f32 %v1275, %v1227
        %v1357 = vmul.f32 %v1279, %v1195
        %v1358 = vmul.f32 %v1271, %v1260
        %v1359 = vmul.f32 %v1275, %v1228
        %v1360 = vmul.f32 %v1279, %v1196
        %v1361 = vmul.f32 %v1271, %v1261
        %v1362 = vmul.f32 %v1275, %v1229
        %v1363 = vmul.f32 %v1279, %v1197
        %v1364 = vmul.f32 %v1271, %v1262
        %v1365 = vmul.f32 %v1275, %v1230
        %v1366 = vmul.f32 %v1279, %v1198
        %v1367 = vmul.f32 %v1271, %v1263
        %v1368 = vmul.f32 %v1275, %v1231
        %v1369 = vmul.f32 %v1279, %v1199
        %v1370 = vmul.f32 %v1271, %v1264
        %v1371 = vmul.f32 %v1275, %v1232
        %v1372 = vmul.f32 %v1279, %v1200
        %v1373 = vmul.f32 %v1271, %v1265
        %v1374 = vmul.f32 %v1275, %v1233
        %v1375 = vmul.f32 %v1279, %v1201
        %v1376 = vmul.f32 %v1271, %v1266
        %v1377 = vmul.f32 %v1275, %v1234
        %v1378 = vmul.f32 %v1279, %v1202
        %v1379 = vadd.f32 %v561, %v1283
        %v1380 = vadd.f32 %v563, %v1284
        %v1381 = vadd.f32 %v818, %v1285
        %v1382 = vadd.f32 %v567, %v1286
        %v1383 = vadd.f32 %v569, %v1287
        %v1384 = vadd.f32 %v823, %v1288
        %v1385 = vadd.f32 %v573, %v1289
        %v1386 = vadd.f32 %v575, %v1290
        %v1387 = vadd.f32 %v828, %v1291
        %v1388 = vadd.f32 %v579, %v1292
        %v1389 = vadd.f32 %v581, %v1293
        %v1390 = vadd.f32 %v833, %v1294
        %v1391 = vadd.f32 %v585, %v1295
        %v1392 = vadd.f32 %v587, %v1296
        %v1393 = vadd.f32 %v838, %v1297
        %v1394 = vadd.f32 %v591, %v1298
        %v1395 = vadd.f32 %v593, %v1299
        %v1396 = vadd.f32 %v843, %v1300
        %v1397 = vadd.f32 %v597, %v1301
        %v1398 = vadd.f32 %v599, %v1302
        %v1399 = vadd.f32 %v848, %v1303
        %v1400 = vadd.f32 %v603, %v1304
        %v1401 = vadd.f32 %v605, %v1305
        %v1402 = vadd.f32 %v853, %v1306
        %v1403 = vadd.f32 %v609, %v1307
        %v1404 = vadd.f32 %v611, %v1308
        %v1405 = vadd.f32 %v858, %v1309
        %v1406 = vadd.f32 %v615, %v1310
        %v1407 = vadd.f32 %v617, %v1311
        %v1408 = vadd.f32 %v863, %v1312
        %v1409 = vadd.f32 %v621, %v1313
        %v1410 = vadd.f32 %v623, %v1314
        %v1411 = vadd.f32 %v868, %v1315
        %v1412 = vadd.f32 %v627, %v1316
        %v1413 = vadd.f32 %v629, %v1317
        %v1414 = vadd.f32 %v873, %v1318
        %v1415 = vadd.f32 %v633, %v1319
        %v1416 = vadd.f32 %v635, %v1320
        %v1417 = vadd.f32 %v878, %v1321
        %v1418 = vadd.f32 %v639, %v1322
        %v1419 = vadd.f32 %v641, %v1323
        %v1420 = vadd.f32 %v883, %v1324
        %v1421 = vadd.f32 %v645, %v1325
        %v1422 = vadd.f32 %v647, %v1326
        %v1423 = vadd.f32 %v888, %v1327
        %v1424 = vadd.f32 %v651, %v1328
        %v1425 = vadd.f32 %v653, %v1329
        %v1426 = vadd.f32 %v893, %v1330
        %v1427 = vadd.f32 %v657, %v1331
        %v1428 = vadd.f32 %v659, %v1332
        %v1429 = vadd.f32 %v898, %v1333
        %v1430 = vadd.f32 %v663, %v1334
        %v1431 = vadd.f32 %v665, %v1335
        %v1432 = vadd.f32 %v903, %v1336
        %v1433 = vadd.f32 %v669, %v1337
        %v1434 = vadd.f32 %v671, %v1338
        %v1435 = vadd.f32 %v908, %v1339
        %v1436 = vadd.f32 %v675, %v1340
        %v1437 = vadd.f32 %v677, %v1341
        %v1438 = vadd.f32 %v913, %v1342
        %v1439 = vadd.f32 %v681, %v1343
        %v1440 = vadd.f32 %v683, %v1344
        %v1441 = vadd.f32 %v918, %v1345
        %v1442 = vadd.f32 %v687, %v1346
        %v1443 = vadd.f32 %v689, %v1347
        %v1444 = vadd.f32 %v923, %v1348
        %v1445 = vadd.f32 %v693, %v1349
        %v1446 = vadd.f32 %v695, %v1350
        %v1447 = vadd.f32 %v928, %v1351
        %v1448 = vadd.f32 %v699, %v1352
        %v1449 = vadd.f32 %v701, %v1353
        %v1450 = vadd.f32 %v933, %v1354
        %v1451 = vadd.f32 %v705, %v1355
        %v1452 = vadd.f32 %v707, %v1356
        %v1453 = vadd.f32 %v938, %v1357
        %v1454 = vadd.f32 %v711, %v1358
        %v1455 = vadd.f32 %v713, %v1359
        %v1456 = vadd.f32 %v943, %v1360
        %v1457 = vadd.f32 %v717, %v1361
        %v1458 = vadd.f32 %v719, %v1362
        %v1459 = vadd.f32 %v948, %v1363
        %v1460 = vadd.f32 %v723, %v1364
        %v1461 = vadd.f32 %v725, %v1365
        %v1462 = vadd.f32 %v953, %v1366
        %v1463 = vadd.f32 %v729, %v1367
        %v1464 = vadd.f32 %v731, %v1368
        %v1465 = vadd.f32 %v958, %v1369
        %v1466 = vadd.f32 %v735, %v1370
        %v1467 = vadd.f32 %v737, %v1371
        %v1468 = vadd.f32 %v963, %v1372
        %v1469 = vadd.f32 %v741, %v1373
        %v1470 = vadd.f32 %v743, %v1374
        %v1471 = vadd.f32 %v968, %v1375
        %v1472 = vadd.f32 %v747, %v1376
        %v1473 = vadd.f32 %v749, %v1377
        %v1474 = vadd.f32 %v973, %v1378
        %1475 = vrot.lane.b32.xlu0 %v561, 127
        %v1476 = vpop.permute.xlu0 %1475
        %1477 = vrot.lane.b32.xlu0 %v567, 127
        %v1478 = vpop.permute.xlu0 %1477
        %1479 = vrot.lane.b32.xlu0 %v573, 127
        %v1480 = vpop.permute.xlu0 %1479
        %1481 = vrot.lane.b32.xlu0 %v579, 127
        %v1482 = vpop.permute.xlu0 %1481
        %1483 = vrot.lane.b32.xlu0 %v585, 127
        %v1484 = vpop.permute.xlu0 %1483
        %1485 = vrot.lane.b32.xlu0 %v591, 127
        %v1486 = vpop.permute.xlu0 %1485
        %1487 = vrot.lane.b32.xlu0 %v597, 127
        %v1488 = vpop.permute.xlu0 %1487
        %1489 = vrot.lane.b32.xlu0 %v603, 127
        %v1490 = vpop.permute.xlu0 %1489
        %1491 = vrot.lane.b32.xlu0 %v609, 127
        %v1492 = vpop.permute.xlu0 %1491
        %1493 = vrot.lane.b32.xlu0 %v615, 127
        %v1494 = vpop.permute.xlu0 %1493
        %1495 = vrot.lane.b32.xlu0 %v621, 127
        %v1496 = vpop.permute.xlu0 %1495
        %1497 = vrot.lane.b32.xlu0 %v627, 127
        %v1498 = vpop.permute.xlu0 %1497
        %1499 = vrot.lane.b32.xlu0 %v633, 127
        %v1500 = vpop.permute.xlu0 %1499
        %1501 = vrot.lane.b32.xlu0 %v639, 127
        %v1502 = vpop.permute.xlu0 %1501
        %1503 = vrot.lane.b32.xlu0 %v645, 127
        %v1504 = vpop.permute.xlu0 %1503
        %1505 = vrot.lane.b32.xlu0 %v651, 127
        %v1506 = vpop.permute.xlu0 %1505
        %1507 = vrot.lane.b32.xlu0 %v657, 127
        %v1508 = vpop.permute.xlu0 %1507
        %1509 = vrot.lane.b32.xlu0 %v663, 127
        %v1510 = vpop.permute.xlu0 %1509
        %1511 = vrot.lane.b32.xlu0 %v669, 127
        %v1512 = vpop.permute.xlu0 %1511
        %1513 = vrot.lane.b32.xlu0 %v675, 127
        %v1514 = vpop.permute.xlu0 %1513
        %1515 = vrot.lane.b32.xlu0 %v681, 127
        %v1516 = vpop.permute.xlu0 %1515
        %1517 = vrot.lane.b32.xlu0 %v687, 127
        %v1518 = vpop.permute.xlu0 %1517
        %1519 = vrot.lane.b32.xlu0 %v693, 127
        %v1520 = vpop.permute.xlu0 %1519
        %1521 = vrot.lane.b32.xlu0 %v699, 127
        %v1522 = vpop.permute.xlu0 %1521
        %1523 = vrot.lane.b32.xlu0 %v705, 127
        %v1524 = vpop.permute.xlu0 %1523
        %1525 = vrot.lane.b32.xlu0 %v711, 127
        %v1526 = vpop.permute.xlu0 %1525
        %1527 = vrot.lane.b32.xlu0 %v717, 127
        %v1528 = vpop.permute.xlu0 %1527
        %1529 = vrot.lane.b32.xlu0 %v723, 127
        %v1530 = vpop.permute.xlu0 %1529
        %1531 = vrot.lane.b32.xlu0 %v729, 127
        %v1532 = vpop.permute.xlu0 %1531
        %1533 = vrot.lane.b32.xlu0 %v735, 127
        %v1534 = vpop.permute.xlu0 %1533
        %1535 = vrot.lane.b32.xlu0 %v741, 127
        %v1536 = vpop.permute.xlu0 %1535
        %1537 = vrot.lane.b32.xlu0 %v747, 127
        %v1538 = vpop.permute.xlu0 %1537
        %1539 = vrot.lane.b32.xlu0 %v563, 127
        %v1540 = vpop.permute.xlu0 %1539
        %1541 = vrot.lane.b32.xlu0 %v569, 127
        %v1542 = vpop.permute.xlu0 %1541
        %1543 = vrot.lane.b32.xlu0 %v575, 127
        %v1544 = vpop.permute.xlu0 %1543
        %1545 = vrot.lane.b32.xlu0 %v581, 127
        %v1546 = vpop.permute.xlu0 %1545
        %1547 = vrot.lane.b32.xlu0 %v587, 127
        %v1548 = vpop.permute.xlu0 %1547
        %1549 = vrot.lane.b32.xlu0 %v593, 127
        %v1550 = vpop.permute.xlu0 %1549
        %1551 = vrot.lane.b32.xlu0 %v599, 127
        %v1552 = vpop.permute.xlu0 %1551
        %1553 = vrot.lane.b32.xlu0 %v605, 127
        %v1554 = vpop.permute.xlu0 %1553
        %1555 = vrot.lane.b32.xlu0 %v611, 127
        %v1556 = vpop.permute.xlu0 %1555
        %1557 = vrot.lane.b32.xlu0 %v617, 127
        %v1558 = vpop.permute.xlu0 %1557
        %1559 = vrot.lane.b32.xlu0 %v623, 127
        %v1560 = vpop.permute.xlu0 %1559
        %1561 = vrot.lane.b32.xlu0 %v629, 127
        %v1562 = vpop.permute.xlu0 %1561
        %1563 = vrot.lane.b32.xlu0 %v635, 127
        %v1564 = vpop.permute.xlu0 %1563
        %1565 = vrot.lane.b32.xlu0 %v641, 127
        %v1566 = vpop.permute.xlu0 %1565
        %1567 = vrot.lane.b32.xlu0 %v647, 127
        %v1568 = vpop.permute.xlu0 %1567
        %1569 = vrot.lane.b32.xlu0 %v653, 127
        %v1570 = vpop.permute.xlu0 %1569
        %1571 = vrot.lane.b32.xlu0 %v659, 127
        %v1572 = vpop.permute.xlu0 %1571
        %1573 = vrot.lane.b32.xlu0 %v665, 127
        %v1574 = vpop.permute.xlu0 %1573
        %1575 = vrot.lane.b32.xlu0 %v671, 127
        %v1576 = vpop.permute.xlu0 %1575
        %1577 = vrot.lane.b32.xlu0 %v677, 127
        %v1578 = vpop.permute.xlu0 %1577
        %1579 = vrot.lane.b32.xlu0 %v683, 127
        %v1580 = vpop.permute.xlu0 %1579
        %1581 = vrot.lane.b32.xlu0 %v689, 127
        %v1582 = vpop.permute.xlu0 %1581
        %1583 = vrot.lane.b32.xlu0 %v695, 127
        %v1584 = vpop.permute.xlu0 %1583
        %1585 = vrot.lane.b32.xlu0 %v701, 127
        %v1586 = vpop.permute.xlu0 %1585
        %1587 = vrot.lane.b32.xlu0 %v707, 127
        %v1588 = vpop.permute.xlu0 %1587
        %1589 = vrot.lane.b32.xlu0 %v713, 127
        %v1590 = vpop.permute.xlu0 %1589
        %1591 = vrot.lane.b32.xlu0 %v719, 127
        %v1592 = vpop.permute.xlu0 %1591
        %1593 = vrot.lane.b32.xlu0 %v725, 127
        %v1594 = vpop.permute.xlu0 %1593
        %1595 = vrot.lane.b32.xlu0 %v731, 127
        %v1596 = vpop.permute.xlu0 %1595
        %1597 = vrot.lane.b32.xlu0 %v737, 127
        %v1598 = vpop.permute.xlu0 %1597
        %1599 = vrot.lane.b32.xlu0 %v743, 127
        %v1600 = vpop.permute.xlu0 %1599
        %1601 = vrot.lane.b32.xlu0 %v749, 127
        %v1602 = vpop.permute.xlu0 %1601
        %1603 = vrot.lane.b32.xlu0 %v818, 127
        %v1604 = vpop.permute.xlu0 %1603
        %1605 = vrot.lane.b32.xlu0 %v823, 127
        %v1606 = vpop.permute.xlu0 %1605
        %1607 = vrot.lane.b32.xlu0 %v828, 127
        %v1608 = vpop.permute.xlu0 %1607
        %1609 = vrot.lane.b32.xlu0 %v833, 127
        %v1610 = vpop.permute.xlu0 %1609
        %1611 = vrot.lane.b32.xlu0 %v838, 127
        %v1612 = vpop.permute.xlu0 %1611
        %1613 = vrot.lane.b32.xlu0 %v843, 127
        %v1614 = vpop.permute.xlu0 %1613
        %1615 = vrot.lane.b32.xlu0 %v848, 127
        %v1616 = vpop.permute.xlu0 %1615
        %1617 = vrot.lane.b32.xlu0 %v853, 127
        %v1618 = vpop.permute.xlu0 %1617
        %1619 = vrot.lane.b32.xlu0 %v858, 127
        %v1620 = vpop.permute.xlu0 %1619
        %1621 = vrot.lane.b32.xlu0 %v863, 127
        %v1622 = vpop.permute.xlu0 %1621
        %1623 = vrot.lane.b32.xlu0 %v868, 127
        %v1624 = vpop.permute.xlu0 %1623
        %1625 = vrot.lane.b32.xlu0 %v873, 127
        %v1626 = vpop.permute.xlu0 %1625
        %1627 = vrot.lane.b32.xlu0 %v878, 127
        %v1628 = vpop.permute.xlu0 %1627
        %1629 = vrot.lane.b32.xlu0 %v883, 127
        %v1630 = vpop.permute.xlu0 %1629
        %1631 = vrot.lane.b32.xlu0 %v888, 127
        %v1632 = vpop.permute.xlu0 %1631
        %1633 = vrot.lane.b32.xlu0 %v893, 127
        %v1634 = vpop.permute.xlu0 %1633
        %1635 = vrot.lane.b32.xlu0 %v898, 127
        %v1636 = vpop.permute.xlu0 %1635
        %1637 = vrot.lane.b32.xlu0 %v903, 127
        %v1638 = vpop.permute.xlu0 %1637
        %1639 = vrot.lane.b32.xlu0 %v908, 127
        %v1640 = vpop.permute.xlu0 %1639
        %1641 = vrot.lane.b32.xlu0 %v913, 127
        %v1642 = vpop.permute.xlu0 %1641
        %1643 = vrot.lane.b32.xlu0 %v918, 127
        %v1644 = vpop.permute.xlu0 %1643
        %1645 = vrot.lane.b32.xlu0 %v923, 127
        %v1646 = vpop.permute.xlu0 %1645
        %1647 = vrot.lane.b32.xlu0 %v928, 127
        %v1648 = vpop.permute.xlu0 %1647
        %1649 = vrot.lane.b32.xlu0 %v933, 127
        %v1650 = vpop.permute.xlu0 %1649
        %1651 = vrot.lane.b32.xlu0 %v938, 127
        %v1652 = vpop.permute.xlu0 %1651
        %1653 = vrot.lane.b32.xlu0 %v943, 127
        %v1654 = vpop.permute.xlu0 %1653
        %1655 = vrot.lane.b32.xlu0 %v948, 127
        %v1656 = vpop.permute.xlu0 %1655
        %1657 = vrot.lane.b32.xlu0 %v953, 127
        %v1658 = vpop.permute.xlu0 %1657
        %1659 = vrot.lane.b32.xlu0 %v958, 127
        %v1660 = vpop.permute.xlu0 %1659
        %1661 = vrot.lane.b32.xlu0 %v963, 127
        %v1662 = vpop.permute.xlu0 %1661
        %1663 = vrot.lane.b32.xlu0 %v968, 127
        %v1664 = vpop.permute.xlu0 %1663
        %1665 = vrot.lane.b32.xlu0 %v973, 127
        %v1666 = vpop.permute.xlu0 %1665
        %vm1667 = vcmp.lt.s32.totalorder %v1169, 127
        %v1668 = vsel %vm1667, %v1540, %v1604
        %v1669 = vsel %vm1667, %v1542, %v1606
        %v1670 = vsel %vm1667, %v1544, %v1608
        %v1671 = vsel %vm1667, %v1546, %v1610
        %v1672 = vsel %vm1667, %v1548, %v1612
        %v1673 = vsel %vm1667, %v1550, %v1614
        %v1674 = vsel %vm1667, %v1552, %v1616
        %v1675 = vsel %vm1667, %v1554, %v1618
        %v1676 = vsel %vm1667, %v1556, %v1620
        %v1677 = vsel %vm1667, %v1558, %v1622
        %v1678 = vsel %vm1667, %v1560, %v1624
        %v1679 = vsel %vm1667, %v1562, %v1626
        %v1680 = vsel %vm1667, %v1564, %v1628
        %v1681 = vsel %vm1667, %v1566, %v1630
        %v1682 = vsel %vm1667, %v1568, %v1632
        %v1683 = vsel %vm1667, %v1570, %v1634
        %v1684 = vsel %vm1667, %v1572, %v1636
        %v1685 = vsel %vm1667, %v1574, %v1638
        %v1686 = vsel %vm1667, %v1576, %v1640
        %v1687 = vsel %vm1667, %v1578, %v1642
        %v1688 = vsel %vm1667, %v1580, %v1644
        %v1689 = vsel %vm1667, %v1582, %v1646
        %v1690 = vsel %vm1667, %v1584, %v1648
        %v1691 = vsel %vm1667, %v1586, %v1650
        %v1692 = vsel %vm1667, %v1588, %v1652
        %v1693 = vsel %vm1667, %v1590, %v1654
        %v1694 = vsel %vm1667, %v1592, %v1656
        %v1695 = vsel %vm1667, %v1594, %v1658
        %v1696 = vsel %vm1667, %v1596, %v1660
        %v1697 = vsel %vm1667, %v1598, %v1662
        %v1698 = vsel %vm1667, %v1600, %v1664
        %v1699 = vsel %vm1667, %v1602, %v1666
        %v1700 = vsel %vm1667, %v1476, %v1540
        %v1701 = vsel %vm1667, %v1478, %v1542
        %v1702 = vsel %vm1667, %v1480, %v1544
        %v1703 = vsel %vm1667, %v1482, %v1546
        %v1704 = vsel %vm1667, %v1484, %v1548
        %v1705 = vsel %vm1667, %v1486, %v1550
        %v1706 = vsel %vm1667, %v1488, %v1552
        %v1707 = vsel %vm1667, %v1490, %v1554
        %v1708 = vsel %vm1667, %v1492, %v1556
        %v1709 = vsel %vm1667, %v1494, %v1558
        %v1710 = vsel %vm1667, %v1496, %v1560
        %v1711 = vsel %vm1667, %v1498, %v1562
        %v1712 = vsel %vm1667, %v1500, %v1564
        %v1713 = vsel %vm1667, %v1502, %v1566
        %v1714 = vsel %vm1667, %v1504, %v1568
        %v1715 = vsel %vm1667, %v1506, %v1570
        %v1716 = vsel %vm1667, %v1508, %v1572
        %v1717 = vsel %vm1667, %v1510, %v1574
        %v1718 = vsel %vm1667, %v1512, %v1576
        %v1719 = vsel %vm1667, %v1514, %v1578
        %v1720 = vsel %vm1667, %v1516, %v1580
        %v1721 = vsel %vm1667, %v1518, %v1582
        %v1722 = vsel %vm1667, %v1520, %v1584
        %v1723 = vsel %vm1667, %v1522, %v1586
        %v1724 = vsel %vm1667, %v1524, %v1588
        %v1725 = vsel %vm1667, %v1526, %v1590
        %v1726 = vsel %vm1667, %v1528, %v1592
        %v1727 = vsel %vm1667, %v1530, %v1594
        %v1728 = vsel %vm1667, %v1532, %v1596
        %v1729 = vsel %vm1667, %v1534, %v1598
        %v1730 = vsel %vm1667, %v1536, %v1600
        %v1731 = vsel %vm1667, %v1538, %v1602
        %v1732 = vsel %vm1667, %v1604, %v1476
        %v1733 = vsel %vm1667, %v1606, %v1478
        %v1734 = vsel %vm1667, %v1608, %v1480
        %v1735 = vsel %vm1667, %v1610, %v1482
        %v1736 = vsel %vm1667, %v1612, %v1484
        %v1737 = vsel %vm1667, %v1614, %v1486
        %v1738 = vsel %vm1667, %v1616, %v1488
        %v1739 = vsel %vm1667, %v1618, %v1490
        %v1740 = vsel %vm1667, %v1620, %v1492
        %v1741 = vsel %vm1667, %v1622, %v1494
        %v1742 = vsel %vm1667, %v1624, %v1496
        %v1743 = vsel %vm1667, %v1626, %v1498
        %v1744 = vsel %vm1667, %v1628, %v1500
        %v1745 = vsel %vm1667, %v1630, %v1502
        %v1746 = vsel %vm1667, %v1632, %v1504
        %v1747 = vsel %vm1667, %v1634, %v1506
        %v1748 = vsel %vm1667, %v1636, %v1508
        %v1749 = vsel %vm1667, %v1638, %v1510
        %v1750 = vsel %vm1667, %v1640, %v1512
        %v1751 = vsel %vm1667, %v1642, %v1514
        %v1752 = vsel %vm1667, %v1644, %v1516
        %v1753 = vsel %vm1667, %v1646, %v1518
        %v1754 = vsel %vm1667, %v1648, %v1520
        %v1755 = vsel %vm1667, %v1650, %v1522
        %v1756 = vsel %vm1667, %v1652, %v1524
        %v1757 = vsel %vm1667, %v1654, %v1526
        %v1758 = vsel %vm1667, %v1656, %v1528
        %v1759 = vsel %vm1667, %v1658, %v1530
        %v1760 = vsel %vm1667, %v1660, %v1532
        %v1761 = vsel %vm1667, %v1662, %v1534
        %v1762 = vsel %vm1667, %v1664, %v1536
        %v1763 = vsel %vm1667, %v1666, %v1538
        %v1765 = vlaneseq
        %v1766 = vshrl.u32 %v1765, 7
        %v1767 = vsub.s32 0, %v1766
        %v1768 = vrot.slane %v286, %v1767
        %v1769 = vlaneseq
        %v1770 = vshrl.u32 %v1769, 7
        %v1771 = vsub.s32 1, %v1770
        %v1772 = vrot.slane %v286, %v1771
        %v1773 = vlaneseq
        %v1774 = vshrl.u32 %v1773, 7
        %v1775 = vsub.s32 2, %v1774
        %v1776 = vrot.slane %v286, %v1775
        %v1780 = vmul.f32 %v1768, %v1700
        %v1781 = vmul.f32 %v1772, %v1668
        %v1782 = vmul.f32 %v1776, %v1732
        %v1783 = vmul.f32 %v1768, %v1701
        %v1784 = vmul.f32 %v1772, %v1669
        %v1785 = vmul.f32 %v1776, %v1733
        %v1786 = vmul.f32 %v1768, %v1702
        %v1787 = vmul.f32 %v1772, %v1670
        %v1788 = vmul.f32 %v1776, %v1734
        %v1789 = vmul.f32 %v1768, %v1703
        %v1790 = vmul.f32 %v1772, %v1671
        %v1791 = vmul.f32 %v1776, %v1735
        %v1792 = vmul.f32 %v1768, %v1704
        %v1793 = vmul.f32 %v1772, %v1672
        %v1794 = vmul.f32 %v1776, %v1736
        %v1795 = vmul.f32 %v1768, %v1705
        %v1796 = vmul.f32 %v1772, %v1673
        %v1797 = vmul.f32 %v1776, %v1737
        %v1798 = vmul.f32 %v1768, %v1706
        %v1799 = vmul.f32 %v1772, %v1674
        %v1800 = vmul.f32 %v1776, %v1738
        %v1801 = vmul.f32 %v1768, %v1707
        %v1802 = vmul.f32 %v1772, %v1675
        %v1803 = vmul.f32 %v1776, %v1739
        %v1804 = vmul.f32 %v1768, %v1708
        %v1805 = vmul.f32 %v1772, %v1676
        %v1806 = vmul.f32 %v1776, %v1740
        %v1807 = vmul.f32 %v1768, %v1709
        %v1808 = vmul.f32 %v1772, %v1677
        %v1809 = vmul.f32 %v1776, %v1741
        %v1810 = vmul.f32 %v1768, %v1710
        %v1811 = vmul.f32 %v1772, %v1678
        %v1812 = vmul.f32 %v1776, %v1742
        %v1813 = vmul.f32 %v1768, %v1711
        %v1814 = vmul.f32 %v1772, %v1679
        %v1815 = vmul.f32 %v1776, %v1743
        %v1816 = vmul.f32 %v1768, %v1712
        %v1817 = vmul.f32 %v1772, %v1680
        %v1818 = vmul.f32 %v1776, %v1744
        %v1819 = vmul.f32 %v1768, %v1713
        %v1820 = vmul.f32 %v1772, %v1681
        %v1821 = vmul.f32 %v1776, %v1745
        %v1822 = vmul.f32 %v1768, %v1714
        %v1823 = vmul.f32 %v1772, %v1682
        %v1824 = vmul.f32 %v1776, %v1746
        %v1825 = vmul.f32 %v1768, %v1715
        %v1826 = vmul.f32 %v1772, %v1683
        %v1827 = vmul.f32 %v1776, %v1747
        %v1828 = vmul.f32 %v1768, %v1716
        %v1829 = vmul.f32 %v1772, %v1684
        %v1830 = vmul.f32 %v1776, %v1748
        %v1831 = vmul.f32 %v1768, %v1717
        %v1832 = vmul.f32 %v1772, %v1685
        %v1833 = vmul.f32 %v1776, %v1749
        %v1834 = vmul.f32 %v1768, %v1718
        %v1835 = vmul.f32 %v1772, %v1686
        %v1836 = vmul.f32 %v1776, %v1750
        %v1837 = vmul.f32 %v1768, %v1719
        %v1838 = vmul.f32 %v1772, %v1687
        %v1839 = vmul.f32 %v1776, %v1751
        %v1840 = vmul.f32 %v1768, %v1720
        %v1841 = vmul.f32 %v1772, %v1688
        %v1842 = vmul.f32 %v1776, %v1752
        %v1843 = vmul.f32 %v1768, %v1721
        %v1844 = vmul.f32 %v1772, %v1689
        %v1845 = vmul.f32 %v1776, %v1753
        %v1846 = vmul.f32 %v1768, %v1722
        %v1847 = vmul.f32 %v1772, %v1690
        %v1848 = vmul.f32 %v1776, %v1754
        %v1849 = vmul.f32 %v1768, %v1723
        %v1850 = vmul.f32 %v1772, %v1691
        %v1851 = vmul.f32 %v1776, %v1755
        %v1852 = vmul.f32 %v1768, %v1724
        %v1853 = vmul.f32 %v1772, %v1692
        %v1854 = vmul.f32 %v1776, %v1756
        %v1855 = vmul.f32 %v1768, %v1725
        %v1856 = vmul.f32 %v1772, %v1693
        %v1857 = vmul.f32 %v1776, %v1757
        %v1858 = vmul.f32 %v1768, %v1726
        %v1859 = vmul.f32 %v1772, %v1694
        %v1860 = vmul.f32 %v1776, %v1758
        %v1861 = vmul.f32 %v1768, %v1727
        %v1862 = vmul.f32 %v1772, %v1695
        %v1863 = vmul.f32 %v1776, %v1759
        %v1864 = vmul.f32 %v1768, %v1728
        %v1865 = vmul.f32 %v1772, %v1696
        %v1866 = vmul.f32 %v1776, %v1760
        %v1867 = vmul.f32 %v1768, %v1729
        %v1868 = vmul.f32 %v1772, %v1697
        %v1869 = vmul.f32 %v1776, %v1761
        %v1870 = vmul.f32 %v1768, %v1730
        %v1871 = vmul.f32 %v1772, %v1698
        %v1872 = vmul.f32 %v1776, %v1762
        %v1873 = vmul.f32 %v1768, %v1731
        %v1874 = vmul.f32 %v1772, %v1699
        %v1875 = vmul.f32 %v1776, %v1763
        %v1876 = vadd.f32 %v1379, %v1780
        %v1877 = vadd.f32 %v1380, %v1781
        %v1878 = vadd.f32 %v1381, %v1782
        %v1879 = vadd.f32 %v1382, %v1783
        %v1880 = vadd.f32 %v1383, %v1784
        %v1881 = vadd.f32 %v1384, %v1785
        %v1882 = vadd.f32 %v1385, %v1786
        %v1883 = vadd.f32 %v1386, %v1787
        %v1884 = vadd.f32 %v1387, %v1788
        %v1885 = vadd.f32 %v1388, %v1789
        %v1886 = vadd.f32 %v1389, %v1790
        %v1887 = vadd.f32 %v1390, %v1791
        %v1888 = vadd.f32 %v1391, %v1792
        %v1889 = vadd.f32 %v1392, %v1793
        %v1890 = vadd.f32 %v1393, %v1794
        %v1891 = vadd.f32 %v1394, %v1795
        %v1892 = vadd.f32 %v1395, %v1796
        %v1893 = vadd.f32 %v1396, %v1797
        %v1894 = vadd.f32 %v1397, %v1798
        %v1895 = vadd.f32 %v1398, %v1799
        %v1896 = vadd.f32 %v1399, %v1800
        %v1897 = vadd.f32 %v1400, %v1801
        %v1898 = vadd.f32 %v1401, %v1802
        %v1899 = vadd.f32 %v1402, %v1803
        %v1900 = vadd.f32 %v1403, %v1804
        %v1901 = vadd.f32 %v1404, %v1805
        %v1902 = vadd.f32 %v1405, %v1806
        %v1903 = vadd.f32 %v1406, %v1807
        %v1904 = vadd.f32 %v1407, %v1808
        %v1905 = vadd.f32 %v1408, %v1809
        %v1906 = vadd.f32 %v1409, %v1810
        %v1907 = vadd.f32 %v1410, %v1811
        %v1908 = vadd.f32 %v1411, %v1812
        %v1909 = vadd.f32 %v1412, %v1813
        %v1910 = vadd.f32 %v1413, %v1814
        %v1911 = vadd.f32 %v1414, %v1815
        %v1912 = vadd.f32 %v1415, %v1816
        %v1913 = vadd.f32 %v1416, %v1817
        %v1914 = vadd.f32 %v1417, %v1818
        %v1915 = vadd.f32 %v1418, %v1819
        %v1916 = vadd.f32 %v1419, %v1820
        %v1917 = vadd.f32 %v1420, %v1821
        %v1918 = vadd.f32 %v1421, %v1822
        %v1919 = vadd.f32 %v1422, %v1823
        %v1920 = vadd.f32 %v1423, %v1824
        %v1921 = vadd.f32 %v1424, %v1825
        %v1922 = vadd.f32 %v1425, %v1826
        %v1923 = vadd.f32 %v1426, %v1827
        %v1924 = vadd.f32 %v1427, %v1828
        %v1925 = vadd.f32 %v1428, %v1829
        %v1926 = vadd.f32 %v1429, %v1830
        %v1927 = vadd.f32 %v1430, %v1831
        %v1928 = vadd.f32 %v1431, %v1832
        %v1929 = vadd.f32 %v1432, %v1833
        %v1930 = vadd.f32 %v1433, %v1834
        %v1931 = vadd.f32 %v1434, %v1835
        %v1932 = vadd.f32 %v1435, %v1836
        %v1933 = vadd.f32 %v1436, %v1837
        %v1934 = vadd.f32 %v1437, %v1838
        %v1935 = vadd.f32 %v1438, %v1839
        %v1936 = vadd.f32 %v1439, %v1840
        %v1937 = vadd.f32 %v1440, %v1841
        %v1938 = vadd.f32 %v1441, %v1842
        %v1939 = vadd.f32 %v1442, %v1843
        %v1940 = vadd.f32 %v1443, %v1844
        %v1941 = vadd.f32 %v1444, %v1845
        %v1942 = vadd.f32 %v1445, %v1846
        %v1943 = vadd.f32 %v1446, %v1847
        %v1944 = vadd.f32 %v1447, %v1848
        %v1945 = vadd.f32 %v1448, %v1849
        %v1946 = vadd.f32 %v1449, %v1850
        %v1947 = vadd.f32 %v1450, %v1851
        %v1948 = vadd.f32 %v1451, %v1852
        %v1949 = vadd.f32 %v1452, %v1853
        %v1950 = vadd.f32 %v1453, %v1854
        %v1951 = vadd.f32 %v1454, %v1855
        %v1952 = vadd.f32 %v1455, %v1856
        %v1953 = vadd.f32 %v1456, %v1857
        %v1954 = vadd.f32 %v1457, %v1858
        %v1955 = vadd.f32 %v1458, %v1859
        %v1956 = vadd.f32 %v1459, %v1860
        %v1957 = vadd.f32 %v1460, %v1861
        %v1958 = vadd.f32 %v1461, %v1862
        %v1959 = vadd.f32 %v1462, %v1863
        %v1960 = vadd.f32 %v1463, %v1864
        %v1961 = vadd.f32 %v1464, %v1865
        %v1962 = vadd.f32 %v1465, %v1866
        %v1963 = vadd.f32 %v1466, %v1867
        %v1964 = vadd.f32 %v1467, %v1868
        %v1965 = vadd.f32 %v1468, %v1869
        %v1966 = vadd.f32 %v1469, %v1870
        %v1967 = vadd.f32 %v1470, %v1871
        %v1968 = vadd.f32 %v1471, %v1872
        %v1969 = vadd.f32 %v1472, %v1873
        %v1970 = vadd.f32 %v1473, %v1874
        %v1971 = vadd.f32 %v1474, %v1875
        %1972 = vrot.lane.b32.xlu0 %v1876, 18
        %v1973 = vpop.permute.xlu0 %1972
        %1974 = vrot.lane.b32.xlu0 %v1879, 18
        %v1975 = vpop.permute.xlu0 %1974
        %1976 = vrot.lane.b32.xlu0 %v1882, 18
        %v1977 = vpop.permute.xlu0 %1976
        %1978 = vrot.lane.b32.xlu0 %v1885, 18
        %v1979 = vpop.permute.xlu0 %1978
        %1980 = vrot.lane.b32.xlu0 %v1888, 18
        %v1981 = vpop.permute.xlu0 %1980
        %1982 = vrot.lane.b32.xlu0 %v1891, 18
        %v1983 = vpop.permute.xlu0 %1982
        %1984 = vrot.lane.b32.xlu0 %v1894, 18
        %v1985 = vpop.permute.xlu0 %1984
        %1986 = vrot.lane.b32.xlu0 %v1897, 18
        %v1987 = vpop.permute.xlu0 %1986
        %1988 = vrot.lane.b32.xlu0 %v1900, 18
        %v1989 = vpop.permute.xlu0 %1988
        %1990 = vrot.lane.b32.xlu0 %v1903, 18
        %v1991 = vpop.permute.xlu0 %1990
        %1992 = vrot.lane.b32.xlu0 %v1906, 18
        %v1993 = vpop.permute.xlu0 %1992
        %1994 = vrot.lane.b32.xlu0 %v1909, 18
        %v1995 = vpop.permute.xlu0 %1994
        %1996 = vrot.lane.b32.xlu0 %v1912, 18
        %v1997 = vpop.permute.xlu0 %1996
        %1998 = vrot.lane.b32.xlu0 %v1915, 18
        %v1999 = vpop.permute.xlu0 %1998
        %2000 = vrot.lane.b32.xlu0 %v1918, 18
        %v2001 = vpop.permute.xlu0 %2000
        %2002 = vrot.lane.b32.xlu0 %v1921, 18
        %v2003 = vpop.permute.xlu0 %2002
        %2004 = vrot.lane.b32.xlu0 %v1924, 18
        %v2005 = vpop.permute.xlu0 %2004
        %2006 = vrot.lane.b32.xlu0 %v1927, 18
        %v2007 = vpop.permute.xlu0 %2006
        %2008 = vrot.lane.b32.xlu0 %v1930, 18
        %v2009 = vpop.permute.xlu0 %2008
        %2010 = vrot.lane.b32.xlu0 %v1933, 18
        %v2011 = vpop.permute.xlu0 %2010
        %2012 = vrot.lane.b32.xlu0 %v1936, 18
        %v2013 = vpop.permute.xlu0 %2012
        %2014 = vrot.lane.b32.xlu0 %v1939, 18
        %v2015 = vpop.permute.xlu0 %2014
        %2016 = vrot.lane.b32.xlu0 %v1942, 18
        %v2017 = vpop.permute.xlu0 %2016
        %2018 = vrot.lane.b32.xlu0 %v1945, 18
        %v2019 = vpop.permute.xlu0 %2018
        %2020 = vrot.lane.b32.xlu0 %v1948, 18
        %v2021 = vpop.permute.xlu0 %2020
        %2022 = vrot.lane.b32.xlu0 %v1951, 18
        %v2023 = vpop.permute.xlu0 %2022
        %2024 = vrot.lane.b32.xlu0 %v1954, 18
        %v2025 = vpop.permute.xlu0 %2024
        %2026 = vrot.lane.b32.xlu0 %v1957, 18
        %v2027 = vpop.permute.xlu0 %2026
        %2028 = vrot.lane.b32.xlu0 %v1960, 18
        %v2029 = vpop.permute.xlu0 %2028
        %2030 = vrot.lane.b32.xlu0 %v1963, 18
        %v2031 = vpop.permute.xlu0 %2030
        %2032 = vrot.lane.b32.xlu0 %v1966, 18
        %v2033 = vpop.permute.xlu0 %2032
        %2034 = vrot.lane.b32.xlu0 %v1969, 18
        %v2035 = vpop.permute.xlu0 %2034
        %2036 = vrot.lane.b32.xlu0 %v1877, 18
        %v2037 = vpop.permute.xlu0 %2036
        %2038 = vrot.lane.b32.xlu0 %v1880, 18
        %v2039 = vpop.permute.xlu0 %2038
        %2040 = vrot.lane.b32.xlu0 %v1883, 18
        %v2041 = vpop.permute.xlu0 %2040
        %2042 = vrot.lane.b32.xlu0 %v1886, 18
        %v2043 = vpop.permute.xlu0 %2042
        %2044 = vrot.lane.b32.xlu0 %v1889, 18
        %v2045 = vpop.permute.xlu0 %2044
        %2046 = vrot.lane.b32.xlu0 %v1892, 18
        %v2047 = vpop.permute.xlu0 %2046
        %2048 = vrot.lane.b32.xlu0 %v1895, 18
        %v2049 = vpop.permute.xlu0 %2048
        %2050 = vrot.lane.b32.xlu0 %v1898, 18
        %v2051 = vpop.permute.xlu0 %2050
        %2052 = vrot.lane.b32.xlu0 %v1901, 18
        %v2053 = vpop.permute.xlu0 %2052
        %2054 = vrot.lane.b32.xlu0 %v1904, 18
        %v2055 = vpop.permute.xlu0 %2054
        %2056 = vrot.lane.b32.xlu0 %v1907, 18
        %v2057 = vpop.permute.xlu0 %2056
        %2058 = vrot.lane.b32.xlu0 %v1910, 18
        %v2059 = vpop.permute.xlu0 %2058
        %2060 = vrot.lane.b32.xlu0 %v1913, 18
        %v2061 = vpop.permute.xlu0 %2060
        %2062 = vrot.lane.b32.xlu0 %v1916, 18
        %v2063 = vpop.permute.xlu0 %2062
        %2064 = vrot.lane.b32.xlu0 %v1919, 18
        %v2065 = vpop.permute.xlu0 %2064
        %2066 = vrot.lane.b32.xlu0 %v1922, 18
        %v2067 = vpop.permute.xlu0 %2066
        %2068 = vrot.lane.b32.xlu0 %v1925, 18
        %v2069 = vpop.permute.xlu0 %2068
        %2070 = vrot.lane.b32.xlu0 %v1928, 18
        %v2071 = vpop.permute.xlu0 %2070
        %2072 = vrot.lane.b32.xlu0 %v1931, 18
        %v2073 = vpop.permute.xlu0 %2072
        %2074 = vrot.lane.b32.xlu0 %v1934, 18
        %v2075 = vpop.permute.xlu0 %2074
        %2076 = vrot.lane.b32.xlu0 %v1937, 18
        %v2077 = vpop.permute.xlu0 %2076
        %2078 = vrot.lane.b32.xlu0 %v1940, 18
        %v2079 = vpop.permute.xlu0 %2078
        %2080 = vrot.lane.b32.xlu0 %v1943, 18
        %v2081 = vpop.permute.xlu0 %2080
        %2082 = vrot.lane.b32.xlu0 %v1946, 18
        %v2083 = vpop.permute.xlu0 %2082
        %2084 = vrot.lane.b32.xlu0 %v1949, 18
        %v2085 = vpop.permute.xlu0 %2084
        %2086 = vrot.lane.b32.xlu0 %v1952, 18
        %v2087 = vpop.permute.xlu0 %2086
        %2088 = vrot.lane.b32.xlu0 %v1955, 18
        %v2089 = vpop.permute.xlu0 %2088
        %2090 = vrot.lane.b32.xlu0 %v1958, 18
        %v2091 = vpop.permute.xlu0 %2090
        %2092 = vrot.lane.b32.xlu0 %v1961, 18
        %v2093 = vpop.permute.xlu0 %2092
        %2094 = vrot.lane.b32.xlu0 %v1964, 18
        %v2095 = vpop.permute.xlu0 %2094
        %2096 = vrot.lane.b32.xlu0 %v1967, 18
        %v2097 = vpop.permute.xlu0 %2096
        %2098 = vrot.lane.b32.xlu0 %v1970, 18
        %v2099 = vpop.permute.xlu0 %2098
        %2100 = vrot.lane.b32.xlu0 %v1878, 18
        %v2101 = vpop.permute.xlu0 %2100
        %2102 = vrot.lane.b32.xlu0 %v1881, 18
        %v2103 = vpop.permute.xlu0 %2102
        %2104 = vrot.lane.b32.xlu0 %v1884, 18
        %v2105 = vpop.permute.xlu0 %2104
        %2106 = vrot.lane.b32.xlu0 %v1887, 18
        %v2107 = vpop.permute.xlu0 %2106
        %2108 = vrot.lane.b32.xlu0 %v1890, 18
        %v2109 = vpop.permute.xlu0 %2108
        %2110 = vrot.lane.b32.xlu0 %v1893, 18
        %v2111 = vpop.permute.xlu0 %2110
        %2112 = vrot.lane.b32.xlu0 %v1896, 18
        %v2113 = vpop.permute.xlu0 %2112
        %2114 = vrot.lane.b32.xlu0 %v1899, 18
        %v2115 = vpop.permute.xlu0 %2114
        %2116 = vrot.lane.b32.xlu0 %v1902, 18
        %v2117 = vpop.permute.xlu0 %2116
        %2118 = vrot.lane.b32.xlu0 %v1905, 18
        %v2119 = vpop.permute.xlu0 %2118
        %2120 = vrot.lane.b32.xlu0 %v1908, 18
        %v2121 = vpop.permute.xlu0 %2120
        %2122 = vrot.lane.b32.xlu0 %v1911, 18
        %v2123 = vpop.permute.xlu0 %2122
        %2124 = vrot.lane.b32.xlu0 %v1914, 18
        %v2125 = vpop.permute.xlu0 %2124
        %2126 = vrot.lane.b32.xlu0 %v1917, 18
        %v2127 = vpop.permute.xlu0 %2126
        %2128 = vrot.lane.b32.xlu0 %v1920, 18
        %v2129 = vpop.permute.xlu0 %2128
        %2130 = vrot.lane.b32.xlu0 %v1923, 18
        %v2131 = vpop.permute.xlu0 %2130
        %2132 = vrot.lane.b32.xlu0 %v1926, 18
        %v2133 = vpop.permute.xlu0 %2132
        %2134 = vrot.lane.b32.xlu0 %v1929, 18
        %v2135 = vpop.permute.xlu0 %2134
        %2136 = vrot.lane.b32.xlu0 %v1932, 18
        %v2137 = vpop.permute.xlu0 %2136
        %2138 = vrot.lane.b32.xlu0 %v1935, 18
        %v2139 = vpop.permute.xlu0 %2138
        %2140 = vrot.lane.b32.xlu0 %v1938, 18
        %v2141 = vpop.permute.xlu0 %2140
        %2142 = vrot.lane.b32.xlu0 %v1941, 18
        %v2143 = vpop.permute.xlu0 %2142
        %2144 = vrot.lane.b32.xlu0 %v1944, 18
        %v2145 = vpop.permute.xlu0 %2144
        %2146 = vrot.lane.b32.xlu0 %v1947, 18
        %v2147 = vpop.permute.xlu0 %2146
        %2148 = vrot.lane.b32.xlu0 %v1950, 18
        %v2149 = vpop.permute.xlu0 %2148
        %2150 = vrot.lane.b32.xlu0 %v1953, 18
        %v2151 = vpop.permute.xlu0 %2150
        %2152 = vrot.lane.b32.xlu0 %v1956, 18
        %v2153 = vpop.permute.xlu0 %2152
        %2154 = vrot.lane.b32.xlu0 %v1959, 18
        %v2155 = vpop.permute.xlu0 %2154
        %2156 = vrot.lane.b32.xlu0 %v1962, 18
        %v2157 = vpop.permute.xlu0 %2156
        %2158 = vrot.lane.b32.xlu0 %v1965, 18
        %v2159 = vpop.permute.xlu0 %2158
        %2160 = vrot.lane.b32.xlu0 %v1968, 18
        %v2161 = vpop.permute.xlu0 %2160
        %2162 = vrot.lane.b32.xlu0 %v1971, 18
        %v2163 = vpop.permute.xlu0 %2162
        %vm2164 = vcmp.lt.s32.totalorder %v1169, 18
        %v2165 = vsel %vm2164, %v2037, %v2101
        %v2166 = vsel %vm2164, %v2039, %v2103
        %v2167 = vsel %vm2164, %v2041, %v2105
        %v2168 = vsel %vm2164, %v2043, %v2107
        %v2169 = vsel %vm2164, %v2045, %v2109
        %v2170 = vsel %vm2164, %v2047, %v2111
        %v2171 = vsel %vm2164, %v2049, %v2113
        %v2172 = vsel %vm2164, %v2051, %v2115
        %v2173 = vsel %vm2164, %v2053, %v2117
        %v2174 = vsel %vm2164, %v2055, %v2119
        %v2175 = vsel %vm2164, %v2057, %v2121
        %v2176 = vsel %vm2164, %v2059, %v2123
        %v2177 = vsel %vm2164, %v2061, %v2125
        %v2178 = vsel %vm2164, %v2063, %v2127
        %v2179 = vsel %vm2164, %v2065, %v2129
        %v2180 = vsel %vm2164, %v2067, %v2131
        %v2181 = vsel %vm2164, %v2069, %v2133
        %v2182 = vsel %vm2164, %v2071, %v2135
        %v2183 = vsel %vm2164, %v2073, %v2137
        %v2184 = vsel %vm2164, %v2075, %v2139
        %v2185 = vsel %vm2164, %v2077, %v2141
        %v2186 = vsel %vm2164, %v2079, %v2143
        %v2187 = vsel %vm2164, %v2081, %v2145
        %v2188 = vsel %vm2164, %v2083, %v2147
        %v2189 = vsel %vm2164, %v2085, %v2149
        %v2190 = vsel %vm2164, %v2087, %v2151
        %v2191 = vsel %vm2164, %v2089, %v2153
        %v2192 = vsel %vm2164, %v2091, %v2155
        %v2193 = vsel %vm2164, %v2093, %v2157
        %v2194 = vsel %vm2164, %v2095, %v2159
        %v2195 = vsel %vm2164, %v2097, %v2161
        %v2196 = vsel %vm2164, %v2099, %v2163
        %v2197 = vsel %vm2164, %v1973, %v2037
        %v2198 = vsel %vm2164, %v1975, %v2039
        %v2199 = vsel %vm2164, %v1977, %v2041
        %v2200 = vsel %vm2164, %v1979, %v2043
        %v2201 = vsel %vm2164, %v1981, %v2045
        %v2202 = vsel %vm2164, %v1983, %v2047
        %v2203 = vsel %vm2164, %v1985, %v2049
        %v2204 = vsel %vm2164, %v1987, %v2051
        %v2205 = vsel %vm2164, %v1989, %v2053
        %v2206 = vsel %vm2164, %v1991, %v2055
        %v2207 = vsel %vm2164, %v1993, %v2057
        %v2208 = vsel %vm2164, %v1995, %v2059
        %v2209 = vsel %vm2164, %v1997, %v2061
        %v2210 = vsel %vm2164, %v1999, %v2063
        %v2211 = vsel %vm2164, %v2001, %v2065
        %v2212 = vsel %vm2164, %v2003, %v2067
        %v2213 = vsel %vm2164, %v2005, %v2069
        %v2214 = vsel %vm2164, %v2007, %v2071
        %v2215 = vsel %vm2164, %v2009, %v2073
        %v2216 = vsel %vm2164, %v2011, %v2075
        %v2217 = vsel %vm2164, %v2013, %v2077
        %v2218 = vsel %vm2164, %v2015, %v2079
        %v2219 = vsel %vm2164, %v2017, %v2081
        %v2220 = vsel %vm2164, %v2019, %v2083
        %v2221 = vsel %vm2164, %v2021, %v2085
        %v2222 = vsel %vm2164, %v2023, %v2087
        %v2223 = vsel %vm2164, %v2025, %v2089
        %v2224 = vsel %vm2164, %v2027, %v2091
        %v2225 = vsel %vm2164, %v2029, %v2093
        %v2226 = vsel %vm2164, %v2031, %v2095
        %v2227 = vsel %vm2164, %v2033, %v2097
        %v2228 = vsel %vm2164, %v2035, %v2099
        %v2229 = vsel %vm2164, %v2101, %v1973
        %v2230 = vsel %vm2164, %v2103, %v1975
        %v2231 = vsel %vm2164, %v2105, %v1977
        %v2232 = vsel %vm2164, %v2107, %v1979
        %v2233 = vsel %vm2164, %v2109, %v1981
        %v2234 = vsel %vm2164, %v2111, %v1983
        %v2235 = vsel %vm2164, %v2113, %v1985
        %v2236 = vsel %vm2164, %v2115, %v1987
        %v2237 = vsel %vm2164, %v2117, %v1989
        %v2238 = vsel %vm2164, %v2119, %v1991
        %v2239 = vsel %vm2164, %v2121, %v1993
        %v2240 = vsel %vm2164, %v2123, %v1995
        %v2241 = vsel %vm2164, %v2125, %v1997
        %v2242 = vsel %vm2164, %v2127, %v1999
        %v2243 = vsel %vm2164, %v2129, %v2001
        %v2244 = vsel %vm2164, %v2131, %v2003
        %v2245 = vsel %vm2164, %v2133, %v2005
        %v2246 = vsel %vm2164, %v2135, %v2007
        %v2247 = vsel %vm2164, %v2137, %v2009
        %v2248 = vsel %vm2164, %v2139, %v2011
        %v2249 = vsel %vm2164, %v2141, %v2013
        %v2250 = vsel %vm2164, %v2143, %v2015
        %v2251 = vsel %vm2164, %v2145, %v2017
        %v2252 = vsel %vm2164, %v2147, %v2019
        %v2253 = vsel %vm2164, %v2149, %v2021
        %v2254 = vsel %vm2164, %v2151, %v2023
        %v2255 = vsel %vm2164, %v2153, %v2025
        %v2256 = vsel %vm2164, %v2155, %v2027
        %v2257 = vsel %vm2164, %v2157, %v2029
        %v2258 = vsel %vm2164, %v2159, %v2031
        %v2259 = vsel %vm2164, %v2161, %v2033
        %v2260 = vsel %vm2164, %v2163, %v2035
        %v2262 = vlaneseq
        %v2263 = vshrl.u32 %v2262, 7
        %v2264 = vsub.s32 0, %v2263
        %v2265 = vrot.slane %v288, %v2264
        %v2266 = vlaneseq
        %v2267 = vshrl.u32 %v2266, 7
        %v2268 = vsub.s32 1, %v2267
        %v2269 = vrot.slane %v288, %v2268
        %v2270 = vlaneseq
        %v2271 = vshrl.u32 %v2270, 7
        %v2272 = vsub.s32 2, %v2271
        %v2273 = vrot.slane %v288, %v2272
        %v2277 = vmul.f32 %v2265, %v2229
        %v2278 = vmul.f32 %v2269, %v2197
        %v2279 = vmul.f32 %v2273, %v2165
        %v2280 = vmul.f32 %v2265, %v2230
        %v2281 = vmul.f32 %v2269, %v2198
        %v2282 = vmul.f32 %v2273, %v2166
        %v2283 = vmul.f32 %v2265, %v2231
        %v2284 = vmul.f32 %v2269, %v2199
        %v2285 = vmul.f32 %v2273, %v2167
        %v2286 = vmul.f32 %v2265, %v2232
        %v2287 = vmul.f32 %v2269, %v2200
        %v2288 = vmul.f32 %v2273, %v2168
        %v2289 = vmul.f32 %v2265, %v2233
        %v2290 = vmul.f32 %v2269, %v2201
        %v2291 = vmul.f32 %v2273, %v2169
        %v2292 = vmul.f32 %v2265, %v2234
        %v2293 = vmul.f32 %v2269, %v2202
        %v2294 = vmul.f32 %v2273, %v2170
        %v2295 = vmul.f32 %v2265, %v2235
        %v2296 = vmul.f32 %v2269, %v2203
        %v2297 = vmul.f32 %v2273, %v2171
        %v2298 = vmul.f32 %v2265, %v2236
        %v2299 = vmul.f32 %v2269, %v2204
        %v2300 = vmul.f32 %v2273, %v2172
        %v2301 = vmul.f32 %v2265, %v2237
        %v2302 = vmul.f32 %v2269, %v2205
        %v2303 = vmul.f32 %v2273, %v2173
        %v2304 = vmul.f32 %v2265, %v2238
        %v2305 = vmul.f32 %v2269, %v2206
        %v2306 = vmul.f32 %v2273, %v2174
        %v2307 = vmul.f32 %v2265, %v2239
        %v2308 = vmul.f32 %v2269, %v2207
        %v2309 = vmul.f32 %v2273, %v2175
        %v2310 = vmul.f32 %v2265, %v2240
        %v2311 = vmul.f32 %v2269, %v2208
        %v2312 = vmul.f32 %v2273, %v2176
        %v2313 = vmul.f32 %v2265, %v2241
        %v2314 = vmul.f32 %v2269, %v2209
        %v2315 = vmul.f32 %v2273, %v2177
        %v2316 = vmul.f32 %v2265, %v2242
        %v2317 = vmul.f32 %v2269, %v2210
        %v2318 = vmul.f32 %v2273, %v2178
        %v2319 = vmul.f32 %v2265, %v2243
        %v2320 = vmul.f32 %v2269, %v2211
        %v2321 = vmul.f32 %v2273, %v2179
        %v2322 = vmul.f32 %v2265, %v2244
        %v2323 = vmul.f32 %v2269, %v2212
        %v2324 = vmul.f32 %v2273, %v2180
        %v2325 = vmul.f32 %v2265, %v2245
        %v2326 = vmul.f32 %v2269, %v2213
        %v2327 = vmul.f32 %v2273, %v2181
        %v2328 = vmul.f32 %v2265, %v2246
        %v2329 = vmul.f32 %v2269, %v2214
        %v2330 = vmul.f32 %v2273, %v2182
        %v2331 = vmul.f32 %v2265, %v2247
        %v2332 = vmul.f32 %v2269, %v2215
        %v2333 = vmul.f32 %v2273, %v2183
        %v2334 = vmul.f32 %v2265, %v2248
        %v2335 = vmul.f32 %v2269, %v2216
        %v2336 = vmul.f32 %v2273, %v2184
        %v2337 = vmul.f32 %v2265, %v2249
        %v2338 = vmul.f32 %v2269, %v2217
        %v2339 = vmul.f32 %v2273, %v2185
        %v2340 = vmul.f32 %v2265, %v2250
        %v2341 = vmul.f32 %v2269, %v2218
        %v2342 = vmul.f32 %v2273, %v2186
        %v2343 = vmul.f32 %v2265, %v2251
        %v2344 = vmul.f32 %v2269, %v2219
        %v2345 = vmul.f32 %v2273, %v2187
        %v2346 = vmul.f32 %v2265, %v2252
        %v2347 = vmul.f32 %v2269, %v2220
        %v2348 = vmul.f32 %v2273, %v2188
        %v2349 = vmul.f32 %v2265, %v2253
        %v2350 = vmul.f32 %v2269, %v2221
        %v2351 = vmul.f32 %v2273, %v2189
        %v2352 = vmul.f32 %v2265, %v2254
        %v2353 = vmul.f32 %v2269, %v2222
        %v2354 = vmul.f32 %v2273, %v2190
        %v2355 = vmul.f32 %v2265, %v2255
        %v2356 = vmul.f32 %v2269, %v2223
        %v2357 = vmul.f32 %v2273, %v2191
        %v2358 = vmul.f32 %v2265, %v2256
        %v2359 = vmul.f32 %v2269, %v2224
        %v2360 = vmul.f32 %v2273, %v2192
        %v2361 = vmul.f32 %v2265, %v2257
        %v2362 = vmul.f32 %v2269, %v2225
        %v2363 = vmul.f32 %v2273, %v2193
        %v2364 = vmul.f32 %v2265, %v2258
        %v2365 = vmul.f32 %v2269, %v2226
        %v2366 = vmul.f32 %v2273, %v2194
        %v2367 = vmul.f32 %v2265, %v2259
        %v2368 = vmul.f32 %v2269, %v2227
        %v2369 = vmul.f32 %v2273, %v2195
        %v2370 = vmul.f32 %v2265, %v2260
        %v2371 = vmul.f32 %v2269, %v2228
        %v2372 = vmul.f32 %v2273, %v2196
        %v2373 = vadd.f32 %v1876, %v2277
        %v2374 = vadd.f32 %v1877, %v2278
        %v2375 = vadd.f32 %v1878, %v2279
        %v2376 = vadd.f32 %v1879, %v2280
        %v2377 = vadd.f32 %v1880, %v2281
        %v2378 = vadd.f32 %v1881, %v2282
        %v2379 = vadd.f32 %v1882, %v2283
        %v2380 = vadd.f32 %v1883, %v2284
        %v2381 = vadd.f32 %v1884, %v2285
        %v2382 = vadd.f32 %v1885, %v2286
        %v2383 = vadd.f32 %v1886, %v2287
        %v2384 = vadd.f32 %v1887, %v2288
        %v2385 = vadd.f32 %v1888, %v2289
        %v2386 = vadd.f32 %v1889, %v2290
        %v2387 = vadd.f32 %v1890, %v2291
        %v2388 = vadd.f32 %v1891, %v2292
        %v2389 = vadd.f32 %v1892, %v2293
        %v2390 = vadd.f32 %v1893, %v2294
        %v2391 = vadd.f32 %v1894, %v2295
        %v2392 = vadd.f32 %v1895, %v2296
        %v2393 = vadd.f32 %v1896, %v2297
        %v2394 = vadd.f32 %v1897, %v2298
        %v2395 = vadd.f32 %v1898, %v2299
        %v2396 = vadd.f32 %v1899, %v2300
        %v2397 = vadd.f32 %v1900, %v2301
        %v2398 = vadd.f32 %v1901, %v2302
        %v2399 = vadd.f32 %v1902, %v2303
        %v2400 = vadd.f32 %v1903, %v2304
        %v2401 = vadd.f32 %v1904, %v2305
        %v2402 = vadd.f32 %v1905, %v2306
        %v2403 = vadd.f32 %v1906, %v2307
        %v2404 = vadd.f32 %v1907, %v2308
        %v2405 = vadd.f32 %v1908, %v2309
        %v2406 = vadd.f32 %v1909, %v2310
        %v2407 = vadd.f32 %v1910, %v2311
        %v2408 = vadd.f32 %v1911, %v2312
        %v2409 = vadd.f32 %v1912, %v2313
        %v2410 = vadd.f32 %v1913, %v2314
        %v2411 = vadd.f32 %v1914, %v2315
        %v2412 = vadd.f32 %v1915, %v2316
        %v2413 = vadd.f32 %v1916, %v2317
        %v2414 = vadd.f32 %v1917, %v2318
        %v2415 = vadd.f32 %v1918, %v2319
        %v2416 = vadd.f32 %v1919, %v2320
        %v2417 = vadd.f32 %v1920, %v2321
        %v2418 = vadd.f32 %v1921, %v2322
        %v2419 = vadd.f32 %v1922, %v2323
        %v2420 = vadd.f32 %v1923, %v2324
        %v2421 = vadd.f32 %v1924, %v2325
        %v2422 = vadd.f32 %v1925, %v2326
        %v2423 = vadd.f32 %v1926, %v2327
        %v2424 = vadd.f32 %v1927, %v2328
        %v2425 = vadd.f32 %v1928, %v2329
        %v2426 = vadd.f32 %v1929, %v2330
        %v2427 = vadd.f32 %v1930, %v2331
        %v2428 = vadd.f32 %v1931, %v2332
        %v2429 = vadd.f32 %v1932, %v2333
        %v2430 = vadd.f32 %v1933, %v2334
        %v2431 = vadd.f32 %v1934, %v2335
        %v2432 = vadd.f32 %v1935, %v2336
        %v2433 = vadd.f32 %v1936, %v2337
        %v2434 = vadd.f32 %v1937, %v2338
        %v2435 = vadd.f32 %v1938, %v2339
        %v2436 = vadd.f32 %v1939, %v2340
        %v2437 = vadd.f32 %v1940, %v2341
        %v2438 = vadd.f32 %v1941, %v2342
        %v2439 = vadd.f32 %v1942, %v2343
        %v2440 = vadd.f32 %v1943, %v2344
        %v2441 = vadd.f32 %v1944, %v2345
        %v2442 = vadd.f32 %v1945, %v2346
        %v2443 = vadd.f32 %v1946, %v2347
        %v2444 = vadd.f32 %v1947, %v2348
        %v2445 = vadd.f32 %v1948, %v2349
        %v2446 = vadd.f32 %v1949, %v2350
        %v2447 = vadd.f32 %v1950, %v2351
        %v2448 = vadd.f32 %v1951, %v2352
        %v2449 = vadd.f32 %v1952, %v2353
        %v2450 = vadd.f32 %v1953, %v2354
        %v2451 = vadd.f32 %v1954, %v2355
        %v2452 = vadd.f32 %v1955, %v2356
        %v2453 = vadd.f32 %v1956, %v2357
        %v2454 = vadd.f32 %v1957, %v2358
        %v2455 = vadd.f32 %v1958, %v2359
        %v2456 = vadd.f32 %v1959, %v2360
        %v2457 = vadd.f32 %v1960, %v2361
        %v2458 = vadd.f32 %v1961, %v2362
        %v2459 = vadd.f32 %v1962, %v2363
        %v2460 = vadd.f32 %v1963, %v2364
        %v2461 = vadd.f32 %v1964, %v2365
        %v2462 = vadd.f32 %v1965, %v2366
        %v2463 = vadd.f32 %v1966, %v2367
        %v2464 = vadd.f32 %v1967, %v2368
        %v2465 = vadd.f32 %v1968, %v2369
        %v2466 = vadd.f32 %v1969, %v2370
        %v2467 = vadd.f32 %v1970, %v2371
        %v2468 = vadd.f32 %v1971, %v2372
        %2469 = vrot.lane.b32.xlu0 %v1876, 110
        %v2470 = vpop.permute.xlu0 %2469
        %2471 = vrot.lane.b32.xlu0 %v1879, 110
        %v2472 = vpop.permute.xlu0 %2471
        %2473 = vrot.lane.b32.xlu0 %v1882, 110
        %v2474 = vpop.permute.xlu0 %2473
        %2475 = vrot.lane.b32.xlu0 %v1885, 110
        %v2476 = vpop.permute.xlu0 %2475
        %2477 = vrot.lane.b32.xlu0 %v1888, 110
        %v2478 = vpop.permute.xlu0 %2477
        %2479 = vrot.lane.b32.xlu0 %v1891, 110
        %v2480 = vpop.permute.xlu0 %2479
        %2481 = vrot.lane.b32.xlu0 %v1894, 110
        %v2482 = vpop.permute.xlu0 %2481
        %2483 = vrot.lane.b32.xlu0 %v1897, 110
        %v2484 = vpop.permute.xlu0 %2483
        %2485 = vrot.lane.b32.xlu0 %v1900, 110
        %v2486 = vpop.permute.xlu0 %2485
        %2487 = vrot.lane.b32.xlu0 %v1903, 110
        %v2488 = vpop.permute.xlu0 %2487
        %2489 = vrot.lane.b32.xlu0 %v1906, 110
        %v2490 = vpop.permute.xlu0 %2489
        %2491 = vrot.lane.b32.xlu0 %v1909, 110
        %v2492 = vpop.permute.xlu0 %2491
        %2493 = vrot.lane.b32.xlu0 %v1912, 110
        %v2494 = vpop.permute.xlu0 %2493
        %2495 = vrot.lane.b32.xlu0 %v1915, 110
        %v2496 = vpop.permute.xlu0 %2495
        %2497 = vrot.lane.b32.xlu0 %v1918, 110
        %v2498 = vpop.permute.xlu0 %2497
        %2499 = vrot.lane.b32.xlu0 %v1921, 110
        %v2500 = vpop.permute.xlu0 %2499
        %2501 = vrot.lane.b32.xlu0 %v1924, 110
        %v2502 = vpop.permute.xlu0 %2501
        %2503 = vrot.lane.b32.xlu0 %v1927, 110
        %v2504 = vpop.permute.xlu0 %2503
        %2505 = vrot.lane.b32.xlu0 %v1930, 110
        %v2506 = vpop.permute.xlu0 %2505
        %2507 = vrot.lane.b32.xlu0 %v1933, 110
        %v2508 = vpop.permute.xlu0 %2507
        %2509 = vrot.lane.b32.xlu0 %v1936, 110
        %v2510 = vpop.permute.xlu0 %2509
        %2511 = vrot.lane.b32.xlu0 %v1939, 110
        %v2512 = vpop.permute.xlu0 %2511
        %2513 = vrot.lane.b32.xlu0 %v1942, 110
        %v2514 = vpop.permute.xlu0 %2513
        %2515 = vrot.lane.b32.xlu0 %v1945, 110
        %v2516 = vpop.permute.xlu0 %2515
        %2517 = vrot.lane.b32.xlu0 %v1948, 110
        %v2518 = vpop.permute.xlu0 %2517
        %2519 = vrot.lane.b32.xlu0 %v1951, 110
        %v2520 = vpop.permute.xlu0 %2519
        %2521 = vrot.lane.b32.xlu0 %v1954, 110
        %v2522 = vpop.permute.xlu0 %2521
        %2523 = vrot.lane.b32.xlu0 %v1957, 110
        %v2524 = vpop.permute.xlu0 %2523
        %2525 = vrot.lane.b32.xlu0 %v1960, 110
        %v2526 = vpop.permute.xlu0 %2525
        %2527 = vrot.lane.b32.xlu0 %v1963, 110
        %v2528 = vpop.permute.xlu0 %2527
        %2529 = vrot.lane.b32.xlu0 %v1966, 110
        %v2530 = vpop.permute.xlu0 %2529
        %2531 = vrot.lane.b32.xlu0 %v1969, 110
        %v2532 = vpop.permute.xlu0 %2531
        %2533 = vrot.lane.b32.xlu0 %v1877, 110
        %v2534 = vpop.permute.xlu0 %2533
        %2535 = vrot.lane.b32.xlu0 %v1880, 110
        %v2536 = vpop.permute.xlu0 %2535
        %2537 = vrot.lane.b32.xlu0 %v1883, 110
        %v2538 = vpop.permute.xlu0 %2537
        %2539 = vrot.lane.b32.xlu0 %v1886, 110
        %v2540 = vpop.permute.xlu0 %2539
        %2541 = vrot.lane.b32.xlu0 %v1889, 110
        %v2542 = vpop.permute.xlu0 %2541
        %2543 = vrot.lane.b32.xlu0 %v1892, 110
        %v2544 = vpop.permute.xlu0 %2543
        %2545 = vrot.lane.b32.xlu0 %v1895, 110
        %v2546 = vpop.permute.xlu0 %2545
        %2547 = vrot.lane.b32.xlu0 %v1898, 110
        %v2548 = vpop.permute.xlu0 %2547
        %2549 = vrot.lane.b32.xlu0 %v1901, 110
        %v2550 = vpop.permute.xlu0 %2549
        %2551 = vrot.lane.b32.xlu0 %v1904, 110
        %v2552 = vpop.permute.xlu0 %2551
        %2553 = vrot.lane.b32.xlu0 %v1907, 110
        %v2554 = vpop.permute.xlu0 %2553
        %2555 = vrot.lane.b32.xlu0 %v1910, 110
        %v2556 = vpop.permute.xlu0 %2555
        %2557 = vrot.lane.b32.xlu0 %v1913, 110
        %v2558 = vpop.permute.xlu0 %2557
        %2559 = vrot.lane.b32.xlu0 %v1916, 110
        %v2560 = vpop.permute.xlu0 %2559
        %2561 = vrot.lane.b32.xlu0 %v1919, 110
        %v2562 = vpop.permute.xlu0 %2561
        %2563 = vrot.lane.b32.xlu0 %v1922, 110
        %v2564 = vpop.permute.xlu0 %2563
        %2565 = vrot.lane.b32.xlu0 %v1925, 110
        %v2566 = vpop.permute.xlu0 %2565
        %2567 = vrot.lane.b32.xlu0 %v1928, 110
        %v2568 = vpop.permute.xlu0 %2567
        %2569 = vrot.lane.b32.xlu0 %v1931, 110
        %v2570 = vpop.permute.xlu0 %2569
        %2571 = vrot.lane.b32.xlu0 %v1934, 110
        %v2572 = vpop.permute.xlu0 %2571
        %2573 = vrot.lane.b32.xlu0 %v1937, 110
        %v2574 = vpop.permute.xlu0 %2573
        %2575 = vrot.lane.b32.xlu0 %v1940, 110
        %v2576 = vpop.permute.xlu0 %2575
        %2577 = vrot.lane.b32.xlu0 %v1943, 110
        %v2578 = vpop.permute.xlu0 %2577
        %2579 = vrot.lane.b32.xlu0 %v1946, 110
        %v2580 = vpop.permute.xlu0 %2579
        %2581 = vrot.lane.b32.xlu0 %v1949, 110
        %v2582 = vpop.permute.xlu0 %2581
        %2583 = vrot.lane.b32.xlu0 %v1952, 110
        %v2584 = vpop.permute.xlu0 %2583
        %2585 = vrot.lane.b32.xlu0 %v1955, 110
        %v2586 = vpop.permute.xlu0 %2585
        %2587 = vrot.lane.b32.xlu0 %v1958, 110
        %v2588 = vpop.permute.xlu0 %2587
        %2589 = vrot.lane.b32.xlu0 %v1961, 110
        %v2590 = vpop.permute.xlu0 %2589
        %2591 = vrot.lane.b32.xlu0 %v1964, 110
        %v2592 = vpop.permute.xlu0 %2591
        %2593 = vrot.lane.b32.xlu0 %v1967, 110
        %v2594 = vpop.permute.xlu0 %2593
        %2595 = vrot.lane.b32.xlu0 %v1970, 110
        %v2596 = vpop.permute.xlu0 %2595
        %2597 = vrot.lane.b32.xlu0 %v1878, 110
        %v2598 = vpop.permute.xlu0 %2597
        %2599 = vrot.lane.b32.xlu0 %v1881, 110
        %v2600 = vpop.permute.xlu0 %2599
        %2601 = vrot.lane.b32.xlu0 %v1884, 110
        %v2602 = vpop.permute.xlu0 %2601
        %2603 = vrot.lane.b32.xlu0 %v1887, 110
        %v2604 = vpop.permute.xlu0 %2603
        %2605 = vrot.lane.b32.xlu0 %v1890, 110
        %v2606 = vpop.permute.xlu0 %2605
        %2607 = vrot.lane.b32.xlu0 %v1893, 110
        %v2608 = vpop.permute.xlu0 %2607
        %2609 = vrot.lane.b32.xlu0 %v1896, 110
        %v2610 = vpop.permute.xlu0 %2609
        %2611 = vrot.lane.b32.xlu0 %v1899, 110
        %v2612 = vpop.permute.xlu0 %2611
        %2613 = vrot.lane.b32.xlu0 %v1902, 110
        %v2614 = vpop.permute.xlu0 %2613
        %2615 = vrot.lane.b32.xlu0 %v1905, 110
        %v2616 = vpop.permute.xlu0 %2615
        %2617 = vrot.lane.b32.xlu0 %v1908, 110
        %v2618 = vpop.permute.xlu0 %2617
        %2619 = vrot.lane.b32.xlu0 %v1911, 110
        %v2620 = vpop.permute.xlu0 %2619
        %2621 = vrot.lane.b32.xlu0 %v1914, 110
        %v2622 = vpop.permute.xlu0 %2621
        %2623 = vrot.lane.b32.xlu0 %v1917, 110
        %v2624 = vpop.permute.xlu0 %2623
        %2625 = vrot.lane.b32.xlu0 %v1920, 110
        %v2626 = vpop.permute.xlu0 %2625
        %2627 = vrot.lane.b32.xlu0 %v1923, 110
        %v2628 = vpop.permute.xlu0 %2627
        %2629 = vrot.lane.b32.xlu0 %v1926, 110
        %v2630 = vpop.permute.xlu0 %2629
        %2631 = vrot.lane.b32.xlu0 %v1929, 110
        %v2632 = vpop.permute.xlu0 %2631
        %2633 = vrot.lane.b32.xlu0 %v1932, 110
        %v2634 = vpop.permute.xlu0 %2633
        %2635 = vrot.lane.b32.xlu0 %v1935, 110
        %v2636 = vpop.permute.xlu0 %2635
        %2637 = vrot.lane.b32.xlu0 %v1938, 110
        %v2638 = vpop.permute.xlu0 %2637
        %2639 = vrot.lane.b32.xlu0 %v1941, 110
        %v2640 = vpop.permute.xlu0 %2639
        %2641 = vrot.lane.b32.xlu0 %v1944, 110
        %v2642 = vpop.permute.xlu0 %2641
        %2643 = vrot.lane.b32.xlu0 %v1947, 110
        %v2644 = vpop.permute.xlu0 %2643
        %2645 = vrot.lane.b32.xlu0 %v1950, 110
        %v2646 = vpop.permute.xlu0 %2645
        %2647 = vrot.lane.b32.xlu0 %v1953, 110
        %v2648 = vpop.permute.xlu0 %2647
        %2649 = vrot.lane.b32.xlu0 %v1956, 110
        %v2650 = vpop.permute.xlu0 %2649
        %2651 = vrot.lane.b32.xlu0 %v1959, 110
        %v2652 = vpop.permute.xlu0 %2651
        %2653 = vrot.lane.b32.xlu0 %v1962, 110
        %v2654 = vpop.permute.xlu0 %2653
        %2655 = vrot.lane.b32.xlu0 %v1965, 110
        %v2656 = vpop.permute.xlu0 %2655
        %2657 = vrot.lane.b32.xlu0 %v1968, 110
        %v2658 = vpop.permute.xlu0 %2657
        %2659 = vrot.lane.b32.xlu0 %v1971, 110
        %v2660 = vpop.permute.xlu0 %2659
        %vm2661 = vcmp.lt.s32.totalorder %v1169, 110
        %v2662 = vsel %vm2661, %v2534, %v2598
        %v2663 = vsel %vm2661, %v2536, %v2600
        %v2664 = vsel %vm2661, %v2538, %v2602
        %v2665 = vsel %vm2661, %v2540, %v2604
        %v2666 = vsel %vm2661, %v2542, %v2606
        %v2667 = vsel %vm2661, %v2544, %v2608
        %v2668 = vsel %vm2661, %v2546, %v2610
        %v2669 = vsel %vm2661, %v2548, %v2612
        %v2670 = vsel %vm2661, %v2550, %v2614
        %v2671 = vsel %vm2661, %v2552, %v2616
        %v2672 = vsel %vm2661, %v2554, %v2618
        %v2673 = vsel %vm2661, %v2556, %v2620
        %v2674 = vsel %vm2661, %v2558, %v2622
        %v2675 = vsel %vm2661, %v2560, %v2624
        %v2676 = vsel %vm2661, %v2562, %v2626
        %v2677 = vsel %vm2661, %v2564, %v2628
        %v2678 = vsel %vm2661, %v2566, %v2630
        %v2679 = vsel %vm2661, %v2568, %v2632
        %v2680 = vsel %vm2661, %v2570, %v2634
        %v2681 = vsel %vm2661, %v2572, %v2636
        %v2682 = vsel %vm2661, %v2574, %v2638
        %v2683 = vsel %vm2661, %v2576, %v2640
        %v2684 = vsel %vm2661, %v2578, %v2642
        %v2685 = vsel %vm2661, %v2580, %v2644
        %v2686 = vsel %vm2661, %v2582, %v2646
        %v2687 = vsel %vm2661, %v2584, %v2648
        %v2688 = vsel %vm2661, %v2586, %v2650
        %v2689 = vsel %vm2661, %v2588, %v2652
        %v2690 = vsel %vm2661, %v2590, %v2654
        %v2691 = vsel %vm2661, %v2592, %v2656
        %v2692 = vsel %vm2661, %v2594, %v2658
        %v2693 = vsel %vm2661, %v2596, %v2660
        %v2694 = vsel %vm2661, %v2470, %v2534
        %v2695 = vsel %vm2661, %v2472, %v2536
        %v2696 = vsel %vm2661, %v2474, %v2538
        %v2697 = vsel %vm2661, %v2476, %v2540
        %v2698 = vsel %vm2661, %v2478, %v2542
        %v2699 = vsel %vm2661, %v2480, %v2544
        %v2700 = vsel %vm2661, %v2482, %v2546
        %v2701 = vsel %vm2661, %v2484, %v2548
        %v2702 = vsel %vm2661, %v2486, %v2550
        %v2703 = vsel %vm2661, %v2488, %v2552
        %v2704 = vsel %vm2661, %v2490, %v2554
        %v2705 = vsel %vm2661, %v2492, %v2556
        %v2706 = vsel %vm2661, %v2494, %v2558
        %v2707 = vsel %vm2661, %v2496, %v2560
        %v2708 = vsel %vm2661, %v2498, %v2562
        %v2709 = vsel %vm2661, %v2500, %v2564
        %v2710 = vsel %vm2661, %v2502, %v2566
        %v2711 = vsel %vm2661, %v2504, %v2568
        %v2712 = vsel %vm2661, %v2506, %v2570
        %v2713 = vsel %vm2661, %v2508, %v2572
        %v2714 = vsel %vm2661, %v2510, %v2574
        %v2715 = vsel %vm2661, %v2512, %v2576
        %v2716 = vsel %vm2661, %v2514, %v2578
        %v2717 = vsel %vm2661, %v2516, %v2580
        %v2718 = vsel %vm2661, %v2518, %v2582
        %v2719 = vsel %vm2661, %v2520, %v2584
        %v2720 = vsel %vm2661, %v2522, %v2586
        %v2721 = vsel %vm2661, %v2524, %v2588
        %v2722 = vsel %vm2661, %v2526, %v2590
        %v2723 = vsel %vm2661, %v2528, %v2592
        %v2724 = vsel %vm2661, %v2530, %v2594
        %v2725 = vsel %vm2661, %v2532, %v2596
        %v2726 = vsel %vm2661, %v2598, %v2470
        %v2727 = vsel %vm2661, %v2600, %v2472
        %v2728 = vsel %vm2661, %v2602, %v2474
        %v2729 = vsel %vm2661, %v2604, %v2476
        %v2730 = vsel %vm2661, %v2606, %v2478
        %v2731 = vsel %vm2661, %v2608, %v2480
        %v2732 = vsel %vm2661, %v2610, %v2482
        %v2733 = vsel %vm2661, %v2612, %v2484
        %v2734 = vsel %vm2661, %v2614, %v2486
        %v2735 = vsel %vm2661, %v2616, %v2488
        %v2736 = vsel %vm2661, %v2618, %v2490
        %v2737 = vsel %vm2661, %v2620, %v2492
        %v2738 = vsel %vm2661, %v2622, %v2494
        %v2739 = vsel %vm2661, %v2624, %v2496
        %v2740 = vsel %vm2661, %v2626, %v2498
        %v2741 = vsel %vm2661, %v2628, %v2500
        %v2742 = vsel %vm2661, %v2630, %v2502
        %v2743 = vsel %vm2661, %v2632, %v2504
        %v2744 = vsel %vm2661, %v2634, %v2506
        %v2745 = vsel %vm2661, %v2636, %v2508
        %v2746 = vsel %vm2661, %v2638, %v2510
        %v2747 = vsel %vm2661, %v2640, %v2512
        %v2748 = vsel %vm2661, %v2642, %v2514
        %v2749 = vsel %vm2661, %v2644, %v2516
        %v2750 = vsel %vm2661, %v2646, %v2518
        %v2751 = vsel %vm2661, %v2648, %v2520
        %v2752 = vsel %vm2661, %v2650, %v2522
        %v2753 = vsel %vm2661, %v2652, %v2524
        %v2754 = vsel %vm2661, %v2654, %v2526
        %v2755 = vsel %vm2661, %v2656, %v2528
        %v2756 = vsel %vm2661, %v2658, %v2530
        %v2757 = vsel %vm2661, %v2660, %v2532
        %v2759 = vlaneseq
        %v2760 = vshrl.u32 %v2759, 7
        %v2761 = vsub.s32 0, %v2760
        %v2762 = vrot.slane %v290, %v2761
        %v2763 = vlaneseq
        %v2764 = vshrl.u32 %v2763, 7
        %v2765 = vsub.s32 1, %v2764
        %v2766 = vrot.slane %v290, %v2765
        %v2767 = vlaneseq
        %v2768 = vshrl.u32 %v2767, 7
        %v2769 = vsub.s32 2, %v2768
        %v2770 = vrot.slane %v290, %v2769
        %v2774 = vmul.f32 %v2762, %v2694
        %v2775 = vmul.f32 %v2766, %v2662
        %v2776 = vmul.f32 %v2770, %v2726
        %v2777 = vmul.f32 %v2762, %v2695
        %v2778 = vmul.f32 %v2766, %v2663
        %v2779 = vmul.f32 %v2770, %v2727
        %v2780 = vmul.f32 %v2762, %v2696
        %v2781 = vmul.f32 %v2766, %v2664
        %v2782 = vmul.f32 %v2770, %v2728
        %v2783 = vmul.f32 %v2762, %v2697
        %v2784 = vmul.f32 %v2766, %v2665
        %v2785 = vmul.f32 %v2770, %v2729
        %v2786 = vmul.f32 %v2762, %v2698
        %v2787 = vmul.f32 %v2766, %v2666
        %v2788 = vmul.f32 %v2770, %v2730
        %v2789 = vmul.f32 %v2762, %v2699
        %v2790 = vmul.f32 %v2766, %v2667
        %v2791 = vmul.f32 %v2770, %v2731
        %v2792 = vmul.f32 %v2762, %v2700
        %v2793 = vmul.f32 %v2766, %v2668
        %v2794 = vmul.f32 %v2770, %v2732
        %v2795 = vmul.f32 %v2762, %v2701
        %v2796 = vmul.f32 %v2766, %v2669
        %v2797 = vmul.f32 %v2770, %v2733
        %v2798 = vmul.f32 %v2762, %v2702
        %v2799 = vmul.f32 %v2766, %v2670
        %v2800 = vmul.f32 %v2770, %v2734
        %v2801 = vmul.f32 %v2762, %v2703
        %v2802 = vmul.f32 %v2766, %v2671
        %v2803 = vmul.f32 %v2770, %v2735
        %v2804 = vmul.f32 %v2762, %v2704
        %v2805 = vmul.f32 %v2766, %v2672
        %v2806 = vmul.f32 %v2770, %v2736
        %v2807 = vmul.f32 %v2762, %v2705
        %v2808 = vmul.f32 %v2766, %v2673
        %v2809 = vmul.f32 %v2770, %v2737
        %v2810 = vmul.f32 %v2762, %v2706
        %v2811 = vmul.f32 %v2766, %v2674
        %v2812 = vmul.f32 %v2770, %v2738
        %v2813 = vmul.f32 %v2762, %v2707
        %v2814 = vmul.f32 %v2766, %v2675
        %v2815 = vmul.f32 %v2770, %v2739
        %v2816 = vmul.f32 %v2762, %v2708
        %v2817 = vmul.f32 %v2766, %v2676
        %v2818 = vmul.f32 %v2770, %v2740
        %v2819 = vmul.f32 %v2762, %v2709
        %v2820 = vmul.f32 %v2766, %v2677
        %v2821 = vmul.f32 %v2770, %v2741
        %v2822 = vmul.f32 %v2762, %v2710
        %v2823 = vmul.f32 %v2766, %v2678
        %v2824 = vmul.f32 %v2770, %v2742
        %v2825 = vmul.f32 %v2762, %v2711
        %v2826 = vmul.f32 %v2766, %v2679
        %v2827 = vmul.f32 %v2770, %v2743
        %v2828 = vmul.f32 %v2762, %v2712
        %v2829 = vmul.f32 %v2766, %v2680
        %v2830 = vmul.f32 %v2770, %v2744
        %v2831 = vmul.f32 %v2762, %v2713
        %v2832 = vmul.f32 %v2766, %v2681
        %v2833 = vmul.f32 %v2770, %v2745
        %v2834 = vmul.f32 %v2762, %v2714
        %v2835 = vmul.f32 %v2766, %v2682
        %v2836 = vmul.f32 %v2770, %v2746
        %v2837 = vmul.f32 %v2762, %v2715
        %v2838 = vmul.f32 %v2766, %v2683
        %v2839 = vmul.f32 %v2770, %v2747
        %v2840 = vmul.f32 %v2762, %v2716
        %v2841 = vmul.f32 %v2766, %v2684
        %v2842 = vmul.f32 %v2770, %v2748
        %v2843 = vmul.f32 %v2762, %v2717
        %v2844 = vmul.f32 %v2766, %v2685
        %v2845 = vmul.f32 %v2770, %v2749
        %v2846 = vmul.f32 %v2762, %v2718
        %v2847 = vmul.f32 %v2766, %v2686
        %v2848 = vmul.f32 %v2770, %v2750
        %v2849 = vmul.f32 %v2762, %v2719
        %v2850 = vmul.f32 %v2766, %v2687
        %v2851 = vmul.f32 %v2770, %v2751
        %v2852 = vmul.f32 %v2762, %v2720
        %v2853 = vmul.f32 %v2766, %v2688
        %v2854 = vmul.f32 %v2770, %v2752
        %v2855 = vmul.f32 %v2762, %v2721
        %v2856 = vmul.f32 %v2766, %v2689
        %v2857 = vmul.f32 %v2770, %v2753
        %v2858 = vmul.f32 %v2762, %v2722
        %v2859 = vmul.f32 %v2766, %v2690
        %v2860 = vmul.f32 %v2770, %v2754
        %v2861 = vmul.f32 %v2762, %v2723
        %v2862 = vmul.f32 %v2766, %v2691
        %v2863 = vmul.f32 %v2770, %v2755
        %v2864 = vmul.f32 %v2762, %v2724
        %v2865 = vmul.f32 %v2766, %v2692
        %v2866 = vmul.f32 %v2770, %v2756
        %v2867 = vmul.f32 %v2762, %v2725
        %v2868 = vmul.f32 %v2766, %v2693
        %v2869 = vmul.f32 %v2770, %v2757
        %v2870 = vadd.f32 %v2373, %v2774
        %v2871 = vadd.f32 %v2374, %v2775
        %v2872 = vadd.f32 %v2375, %v2776
        %v2873 = vadd.f32 %v2376, %v2777
        %v2874 = vadd.f32 %v2377, %v2778
        %v2875 = vadd.f32 %v2378, %v2779
        %v2876 = vadd.f32 %v2379, %v2780
        %v2877 = vadd.f32 %v2380, %v2781
        %v2878 = vadd.f32 %v2381, %v2782
        %v2879 = vadd.f32 %v2382, %v2783
        %v2880 = vadd.f32 %v2383, %v2784
        %v2881 = vadd.f32 %v2384, %v2785
        %v2882 = vadd.f32 %v2385, %v2786
        %v2883 = vadd.f32 %v2386, %v2787
        %v2884 = vadd.f32 %v2387, %v2788
        %v2885 = vadd.f32 %v2388, %v2789
        %v2886 = vadd.f32 %v2389, %v2790
        %v2887 = vadd.f32 %v2390, %v2791
        %v2888 = vadd.f32 %v2391, %v2792
        %v2889 = vadd.f32 %v2392, %v2793
        %v2890 = vadd.f32 %v2393, %v2794
        %v2891 = vadd.f32 %v2394, %v2795
        %v2892 = vadd.f32 %v2395, %v2796
        %v2893 = vadd.f32 %v2396, %v2797
        %v2894 = vadd.f32 %v2397, %v2798
        %v2895 = vadd.f32 %v2398, %v2799
        %v2896 = vadd.f32 %v2399, %v2800
        %v2897 = vadd.f32 %v2400, %v2801
        %v2898 = vadd.f32 %v2401, %v2802
        %v2899 = vadd.f32 %v2402, %v2803
        %v2900 = vadd.f32 %v2403, %v2804
        %v2901 = vadd.f32 %v2404, %v2805
        %v2902 = vadd.f32 %v2405, %v2806
        %v2903 = vadd.f32 %v2406, %v2807
        %v2904 = vadd.f32 %v2407, %v2808
        %v2905 = vadd.f32 %v2408, %v2809
        %v2906 = vadd.f32 %v2409, %v2810
        %v2907 = vadd.f32 %v2410, %v2811
        %v2908 = vadd.f32 %v2411, %v2812
        %v2909 = vadd.f32 %v2412, %v2813
        %v2910 = vadd.f32 %v2413, %v2814
        %v2911 = vadd.f32 %v2414, %v2815
        %v2912 = vadd.f32 %v2415, %v2816
        %v2913 = vadd.f32 %v2416, %v2817
        %v2914 = vadd.f32 %v2417, %v2818
        %v2915 = vadd.f32 %v2418, %v2819
        %v2916 = vadd.f32 %v2419, %v2820
        %v2917 = vadd.f32 %v2420, %v2821
        %v2918 = vadd.f32 %v2421, %v2822
        %v2919 = vadd.f32 %v2422, %v2823
        %v2920 = vadd.f32 %v2423, %v2824
        %v2921 = vadd.f32 %v2424, %v2825
        %v2922 = vadd.f32 %v2425, %v2826
        %v2923 = vadd.f32 %v2426, %v2827
        %v2924 = vadd.f32 %v2427, %v2828
        %v2925 = vadd.f32 %v2428, %v2829
        %v2926 = vadd.f32 %v2429, %v2830
        %v2927 = vadd.f32 %v2430, %v2831
        %v2928 = vadd.f32 %v2431, %v2832
        %v2929 = vadd.f32 %v2432, %v2833
        %v2930 = vadd.f32 %v2433, %v2834
        %v2931 = vadd.f32 %v2434, %v2835
        %v2932 = vadd.f32 %v2435, %v2836
        %v2933 = vadd.f32 %v2436, %v2837
        %v2934 = vadd.f32 %v2437, %v2838
        %v2935 = vadd.f32 %v2438, %v2839
        %v2936 = vadd.f32 %v2439, %v2840
        %v2937 = vadd.f32 %v2440, %v2841
        %v2938 = vadd.f32 %v2441, %v2842
        %v2939 = vadd.f32 %v2442, %v2843
        %v2940 = vadd.f32 %v2443, %v2844
        %v2941 = vadd.f32 %v2444, %v2845
        %v2942 = vadd.f32 %v2445, %v2846
        %v2943 = vadd.f32 %v2446, %v2847
        %v2944 = vadd.f32 %v2447, %v2848
        %v2945 = vadd.f32 %v2448, %v2849
        %v2946 = vadd.f32 %v2449, %v2850
        %v2947 = vadd.f32 %v2450, %v2851
        %v2948 = vadd.f32 %v2451, %v2852
        %v2949 = vadd.f32 %v2452, %v2853
        %v2950 = vadd.f32 %v2453, %v2854
        %v2951 = vadd.f32 %v2454, %v2855
        %v2952 = vadd.f32 %v2455, %v2856
        %v2953 = vadd.f32 %v2456, %v2857
        %v2954 = vadd.f32 %v2457, %v2858
        %v2955 = vadd.f32 %v2458, %v2859
        %v2956 = vadd.f32 %v2459, %v2860
        %v2957 = vadd.f32 %v2460, %v2861
        %v2958 = vadd.f32 %v2461, %v2862
        %v2959 = vadd.f32 %v2462, %v2863
        %v2960 = vadd.f32 %v2463, %v2864
        %v2961 = vadd.f32 %v2464, %v2865
        %v2962 = vadd.f32 %v2465, %v2866
        %v2963 = vadd.f32 %v2466, %v2867
        %v2964 = vadd.f32 %v2467, %v2868
        %v2965 = vadd.f32 %v2468, %v2869
        %v2966 = vmax.f32 %v2870, %v2876
        %v2967 = vmax.f32 %v2873, %v2879
        %v2968 = vmax.f32 %v2966, %v2882
        %v2969 = vmax.f32 %v2967, %v2885
        %v2970 = vmax.f32 %v2968, %v2888
        %v2971 = vmax.f32 %v2969, %v2891
        %v2972 = vmax.f32 %v2970, %v2894
        %v2973 = vmax.f32 %v2971, %v2897
        %v2974 = vmax.f32 %v2972, %v2900
        %v2975 = vmax.f32 %v2973, %v2903
        %v2976 = vmax.f32 %v2974, %v2906
        %v2977 = vmax.f32 %v2975, %v2909
        %v2978 = vmax.f32 %v2976, %v2912
        %v2979 = vmax.f32 %v2977, %v2915
        %v2980 = vmax.f32 %v2978, %v2918
        %v2981 = vmax.f32 %v2979, %v2921
        %v2982 = vmax.f32 %v2980, %v2924
        %v2983 = vmax.f32 %v2981, %v2927
        %v2984 = vmax.f32 %v2982, %v2930
        %v2985 = vmax.f32 %v2983, %v2933
        %v2986 = vmax.f32 %v2984, %v2936
        %v2987 = vmax.f32 %v2985, %v2939
        %v2988 = vmax.f32 %v2986, %v2942
        %v2989 = vmax.f32 %v2987, %v2945
        %v2990 = vmax.f32 %v2988, %v2948
        %v2991 = vmax.f32 %v2989, %v2951
        %v2992 = vmax.f32 %v2990, %v2954
        %v2993 = vmax.f32 %v2991, %v2957
        %v2994 = vmax.f32 %v2992, %v2960
        %v2995 = vmax.f32 %v2993, %v2963
        %v2996 = vmax.f32 %v2994, %v2995
        %v2997 = vrot.slane %v2996, 4
        %v2998 = vmax.f32 %v2996, %v2997
        %v2999 = vrot.slane %v2998, 2
        %v3000 = vmax.f32 %v2998, %v2999
        %v3001 = vrot.slane %v3000, 1
        %v3002 = vmax.f32 %v3000, %v3001
        %v3003 = vmax.f32 %v2871, %v2877
        %v3004 = vmax.f32 %v2874, %v2880
        %v3005 = vmax.f32 %v3003, %v2883
        %v3006 = vmax.f32 %v3004, %v2886
        %v3007 = vmax.f32 %v3005, %v2889
        %v3008 = vmax.f32 %v3006, %v2892
        %v3009 = vmax.f32 %v3007, %v2895
        %v3010 = vmax.f32 %v3008, %v2898
        %v3011 = vmax.f32 %v3009, %v2901
        %v3012 = vmax.f32 %v3010, %v2904
        %v3013 = vmax.f32 %v3011, %v2907
        %v3014 = vmax.f32 %v3012, %v2910
        %v3015 = vmax.f32 %v3013, %v2913
        %v3016 = vmax.f32 %v3014, %v2916
        %v3017 = vmax.f32 %v3015, %v2919
        %v3018 = vmax.f32 %v3016, %v2922
        %v3019 = vmax.f32 %v3017, %v2925
        %v3020 = vmax.f32 %v3018, %v2928
        %v3021 = vmax.f32 %v3019, %v2931
        %v3022 = vmax.f32 %v3020, %v2934
        %v3023 = vmax.f32 %v3021, %v2937
        %v3024 = vmax.f32 %v3022, %v2940
        %v3025 = vmax.f32 %v3023, %v2943
        %v3026 = vmax.f32 %v3024, %v2946
        %v3027 = vmax.f32 %v3025, %v2949
        %v3028 = vmax.f32 %v3026, %v2952
        %v3029 = vmax.f32 %v3027, %v2955
        %v3030 = vmax.f32 %v3028, %v2958
        %v3031 = vmax.f32 %v3029, %v2961
        %v3032 = vmax.f32 %v3030, %v2964
        %v3033 = vmax.f32 %v3031, %v3032
        %v3034 = vrot.slane %v3033, 4
        %v3035 = vmax.f32 %v3033, %v3034
        %v3036 = vrot.slane %v3035, 2
        %v3037 = vmax.f32 %v3035, %v3036
        %v3038 = vrot.slane %v3037, 1
        %v3039 = vmax.f32 %v3037, %v3038
        %v3040 = vmax.f32 %v2872, %v2878
        %v3041 = vmax.f32 %v2875, %v2881
        %v3042 = vmax.f32 %v3040, %v2884
        %v3043 = vmax.f32 %v3041, %v2887
        %v3044 = vmax.f32 %v3042, %v2890
        %v3045 = vmax.f32 %v3043, %v2893
        %v3046 = vmax.f32 %v3044, %v2896
        %v3047 = vmax.f32 %v3045, %v2899
        %v3048 = vmax.f32 %v3046, %v2902
        %v3049 = vmax.f32 %v3047, %v2905
        %v3050 = vmax.f32 %v3048, %v2908
        %v3051 = vmax.f32 %v3049, %v2911
        %v3052 = vmax.f32 %v3050, %v2914
        %v3053 = vmax.f32 %v3051, %v2917
        %v3054 = vmax.f32 %v3052, %v2920
        %v3055 = vmax.f32 %v3053, %v2923
        %v3056 = vmax.f32 %v3054, %v2926
        %v3057 = vmax.f32 %v3055, %v2929
        %v3058 = vmax.f32 %v3056, %v2932
        %v3059 = vmax.f32 %v3057, %v2935
        %v3060 = vmax.f32 %v3058, %v2938
        %v3061 = vmax.f32 %v3059, %v2941
        %v3062 = vmax.f32 %v3060, %v2944
        %v3063 = vmax.f32 %v3061, %v2947
        %v3064 = vmax.f32 %v3062, %v2950
        %v3065 = vmax.f32 %v3063, %v2953
        %v3066 = vmax.f32 %v3064, %v2956
        %v3067 = vmax.f32 %v3065, %v2959
        %v3068 = vmax.f32 %v3066, %v2962
        %v3069 = vmax.f32 %v3067, %v2965
        %v3070 = vmax.f32 %v3068, %v3069
        %v3071 = vrot.slane %v3070, 4
        %v3072 = vmax.f32 %v3070, %v3071
        %v3073 = vrot.slane %v3072, 2
        %v3074 = vmax.f32 %v3072, %v3073
        %v3075 = vrot.slane %v3074, 1
        %v3076 = vmax.f32 %v3074, %v3075
        %v3077 = vsub.f32 %v2870, %v3002
        %v3078 = vsub.f32 %v2871, %v3039
        %v3079 = vsub.f32 %v2872, %v3076
        %v3080 = vsub.f32 %v2873, %v3002
        %v3081 = vsub.f32 %v2874, %v3039
        %v3082 = vsub.f32 %v2875, %v3076
        %v3083 = vsub.f32 %v2876, %v3002
        %v3084 = vsub.f32 %v2877, %v3039
        %v3085 = vsub.f32 %v2878, %v3076
        %v3086 = vsub.f32 %v2879, %v3002
        %v3087 = vsub.f32 %v2880, %v3039
        %v3088 = vsub.f32 %v2881, %v3076
        %v3089 = vsub.f32 %v2882, %v3002
        %v3090 = vsub.f32 %v2883, %v3039
        %v3091 = vsub.f32 %v2884, %v3076
        %v3092 = vsub.f32 %v2885, %v3002
        %v3093 = vsub.f32 %v2886, %v3039
        %v3094 = vsub.f32 %v2887, %v3076
        %v3095 = vsub.f32 %v2888, %v3002
        %v3096 = vsub.f32 %v2889, %v3039
        %v3097 = vsub.f32 %v2890, %v3076
        %v3098 = vsub.f32 %v2891, %v3002
        %v3099 = vsub.f32 %v2892, %v3039
        %v3100 = vsub.f32 %v2893, %v3076
        %v3101 = vsub.f32 %v2894, %v3002
        %v3102 = vsub.f32 %v2895, %v3039
        %v3103 = vsub.f32 %v2896, %v3076
        %v3104 = vsub.f32 %v2897, %v3002
        %v3105 = vsub.f32 %v2898, %v3039
        %v3106 = vsub.f32 %v2899, %v3076
        %v3107 = vsub.f32 %v2900, %v3002
        %v3108 = vsub.f32 %v2901, %v3039
        %v3109 = vsub.f32 %v2902, %v3076
        %v3110 = vsub.f32 %v2903, %v3002
        %v3111 = vsub.f32 %v2904, %v3039
        %v3112 = vsub.f32 %v2905, %v3076
        %v3113 = vsub.f32 %v2906, %v3002
        %v3114 = vsub.f32 %v2907, %v3039
        %v3115 = vsub.f32 %v2908, %v3076
        %v3116 = vsub.f32 %v2909, %v3002
        %v3117 = vsub.f32 %v2910, %v3039
        %v3118 = vsub.f32 %v2911, %v3076
        %v3119 = vsub.f32 %v2912, %v3002
        %v3120 = vsub.f32 %v2913, %v3039
        %v3121 = vsub.f32 %v2914, %v3076
        %v3122 = vsub.f32 %v2915, %v3002
        %v3123 = vsub.f32 %v2916, %v3039
        %v3124 = vsub.f32 %v2917, %v3076
        %v3125 = vsub.f32 %v2918, %v3002
        %v3126 = vsub.f32 %v2919, %v3039
        %v3127 = vsub.f32 %v2920, %v3076
        %v3128 = vsub.f32 %v2921, %v3002
        %v3129 = vsub.f32 %v2922, %v3039
        %v3130 = vsub.f32 %v2923, %v3076
        %v3131 = vsub.f32 %v2924, %v3002
        %v3132 = vsub.f32 %v2925, %v3039
        %v3133 = vsub.f32 %v2926, %v3076
        %v3134 = vsub.f32 %v2927, %v3002
        %v3135 = vsub.f32 %v2928, %v3039
        %v3136 = vsub.f32 %v2929, %v3076
        %v3137 = vsub.f32 %v2930, %v3002
        %v3138 = vsub.f32 %v2931, %v3039
        %v3139 = vsub.f32 %v2932, %v3076
        %v3140 = vsub.f32 %v2933, %v3002
        %v3141 = vsub.f32 %v2934, %v3039
        %v3142 = vsub.f32 %v2935, %v3076
        %v3143 = vsub.f32 %v2936, %v3002
        %v3144 = vsub.f32 %v2937, %v3039
        %v3145 = vsub.f32 %v2938, %v3076
        %v3146 = vsub.f32 %v2939, %v3002
        %v3147 = vsub.f32 %v2940, %v3039
        %v3148 = vsub.f32 %v2941, %v3076
        %v3149 = vsub.f32 %v2942, %v3002
        %v3150 = vsub.f32 %v2943, %v3039
        %v3151 = vsub.f32 %v2944, %v3076
        %v3152 = vsub.f32 %v2945, %v3002
        %v3153 = vsub.f32 %v2946, %v3039
        %v3154 = vsub.f32 %v2947, %v3076
        %v3155 = vsub.f32 %v2948, %v3002
        %v3156 = vsub.f32 %v2949, %v3039
        %v3157 = vsub.f32 %v2950, %v3076
        %v3158 = vsub.f32 %v2951, %v3002
        %v3159 = vsub.f32 %v2952, %v3039
        %v3160 = vsub.f32 %v2953, %v3076
        %v3161 = vsub.f32 %v2954, %v3002
        %v3162 = vsub.f32 %v2955, %v3039
        %v3163 = vsub.f32 %v2956, %v3076
        %v3164 = vsub.f32 %v2957, %v3002
        %v3165 = vsub.f32 %v2958, %v3039
        %v3166 = vsub.f32 %v2959, %v3076
        %v3167 = vsub.f32 %v2960, %v3002
        %v3168 = vsub.f32 %v2961, %v3039
        %v3169 = vsub.f32 %v2962, %v3076
        %v3170 = vsub.f32 %v2963, %v3002
        %v3171 = vsub.f32 %v2964, %v3039
        %v3172 = vsub.f32 %v2965, %v3076
        %v3173 = vmul.f32 %v3077, 1.442695
        %v3174 = vpow.pop %v3173
        %v3175 = vmul.f32 %v3078, 1.442695
        %v3176 = vpow.pop %v3175
        %v3177 = vmul.f32 %v3079, 1.442695
        %v3178 = vpow.pop %v3177
        %v3179 = vmul.f32 %v3080, 1.442695
        %v3180 = vpow.pop %v3179
        %v3181 = vmul.f32 %v3081, 1.442695
        %v3182 = vpow.pop %v3181
        %v3183 = vmul.f32 %v3082, 1.442695
        %v3184 = vpow.pop %v3183
        %v3185 = vmul.f32 %v3083, 1.442695
        %v3186 = vpow.pop %v3185
        %v3187 = vmul.f32 %v3084, 1.442695
        %v3188 = vpow.pop %v3187
        %v3189 = vmul.f32 %v3085, 1.442695
        %v3190 = vpow.pop %v3189
        %v3191 = vmul.f32 %v3086, 1.442695
        %v3192 = vpow.pop %v3191
        %v3193 = vmul.f32 %v3087, 1.442695
        %v3194 = vpow.pop %v3193
        %v3195 = vmul.f32 %v3088, 1.442695
        %v3196 = vpow.pop %v3195
        %v3197 = vmul.f32 %v3089, 1.442695
        %v3198 = vpow.pop %v3197
        %v3199 = vmul.f32 %v3090, 1.442695
        %v3200 = vpow.pop %v3199
        %v3201 = vmul.f32 %v3091, 1.442695
        %v3202 = vpow.pop %v3201
        %v3203 = vmul.f32 %v3092, 1.442695
        %v3204 = vpow.pop %v3203
        %v3205 = vmul.f32 %v3093, 1.442695
        %v3206 = vpow.pop %v3205
        %v3207 = vmul.f32 %v3094, 1.442695
        %v3208 = vpow.pop %v3207
        %v3209 = vmul.f32 %v3095, 1.442695
        %v3210 = vpow.pop %v3209
        %v3211 = vmul.f32 %v3096, 1.442695
        %v3212 = vpow.pop %v3211
        %v3213 = vmul.f32 %v3097, 1.442695
        %v3214 = vpow.pop %v3213
        %v3215 = vmul.f32 %v3098, 1.442695
        %v3216 = vpow.pop %v3215
        %v3217 = vmul.f32 %v3099, 1.442695
        %v3218 = vpow.pop %v3217
        %v3219 = vmul.f32 %v3100, 1.442695
        %v3220 = vpow.pop %v3219
        %v3221 = vmul.f32 %v3101, 1.442695
        %v3222 = vpow.pop %v3221
        %v3223 = vmul.f32 %v3102, 1.442695
        %v3224 = vpow.pop %v3223
        %v3225 = vmul.f32 %v3103, 1.442695
        %v3226 = vpow.pop %v3225
        %v3227 = vmul.f32 %v3104, 1.442695
        %v3228 = vpow.pop %v3227
        %v3229 = vmul.f32 %v3105, 1.442695
        %v3230 = vpow.pop %v3229
        %v3231 = vmul.f32 %v3106, 1.442695
        %v3232 = vpow.pop %v3231
        %v3233 = vmul.f32 %v3107, 1.442695
        %v3234 = vpow.pop %v3233
        %v3235 = vmul.f32 %v3108, 1.442695
        %v3236 = vpow.pop %v3235
        %v3237 = vmul.f32 %v3109, 1.442695
        %v3238 = vpow.pop %v3237
        %v3239 = vmul.f32 %v3110, 1.442695
        %v3240 = vpow.pop %v3239
        %v3241 = vmul.f32 %v3111, 1.442695
        %v3242 = vpow.pop %v3241
        %v3243 = vmul.f32 %v3112, 1.442695
        %v3244 = vpow.pop %v3243
        %v3245 = vmul.f32 %v3113, 1.442695
        %v3246 = vpow.pop %v3245
        %v3247 = vmul.f32 %v3114, 1.442695
        %v3248 = vpow.pop %v3247
        %v3249 = vmul.f32 %v3115, 1.442695
        %v3250 = vpow.pop %v3249
        %v3251 = vmul.f32 %v3116, 1.442695
        %v3252 = vpow.pop %v3251
        %v3253 = vmul.f32 %v3117, 1.442695
        %v3254 = vpow.pop %v3253
        %v3255 = vmul.f32 %v3118, 1.442695
        %v3256 = vpow.pop %v3255
        %v3257 = vmul.f32 %v3119, 1.442695
        %v3258 = vpow.pop %v3257
        %v3259 = vmul.f32 %v3120, 1.442695
        %v3260 = vpow.pop %v3259
        %v3261 = vmul.f32 %v3121, 1.442695
        %v3262 = vpow.pop %v3261
        %v3263 = vmul.f32 %v3122, 1.442695
        %v3264 = vpow.pop %v3263
        %v3265 = vmul.f32 %v3123, 1.442695
        %v3266 = vpow.pop %v3265
        %v3267 = vmul.f32 %v3124, 1.442695
        %v3268 = vpow.pop %v3267
        %v3269 = vmul.f32 %v3125, 1.442695
        %v3270 = vpow.pop %v3269
        %v3271 = vmul.f32 %v3126, 1.442695
        %v3272 = vpow.pop %v3271
        %v3273 = vmul.f32 %v3127, 1.442695
        %v3274 = vpow.pop %v3273
        %v3275 = vmul.f32 %v3128, 1.442695
        %v3276 = vpow.pop %v3275
        %v3277 = vmul.f32 %v3129, 1.442695
        %v3278 = vpow.pop %v3277
        %v3279 = vmul.f32 %v3130, 1.442695
        %v3280 = vpow.pop %v3279
        %v3281 = vmul.f32 %v3131, 1.442695
        %v3282 = vpow.pop %v3281
        %v3283 = vmul.f32 %v3132, 1.442695
        %v3284 = vpow.pop %v3283
        %v3285 = vmul.f32 %v3133, 1.442695
        %v3286 = vpow.pop %v3285
        %v3287 = vmul.f32 %v3134, 1.442695
        %v3288 = vpow.pop %v3287
        %v3289 = vmul.f32 %v3135, 1.442695
        %v3290 = vpow.pop %v3289
        %v3291 = vmul.f32 %v3136, 1.442695
        %v3292 = vpow.pop %v3291
        %v3293 = vmul.f32 %v3137, 1.442695
        %v3294 = vpow.pop %v3293
        %v3295 = vmul.f32 %v3138, 1.442695
        %v3296 = vpow.pop %v3295
        %v3297 = vmul.f32 %v3139, 1.442695
        %v3298 = vpow.pop %v3297
        %v3299 = vmul.f32 %v3140, 1.442695
        %v3300 = vpow.pop %v3299
        %v3301 = vmul.f32 %v3141, 1.442695
        %v3302 = vpow.pop %v3301
        %v3303 = vmul.f32 %v3142, 1.442695
        %v3304 = vpow.pop %v3303
        %v3305 = vmul.f32 %v3143, 1.442695
        %v3306 = vpow.pop %v3305
        %v3307 = vmul.f32 %v3144, 1.442695
        %v3308 = vpow.pop %v3307
        %v3309 = vmul.f32 %v3145, 1.442695
        %v3310 = vpow.pop %v3309
        %v3311 = vmul.f32 %v3146, 1.442695
        %v3312 = vpow.pop %v3311
        %v3313 = vmul.f32 %v3147, 1.442695
        %v3314 = vpow.pop %v3313
        %v3315 = vmul.f32 %v3148, 1.442695
        %v3316 = vpow.pop %v3315
        %v3317 = vmul.f32 %v3149, 1.442695
        %v3318 = vpow.pop %v3317
        %v3319 = vmul.f32 %v3150, 1.442695
        %v3320 = vpow.pop %v3319
        %v3321 = vmul.f32 %v3151, 1.442695
        %v3322 = vpow.pop %v3321
        %v3323 = vmul.f32 %v3152, 1.442695
        %v3324 = vpow.pop %v3323
        %v3325 = vmul.f32 %v3153, 1.442695
        %v3326 = vpow.pop %v3325
        %v3327 = vmul.f32 %v3154, 1.442695
        %v3328 = vpow.pop %v3327
        %v3329 = vmul.f32 %v3155, 1.442695
        %v3330 = vpow.pop %v3329
        %v3331 = vmul.f32 %v3156, 1.442695
        %v3332 = vpow.pop %v3331
        %v3333 = vmul.f32 %v3157, 1.442695
        %v3334 = vpow.pop %v3333
        %v3335 = vmul.f32 %v3158, 1.442695
        %v3336 = vpow.pop %v3335
        %v3337 = vmul.f32 %v3159, 1.442695
        %v3338 = vpow.pop %v3337
        %v3339 = vmul.f32 %v3160, 1.442695
        %v3340 = vpow.pop %v3339
        %v3341 = vmul.f32 %v3161, 1.442695
        %v3342 = vpow.pop %v3341
        %v3343 = vmul.f32 %v3162, 1.442695
        %v3344 = vpow.pop %v3343
        %v3345 = vmul.f32 %v3163, 1.442695
        %v3346 = vpow.pop %v3345
        %v3347 = vmul.f32 %v3164, 1.442695
        %v3348 = vpow.pop %v3347
        %v3349 = vmul.f32 %v3165, 1.442695
        %v3350 = vpow.pop %v3349
        %v3351 = vmul.f32 %v3166, 1.442695
        %v3352 = vpow.pop %v3351
        %v3353 = vmul.f32 %v3167, 1.442695
        %v3354 = vpow.pop %v3353
        %v3355 = vmul.f32 %v3168, 1.442695
        %v3356 = vpow.pop %v3355
        %v3357 = vmul.f32 %v3169, 1.442695
        %v3358 = vpow.pop %v3357
        %v3359 = vmul.f32 %v3170, 1.442695
        %v3360 = vpow.pop %v3359
        %v3361 = vmul.f32 %v3171, 1.442695
        %v3362 = vpow.pop %v3361
        %v3363 = vmul.f32 %v3172, 1.442695
        %v3364 = vpow.pop %v3363
        %v3365 = vadd.f32 %v3174, %v3180
        %v3366 = vadd.f32 %v3365, %v3186
        %v3367 = vadd.f32 %v3366, %v3192
        %v3368 = vadd.f32 %v3367, %v3198
        %v3369 = vadd.f32 %v3368, %v3204
        %v3370 = vadd.f32 %v3369, %v3210
        %v3371 = vadd.f32 %v3370, %v3216
        %v3372 = vadd.f32 %v3371, %v3222
        %v3373 = vadd.f32 %v3372, %v3228
        %v3374 = vadd.f32 %v3373, %v3234
        %v3375 = vadd.f32 %v3374, %v3240
        %v3376 = vadd.f32 %v3375, %v3246
        %v3377 = vadd.f32 %v3376, %v3252
        %v3378 = vadd.f32 %v3377, %v3258
        %v3379 = vadd.f32 %v3378, %v3264
        %v3380 = vadd.f32 %v3379, %v3270
        %v3381 = vadd.f32 %v3380, %v3276
        %v3382 = vadd.f32 %v3381, %v3282
        %v3383 = vadd.f32 %v3382, %v3288
        %v3384 = vadd.f32 %v3383, %v3294
        %v3385 = vadd.f32 %v3384, %v3300
        %v3386 = vadd.f32 %v3385, %v3306
        %v3387 = vadd.f32 %v3386, %v3312
        %v3388 = vadd.f32 %v3387, %v3318
        %v3389 = vadd.f32 %v3388, %v3324
        %v3390 = vadd.f32 %v3389, %v3330
        %v3391 = vadd.f32 %v3390, %v3336
        %v3392 = vadd.f32 %v3391, %v3342
        %v3393 = vadd.f32 %v3392, %v3348
        %v3394 = vadd.f32 %v3393, %v3354
        %v3395 = vadd.f32 %v3394, %v3360
        %v3396 = vrot.slane %v3395, 4
        %v3397 = vadd.f32 %v3395, %v3396
        %v3398 = vrot.slane %v3397, 2
        %v3399 = vadd.f32 %v3397, %v3398
        %v3400 = vrot.slane %v3399, 1
        %v3401 = vadd.f32 %v3399, %v3400
        %v3402 = vadd.f32 %v3176, %v3182
        %v3403 = vadd.f32 %v3402, %v3188
        %v3404 = vadd.f32 %v3403, %v3194
        %v3405 = vadd.f32 %v3404, %v3200
        %v3406 = vadd.f32 %v3405, %v3206
        %v3407 = vadd.f32 %v3406, %v3212
        %v3408 = vadd.f32 %v3407, %v3218
        %v3409 = vadd.f32 %v3408, %v3224
        %v3410 = vadd.f32 %v3409, %v3230
        %v3411 = vadd.f32 %v3410, %v3236
        %v3412 = vadd.f32 %v3411, %v3242
        %v3413 = vadd.f32 %v3412, %v3248
        %v3414 = vadd.f32 %v3413, %v3254
        %v3415 = vadd.f32 %v3414, %v3260
        %v3416 = vadd.f32 %v3415, %v3266
        %v3417 = vadd.f32 %v3416, %v3272
        %v3418 = vadd.f32 %v3417, %v3278
        %v3419 = vadd.f32 %v3418, %v3284
        %v3420 = vadd.f32 %v3419, %v3290
        %v3421 = vadd.f32 %v3420, %v3296
        %v3422 = vadd.f32 %v3421, %v3302
        %v3423 = vadd.f32 %v3422, %v3308
        %v3424 = vadd.f32 %v3423, %v3314
        %v3425 = vadd.f32 %v3424, %v3320
        %v3426 = vadd.f32 %v3425, %v3326
        %v3427 = vadd.f32 %v3426, %v3332
        %v3428 = vadd.f32 %v3427, %v3338
        %v3429 = vadd.f32 %v3428, %v3344
        %v3430 = vadd.f32 %v3429, %v3350
        %v3431 = vadd.f32 %v3430, %v3356
        %v3432 = vadd.f32 %v3431, %v3362
        %v3433 = vrot.slane %v3432, 4
        %v3434 = vadd.f32 %v3432, %v3433
        %v3435 = vrot.slane %v3434, 2
        %v3436 = vadd.f32 %v3434, %v3435
        %v3437 = vrot.slane %v3436, 1
        %v3438 = vadd.f32 %v3436, %v3437
        %v3439 = vadd.f32 %v3178, %v3184
        %v3440 = vadd.f32 %v3439, %v3190
        %v3441 = vadd.f32 %v3440, %v3196
        %v3442 = vadd.f32 %v3441, %v3202
        %v3443 = vadd.f32 %v3442, %v3208
        %v3444 = vadd.f32 %v3443, %v3214
        %v3445 = vadd.f32 %v3444, %v3220
        %v3446 = vadd.f32 %v3445, %v3226
        %v3447 = vadd.f32 %v3446, %v3232
        %v3448 = vadd.f32 %v3447, %v3238
        %v3449 = vadd.f32 %v3448, %v3244
        %v3450 = vadd.f32 %v3449, %v3250
        %v3451 = vadd.f32 %v3450, %v3256
        %v3452 = vadd.f32 %v3451, %v3262
        %v3453 = vadd.f32 %v3452, %v3268
        %v3454 = vadd.f32 %v3453, %v3274
        %v3455 = vadd.f32 %v3454, %v3280
        %v3456 = vadd.f32 %v3455, %v3286
        %v3457 = vadd.f32 %v3456, %v3292
        %v3458 = vadd.f32 %v3457, %v3298
        %v3459 = vadd.f32 %v3458, %v3304
        %v3460 = vadd.f32 %v3459, %v3310
        %v3461 = vadd.f32 %v3460, %v3316
        %v3462 = vadd.f32 %v3461, %v3322
        %v3463 = vadd.f32 %v3462, %v3328
        %v3464 = vadd.f32 %v3463, %v3334
        %v3465 = vadd.f32 %v3464, %v3340
        %v3466 = vadd.f32 %v3465, %v3346
        %v3467 = vadd.f32 %v3466, %v3352
        %v3468 = vadd.f32 %v3467, %v3358
        %v3469 = vadd.f32 %v3468, %v3364
        %v3470 = vrot.slane %v3469, 4
        %v3471 = vadd.f32 %v3469, %v3470
        %v3472 = vrot.slane %v3471, 2
        %v3473 = vadd.f32 %v3471, %v3472
        %v3474 = vrot.slane %v3473, 1
        %v3475 = vadd.f32 %v3473, %v3474
        %v3476 = vrcp.pop %v3401
        %v3477 = vrcp.pop %v3438
        %v3478 = vrcp.pop %v3475
        %v3479 = vmul.f32 %v3174, %v3476
        %v3480 = vmul.f32 %v3176, %v3477
        %v3481 = vmul.f32 %v3178, %v3478
        %v3482 = vmul.f32 %v3180, %v3476
        %v3483 = vmul.f32 %v3182, %v3477
        %v3484 = vmul.f32 %v3184, %v3478
        %v3485 = vmul.f32 %v3186, %v3476
        %v3486 = vmul.f32 %v3188, %v3477
        %v3487 = vmul.f32 %v3190, %v3478
        %v3488 = vmul.f32 %v3192, %v3476
        %v3489 = vmul.f32 %v3194, %v3477
        %v3490 = vmul.f32 %v3196, %v3478
        %v3491 = vmul.f32 %v3198, %v3476
        %v3492 = vmul.f32 %v3200, %v3477
        %v3493 = vmul.f32 %v3202, %v3478
        %v3494 = vmul.f32 %v3204, %v3476
        %v3495 = vmul.f32 %v3206, %v3477
        %v3496 = vmul.f32 %v3208, %v3478
        %v3497 = vmul.f32 %v3210, %v3476
        %v3498 = vmul.f32 %v3212, %v3477
        %v3499 = vmul.f32 %v3214, %v3478
        %v3500 = vmul.f32 %v3216, %v3476
        %v3501 = vmul.f32 %v3218, %v3477
        %v3502 = vmul.f32 %v3220, %v3478
        %v3503 = vmul.f32 %v3222, %v3476
        %v3504 = vmul.f32 %v3224, %v3477
        %v3505 = vmul.f32 %v3226, %v3478
        %v3506 = vmul.f32 %v3228, %v3476
        %v3507 = vmul.f32 %v3230, %v3477
        %v3508 = vmul.f32 %v3232, %v3478
        %v3509 = vmul.f32 %v3234, %v3476
        %v3510 = vmul.f32 %v3236, %v3477
        %v3511 = vmul.f32 %v3238, %v3478
        %v3512 = vmul.f32 %v3240, %v3476
        %v3513 = vmul.f32 %v3242, %v3477
        %v3514 = vmul.f32 %v3244, %v3478
        %v3515 = vmul.f32 %v3246, %v3476
        %v3516 = vmul.f32 %v3248, %v3477
        %v3517 = vmul.f32 %v3250, %v3478
        %v3518 = vmul.f32 %v3252, %v3476
        %v3519 = vmul.f32 %v3254, %v3477
        %v3520 = vmul.f32 %v3256, %v3478
        %v3521 = vmul.f32 %v3258, %v3476
        %v3522 = vmul.f32 %v3260, %v3477
        %v3523 = vmul.f32 %v3262, %v3478
        %v3524 = vmul.f32 %v3264, %v3476
        %v3525 = vmul.f32 %v3266, %v3477
        %v3526 = vmul.f32 %v3268, %v3478
        %v3527 = vmul.f32 %v3270, %v3476
        %v3528 = vmul.f32 %v3272, %v3477
        %v3529 = vmul.f32 %v3274, %v3478
        %v3530 = vmul.f32 %v3276, %v3476
        %v3531 = vmul.f32 %v3278, %v3477
        %v3532 = vmul.f32 %v3280, %v3478
        %v3533 = vmul.f32 %v3282, %v3476
        %v3534 = vmul.f32 %v3284, %v3477
        %v3535 = vmul.f32 %v3286, %v3478
        %v3536 = vmul.f32 %v3288, %v3476
        %v3537 = vmul.f32 %v3290, %v3477
        %v3538 = vmul.f32 %v3292, %v3478
        %v3539 = vmul.f32 %v3294, %v3476
        %v3540 = vmul.f32 %v3296, %v3477
        %v3541 = vmul.f32 %v3298, %v3478
        %v3542 = vmul.f32 %v3300, %v3476
        %v3543 = vmul.f32 %v3302, %v3477
        %v3544 = vmul.f32 %v3304, %v3478
        %v3545 = vmul.f32 %v3306, %v3476
        %v3546 = vmul.f32 %v3308, %v3477
        %v3547 = vmul.f32 %v3310, %v3478
        %v3548 = vmul.f32 %v3312, %v3476
        %v3549 = vmul.f32 %v3314, %v3477
        %v3550 = vmul.f32 %v3316, %v3478
        %v3551 = vmul.f32 %v3318, %v3476
        %v3552 = vmul.f32 %v3320, %v3477
        %v3553 = vmul.f32 %v3322, %v3478
        %v3554 = vmul.f32 %v3324, %v3476
        %v3555 = vmul.f32 %v3326, %v3477
        %v3556 = vmul.f32 %v3328, %v3478
        %v3557 = vmul.f32 %v3330, %v3476
        %v3558 = vmul.f32 %v3332, %v3477
        %v3559 = vmul.f32 %v3334, %v3478
        %v3560 = vmul.f32 %v3336, %v3476
        %v3561 = vmul.f32 %v3338, %v3477
        %v3562 = vmul.f32 %v3340, %v3478
        %v3563 = vmul.f32 %v3342, %v3476
        %v3564 = vmul.f32 %v3344, %v3477
        %v3565 = vmul.f32 %v3346, %v3478
        %v3566 = vmul.f32 %v3348, %v3476
        %v3567 = vmul.f32 %v3350, %v3477
        %v3568 = vmul.f32 %v3352, %v3478
        %v3569 = vmul.f32 %v3354, %v3476
        %v3570 = vmul.f32 %v3356, %v3477
        %v3571 = vmul.f32 %v3358, %v3478
        %v3572 = vmul.f32 %v3360, %v3476
        %v3573 = vmul.f32 %v3362, %v3477
        %v3574 = vmul.f32 %v3364, %v3478
        %3575 = vst [vmem:[%s280] sm:$0xff] %v3479
        %3576 = vst [vmem:[%s280 + $0x8] sm:$0xff] %v3480
        %3577 = vst [vmem:[%s280 + $0x10] sm:$0xff] %v3481
        %3578 = vst [vmem:[%s280 + $0x18] sm:$0xff] %v3482
        %3579 = vst [vmem:[%s280 + $0x20] sm:$0xff] %v3483
        %3580 = vst [vmem:[%s280 + $0x28] sm:$0xff] %v3484
        %3581 = vst [vmem:[%s280 + $0x30] sm:$0xff] %v3485
        %3582 = vst [vmem:[%s280 + $0x38] sm:$0xff] %v3486
        %3583 = vst [vmem:[%s280 + $0x40] sm:$0xff] %v3487
        %3584 = vst [vmem:[%s280 + $0x48] sm:$0xff] %v3488
        %3585 = vst [vmem:[%s280 + $0x50] sm:$0xff] %v3489
        %3586 = vst [vmem:[%s280 + $0x58] sm:$0xff] %v3490
        %3587 = vst [vmem:[%s280 + $0x60] sm:$0xff] %v3491
        %3588 = vst [vmem:[%s280 + $0x68] sm:$0xff] %v3492
        %3589 = vst [vmem:[%s280 + $0x70] sm:$0xff] %v3493
        %3590 = vst [vmem:[%s280 + $0x78] sm:$0xff] %v3494
        %3591 = vst [vmem:[%s280 + $0x80] sm:$0xff] %v3495
        %3592 = vst [vmem:[%s280 + $0x88] sm:$0xff] %v3496
        %3593 = vst [vmem:[%s280 + $0x90] sm:$0xff] %v3497
        %3594 = vst [vmem:[%s280 + $0x98] sm:$0xff] %v3498
        %3595 = vst [vmem:[%s280 + $0xa0] sm:$0xff] %v3499
        %3596 = vst [vmem:[%s280 + $0xa8] sm:$0xff] %v3500
        %3597 = vst [vmem:[%s280 + $0xb0] sm:$0xff] %v3501
        %3598 = vst [vmem:[%s280 + $0xb8] sm:$0xff] %v3502
        %3599 = vst [vmem:[%s280 + $0xc0] sm:$0xff] %v3503
        %3600 = vst [vmem:[%s280 + $0xc8] sm:$0xff] %v3504
        %3601 = vst [vmem:[%s280 + $0xd0] sm:$0xff] %v3505
        %3602 = vst [vmem:[%s280 + $0xd8] sm:$0xff] %v3506
        %3603 = vst [vmem:[%s280 + $0xe0] sm:$0xff] %v3507
        %3604 = vst [vmem:[%s280 + $0xe8] sm:$0xff] %v3508
        %3605 = vst [vmem:[%s280 + $0xf0] sm:$0xff] %v3509
        %3606 = vst [vmem:[%s280 + $0xf8] sm:$0xff] %v3510
        %3607 = vst [vmem:[%s280 + $0x100] sm:$0xff] %v3511
        %3608 = vst [vmem:[%s280 + $0x108] sm:$0xff] %v3512
        %3609 = vst [vmem:[%s280 + $0x110] sm:$0xff] %v3513
        %3610 = vst [vmem:[%s280 + $0x118] sm:$0xff] %v3514
        %3611 = vst [vmem:[%s280 + $0x120] sm:$0xff] %v3515
        %3612 = vst [vmem:[%s280 + $0x128] sm:$0xff] %v3516
        %3613 = vst [vmem:[%s280 + $0x130] sm:$0xff] %v3517
        %3614 = vst [vmem:[%s280 + $0x138] sm:$0xff] %v3518
        %3615 = vst [vmem:[%s280 + $0x140] sm:$0xff] %v3519
        %3616 = vst [vmem:[%s280 + $0x148] sm:$0xff] %v3520
        %3617 = vst [vmem:[%s280 + $0x150] sm:$0xff] %v3521
        %3618 = vst [vmem:[%s280 + $0x158] sm:$0xff] %v3522
        %3619 = vst [vmem:[%s280 + $0x160] sm:$0xff] %v3523
        %3620 = vst [vmem:[%s280 + $0x168] sm:$0xff] %v3524
        %3621 = vst [vmem:[%s280 + $0x170] sm:$0xff] %v3525
        %3622 = vst [vmem:[%s280 + $0x178] sm:$0xff] %v3526
        %3623 = vst [vmem:[%s280 + $0x180] sm:$0xff] %v3527
        %3624 = vst [vmem:[%s280 + $0x188] sm:$0xff] %v3528
        %3625 = vst [vmem:[%s280 + $0x190] sm:$0xff] %v3529
        %3626 = vst [vmem:[%s280 + $0x198] sm:$0xff] %v3530
        %3627 = vst [vmem:[%s280 + $0x1a0] sm:$0xff] %v3531
        %3628 = vst [vmem:[%s280 + $0x1a8] sm:$0xff] %v3532
        %3629 = vst [vmem:[%s280 + $0x1b0] sm:$0xff] %v3533
        %3630 = vst [vmem:[%s280 + $0x1b8] sm:$0xff] %v3534
        %3631 = vst [vmem:[%s280 + $0x1c0] sm:$0xff] %v3535
        %3632 = vst [vmem:[%s280 + $0x1c8] sm:$0xff] %v3536
        %3633 = vst [vmem:[%s280 + $0x1d0] sm:$0xff] %v3537
        %3634 = vst [vmem:[%s280 + $0x1d8] sm:$0xff] %v3538
        %3635 = vst [vmem:[%s280 + $0x1e0] sm:$0xff] %v3539
        %3636 = vst [vmem:[%s280 + $0x1e8] sm:$0xff] %v3540
        %3637 = vst [vmem:[%s280 + $0x1f0] sm:$0xff] %v3541
        %3638 = vst [vmem:[%s280 + $0x1f8] sm:$0xff] %v3542
        %3639 = vst [vmem:[%s280 + $0x200] sm:$0xff] %v3543
        %3640 = vst [vmem:[%s280 + $0x208] sm:$0xff] %v3544
        %3641 = vst [vmem:[%s280 + $0x210] sm:$0xff] %v3545
        %3642 = vst [vmem:[%s280 + $0x218] sm:$0xff] %v3546
        %3643 = vst [vmem:[%s280 + $0x220] sm:$0xff] %v3547
        %3644 = vst [vmem:[%s280 + $0x228] sm:$0xff] %v3548
        %3645 = vst [vmem:[%s280 + $0x230] sm:$0xff] %v3549
        %3646 = vst [vmem:[%s280 + $0x238] sm:$0xff] %v3550
        %3647 = vst [vmem:[%s280 + $0x240] sm:$0xff] %v3551
        %3648 = vst [vmem:[%s280 + $0x248] sm:$0xff] %v3552
        %3649 = vst [vmem:[%s280 + $0x250] sm:$0xff] %v3553
        %3650 = vst [vmem:[%s280 + $0x258] sm:$0xff] %v3554
        %3651 = vst [vmem:[%s280 + $0x260] sm:$0xff] %v3555
        %3652 = vst [vmem:[%s280 + $0x268] sm:$0xff] %v3556
        %3653 = vst [vmem:[%s280 + $0x270] sm:$0xff] %v3557
        %3654 = vst [vmem:[%s280 + $0x278] sm:$0xff] %v3558
        %3655 = vst [vmem:[%s280 + $0x280] sm:$0xff] %v3559
        %3656 = vst [vmem:[%s280 + $0x288] sm:$0xff] %v3560
        %3657 = vst [vmem:[%s280 + $0x290] sm:$0xff] %v3561
        %3658 = vst [vmem:[%s280 + $0x298] sm:$0xff] %v3562
        %3659 = vst [vmem:[%s280 + $0x2a0] sm:$0xff] %v3563
        %3660 = vst [vmem:[%s280 + $0x2a8] sm:$0xff] %v3564
        %3661 = vst [vmem:[%s280 + $0x2b0] sm:$0xff] %v3565
        %3662 = vst [vmem:[%s280 + $0x2b8] sm:$0xff] %v3566
        %3663 = vst [vmem:[%s280 + $0x2c0] sm:$0xff] %v3567
        %3664 = vst [vmem:[%s280 + $0x2c8] sm:$0xff] %v3568
        %3665 = vst [vmem:[%s280 + $0x2d0] sm:$0xff] %v3569
        %3666 = vst [vmem:[%s280 + $0x2d8] sm:$0xff] %v3570
        %3667 = vst [vmem:[%s280 + $0x2e0] sm:$0xff] %v3571
        %3668 = vst [vmem:[%s280 + $0x2e8] sm:$0xff] %v3572
        %3669 = vst [vmem:[%s280 + $0x2f0] sm:$0xff] %v3573
        %3670 = vst [vmem:[%s280 + $0x2f8] sm:$0xff] %v3574
        %3671 = vmatprep.subr.mxu0 %v3525
        %3672 = vmatpush1.msra.mxu0 %v3524
        %3673 = vmatprep.subr.mxu0 %v3522
        %3674 = vmatpush1.msra.mxu0 %v3521
        %3675 = vmatprep.subr.mxu0 %v3519
        %3676 = vmatpush1.msra.mxu0 %v3518
        %3677 = vmatprep.subr.mxu0 %v3516
        %3678 = vmatpush1.msra.mxu0 %v3515
        %3679 = vmatprep.subr.mxu0 %v3513
        %3680 = vmatpush1.msra.mxu0 %v3512
        %3681 = vmatprep.subr.mxu0 %v3510
        %3682 = vmatpush1.msra.mxu0 %v3509
        %3683 = vmatprep.subr.mxu0 %v3507
        %3684 = vmatpush1.msra.mxu0 %v3506
        %3685 = vmatprep.subr.mxu0 %v3504
        %3686 = vmatpush1.msra.mxu0 %v3503
        %3687 = vmatprep.subr.mxu0 %v3501
        %3688 = vmatpush1.msra.mxu0 %v3500
        %3689 = vmatprep.subr.mxu0 %v3498
        %3690 = vmatpush1.msra.mxu0 %v3497
        %3691 = vmatprep.subr.mxu0 %v3495
        %3692 = vmatpush1.msra.mxu0 %v3494
        %3693 = vmatprep.subr.mxu0 %v3492
        %3694 = vmatpush1.msra.mxu0 %v3491
        %3695 = vmatprep.subr.mxu0 %v3489
        %3696 = vmatpush1.msra.mxu0 %v3488
        %3697 = vmatprep.subr.mxu0 %v3486
        %3698 = vmatpush1.msra.mxu0 %v3485
        %3699 = vmatprep.subr.mxu0 %v3483
        %3700 = vmatpush1.msra.mxu0 %v3482
        %3701 = vmatprep.subr.mxu0 %v3480
        %3702 = vmatpush1.msra.mxu0 %v3479
        %3703 = vmatprep.subr.mxu0 %v3573
        %3704 = vmatpush2.msra.mxu0 %v3572
        %3705 = vmatprep.subr.mxu0 %v3570
        %3706 = vmatpush2.msra.mxu0 %v3569
        %3707 = vmatprep.subr.mxu0 %v3567
        %3708 = vmatpush2.msra.mxu0 %v3566
        %3709 = vmatprep.subr.mxu0 %v3564
        %3710 = vmatpush2.msra.mxu0 %v3563
        %3711 = vmatprep.subr.mxu0 %v3561
        %3712 = vmatpush2.msra.mxu0 %v3560
        %3713 = vmatprep.subr.mxu0 %v3558
        %3714 = vmatpush2.msra.mxu0 %v3557
        %3715 = vmatprep.subr.mxu0 %v3555
        %3716 = vmatpush2.msra.mxu0 %v3554
        %3717 = vmatprep.subr.mxu0 %v3552
        %3718 = vmatpush2.msra.mxu0 %v3551
        %3719 = vmatprep.subr.mxu0 %v3549
        %3720 = vmatpush2.msra.mxu0 %v3548
        %3721 = vmatprep.subr.mxu0 %v3546
        %3722 = vmatpush2.msra.mxu0 %v3545
        %3723 = vmatprep.subr.mxu0 %v3543
        %3724 = vmatpush2.msra.mxu0 %v3542
        %3725 = vmatprep.subr.mxu0 %v3540
        %3726 = vmatpush2.msra.mxu0 %v3539
        %3727 = vmatprep.subr.mxu0 %v3537
        %3728 = vmatpush2.msra.mxu0 %v3536
        %3729 = vmatprep.subr.mxu0 %v3534
        %3730 = vmatpush2.msra.mxu0 %v3533
        %3731 = vmatprep.subr.mxu0 %v3531
        %3732 = vmatpush2.msra.mxu0 %v3530
        %3733 = vmatprep.subr.mxu0 %v3528
        %3734 = vmatpush2.msra.mxu0 %v3527
        %3735 = vmatprep.mubr.f32.mxu0 %v322
        %3736 = vmatmul.mubr.f32.gmra.mxu0 %v318
        %v3737 = vpop.f32.mrf.mxu0
        %v3738 = vadd.f32 0.0, %v3737
        %v3739 = vpop.f32.mrf.mxu0
        %v3740 = vadd.f32 0.0, %v3739
        %3741 = vdwg.mxu0
        %3742 = vmatprep.subr.mxu0 0.0
        %3743 = vmatpush1.msra.mxu0 %v3526
        %3744 = vmatprep.subr.mxu0 0.0
        %3745 = vmatpush1.msra.mxu0 %v3523
        %3746 = vmatprep.subr.mxu0 0.0
        %3747 = vmatpush1.msra.mxu0 %v3520
        %3748 = vmatprep.subr.mxu0 0.0
        %3749 = vmatpush1.msra.mxu0 %v3517
        %3750 = vmatprep.subr.mxu0 0.0
        %3751 = vmatpush1.msra.mxu0 %v3514
        %3752 = vmatprep.subr.mxu0 0.0
        %3753 = vmatpush1.msra.mxu0 %v3511
        %3754 = vmatprep.subr.mxu0 0.0
        %3755 = vmatpush1.msra.mxu0 %v3508
        %3756 = vmatprep.subr.mxu0 0.0
        %3757 = vmatpush1.msra.mxu0 %v3505
        %3758 = vmatprep.subr.mxu0 0.0
        %3759 = vmatpush1.msra.mxu0 %v3502
        %3760 = vmatprep.subr.mxu0 0.0
        %3761 = vmatpush1.msra.mxu0 %v3499
        %3762 = vmatprep.subr.mxu0 0.0
        %3763 = vmatpush1.msra.mxu0 %v3496
        %3764 = vmatprep.subr.mxu0 0.0
        %3765 = vmatpush1.msra.mxu0 %v3493
        %3766 = vmatprep.subr.mxu0 0.0
        %3767 = vmatpush1.msra.mxu0 %v3490
        %3768 = vmatprep.subr.mxu0 0.0
        %3769 = vmatpush1.msra.mxu0 %v3487
        %3770 = vmatprep.subr.mxu0 0.0
        %3771 = vmatpush1.msra.mxu0 %v3484
        %3772 = vmatprep.subr.mxu0 0.0
        %3773 = vmatpush1.msra.mxu0 %v3481
        %3774 = vmatprep.subr.mxu0 0.0
        %3775 = vmatpush2.msra.mxu0 %v3574
        %3776 = vmatprep.subr.mxu0 0.0
        %3777 = vmatpush2.msra.mxu0 %v3571
        %3778 = vmatprep.subr.mxu0 0.0
        %3779 = vmatpush2.msra.mxu0 %v3568
        %3780 = vmatprep.subr.mxu0 0.0
        %3781 = vmatpush2.msra.mxu0 %v3565
        %3782 = vmatprep.subr.mxu0 0.0
        %3783 = vmatpush2.msra.mxu0 %v3562
        %3784 = vmatprep.subr.mxu0 0.0
        %3785 = vmatpush2.msra.mxu0 %v3559
        %3786 = vmatprep.subr.mxu0 0.0
        %3787 = vmatpush2.msra.mxu0 %v3556
        %3788 = vmatprep.subr.mxu0 0.0
        %3789 = vmatpush2.msra.mxu0 %v3553
        %3790 = vmatprep.subr.mxu0 0.0
        %3791 = vmatpush2.msra.mxu0 %v3550
        %3792 = vmatprep.subr.mxu0 0.0
        %3793 = vmatpush2.msra.mxu0 %v3547
        %3794 = vmatprep.subr.mxu0 0.0
        %3795 = vmatpush2.msra.mxu0 %v3544
        %3796 = vmatprep.subr.mxu0 0.0
        %3797 = vmatpush2.msra.mxu0 %v3541
        %3798 = vmatprep.subr.mxu0 0.0
        %3799 = vmatpush2.msra.mxu0 %v3538
        %3800 = vmatprep.subr.mxu0 0.0
        %3801 = vmatpush2.msra.mxu0 %v3535
        %3802 = vmatprep.subr.mxu0 0.0
        %3803 = vmatpush2.msra.mxu0 %v3532
        %3804 = vmatprep.subr.mxu0 0.0
        %3805 = vmatpush2.msra.mxu0 %v3529
        %3806 = vmatprep.mubr.f32.mxu0 %v322
        %3807 = vmatmul.mubr.f32.gmra.mxu0 %v318
        %v3808 = vpop.f32.mrf.mxu0
        %v3809 = vadd.f32 0.0, %v3808
        %v3810 = vpop.f32.mrf.mxu0
        %3811 = vdwg.mxu0
        %3812 = vst [vmem:[%s273] sm:$0xf] %v3738
        %3813 = vst [vmem:[%s273 + $0x8] sm:$0xf] %v3740
        %3814 = vst [vmem:[%s273 + $0x10] sm:$0xf] %v3809
        %s3815 = scalar_lea.vmem %s233, 8 [#allocation2]
        %v3816 = vld [vmem:[%s3815] sm:$0xff]
        %v3817 = vadd.f32 %v3816, 1e-07
        %v3818 = vmul.f32 %v3817, %v3817
        %v3820 = vcombine.high %v3818, %v3818
        %v3822 = vsel %vm297, %v3818, 0.0
        %v3823 = vrot.slane %v3822, 4
        %v3824 = vadd.f32 %v3822, %v3823
        %v3825 = vrot.slane %v3824, 2
        %v3826 = vadd.f32 %v3824, %v3825
        %v3827 = vrot.slane %v3826, 1
        %v3828 = vadd.f32 %v3826, %v3827
        %v3829 = vsel %vm297, %v3820, 0.0
        %v3830 = vrot.slane %v3829, 4
        %v3831 = vadd.f32 %v3829, %v3830
        %v3832 = vrot.slane %v3831, 2
        %v3833 = vadd.f32 %v3831, %v3832
        %v3834 = vrot.slane %v3833, 1
        %v3835 = vadd.f32 %v3833, %v3834
        %v3836 = vrsqrt.pop %v3828
        %v3837 = vrsqrt.pop %v3835
        %v3840 = vcombine.low %v3836, %v3837
        %v3842 = vmul.f32 %v3817, %v3840
        %s3843 = scalar_lea.vmem %s242, 12 [#allocation5]
        %v3844 = vld [vmem:[%s3843] sm:$0xff]
        %v3845 = vld [vmem:[%s3843 + $0x8] sm:$0xf]
        %v3847 = vcombine.high %v3842, %v3842
        %3849 = vxpose.xlu0.b32.start [1/16] %v3842, 128
        %3850 = vxpose.xlu0.b32.cont [2/16] 0.0, 128
        %3851 = vxpose.xlu0.b32.cont [3/16] 0.0, 128
        %3852 = vxpose.xlu0.b32.cont [4/16] 0.0, 128
        %3853 = vxpose.xlu0.b32.cont [5/16] 0.0, 128
        %3854 = vxpose.xlu0.b32.cont [6/16] 0.0, 128
        %3855 = vxpose.xlu0.b32.cont [7/16] 0.0, 128
        %3856 = vxpose.xlu0.b32.cont [8/16] 0.0, 128
        %3857 = vxpose.xlu0.b32.cont [9/16] 0.0, 128
        %3858 = vxpose.xlu0.b32.cont [10/16] 0.0, 128
        %3859 = vxpose.xlu0.b32.cont [11/16] 0.0, 128
        %3860 = vxpose.xlu0.b32.cont [12/16] 0.0, 128
        %3861 = vxpose.xlu0.b32.cont [13/16] 0.0, 128
        %3862 = vxpose.xlu0.b32.cont [14/16] 0.0, 128
        %3863 = vxpose.xlu0.b32.cont [15/16] 0.0, 128
        %3864 = vxpose.xlu0.b32.end [16/16] 0.0, 128
        %v3865 = vpop.trf.xlu0
        %v3866 = vpop.trf.xlu0
        %v3867 = vpop.trf.xlu0
        %v3868 = vpop.trf.xlu0
        %v3869 = vpop.trf.xlu0
        %v3870 = vpop.trf.xlu0
        %v3871 = vpop.trf.xlu0
        %v3872 = vpop.trf.xlu0
        %v3873 = vpop.trf.xlu0
        %v3874 = vpop.trf.xlu0
        %v3875 = vpop.trf.xlu0
        %v3876 = vpop.trf.xlu0
        %v3877 = vpop.trf.xlu0
        %v3878 = vpop.trf.xlu0
        %v3879 = vpop.trf.xlu0
        %v3880 = vpop.trf.xlu0
        %3881 = vxpose.xlu0.b32.start [1/16] %v3847, 128
        %3882 = vxpose.xlu0.b32.cont [2/16] 0.0, 128
        %3883 = vxpose.xlu0.b32.cont [3/16] 0.0, 128
        %3884 = vxpose.xlu0.b32.cont [4/16] 0.0, 128
        %3885 = vxpose.xlu0.b32.cont [5/16] 0.0, 128
        %3886 = vxpose.xlu0.b32.cont [6/16] 0.0, 128
        %3887 = vxpose.xlu0.b32.cont [7/16] 0.0, 128
        %3888 = vxpose.xlu0.b32.cont [8/16] 0.0, 128
        %3889 = vxpose.xlu0.b32.cont [9/16] 0.0, 128
        %3890 = vxpose.xlu0.b32.cont [10/16] 0.0, 128
        %3891 = vxpose.xlu0.b32.cont [11/16] 0.0, 128
        %3892 = vxpose.xlu0.b32.cont [12/16] 0.0, 128
        %3893 = vxpose.xlu0.b32.cont [13/16] 0.0, 128
        %3894 = vxpose.xlu0.b32.cont [14/16] 0.0, 128
        %3895 = vxpose.xlu0.b32.cont [15/16] 0.0, 128
        %3896 = vxpose.xlu0.b32.end [16/16] 0.0, 128
        %v3897 = vpop.trf.xlu0
        %v3898 = vpop.trf.xlu0
        %v3899 = vpop.trf.xlu0
        %v3900 = vpop.trf.xlu0
        %v3901 = vpop.trf.xlu0
        %v3902 = vpop.trf.xlu0
        %v3903 = vpop.trf.xlu0
        %v3904 = vpop.trf.xlu0
        %v3905 = vpop.trf.xlu0
        %v3906 = vpop.trf.xlu0
        %v3907 = vpop.trf.xlu0
        %v3908 = vpop.trf.xlu0
        %v3909 = vpop.trf.xlu0
        %v3910 = vpop.trf.xlu0
        %v3911 = vpop.trf.xlu0
        %v3912 = vpop.trf.xlu0
        %v3915 = vcombine.high %v3844, %v3844
        %v3917 = vsel %vm391, %v3865, 0
        %v3920 = vsel %vm391, %v3866, 0
        %v3923 = vsel %vm391, %v3867, 0
        %v3926 = vsel %vm391, %v3868, 0
        %v3929 = vsel %vm391, %v3869, 0
        %v3932 = vsel %vm391, %v3870, 0
        %v3935 = vsel %vm391, %v3871, 0
        %v3938 = vsel %vm391, %v3872, 0
        %v3941 = vsel %vm391, %v3873, 0
        %v3944 = vsel %vm391, %v3874, 0
        %v3947 = vsel %vm391, %v3875, 0
        %v3950 = vsel %vm391, %v3876, 0
        %v3953 = vsel %vm391, %v3877, 0
        %v3956 = vsel %vm391, %v3878, 0
        %v3959 = vsel %vm391, %v3879, 0
        %v3962 = vsel %vm391, %v3880, 0
        %v3965 = vsel %vm391, %v3897, 0
        %v3968 = vsel %vm391, %v3898, 0
        %v3971 = vsel %vm391, %v3899, 0
        %v3974 = vsel %vm391, %v3900, 0
        %v3977 = vsel %vm391, %v3901, 0
        %v3980 = vsel %vm391, %v3902, 0
        %v3983 = vsel %vm391, %v3903, 0
        %v3986 = vsel %vm391, %v3904, 0
        %v3989 = vsel %vm391, %v3905, 0
        %v3992 = vsel %vm391, %v3906, 0
        %v3995 = vsel %vm391, %v3907, 0
        %v3998 = vsel %vm391, %v3908, 0
        %v4001 = vsel %vm391, %v3909, 0
        %v4004 = vsel %vm391, %v3910, 0
        %v4007 = vsel %vm391, %v3911, 0
        %v4010 = vsel %vm391, %v3912, 0
        %v4012 = vsel %vm297, %v3844, 0
        %v4014 = vsel %vm297, %v3915, 0
        %v4016 = vsel %vm297, %v3845, 0
        %4018 = vmatprep.subr.mxu0 0.0
        %4019 = vmatpush1.msra.mxu0 0.0
        %4020 = vmatprep.subr.mxu0 0.0
        %4021 = vmatpush1.msra.mxu0 0.0
        %4022 = vmatprep.subr.mxu0 0.0
        %4023 = vmatpush1.msra.mxu0 0.0
        %4024 = vmatprep.subr.mxu0 0.0
        %4025 = vmatpush1.msra.mxu0 0.0
        %4026 = vmatprep.subr.mxu0 0.0
        %4027 = vmatpush1.msra.mxu0 0.0
        %4028 = vmatprep.subr.mxu0 0.0
        %4029 = vmatpush1.msra.mxu0 0.0
        %4030 = vmatprep.subr.mxu0 0.0
        %4031 = vmatpush1.msra.mxu0 0.0
        %4032 = vmatprep.subr.mxu0 0.0
        %4033 = vmatpush1.msra.mxu0 0.0
        %4034 = vmatprep.subr.mxu0 0.0
        %4035 = vmatpush1.msra.mxu0 0.0
        %4036 = vmatprep.subr.mxu0 0.0
        %4037 = vmatpush1.msra.mxu0 0.0
        %4038 = vmatprep.subr.mxu0 0.0
        %4039 = vmatpush1.msra.mxu0 0.0
        %4040 = vmatprep.subr.mxu0 0.0
        %4041 = vmatpush1.msra.mxu0 0.0
        %4042 = vmatprep.subr.mxu0 0.0
        %4043 = vmatpush1.msra.mxu0 0.0
        %4044 = vmatprep.subr.mxu0 0.0
        %4045 = vmatpush1.msra.mxu0 0.0
        %4046 = vmatprep.subr.mxu0 0.0
        %4047 = vmatpush1.msra.mxu0 0.0
        %4048 = vmatprep.subr.mxu0 %v4014
        %4049 = vmatpush1.msra.mxu0 %v4012
        %4050 = vmatprep.subr.mxu0 0.0
        %4051 = vmatpush2.msra.mxu0 0.0
        %4052 = vmatprep.subr.mxu0 0.0
        %4053 = vmatpush2.msra.mxu0 0.0
        %4054 = vmatprep.subr.mxu0 0.0
        %4055 = vmatpush2.msra.mxu0 0.0
        %4056 = vmatprep.subr.mxu0 0.0
        %4057 = vmatpush2.msra.mxu0 0.0
        %4058 = vmatprep.subr.mxu0 0.0
        %4059 = vmatpush2.msra.mxu0 0.0
        %4060 = vmatprep.subr.mxu0 0.0
        %4061 = vmatpush2.msra.mxu0 0.0
        %4062 = vmatprep.subr.mxu0 0.0
        %4063 = vmatpush2.msra.mxu0 0.0
        %4064 = vmatprep.subr.mxu0 0.0
        %4065 = vmatpush2.msra.mxu0 0.0
        %4066 = vmatprep.subr.mxu0 0.0
        %4067 = vmatpush2.msra.mxu0 0.0
        %4068 = vmatprep.subr.mxu0 0.0
        %4069 = vmatpush2.msra.mxu0 0.0
        %4070 = vmatprep.subr.mxu0 0.0
        %4071 = vmatpush2.msra.mxu0 0.0
        %4072 = vmatprep.subr.mxu0 0.0
        %4073 = vmatpush2.msra.mxu0 0.0
        %4074 = vmatprep.subr.mxu0 0.0
        %4075 = vmatpush2.msra.mxu0 0.0
        %4076 = vmatprep.subr.mxu0 0.0
        %4077 = vmatpush2.msra.mxu0 0.0
        %4078 = vmatprep.subr.mxu0 0.0
        %4079 = vmatpush2.msra.mxu0 0.0
        %4080 = vmatprep.subr.mxu0 0.0
        %4081 = vmatpush2.msra.mxu0 0.0
        %4082 = vmatprep.mubr.f32.mxu0 0.0
        %4083 = vmatmul.mubr.f32.gmra.mxu0 %v3917
        %v4084 = vpop.f32.mrf.mxu0
        %v4085 = vadd.f32 0.0, %v4084
        %v4086 = vpop.f32.mrf.mxu0
        %v4087 = vadd.f32 0.0, %v4086
        %4088 = vmatprep.mubr.f32.mxu0 0.0
        %4089 = vmatmul.mubr.f32.gmra.mxu0 %v3920
        %v4090 = vpop.f32.mrf.mxu0
        %v4091 = vadd.f32 0.0, %v4090
        %v4092 = vpop.f32.mrf.mxu0
        %v4093 = vadd.f32 0.0, %v4092
        %4094 = vmatprep.mubr.f32.mxu0 0.0
        %4095 = vmatmul.mubr.f32.gmra.mxu0 %v3923
        %v4096 = vpop.f32.mrf.mxu0
        %v4097 = vadd.f32 0.0, %v4096
        %v4098 = vpop.f32.mrf.mxu0
        %v4099 = vadd.f32 0.0, %v4098
        %4100 = vmatprep.mubr.f32.mxu0 0.0
        %4101 = vmatmul.mubr.f32.gmra.mxu0 %v3926
        %v4102 = vpop.f32.mrf.mxu0
        %v4103 = vadd.f32 0.0, %v4102
        %v4104 = vpop.f32.mrf.mxu0
        %v4105 = vadd.f32 0.0, %v4104
        %4106 = vmatprep.mubr.f32.mxu0 0.0
        %4107 = vmatmul.mubr.f32.gmra.mxu0 %v3929
        %v4108 = vpop.f32.mrf.mxu0
        %v4109 = vadd.f32 0.0, %v4108
        %v4110 = vpop.f32.mrf.mxu0
        %v4111 = vadd.f32 0.0, %v4110
        %4112 = vmatprep.mubr.f32.mxu0 0.0
        %4113 = vmatmul.mubr.f32.gmra.mxu0 %v3932
        %v4114 = vpop.f32.mrf.mxu0
        %v4115 = vadd.f32 0.0, %v4114
        %v4116 = vpop.f32.mrf.mxu0
        %v4117 = vadd.f32 0.0, %v4116
        %4118 = vmatprep.mubr.f32.mxu0 0.0
        %4119 = vmatmul.mubr.f32.gmra.mxu0 %v3935
        %v4120 = vpop.f32.mrf.mxu0
        %v4121 = vadd.f32 0.0, %v4120
        %v4122 = vpop.f32.mrf.mxu0
        %v4123 = vadd.f32 0.0, %v4122
        %4124 = vmatprep.mubr.f32.mxu0 0.0
        %4125 = vmatmul.mubr.f32.gmra.mxu0 %v3938
        %v4126 = vpop.f32.mrf.mxu0
        %v4127 = vadd.f32 0.0, %v4126
        %v4128 = vpop.f32.mrf.mxu0
        %v4129 = vadd.f32 0.0, %v4128
        %4130 = vmatprep.mubr.f32.mxu0 0.0
        %4131 = vmatmul.mubr.f32.gmra.mxu0 %v3941
        %v4132 = vpop.f32.mrf.mxu0
        %v4133 = vadd.f32 0.0, %v4132
        %v4134 = vpop.f32.mrf.mxu0
        %v4135 = vadd.f32 0.0, %v4134
        %4136 = vmatprep.mubr.f32.mxu0 0.0
        %4137 = vmatmul.mubr.f32.gmra.mxu0 %v3944
        %v4138 = vpop.f32.mrf.mxu0
        %v4139 = vadd.f32 0.0, %v4138
        %v4140 = vpop.f32.mrf.mxu0
        %v4141 = vadd.f32 0.0, %v4140
        %4142 = vmatprep.mubr.f32.mxu0 0.0
        %4143 = vmatmul.mubr.f32.gmra.mxu0 %v3947
        %v4144 = vpop.f32.mrf.mxu0
        %v4145 = vadd.f32 0.0, %v4144
        %v4146 = vpop.f32.mrf.mxu0
        %v4147 = vadd.f32 0.0, %v4146
        %4148 = vmatprep.mubr.f32.mxu0 0.0
        %4149 = vmatmul.mubr.f32.gmra.mxu0 %v3950
        %v4150 = vpop.f32.mrf.mxu0
        %v4151 = vadd.f32 0.0, %v4150
        %v4152 = vpop.f32.mrf.mxu0
        %v4153 = vadd.f32 0.0, %v4152
        %4154 = vmatprep.mubr.f32.mxu0 0.0
        %4155 = vmatmul.mubr.f32.gmra.mxu0 %v3953
        %v4156 = vpop.f32.mrf.mxu0
        %v4157 = vadd.f32 0.0, %v4156
        %v4158 = vpop.f32.mrf.mxu0
        %v4159 = vadd.f32 0.0, %v4158
        %4160 = vmatprep.mubr.f32.mxu0 0.0
        %4161 = vmatmul.mubr.f32.gmra.mxu0 %v3956
        %v4162 = vpop.f32.mrf.mxu0
        %v4163 = vadd.f32 0.0, %v4162
        %v4164 = vpop.f32.mrf.mxu0
        %v4165 = vadd.f32 0.0, %v4164
        %4166 = vmatprep.mubr.f32.mxu0 0.0
        %4167 = vmatmul.mubr.f32.gmra.mxu0 %v3959
        %v4168 = vpop.f32.mrf.mxu0
        %v4169 = vadd.f32 0.0, %v4168
        %v4170 = vpop.f32.mrf.mxu0
        %v4171 = vadd.f32 0.0, %v4170
        %4172 = vmatprep.mubr.f32.mxu0 0.0
        %4173 = vmatmul.mubr.f32.gmra.mxu0 %v3962
        %v4174 = vpop.f32.mrf.mxu0
        %v4175 = vadd.f32 0.0, %v4174
        %v4176 = vpop.f32.mrf.mxu0
        %v4177 = vadd.f32 0.0, %v4176
        %4178 = vmatprep.mubr.f32.mxu0 0.0
        %4179 = vmatmul.mubr.f32.gmra.mxu0 %v3965
        %v4180 = vpop.f32.mrf.mxu0
        %v4181 = vadd.f32 0.0, %v4180
        %v4182 = vpop.f32.mrf.mxu0
        %v4183 = vadd.f32 0.0, %v4182
        %4184 = vmatprep.mubr.f32.mxu0 0.0
        %4185 = vmatmul.mubr.f32.gmra.mxu0 %v3968
        %v4186 = vpop.f32.mrf.mxu0
        %v4187 = vadd.f32 0.0, %v4186
        %v4188 = vpop.f32.mrf.mxu0
        %v4189 = vadd.f32 0.0, %v4188
        %4190 = vmatprep.mubr.f32.mxu0 0.0
        %4191 = vmatmul.mubr.f32.gmra.mxu0 %v3971
        %v4192 = vpop.f32.mrf.mxu0
        %v4193 = vadd.f32 0.0, %v4192
        %v4194 = vpop.f32.mrf.mxu0
        %v4195 = vadd.f32 0.0, %v4194
        %4196 = vmatprep.mubr.f32.mxu0 0.0
        %4197 = vmatmul.mubr.f32.gmra.mxu0 %v3974
        %v4198 = vpop.f32.mrf.mxu0
        %v4199 = vadd.f32 0.0, %v4198
        %v4200 = vpop.f32.mrf.mxu0
        %v4201 = vadd.f32 0.0, %v4200
        %4202 = vmatprep.mubr.f32.mxu0 0.0
        %4203 = vmatmul.mubr.f32.gmra.mxu0 %v3977
        %v4204 = vpop.f32.mrf.mxu0
        %v4205 = vadd.f32 0.0, %v4204
        %v4206 = vpop.f32.mrf.mxu0
        %v4207 = vadd.f32 0.0, %v4206
        %4208 = vmatprep.mubr.f32.mxu0 0.0
        %4209 = vmatmul.mubr.f32.gmra.mxu0 %v3980
        %v4210 = vpop.f32.mrf.mxu0
        %v4211 = vadd.f32 0.0, %v4210
        %v4212 = vpop.f32.mrf.mxu0
        %v4213 = vadd.f32 0.0, %v4212
        %4214 = vmatprep.mubr.f32.mxu0 0.0
        %4215 = vmatmul.mubr.f32.gmra.mxu0 %v3983
        %v4216 = vpop.f32.mrf.mxu0
        %v4217 = vadd.f32 0.0, %v4216
        %v4218 = vpop.f32.mrf.mxu0
        %v4219 = vadd.f32 0.0, %v4218
        %4220 = vmatprep.mubr.f32.mxu0 0.0
        %4221 = vmatmul.mubr.f32.gmra.mxu0 %v3986
        %v4222 = vpop.f32.mrf.mxu0
        %v4223 = vadd.f32 0.0, %v4222
        %v4224 = vpop.f32.mrf.mxu0
        %v4225 = vadd.f32 0.0, %v4224
        %4226 = vmatprep.mubr.f32.mxu0 0.0
        %4227 = vmatmul.mubr.f32.gmra.mxu0 %v3989
        %v4228 = vpop.f32.mrf.mxu0
        %v4229 = vadd.f32 0.0, %v4228
        %v4230 = vpop.f32.mrf.mxu0
        %v4231 = vadd.f32 0.0, %v4230
        %4232 = vmatprep.mubr.f32.mxu0 0.0
        %4233 = vmatmul.mubr.f32.gmra.mxu0 %v3992
        %v4234 = vpop.f32.mrf.mxu0
        %v4235 = vadd.f32 0.0, %v4234
        %v4236 = vpop.f32.mrf.mxu0
        %v4237 = vadd.f32 0.0, %v4236
        %4238 = vmatprep.mubr.f32.mxu0 0.0
        %4239 = vmatmul.mubr.f32.gmra.mxu0 %v3995
        %v4240 = vpop.f32.mrf.mxu0
        %v4241 = vadd.f32 0.0, %v4240
        %v4242 = vpop.f32.mrf.mxu0
        %v4243 = vadd.f32 0.0, %v4242
        %4244 = vmatprep.mubr.f32.mxu0 0.0
        %4245 = vmatmul.mubr.f32.gmra.mxu0 %v3998
        %v4246 = vpop.f32.mrf.mxu0
        %v4247 = vadd.f32 0.0, %v4246
        %v4248 = vpop.f32.mrf.mxu0
        %v4249 = vadd.f32 0.0, %v4248
        %4250 = vmatprep.mubr.f32.mxu0 0.0
        %4251 = vmatmul.mubr.f32.gmra.mxu0 %v4001
        %v4252 = vpop.f32.mrf.mxu0
        %v4253 = vadd.f32 0.0, %v4252
        %v4254 = vpop.f32.mrf.mxu0
        %v4255 = vadd.f32 0.0, %v4254
        %4256 = vmatprep.mubr.f32.mxu0 0.0
        %4257 = vmatmul.mubr.f32.gmra.mxu0 %v4004
        %v4258 = vpop.f32.mrf.mxu0
        %v4259 = vadd.f32 0.0, %v4258
        %v4260 = vpop.f32.mrf.mxu0
        %v4261 = vadd.f32 0.0, %v4260
        %4262 = vmatprep.mubr.f32.mxu0 0.0
        %4263 = vmatmul.mubr.f32.gmra.mxu0 %v4007
        %v4264 = vpop.f32.mrf.mxu0
        %v4265 = vadd.f32 0.0, %v4264
        %v4266 = vpop.f32.mrf.mxu0
        %v4267 = vadd.f32 0.0, %v4266
        %4268 = vmatprep.mubr.f32.mxu0 0.0
        %4269 = vmatmul.mubr.f32.gmra.mxu0 %v4010
        %v4270 = vpop.f32.mrf.mxu0
        %v4271 = vadd.f32 0.0, %v4270
        %v4272 = vpop.f32.mrf.mxu0
        %v4273 = vadd.f32 0.0, %v4272
        %4274 = vdwg.mxu0
        %4275 = vmatprep.subr.mxu0 0.0
        %4276 = vmatpush1.msra.mxu0 0.0
        %4277 = vmatprep.subr.mxu0 0.0
        %4278 = vmatpush1.msra.mxu0 0.0
        %4279 = vmatprep.subr.mxu0 0.0
        %4280 = vmatpush1.msra.mxu0 0.0
        %4281 = vmatprep.subr.mxu0 0.0
        %4282 = vmatpush1.msra.mxu0 0.0
        %4283 = vmatprep.subr.mxu0 0.0
        %4284 = vmatpush1.msra.mxu0 0.0
        %4285 = vmatprep.subr.mxu0 0.0
        %4286 = vmatpush1.msra.mxu0 0.0
        %4287 = vmatprep.subr.mxu0 0.0
        %4288 = vmatpush1.msra.mxu0 0.0
        %4289 = vmatprep.subr.mxu0 0.0
        %4290 = vmatpush1.msra.mxu0 0.0
        %4291 = vmatprep.subr.mxu0 0.0
        %4292 = vmatpush1.msra.mxu0 0.0
        %4293 = vmatprep.subr.mxu0 0.0
        %4294 = vmatpush1.msra.mxu0 0.0
        %4295 = vmatprep.subr.mxu0 0.0
        %4296 = vmatpush1.msra.mxu0 0.0
        %4297 = vmatprep.subr.mxu0 0.0
        %4298 = vmatpush1.msra.mxu0 0.0
        %4299 = vmatprep.subr.mxu0 0.0
        %4300 = vmatpush1.msra.mxu0 0.0
        %4301 = vmatprep.subr.mxu0 0.0
        %4302 = vmatpush1.msra.mxu0 0.0
        %4303 = vmatprep.subr.mxu0 0.0
        %4304 = vmatpush1.msra.mxu0 0.0
        %4305 = vmatprep.subr.mxu0 0.0
        %4306 = vmatpush1.msra.mxu0 %v4016
        %4307 = vmatprep.subr.mxu0 0.0
        %4308 = vmatpush2.msra.mxu0 0.0
        %4309 = vmatprep.subr.mxu0 0.0
        %4310 = vmatpush2.msra.mxu0 0.0
        %4311 = vmatprep.subr.mxu0 0.0
        %4312 = vmatpush2.msra.mxu0 0.0
        %4313 = vmatprep.subr.mxu0 0.0
        %4314 = vmatpush2.msra.mxu0 0.0
        %4315 = vmatprep.subr.mxu0 0.0
        %4316 = vmatpush2.msra.mxu0 0.0
        %4317 = vmatprep.subr.mxu0 0.0
        %4318 = vmatpush2.msra.mxu0 0.0
        %4319 = vmatprep.subr.mxu0 0.0
        %4320 = vmatpush2.msra.mxu0 0.0
        %4321 = vmatprep.subr.mxu0 0.0
        %4322 = vmatpush2.msra.mxu0 0.0
        %4323 = vmatprep.subr.mxu0 0.0
        %4324 = vmatpush2.msra.mxu0 0.0
        %4325 = vmatprep.subr.mxu0 0.0
        %4326 = vmatpush2.msra.mxu0 0.0
        %4327 = vmatprep.subr.mxu0 0.0
        %4328 = vmatpush2.msra.mxu0 0.0
        %4329 = vmatprep.subr.mxu0 0.0
        %4330 = vmatpush2.msra.mxu0 0.0
        %4331 = vmatprep.subr.mxu0 0.0
        %4332 = vmatpush2.msra.mxu0 0.0
        %4333 = vmatprep.subr.mxu0 0.0
        %4334 = vmatpush2.msra.mxu0 0.0
        %4335 = vmatprep.subr.mxu0 0.0
        %4336 = vmatpush2.msra.mxu0 0.0
        %4337 = vmatprep.subr.mxu0 0.0
        %4338 = vmatpush2.msra.mxu0 0.0
        %4339 = vmatprep.mubr.f32.mxu0 0.0
        %4340 = vmatmul.mubr.f32.gmra.mxu0 %v3917
        %v4341 = vpop.f32.mrf.mxu0
        %v4342 = vadd.f32 0.0, %v4341
        %v4343 = vpop.f32.mrf.mxu0
        %4344 = vmatprep.mubr.f32.mxu0 0.0
        %4345 = vmatmul.mubr.f32.gmra.mxu0 %v3920
        %v4346 = vpop.f32.mrf.mxu0
        %v4347 = vadd.f32 0.0, %v4346
        %v4348 = vpop.f32.mrf.mxu0
        %4349 = vmatprep.mubr.f32.mxu0 0.0
        %4350 = vmatmul.mubr.f32.gmra.mxu0 %v3923
        %v4351 = vpop.f32.mrf.mxu0
        %v4352 = vadd.f32 0.0, %v4351
        %v4353 = vpop.f32.mrf.mxu0
        %4354 = vmatprep.mubr.f32.mxu0 0.0
        %4355 = vmatmul.mubr.f32.gmra.mxu0 %v3926
        %v4356 = vpop.f32.mrf.mxu0
        %v4357 = vadd.f32 0.0, %v4356
        %v4358 = vpop.f32.mrf.mxu0
        %4359 = vmatprep.mubr.f32.mxu0 0.0
        %4360 = vmatmul.mubr.f32.gmra.mxu0 %v3929
        %v4361 = vpop.f32.mrf.mxu0
        %v4362 = vadd.f32 0.0, %v4361
        %v4363 = vpop.f32.mrf.mxu0
        %4364 = vmatprep.mubr.f32.mxu0 0.0
        %4365 = vmatmul.mubr.f32.gmra.mxu0 %v3932
        %v4366 = vpop.f32.mrf.mxu0
        %v4367 = vadd.f32 0.0, %v4366
        %v4368 = vpop.f32.mrf.mxu0
        %4369 = vmatprep.mubr.f32.mxu0 0.0
        %4370 = vmatmul.mubr.f32.gmra.mxu0 %v3935
        %v4371 = vpop.f32.mrf.mxu0
        %v4372 = vadd.f32 0.0, %v4371
        %v4373 = vpop.f32.mrf.mxu0
        %4374 = vmatprep.mubr.f32.mxu0 0.0
        %4375 = vmatmul.mubr.f32.gmra.mxu0 %v3938
        %v4376 = vpop.f32.mrf.mxu0
        %v4377 = vadd.f32 0.0, %v4376
        %v4378 = vpop.f32.mrf.mxu0
        %4379 = vmatprep.mubr.f32.mxu0 0.0
        %4380 = vmatmul.mubr.f32.gmra.mxu0 %v3941
        %v4381 = vpop.f32.mrf.mxu0
        %v4382 = vadd.f32 0.0, %v4381
        %v4383 = vpop.f32.mrf.mxu0
        %4384 = vmatprep.mubr.f32.mxu0 0.0
        %4385 = vmatmul.mubr.f32.gmra.mxu0 %v3944
        %v4386 = vpop.f32.mrf.mxu0
        %v4387 = vadd.f32 0.0, %v4386
        %v4388 = vpop.f32.mrf.mxu0
        %4389 = vmatprep.mubr.f32.mxu0 0.0
        %4390 = vmatmul.mubr.f32.gmra.mxu0 %v3947
        %v4391 = vpop.f32.mrf.mxu0
        %v4392 = vadd.f32 0.0, %v4391
        %v4393 = vpop.f32.mrf.mxu0
        %4394 = vmatprep.mubr.f32.mxu0 0.0
        %4395 = vmatmul.mubr.f32.gmra.mxu0 %v3950
        %v4396 = vpop.f32.mrf.mxu0
        %v4397 = vadd.f32 0.0, %v4396
        %v4398 = vpop.f32.mrf.mxu0
        %4399 = vmatprep.mubr.f32.mxu0 0.0
        %4400 = vmatmul.mubr.f32.gmra.mxu0 %v3953
        %v4401 = vpop.f32.mrf.mxu0
        %v4402 = vadd.f32 0.0, %v4401
        %v4403 = vpop.f32.mrf.mxu0
        %4404 = vmatprep.mubr.f32.mxu0 0.0
        %4405 = vmatmul.mubr.f32.gmra.mxu0 %v3956
        %v4406 = vpop.f32.mrf.mxu0
        %v4407 = vadd.f32 0.0, %v4406
        %v4408 = vpop.f32.mrf.mxu0
        %4409 = vmatprep.mubr.f32.mxu0 0.0
        %4410 = vmatmul.mubr.f32.gmra.mxu0 %v3959
        %v4411 = vpop.f32.mrf.mxu0
        %v4412 = vadd.f32 0.0, %v4411
        %v4413 = vpop.f32.mrf.mxu0
        %4414 = vmatprep.mubr.f32.mxu0 0.0
        %4415 = vmatmul.mubr.f32.gmra.mxu0 %v3962
        %v4416 = vpop.f32.mrf.mxu0
        %v4417 = vadd.f32 0.0, %v4416
        %v4418 = vpop.f32.mrf.mxu0
        %4419 = vmatprep.mubr.f32.mxu0 0.0
        %4420 = vmatmul.mubr.f32.gmra.mxu0 %v3965
        %v4421 = vpop.f32.mrf.mxu0
        %v4422 = vadd.f32 0.0, %v4421
        %v4423 = vpop.f32.mrf.mxu0
        %4424 = vmatprep.mubr.f32.mxu0 0.0
        %4425 = vmatmul.mubr.f32.gmra.mxu0 %v3968
        %v4426 = vpop.f32.mrf.mxu0
        %v4427 = vadd.f32 0.0, %v4426
        %v4428 = vpop.f32.mrf.mxu0
        %4429 = vmatprep.mubr.f32.mxu0 0.0
        %4430 = vmatmul.mubr.f32.gmra.mxu0 %v3971
        %v4431 = vpop.f32.mrf.mxu0
        %v4432 = vadd.f32 0.0, %v4431
        %v4433 = vpop.f32.mrf.mxu0
        %4434 = vmatprep.mubr.f32.mxu0 0.0
        %4435 = vmatmul.mubr.f32.gmra.mxu0 %v3974
        %v4436 = vpop.f32.mrf.mxu0
        %v4437 = vadd.f32 0.0, %v4436
        %v4438 = vpop.f32.mrf.mxu0
        %4439 = vmatprep.mubr.f32.mxu0 0.0
        %4440 = vmatmul.mubr.f32.gmra.mxu0 %v3977
        %v4441 = vpop.f32.mrf.mxu0
        %v4442 = vadd.f32 0.0, %v4441
        %v4443 = vpop.f32.mrf.mxu0
        %4444 = vmatprep.mubr.f32.mxu0 0.0
        %4445 = vmatmul.mubr.f32.gmra.mxu0 %v3980
        %v4446 = vpop.f32.mrf.mxu0
        %v4447 = vadd.f32 0.0, %v4446
        %v4448 = vpop.f32.mrf.mxu0
        %4449 = vmatprep.mubr.f32.mxu0 0.0
        %4450 = vmatmul.mubr.f32.gmra.mxu0 %v3983
        %v4451 = vpop.f32.mrf.mxu0
        %v4452 = vadd.f32 0.0, %v4451
        %v4453 = vpop.f32.mrf.mxu0
        %4454 = vmatprep.mubr.f32.mxu0 0.0
        %4455 = vmatmul.mubr.f32.gmra.mxu0 %v3986
        %v4456 = vpop.f32.mrf.mxu0
        %v4457 = vadd.f32 0.0, %v4456
        %v4458 = vpop.f32.mrf.mxu0
        %4459 = vmatprep.mubr.f32.mxu0 0.0
        %4460 = vmatmul.mubr.f32.gmra.mxu0 %v3989
        %v4461 = vpop.f32.mrf.mxu0
        %v4462 = vadd.f32 0.0, %v4461
        %v4463 = vpop.f32.mrf.mxu0
        %4464 = vmatprep.mubr.f32.mxu0 0.0
        %4465 = vmatmul.mubr.f32.gmra.mxu0 %v3992
        %v4466 = vpop.f32.mrf.mxu0
        %v4467 = vadd.f32 0.0, %v4466
        %v4468 = vpop.f32.mrf.mxu0
        %4469 = vmatprep.mubr.f32.mxu0 0.0
        %4470 = vmatmul.mubr.f32.gmra.mxu0 %v3995
        %v4471 = vpop.f32.mrf.mxu0
        %v4472 = vadd.f32 0.0, %v4471
        %v4473 = vpop.f32.mrf.mxu0
        %4474 = vmatprep.mubr.f32.mxu0 0.0
        %4475 = vmatmul.mubr.f32.gmra.mxu0 %v3998
        %v4476 = vpop.f32.mrf.mxu0
        %v4477 = vadd.f32 0.0, %v4476
        %v4478 = vpop.f32.mrf.mxu0
        %4479 = vmatprep.mubr.f32.mxu0 0.0
        %4480 = vmatmul.mubr.f32.gmra.mxu0 %v4001
        %v4481 = vpop.f32.mrf.mxu0
        %v4482 = vadd.f32 0.0, %v4481
        %v4483 = vpop.f32.mrf.mxu0
        %4484 = vmatprep.mubr.f32.mxu0 0.0
        %4485 = vmatmul.mubr.f32.gmra.mxu0 %v4004
        %v4486 = vpop.f32.mrf.mxu0
        %v4487 = vadd.f32 0.0, %v4486
        %v4488 = vpop.f32.mrf.mxu0
        %4489 = vmatprep.mubr.f32.mxu0 0.0
        %4490 = vmatmul.mubr.f32.gmra.mxu0 %v4007
        %v4491 = vpop.f32.mrf.mxu0
        %v4492 = vadd.f32 0.0, %v4491
        %v4493 = vpop.f32.mrf.mxu0
        %4494 = vmatprep.mubr.f32.mxu0 0.0
        %4495 = vmatmul.mubr.f32.gmra.mxu0 %v4010
        %v4496 = vpop.f32.mrf.mxu0
        %v4497 = vadd.f32 0.0, %v4496
        %v4498 = vpop.f32.mrf.mxu0
        %4499 = vdwg.mxu0
        %4500 = vrot.lane.b32.xlu0 %v4085, 1
        %v4501 = vpop.permute.xlu0 %4500
        %4502 = vrot.lane.b32.xlu0 %v4091, 1
        %v4503 = vpop.permute.xlu0 %4502
        %4504 = vrot.lane.b32.xlu0 %v4097, 1
        %v4505 = vpop.permute.xlu0 %4504
        %4506 = vrot.lane.b32.xlu0 %v4103, 1
        %v4507 = vpop.permute.xlu0 %4506
        %4508 = vrot.lane.b32.xlu0 %v4109, 1
        %v4509 = vpop.permute.xlu0 %4508
        %4510 = vrot.lane.b32.xlu0 %v4115, 1
        %v4511 = vpop.permute.xlu0 %4510
        %4512 = vrot.lane.b32.xlu0 %v4121, 1
        %v4513 = vpop.permute.xlu0 %4512
        %4514 = vrot.lane.b32.xlu0 %v4127, 1
        %v4515 = vpop.permute.xlu0 %4514
        %4516 = vrot.lane.b32.xlu0 %v4133, 1
        %v4517 = vpop.permute.xlu0 %4516
        %4518 = vrot.lane.b32.xlu0 %v4139, 1
        %v4519 = vpop.permute.xlu0 %4518
        %4520 = vrot.lane.b32.xlu0 %v4145, 1
        %v4521 = vpop.permute.xlu0 %4520
        %4522 = vrot.lane.b32.xlu0 %v4151, 1
        %v4523 = vpop.permute.xlu0 %4522
        %4524 = vrot.lane.b32.xlu0 %v4157, 1
        %v4525 = vpop.permute.xlu0 %4524
        %4526 = vrot.lane.b32.xlu0 %v4163, 1
        %v4527 = vpop.permute.xlu0 %4526
        %4528 = vrot.lane.b32.xlu0 %v4169, 1
        %v4529 = vpop.permute.xlu0 %4528
        %4530 = vrot.lane.b32.xlu0 %v4175, 1
        %v4531 = vpop.permute.xlu0 %4530
        %4532 = vrot.lane.b32.xlu0 %v4181, 1
        %v4533 = vpop.permute.xlu0 %4532
        %4534 = vrot.lane.b32.xlu0 %v4187, 1
        %v4535 = vpop.permute.xlu0 %4534
        %4536 = vrot.lane.b32.xlu0 %v4193, 1
        %v4537 = vpop.permute.xlu0 %4536
        %4538 = vrot.lane.b32.xlu0 %v4199, 1
        %v4539 = vpop.permute.xlu0 %4538
        %4540 = vrot.lane.b32.xlu0 %v4205, 1
        %v4541 = vpop.permute.xlu0 %4540
        %4542 = vrot.lane.b32.xlu0 %v4211, 1
        %v4543 = vpop.permute.xlu0 %4542
        %4544 = vrot.lane.b32.xlu0 %v4217, 1
        %v4545 = vpop.permute.xlu0 %4544
        %4546 = vrot.lane.b32.xlu0 %v4223, 1
        %v4547 = vpop.permute.xlu0 %4546
        %4548 = vrot.lane.b32.xlu0 %v4229, 1
        %v4549 = vpop.permute.xlu0 %4548
        %4550 = vrot.lane.b32.xlu0 %v4235, 1
        %v4551 = vpop.permute.xlu0 %4550
        %4552 = vrot.lane.b32.xlu0 %v4241, 1
        %v4553 = vpop.permute.xlu0 %4552
        %4554 = vrot.lane.b32.xlu0 %v4247, 1
        %v4555 = vpop.permute.xlu0 %4554
        %4556 = vrot.lane.b32.xlu0 %v4253, 1
        %v4557 = vpop.permute.xlu0 %4556
        %4558 = vrot.lane.b32.xlu0 %v4259, 1
        %v4559 = vpop.permute.xlu0 %4558
        %4560 = vrot.lane.b32.xlu0 %v4265, 1
        %v4561 = vpop.permute.xlu0 %4560
        %4562 = vrot.lane.b32.xlu0 %v4271, 1
        %v4563 = vpop.permute.xlu0 %4562
        %4564 = vrot.lane.b32.xlu0 %v4087, 1
        %v4565 = vpop.permute.xlu0 %4564
        %4566 = vrot.lane.b32.xlu0 %v4093, 1
        %v4567 = vpop.permute.xlu0 %4566
        %4568 = vrot.lane.b32.xlu0 %v4099, 1
        %v4569 = vpop.permute.xlu0 %4568
        %4570 = vrot.lane.b32.xlu0 %v4105, 1
        %v4571 = vpop.permute.xlu0 %4570
        %4572 = vrot.lane.b32.xlu0 %v4111, 1
        %v4573 = vpop.permute.xlu0 %4572
        %4574 = vrot.lane.b32.xlu0 %v4117, 1
        %v4575 = vpop.permute.xlu0 %4574
        %4576 = vrot.lane.b32.xlu0 %v4123, 1
        %v4577 = vpop.permute.xlu0 %4576
        %4578 = vrot.lane.b32.xlu0 %v4129, 1
        %v4579 = vpop.permute.xlu0 %4578
        %4580 = vrot.lane.b32.xlu0 %v4135, 1
        %v4581 = vpop.permute.xlu0 %4580
        %4582 = vrot.lane.b32.xlu0 %v4141, 1
        %v4583 = vpop.permute.xlu0 %4582
        %4584 = vrot.lane.b32.xlu0 %v4147, 1
        %v4585 = vpop.permute.xlu0 %4584
        %4586 = vrot.lane.b32.xlu0 %v4153, 1
        %v4587 = vpop.permute.xlu0 %4586
        %4588 = vrot.lane.b32.xlu0 %v4159, 1
        %v4589 = vpop.permute.xlu0 %4588
        %4590 = vrot.lane.b32.xlu0 %v4165, 1
        %v4591 = vpop.permute.xlu0 %4590
        %4592 = vrot.lane.b32.xlu0 %v4171, 1
        %v4593 = vpop.permute.xlu0 %4592
        %4594 = vrot.lane.b32.xlu0 %v4177, 1
        %v4595 = vpop.permute.xlu0 %4594
        %4596 = vrot.lane.b32.xlu0 %v4183, 1
        %v4597 = vpop.permute.xlu0 %4596
        %4598 = vrot.lane.b32.xlu0 %v4189, 1
        %v4599 = vpop.permute.xlu0 %4598
        %4600 = vrot.lane.b32.xlu0 %v4195, 1
        %v4601 = vpop.permute.xlu0 %4600
        %4602 = vrot.lane.b32.xlu0 %v4201, 1
        %v4603 = vpop.permute.xlu0 %4602
        %4604 = vrot.lane.b32.xlu0 %v4207, 1
        %v4605 = vpop.permute.xlu0 %4604
        %4606 = vrot.lane.b32.xlu0 %v4213, 1
        %v4607 = vpop.permute.xlu0 %4606
        %4608 = vrot.lane.b32.xlu0 %v4219, 1
        %v4609 = vpop.permute.xlu0 %4608
        %4610 = vrot.lane.b32.xlu0 %v4225, 1
        %v4611 = vpop.permute.xlu0 %4610
        %4612 = vrot.lane.b32.xlu0 %v4231, 1
        %v4613 = vpop.permute.xlu0 %4612
        %4614 = vrot.lane.b32.xlu0 %v4237, 1
        %v4615 = vpop.permute.xlu0 %4614
        %4616 = vrot.lane.b32.xlu0 %v4243, 1
        %v4617 = vpop.permute.xlu0 %4616
        %4618 = vrot.lane.b32.xlu0 %v4249, 1
        %v4619 = vpop.permute.xlu0 %4618
        %4620 = vrot.lane.b32.xlu0 %v4255, 1
        %v4621 = vpop.permute.xlu0 %4620
        %4622 = vrot.lane.b32.xlu0 %v4261, 1
        %v4623 = vpop.permute.xlu0 %4622
        %4624 = vrot.lane.b32.xlu0 %v4267, 1
        %v4625 = vpop.permute.xlu0 %4624
        %4626 = vrot.lane.b32.xlu0 %v4273, 1
        %v4627 = vpop.permute.xlu0 %4626
        %4628 = vrot.lane.b32.xlu0 %v4342, 1
        %v4629 = vpop.permute.xlu0 %4628
        %4630 = vrot.lane.b32.xlu0 %v4347, 1
        %v4631 = vpop.permute.xlu0 %4630
        %4632 = vrot.lane.b32.xlu0 %v4352, 1
        %v4633 = vpop.permute.xlu0 %4632
        %4634 = vrot.lane.b32.xlu0 %v4357, 1
        %v4635 = vpop.permute.xlu0 %4634
        %4636 = vrot.lane.b32.xlu0 %v4362, 1
        %v4637 = vpop.permute.xlu0 %4636
        %4638 = vrot.lane.b32.xlu0 %v4367, 1
        %v4639 = vpop.permute.xlu0 %4638
        %4640 = vrot.lane.b32.xlu0 %v4372, 1
        %v4641 = vpop.permute.xlu0 %4640
        %4642 = vrot.lane.b32.xlu0 %v4377, 1
        %v4643 = vpop.permute.xlu0 %4642
        %4644 = vrot.lane.b32.xlu0 %v4382, 1
        %v4645 = vpop.permute.xlu0 %4644
        %4646 = vrot.lane.b32.xlu0 %v4387, 1
        %v4647 = vpop.permute.xlu0 %4646
        %4648 = vrot.lane.b32.xlu0 %v4392, 1
        %v4649 = vpop.permute.xlu0 %4648
        %4650 = vrot.lane.b32.xlu0 %v4397, 1
        %v4651 = vpop.permute.xlu0 %4650
        %4652 = vrot.lane.b32.xlu0 %v4402, 1
        %v4653 = vpop.permute.xlu0 %4652
        %4654 = vrot.lane.b32.xlu0 %v4407, 1
        %v4655 = vpop.permute.xlu0 %4654
        %4656 = vrot.lane.b32.xlu0 %v4412, 1
        %v4657 = vpop.permute.xlu0 %4656
        %4658 = vrot.lane.b32.xlu0 %v4417, 1
        %v4659 = vpop.permute.xlu0 %4658
        %4660 = vrot.lane.b32.xlu0 %v4422, 1
        %v4661 = vpop.permute.xlu0 %4660
        %4662 = vrot.lane.b32.xlu0 %v4427, 1
        %v4663 = vpop.permute.xlu0 %4662
        %4664 = vrot.lane.b32.xlu0 %v4432, 1
        %v4665 = vpop.permute.xlu0 %4664
        %4666 = vrot.lane.b32.xlu0 %v4437, 1
        %v4667 = vpop.permute.xlu0 %4666
        %4668 = vrot.lane.b32.xlu0 %v4442, 1
        %v4669 = vpop.permute.xlu0 %4668
        %4670 = vrot.lane.b32.xlu0 %v4447, 1
        %v4671 = vpop.permute.xlu0 %4670
        %4672 = vrot.lane.b32.xlu0 %v4452, 1
        %v4673 = vpop.permute.xlu0 %4672
        %4674 = vrot.lane.b32.xlu0 %v4457, 1
        %v4675 = vpop.permute.xlu0 %4674
        %4676 = vrot.lane.b32.xlu0 %v4462, 1
        %v4677 = vpop.permute.xlu0 %4676
        %4678 = vrot.lane.b32.xlu0 %v4467, 1
        %v4679 = vpop.permute.xlu0 %4678
        %4680 = vrot.lane.b32.xlu0 %v4472, 1
        %v4681 = vpop.permute.xlu0 %4680
        %4682 = vrot.lane.b32.xlu0 %v4477, 1
        %v4683 = vpop.permute.xlu0 %4682
        %4684 = vrot.lane.b32.xlu0 %v4482, 1
        %v4685 = vpop.permute.xlu0 %4684
        %4686 = vrot.lane.b32.xlu0 %v4487, 1
        %v4687 = vpop.permute.xlu0 %4686
        %4688 = vrot.lane.b32.xlu0 %v4492, 1
        %v4689 = vpop.permute.xlu0 %4688
        %4690 = vrot.lane.b32.xlu0 %v4497, 1
        %v4691 = vpop.permute.xlu0 %4690
        %v4692 = vsel %vm1170, %v4565, %v4629
        %v4693 = vsel %vm1170, %v4567, %v4631
        %v4694 = vsel %vm1170, %v4569, %v4633
        %v4695 = vsel %vm1170, %v4571, %v4635
        %v4696 = vsel %vm1170, %v4573, %v4637
        %v4697 = vsel %vm1170, %v4575, %v4639
        %v4698 = vsel %vm1170, %v4577, %v4641
        %v4699 = vsel %vm1170, %v4579, %v4643
        %v4700 = vsel %vm1170, %v4581, %v4645
        %v4701 = vsel %vm1170, %v4583, %v4647
        %v4702 = vsel %vm1170, %v4585, %v4649
        %v4703 = vsel %vm1170, %v4587, %v4651
        %v4704 = vsel %vm1170, %v4589, %v4653
        %v4705 = vsel %vm1170, %v4591, %v4655
        %v4706 = vsel %vm1170, %v4593, %v4657
        %v4707 = vsel %vm1170, %v4595, %v4659
        %v4708 = vsel %vm1170, %v4597, %v4661
        %v4709 = vsel %vm1170, %v4599, %v4663
        %v4710 = vsel %vm1170, %v4601, %v4665
        %v4711 = vsel %vm1170, %v4603, %v4667
        %v4712 = vsel %vm1170, %v4605, %v4669
        %v4713 = vsel %vm1170, %v4607, %v4671
        %v4714 = vsel %vm1170, %v4609, %v4673
        %v4715 = vsel %vm1170, %v4611, %v4675
        %v4716 = vsel %vm1170, %v4613, %v4677
        %v4717 = vsel %vm1170, %v4615, %v4679
        %v4718 = vsel %vm1170, %v4617, %v4681
        %v4719 = vsel %vm1170, %v4619, %v4683
        %v4720 = vsel %vm1170, %v4621, %v4685
        %v4721 = vsel %vm1170, %v4623, %v4687
        %v4722 = vsel %vm1170, %v4625, %v4689
        %v4723 = vsel %vm1170, %v4627, %v4691
        %v4724 = vsel %vm1170, %v4501, %v4565
        %v4725 = vsel %vm1170, %v4503, %v4567
        %v4726 = vsel %vm1170, %v4505, %v4569
        %v4727 = vsel %vm1170, %v4507, %v4571
        %v4728 = vsel %vm1170, %v4509, %v4573
        %v4729 = vsel %vm1170, %v4511, %v4575
        %v4730 = vsel %vm1170, %v4513, %v4577
        %v4731 = vsel %vm1170, %v4515, %v4579
        %v4732 = vsel %vm1170, %v4517, %v4581
        %v4733 = vsel %vm1170, %v4519, %v4583
        %v4734 = vsel %vm1170, %v4521, %v4585
        %v4735 = vsel %vm1170, %v4523, %v4587
        %v4736 = vsel %vm1170, %v4525, %v4589
        %v4737 = vsel %vm1170, %v4527, %v4591
        %v4738 = vsel %vm1170, %v4529, %v4593
        %v4739 = vsel %vm1170, %v4531, %v4595
        %v4740 = vsel %vm1170, %v4533, %v4597
        %v4741 = vsel %vm1170, %v4535, %v4599
        %v4742 = vsel %vm1170, %v4537, %v4601
        %v4743 = vsel %vm1170, %v4539, %v4603
        %v4744 = vsel %vm1170, %v4541, %v4605
        %v4745 = vsel %vm1170, %v4543, %v4607
        %v4746 = vsel %vm1170, %v4545, %v4609
        %v4747 = vsel %vm1170, %v4547, %v4611
        %v4748 = vsel %vm1170, %v4549, %v4613
        %v4749 = vsel %vm1170, %v4551, %v4615
        %v4750 = vsel %vm1170, %v4553, %v4617
        %v4751 = vsel %vm1170, %v4555, %v4619
        %v4752 = vsel %vm1170, %v4557, %v4621
        %v4753 = vsel %vm1170, %v4559, %v4623
        %v4754 = vsel %vm1170, %v4561, %v4625
        %v4755 = vsel %vm1170, %v4563, %v4627
        %v4756 = vsel %vm1170, %v4629, %v4501
        %v4757 = vsel %vm1170, %v4631, %v4503
        %v4758 = vsel %vm1170, %v4633, %v4505
        %v4759 = vsel %vm1170, %v4635, %v4507
        %v4760 = vsel %vm1170, %v4637, %v4509
        %v4761 = vsel %vm1170, %v4639, %v4511
        %v4762 = vsel %vm1170, %v4641, %v4513
        %v4763 = vsel %vm1170, %v4643, %v4515
        %v4764 = vsel %vm1170, %v4645, %v4517
        %v4765 = vsel %vm1170, %v4647, %v4519
        %v4766 = vsel %vm1170, %v4649, %v4521
        %v4767 = vsel %vm1170, %v4651, %v4523
        %v4768 = vsel %vm1170, %v4653, %v4525
        %v4769 = vsel %vm1170, %v4655, %v4527
        %v4770 = vsel %vm1170, %v4657, %v4529
        %v4771 = vsel %vm1170, %v4659, %v4531
        %v4772 = vsel %vm1170, %v4661, %v4533
        %v4773 = vsel %vm1170, %v4663, %v4535
        %v4774 = vsel %vm1170, %v4665, %v4537
        %v4775 = vsel %vm1170, %v4667, %v4539
        %v4776 = vsel %vm1170, %v4669, %v4541
        %v4777 = vsel %vm1170, %v4671, %v4543
        %v4778 = vsel %vm1170, %v4673, %v4545
        %v4779 = vsel %vm1170, %v4675, %v4547
        %v4780 = vsel %vm1170, %v4677, %v4549
        %v4781 = vsel %vm1170, %v4679, %v4551
        %v4782 = vsel %vm1170, %v4681, %v4553
        %v4783 = vsel %vm1170, %v4683, %v4555
        %v4784 = vsel %vm1170, %v4685, %v4557
        %v4785 = vsel %vm1170, %v4687, %v4559
        %v4786 = vsel %vm1170, %v4689, %v4561
        %v4787 = vsel %vm1170, %v4691, %v4563
        %v4788 = vmul.f32 %v1271, %v4756
        %v4789 = vmul.f32 %v1275, %v4724
        %v4790 = vmul.f32 %v1279, %v4692
        %v4791 = vmul.f32 %v1271, %v4757
        %v4792 = vmul.f32 %v1275, %v4725
        %v4793 = vmul.f32 %v1279, %v4693
        %v4794 = vmul.f32 %v1271, %v4758
        %v4795 = vmul.f32 %v1275, %v4726
        %v4796 = vmul.f32 %v1279, %v4694
        %v4797 = vmul.f32 %v1271, %v4759
        %v4798 = vmul.f32 %v1275, %v4727
        %v4799 = vmul.f32 %v1279, %v4695
        %v4800 = vmul.f32 %v1271, %v4760
        %v4801 = vmul.f32 %v1275, %v4728
        %v4802 = vmul.f32 %v1279, %v4696
        %v4803 = vmul.f32 %v1271, %v4761
        %v4804 = vmul.f32 %v1275, %v4729
        %v4805 = vmul.f32 %v1279, %v4697
        %v4806 = vmul.f32 %v1271, %v4762
        %v4807 = vmul.f32 %v1275, %v4730
        %v4808 = vmul.f32 %v1279, %v4698
        %v4809 = vmul.f32 %v1271, %v4763
        %v4810 = vmul.f32 %v1275, %v4731
        %v4811 = vmul.f32 %v1279, %v4699
        %v4812 = vmul.f32 %v1271, %v4764
        %v4813 = vmul.f32 %v1275, %v4732
        %v4814 = vmul.f32 %v1279, %v4700
        %v4815 = vmul.f32 %v1271, %v4765
        %v4816 = vmul.f32 %v1275, %v4733
        %v4817 = vmul.f32 %v1279, %v4701
        %v4818 = vmul.f32 %v1271, %v4766
        %v4819 = vmul.f32 %v1275, %v4734
        %v4820 = vmul.f32 %v1279, %v4702
        %v4821 = vmul.f32 %v1271, %v4767
        %v4822 = vmul.f32 %v1275, %v4735
        %v4823 = vmul.f32 %v1279, %v4703
        %v4824 = vmul.f32 %v1271, %v4768
        %v4825 = vmul.f32 %v1275, %v4736
        %v4826 = vmul.f32 %v1279, %v4704
        %v4827 = vmul.f32 %v1271, %v4769
        %v4828 = vmul.f32 %v1275, %v4737
        %v4829 = vmul.f32 %v1279, %v4705
        %v4830 = vmul.f32 %v1271, %v4770
        %v4831 = vmul.f32 %v1275, %v4738
        %v4832 = vmul.f32 %v1279, %v4706
        %v4833 = vmul.f32 %v1271, %v4771
        %v4834 = vmul.f32 %v1275, %v4739
        %v4835 = vmul.f32 %v1279, %v4707
        %v4836 = vmul.f32 %v1271, %v4772
        %v4837 = vmul.f32 %v1275, %v4740
        %v4838 = vmul.f32 %v1279, %v4708
        %v4839 = vmul.f32 %v1271, %v4773
        %v4840 = vmul.f32 %v1275, %v4741
        %v4841 = vmul.f32 %v1279, %v4709
        %v4842 = vmul.f32 %v1271, %v4774
        %v4843 = vmul.f32 %v1275, %v4742
        %v4844 = vmul.f32 %v1279, %v4710
        %v4845 = vmul.f32 %v1271, %v4775
        %v4846 = vmul.f32 %v1275, %v4743
        %v4847 = vmul.f32 %v1279, %v4711
        %v4848 = vmul.f32 %v1271, %v4776
        %v4849 = vmul.f32 %v1275, %v4744
        %v4850 = vmul.f32 %v1279, %v4712
        %v4851 = vmul.f32 %v1271, %v4777
        %v4852 = vmul.f32 %v1275, %v4745
        %v4853 = vmul.f32 %v1279, %v4713
        %v4854 = vmul.f32 %v1271, %v4778
        %v4855 = vmul.f32 %v1275, %v4746
        %v4856 = vmul.f32 %v1279, %v4714
        %v4857 = vmul.f32 %v1271, %v4779
        %v4858 = vmul.f32 %v1275, %v4747
        %v4859 = vmul.f32 %v1279, %v4715
        %v4860 = vmul.f32 %v1271, %v4780
        %v4861 = vmul.f32 %v1275, %v4748
        %v4862 = vmul.f32 %v1279, %v4716
        %v4863 = vmul.f32 %v1271, %v4781
        %v4864 = vmul.f32 %v1275, %v4749
        %v4865 = vmul.f32 %v1279, %v4717
        %v4866 = vmul.f32 %v1271, %v4782
        %v4867 = vmul.f32 %v1275, %v4750
        %v4868 = vmul.f32 %v1279, %v4718
        %v4869 = vmul.f32 %v1271, %v4783
        %v4870 = vmul.f32 %v1275, %v4751
        %v4871 = vmul.f32 %v1279, %v4719
        %v4872 = vmul.f32 %v1271, %v4784
        %v4873 = vmul.f32 %v1275, %v4752
        %v4874 = vmul.f32 %v1279, %v4720
        %v4875 = vmul.f32 %v1271, %v4785
        %v4876 = vmul.f32 %v1275, %v4753
        %v4877 = vmul.f32 %v1279, %v4721
        %v4878 = vmul.f32 %v1271, %v4786
        %v4879 = vmul.f32 %v1275, %v4754
        %v4880 = vmul.f32 %v1279, %v4722
        %v4881 = vmul.f32 %v1271, %v4787
        %v4882 = vmul.f32 %v1275, %v4755
        %v4883 = vmul.f32 %v1279, %v4723
        %v4884 = vadd.f32 %v4085, %v4788
        %v4885 = vadd.f32 %v4087, %v4789
        %v4886 = vadd.f32 %v4342, %v4790
        %v4887 = vadd.f32 %v4091, %v4791
        %v4888 = vadd.f32 %v4093, %v4792
        %v4889 = vadd.f32 %v4347, %v4793
        %v4890 = vadd.f32 %v4097, %v4794
        %v4891 = vadd.f32 %v4099, %v4795
        %v4892 = vadd.f32 %v4352, %v4796
        %v4893 = vadd.f32 %v4103, %v4797
        %v4894 = vadd.f32 %v4105, %v4798
        %v4895 = vadd.f32 %v4357, %v4799
        %v4896 = vadd.f32 %v4109, %v4800
        %v4897 = vadd.f32 %v4111, %v4801
        %v4898 = vadd.f32 %v4362, %v4802
        %v4899 = vadd.f32 %v4115, %v4803
        %v4900 = vadd.f32 %v4117, %v4804
        %v4901 = vadd.f32 %v4367, %v4805
        %v4902 = vadd.f32 %v4121, %v4806
        %v4903 = vadd.f32 %v4123, %v4807
        %v4904 = vadd.f32 %v4372, %v4808
        %v4905 = vadd.f32 %v4127, %v4809
        %v4906 = vadd.f32 %v4129, %v4810
        %v4907 = vadd.f32 %v4377, %v4811
        %v4908 = vadd.f32 %v4133, %v4812
        %v4909 = vadd.f32 %v4135, %v4813
        %v4910 = vadd.f32 %v4382, %v4814
        %v4911 = vadd.f32 %v4139, %v4815
        %v4912 = vadd.f32 %v4141, %v4816
        %v4913 = vadd.f32 %v4387, %v4817
        %v4914 = vadd.f32 %v4145, %v4818
        %v4915 = vadd.f32 %v4147, %v4819
        %v4916 = vadd.f32 %v4392, %v4820
        %v4917 = vadd.f32 %v4151, %v4821
        %v4918 = vadd.f32 %v4153, %v4822
        %v4919 = vadd.f32 %v4397, %v4823
        %v4920 = vadd.f32 %v4157, %v4824
        %v4921 = vadd.f32 %v4159, %v4825
        %v4922 = vadd.f32 %v4402, %v4826
        %v4923 = vadd.f32 %v4163, %v4827
        %v4924 = vadd.f32 %v4165, %v4828
        %v4925 = vadd.f32 %v4407, %v4829
        %v4926 = vadd.f32 %v4169, %v4830
        %v4927 = vadd.f32 %v4171, %v4831
        %v4928 = vadd.f32 %v4412, %v4832
        %v4929 = vadd.f32 %v4175, %v4833
        %v4930 = vadd.f32 %v4177, %v4834
        %v4931 = vadd.f32 %v4417, %v4835
        %v4932 = vadd.f32 %v4181, %v4836
        %v4933 = vadd.f32 %v4183, %v4837
        %v4934 = vadd.f32 %v4422, %v4838
        %v4935 = vadd.f32 %v4187, %v4839
        %v4936 = vadd.f32 %v4189, %v4840
        %v4937 = vadd.f32 %v4427, %v4841
        %v4938 = vadd.f32 %v4193, %v4842
        %v4939 = vadd.f32 %v4195, %v4843
        %v4940 = vadd.f32 %v4432, %v4844
        %v4941 = vadd.f32 %v4199, %v4845
        %v4942 = vadd.f32 %v4201, %v4846
        %v4943 = vadd.f32 %v4437, %v4847
        %v4944 = vadd.f32 %v4205, %v4848
        %v4945 = vadd.f32 %v4207, %v4849
        %v4946 = vadd.f32 %v4442, %v4850
        %v4947 = vadd.f32 %v4211, %v4851
        %v4948 = vadd.f32 %v4213, %v4852
        %v4949 = vadd.f32 %v4447, %v4853
        %v4950 = vadd.f32 %v4217, %v4854
        %v4951 = vadd.f32 %v4219, %v4855
        %v4952 = vadd.f32 %v4452, %v4856
        %v4953 = vadd.f32 %v4223, %v4857
        %v4954 = vadd.f32 %v4225, %v4858
        %v4955 = vadd.f32 %v4457, %v4859
        %v4956 = vadd.f32 %v4229, %v4860
        %v4957 = vadd.f32 %v4231, %v4861
        %v4958 = vadd.f32 %v4462, %v4862
        %v4959 = vadd.f32 %v4235, %v4863
        %v4960 = vadd.f32 %v4237, %v4864
        %v4961 = vadd.f32 %v4467, %v4865
        %v4962 = vadd.f32 %v4241, %v4866
        %v4963 = vadd.f32 %v4243, %v4867
        %v4964 = vadd.f32 %v4472, %v4868
        %v4965 = vadd.f32 %v4247, %v4869
        %v4966 = vadd.f32 %v4249, %v4870
        %v4967 = vadd.f32 %v4477, %v4871
        %v4968 = vadd.f32 %v4253, %v4872
        %v4969 = vadd.f32 %v4255, %v4873
        %v4970 = vadd.f32 %v4482, %v4874
        %v4971 = vadd.f32 %v4259, %v4875
        %v4972 = vadd.f32 %v4261, %v4876
        %v4973 = vadd.f32 %v4487, %v4877
        %v4974 = vadd.f32 %v4265, %v4878
        %v4975 = vadd.f32 %v4267, %v4879
        %v4976 = vadd.f32 %v4492, %v4880
        %v4977 = vadd.f32 %v4271, %v4881
        %v4978 = vadd.f32 %v4273, %v4882
        %v4979 = vadd.f32 %v4497, %v4883
        %4980 = vrot.lane.b32.xlu0 %v4085, 127
        %v4981 = vpop.permute.xlu0 %4980
        %4982 = vrot.lane.b32.xlu0 %v4091, 127
        %v4983 = vpop.permute.xlu0 %4982
        %4984 = vrot.lane.b32.xlu0 %v4097, 127
        %v4985 = vpop.permute.xlu0 %4984
        %4986 = vrot.lane.b32.xlu0 %v4103, 127
        %v4987 = vpop.permute.xlu0 %4986
        %4988 = vrot.lane.b32.xlu0 %v4109, 127
        %v4989 = vpop.permute.xlu0 %4988
        %4990 = vrot.lane.b32.xlu0 %v4115, 127
        %v4991 = vpop.permute.xlu0 %4990
        %4992 = vrot.lane.b32.xlu0 %v4121, 127
        %v4993 = vpop.permute.xlu0 %4992
        %4994 = vrot.lane.b32.xlu0 %v4127, 127
        %v4995 = vpop.permute.xlu0 %4994
        %4996 = vrot.lane.b32.xlu0 %v4133, 127
        %v4997 = vpop.permute.xlu0 %4996
        %4998 = vrot.lane.b32.xlu0 %v4139, 127
        %v4999 = vpop.permute.xlu0 %4998
        %5000 = vrot.lane.b32.xlu0 %v4145, 127
        %v5001 = vpop.permute.xlu0 %5000
        %5002 = vrot.lane.b32.xlu0 %v4151, 127
        %v5003 = vpop.permute.xlu0 %5002
        %5004 = vrot.lane.b32.xlu0 %v4157, 127
        %v5005 = vpop.permute.xlu0 %5004
        %5006 = vrot.lane.b32.xlu0 %v4163, 127
        %v5007 = vpop.permute.xlu0 %5006
        %5008 = vrot.lane.b32.xlu0 %v4169, 127
        %v5009 = vpop.permute.xlu0 %5008
        %5010 = vrot.lane.b32.xlu0 %v4175, 127
        %v5011 = vpop.permute.xlu0 %5010
        %5012 = vrot.lane.b32.xlu0 %v4181, 127
        %v5013 = vpop.permute.xlu0 %5012
        %5014 = vrot.lane.b32.xlu0 %v4187, 127
        %v5015 = vpop.permute.xlu0 %5014
        %5016 = vrot.lane.b32.xlu0 %v4193, 127
        %v5017 = vpop.permute.xlu0 %5016
        %5018 = vrot.lane.b32.xlu0 %v4199, 127
        %v5019 = vpop.permute.xlu0 %5018
        %5020 = vrot.lane.b32.xlu0 %v4205, 127
        %v5021 = vpop.permute.xlu0 %5020
        %5022 = vrot.lane.b32.xlu0 %v4211, 127
        %v5023 = vpop.permute.xlu0 %5022
        %5024 = vrot.lane.b32.xlu0 %v4217, 127
        %v5025 = vpop.permute.xlu0 %5024
        %5026 = vrot.lane.b32.xlu0 %v4223, 127
        %v5027 = vpop.permute.xlu0 %5026
        %5028 = vrot.lane.b32.xlu0 %v4229, 127
        %v5029 = vpop.permute.xlu0 %5028
        %5030 = vrot.lane.b32.xlu0 %v4235, 127
        %v5031 = vpop.permute.xlu0 %5030
        %5032 = vrot.lane.b32.xlu0 %v4241, 127
        %v5033 = vpop.permute.xlu0 %5032
        %5034 = vrot.lane.b32.xlu0 %v4247, 127
        %v5035 = vpop.permute.xlu0 %5034
        %5036 = vrot.lane.b32.xlu0 %v4253, 127
        %v5037 = vpop.permute.xlu0 %5036
        %5038 = vrot.lane.b32.xlu0 %v4259, 127
        %v5039 = vpop.permute.xlu0 %5038
        %5040 = vrot.lane.b32.xlu0 %v4265, 127
        %v5041 = vpop.permute.xlu0 %5040
        %5042 = vrot.lane.b32.xlu0 %v4271, 127
        %v5043 = vpop.permute.xlu0 %5042
        %5044 = vrot.lane.b32.xlu0 %v4087, 127
        %v5045 = vpop.permute.xlu0 %5044
        %5046 = vrot.lane.b32.xlu0 %v4093, 127
        %v5047 = vpop.permute.xlu0 %5046
        %5048 = vrot.lane.b32.xlu0 %v4099, 127
        %v5049 = vpop.permute.xlu0 %5048
        %5050 = vrot.lane.b32.xlu0 %v4105, 127
        %v5051 = vpop.permute.xlu0 %5050
        %5052 = vrot.lane.b32.xlu0 %v4111, 127
        %v5053 = vpop.permute.xlu0 %5052
        %5054 = vrot.lane.b32.xlu0 %v4117, 127
        %v5055 = vpop.permute.xlu0 %5054
        %5056 = vrot.lane.b32.xlu0 %v4123, 127
        %v5057 = vpop.permute.xlu0 %5056
        %5058 = vrot.lane.b32.xlu0 %v4129, 127
        %v5059 = vpop.permute.xlu0 %5058
        %5060 = vrot.lane.b32.xlu0 %v4135, 127
        %v5061 = vpop.permute.xlu0 %5060
        %5062 = vrot.lane.b32.xlu0 %v4141, 127
        %v5063 = vpop.permute.xlu0 %5062
        %5064 = vrot.lane.b32.xlu0 %v4147, 127
        %v5065 = vpop.permute.xlu0 %5064
        %5066 = vrot.lane.b32.xlu0 %v4153, 127
        %v5067 = vpop.permute.xlu0 %5066
        %5068 = vrot.lane.b32.xlu0 %v4159, 127
        %v5069 = vpop.permute.xlu0 %5068
        %5070 = vrot.lane.b32.xlu0 %v4165, 127
        %v5071 = vpop.permute.xlu0 %5070
        %5072 = vrot.lane.b32.xlu0 %v4171, 127
        %v5073 = vpop.permute.xlu0 %5072
        %5074 = vrot.lane.b32.xlu0 %v4177, 127
        %v5075 = vpop.permute.xlu0 %5074
        %5076 = vrot.lane.b32.xlu0 %v4183, 127
        %v5077 = vpop.permute.xlu0 %5076
        %5078 = vrot.lane.b32.xlu0 %v4189, 127
        %v5079 = vpop.permute.xlu0 %5078
        %5080 = vrot.lane.b32.xlu0 %v4195, 127
        %v5081 = vpop.permute.xlu0 %5080
        %5082 = vrot.lane.b32.xlu0 %v4201, 127
        %v5083 = vpop.permute.xlu0 %5082
        %5084 = vrot.lane.b32.xlu0 %v4207, 127
        %v5085 = vpop.permute.xlu0 %5084
        %5086 = vrot.lane.b32.xlu0 %v4213, 127
        %v5087 = vpop.permute.xlu0 %5086
        %5088 = vrot.lane.b32.xlu0 %v4219, 127
        %v5089 = vpop.permute.xlu0 %5088
        %5090 = vrot.lane.b32.xlu0 %v4225, 127
        %v5091 = vpop.permute.xlu0 %5090
        %5092 = vrot.lane.b32.xlu0 %v4231, 127
        %v5093 = vpop.permute.xlu0 %5092
        %5094 = vrot.lane.b32.xlu0 %v4237, 127
        %v5095 = vpop.permute.xlu0 %5094
        %5096 = vrot.lane.b32.xlu0 %v4243, 127
        %v5097 = vpop.permute.xlu0 %5096
        %5098 = vrot.lane.b32.xlu0 %v4249, 127
        %v5099 = vpop.permute.xlu0 %5098
        %5100 = vrot.lane.b32.xlu0 %v4255, 127
        %v5101 = vpop.permute.xlu0 %5100
        %5102 = vrot.lane.b32.xlu0 %v4261, 127
        %v5103 = vpop.permute.xlu0 %5102
        %5104 = vrot.lane.b32.xlu0 %v4267, 127
        %v5105 = vpop.permute.xlu0 %5104
        %5106 = vrot.lane.b32.xlu0 %v4273, 127
        %v5107 = vpop.permute.xlu0 %5106
        %5108 = vrot.lane.b32.xlu0 %v4342, 127
        %v5109 = vpop.permute.xlu0 %5108
        %5110 = vrot.lane.b32.xlu0 %v4347, 127
        %v5111 = vpop.permute.xlu0 %5110
        %5112 = vrot.lane.b32.xlu0 %v4352, 127
        %v5113 = vpop.permute.xlu0 %5112
        %5114 = vrot.lane.b32.xlu0 %v4357, 127
        %v5115 = vpop.permute.xlu0 %5114
        %5116 = vrot.lane.b32.xlu0 %v4362, 127
        %v5117 = vpop.permute.xlu0 %5116
        %5118 = vrot.lane.b32.xlu0 %v4367, 127
        %v5119 = vpop.permute.xlu0 %5118
        %5120 = vrot.lane.b32.xlu0 %v4372, 127
        %v5121 = vpop.permute.xlu0 %5120
        %5122 = vrot.lane.b32.xlu0 %v4377, 127
        %v5123 = vpop.permute.xlu0 %5122
        %5124 = vrot.lane.b32.xlu0 %v4382, 127
        %v5125 = vpop.permute.xlu0 %5124
        %5126 = vrot.lane.b32.xlu0 %v4387, 127
        %v5127 = vpop.permute.xlu0 %5126
        %5128 = vrot.lane.b32.xlu0 %v4392, 127
        %v5129 = vpop.permute.xlu0 %5128
        %5130 = vrot.lane.b32.xlu0 %v4397, 127
        %v5131 = vpop.permute.xlu0 %5130
        %5132 = vrot.lane.b32.xlu0 %v4402, 127
        %v5133 = vpop.permute.xlu0 %5132
        %5134 = vrot.lane.b32.xlu0 %v4407, 127
        %v5135 = vpop.permute.xlu0 %5134
        %5136 = vrot.lane.b32.xlu0 %v4412, 127
        %v5137 = vpop.permute.xlu0 %5136
        %5138 = vrot.lane.b32.xlu0 %v4417, 127
        %v5139 = vpop.permute.xlu0 %5138
        %5140 = vrot.lane.b32.xlu0 %v4422, 127
        %v5141 = vpop.permute.xlu0 %5140
        %5142 = vrot.lane.b32.xlu0 %v4427, 127
        %v5143 = vpop.permute.xlu0 %5142
        %5144 = vrot.lane.b32.xlu0 %v4432, 127
        %v5145 = vpop.permute.xlu0 %5144
        %5146 = vrot.lane.b32.xlu0 %v4437, 127
        %v5147 = vpop.permute.xlu0 %5146
        %5148 = vrot.lane.b32.xlu0 %v4442, 127
        %v5149 = vpop.permute.xlu0 %5148
        %5150 = vrot.lane.b32.xlu0 %v4447, 127
        %v5151 = vpop.permute.xlu0 %5150
        %5152 = vrot.lane.b32.xlu0 %v4452, 127
        %v5153 = vpop.permute.xlu0 %5152
        %5154 = vrot.lane.b32.xlu0 %v4457, 127
        %v5155 = vpop.permute.xlu0 %5154
        %5156 = vrot.lane.b32.xlu0 %v4462, 127
        %v5157 = vpop.permute.xlu0 %5156
        %5158 = vrot.lane.b32.xlu0 %v4467, 127
        %v5159 = vpop.permute.xlu0 %5158
        %5160 = vrot.lane.b32.xlu0 %v4472, 127
        %v5161 = vpop.permute.xlu0 %5160
        %5162 = vrot.lane.b32.xlu0 %v4477, 127
        %v5163 = vpop.permute.xlu0 %5162
        %5164 = vrot.lane.b32.xlu0 %v4482, 127
        %v5165 = vpop.permute.xlu0 %5164
        %5166 = vrot.lane.b32.xlu0 %v4487, 127
        %v5167 = vpop.permute.xlu0 %5166
        %5168 = vrot.lane.b32.xlu0 %v4492, 127
        %v5169 = vpop.permute.xlu0 %5168
        %5170 = vrot.lane.b32.xlu0 %v4497, 127
        %v5171 = vpop.permute.xlu0 %5170
        %v5172 = vsel %vm1667, %v5045, %v5109
        %v5173 = vsel %vm1667, %v5047, %v5111
        %v5174 = vsel %vm1667, %v5049, %v5113
        %v5175 = vsel %vm1667, %v5051, %v5115
        %v5176 = vsel %vm1667, %v5053, %v5117
        %v5177 = vsel %vm1667, %v5055, %v5119
        %v5178 = vsel %vm1667, %v5057, %v5121
        %v5179 = vsel %vm1667, %v5059, %v5123
        %v5180 = vsel %vm1667, %v5061, %v5125
        %v5181 = vsel %vm1667, %v5063, %v5127
        %v5182 = vsel %vm1667, %v5065, %v5129
        %v5183 = vsel %vm1667, %v5067, %v5131
        %v5184 = vsel %vm1667, %v5069, %v5133
        %v5185 = vsel %vm1667, %v5071, %v5135
        %v5186 = vsel %vm1667, %v5073, %v5137
        %v5187 = vsel %vm1667, %v5075, %v5139
        %v5188 = vsel %vm1667, %v5077, %v5141
        %v5189 = vsel %vm1667, %v5079, %v5143
        %v5190 = vsel %vm1667, %v5081, %v5145
        %v5191 = vsel %vm1667, %v5083, %v5147
        %v5192 = vsel %vm1667, %v5085, %v5149
        %v5193 = vsel %vm1667, %v5087, %v5151
        %v5194 = vsel %vm1667, %v5089, %v5153
        %v5195 = vsel %vm1667, %v5091, %v5155
        %v5196 = vsel %vm1667, %v5093, %v5157
        %v5197 = vsel %vm1667, %v5095, %v5159
        %v5198 = vsel %vm1667, %v5097, %v5161
        %v5199 = vsel %vm1667, %v5099, %v5163
        %v5200 = vsel %vm1667, %v5101, %v5165
        %v5201 = vsel %vm1667, %v5103, %v5167
        %v5202 = vsel %vm1667, %v5105, %v5169
        %v5203 = vsel %vm1667, %v5107, %v5171
        %v5204 = vsel %vm1667, %v4981, %v5045
        %v5205 = vsel %vm1667, %v4983, %v5047
        %v5206 = vsel %vm1667, %v4985, %v5049
        %v5207 = vsel %vm1667, %v4987, %v5051
        %v5208 = vsel %vm1667, %v4989, %v5053
        %v5209 = vsel %vm1667, %v4991, %v5055
        %v5210 = vsel %vm1667, %v4993, %v5057
        %v5211 = vsel %vm1667, %v4995, %v5059
        %v5212 = vsel %vm1667, %v4997, %v5061
        %v5213 = vsel %vm1667, %v4999, %v5063
        %v5214 = vsel %vm1667, %v5001, %v5065
        %v5215 = vsel %vm1667, %v5003, %v5067
        %v5216 = vsel %vm1667, %v5005, %v5069
        %v5217 = vsel %vm1667, %v5007, %v5071
        %v5218 = vsel %vm1667, %v5009, %v5073
        %v5219 = vsel %vm1667, %v5011, %v5075
        %v5220 = vsel %vm1667, %v5013, %v5077
        %v5221 = vsel %vm1667, %v5015, %v5079
        %v5222 = vsel %vm1667, %v5017, %v5081
        %v5223 = vsel %vm1667, %v5019, %v5083
        %v5224 = vsel %vm1667, %v5021, %v5085
        %v5225 = vsel %vm1667, %v5023, %v5087
        %v5226 = vsel %vm1667, %v5025, %v5089
        %v5227 = vsel %vm1667, %v5027, %v5091
        %v5228 = vsel %vm1667, %v5029, %v5093
        %v5229 = vsel %vm1667, %v5031, %v5095
        %v5230 = vsel %vm1667, %v5033, %v5097
        %v5231 = vsel %vm1667, %v5035, %v5099
        %v5232 = vsel %vm1667, %v5037, %v5101
        %v5233 = vsel %vm1667, %v5039, %v5103
        %v5234 = vsel %vm1667, %v5041, %v5105
        %v5235 = vsel %vm1667, %v5043, %v5107
        %v5236 = vsel %vm1667, %v5109, %v4981
        %v5237 = vsel %vm1667, %v5111, %v4983
        %v5238 = vsel %vm1667, %v5113, %v4985
        %v5239 = vsel %vm1667, %v5115, %v4987
        %v5240 = vsel %vm1667, %v5117, %v4989
        %v5241 = vsel %vm1667, %v5119, %v4991
        %v5242 = vsel %vm1667, %v5121, %v4993
        %v5243 = vsel %vm1667, %v5123, %v4995
        %v5244 = vsel %vm1667, %v5125, %v4997
        %v5245 = vsel %vm1667, %v5127, %v4999
        %v5246 = vsel %vm1667, %v5129, %v5001
        %v5247 = vsel %vm1667, %v5131, %v5003
        %v5248 = vsel %vm1667, %v5133, %v5005
        %v5249 = vsel %vm1667, %v5135, %v5007
        %v5250 = vsel %vm1667, %v5137, %v5009
        %v5251 = vsel %vm1667, %v5139, %v5011
        %v5252 = vsel %vm1667, %v5141, %v5013
        %v5253 = vsel %vm1667, %v5143, %v5015
        %v5254 = vsel %vm1667, %v5145, %v5017
        %v5255 = vsel %vm1667, %v5147, %v5019
        %v5256 = vsel %vm1667, %v5149, %v5021
        %v5257 = vsel %vm1667, %v5151, %v5023
        %v5258 = vsel %vm1667, %v5153, %v5025
        %v5259 = vsel %vm1667, %v5155, %v5027
        %v5260 = vsel %vm1667, %v5157, %v5029
        %v5261 = vsel %vm1667, %v5159, %v5031
        %v5262 = vsel %vm1667, %v5161, %v5033
        %v5263 = vsel %vm1667, %v5163, %v5035
        %v5264 = vsel %vm1667, %v5165, %v5037
        %v5265 = vsel %vm1667, %v5167, %v5039
        %v5266 = vsel %vm1667, %v5169, %v5041
        %v5267 = vsel %vm1667, %v5171, %v5043
        %v5268 = vmul.f32 %v1768, %v5204
        %v5269 = vmul.f32 %v1772, %v5172
        %v5270 = vmul.f32 %v1776, %v5236
        %v5271 = vmul.f32 %v1768, %v5205
        %v5272 = vmul.f32 %v1772, %v5173
        %v5273 = vmul.f32 %v1776, %v5237
        %v5274 = vmul.f32 %v1768, %v5206
        %v5275 = vmul.f32 %v1772, %v5174
        %v5276 = vmul.f32 %v1776, %v5238
        %v5277 = vmul.f32 %v1768, %v5207
        %v5278 = vmul.f32 %v1772, %v5175
        %v5279 = vmul.f32 %v1776, %v5239
        %v5280 = vmul.f32 %v1768, %v5208
        %v5281 = vmul.f32 %v1772, %v5176
        %v5282 = vmul.f32 %v1776, %v5240
        %v5283 = vmul.f32 %v1768, %v5209
        %v5284 = vmul.f32 %v1772, %v5177
        %v5285 = vmul.f32 %v1776, %v5241
        %v5286 = vmul.f32 %v1768, %v5210
        %v5287 = vmul.f32 %v1772, %v5178
        %v5288 = vmul.f32 %v1776, %v5242
        %v5289 = vmul.f32 %v1768, %v5211
        %v5290 = vmul.f32 %v1772, %v5179
        %v5291 = vmul.f32 %v1776, %v5243
        %v5292 = vmul.f32 %v1768, %v5212
        %v5293 = vmul.f32 %v1772, %v5180
        %v5294 = vmul.f32 %v1776, %v5244
        %v5295 = vmul.f32 %v1768, %v5213
        %v5296 = vmul.f32 %v1772, %v5181
        %v5297 = vmul.f32 %v1776, %v5245
        %v5298 = vmul.f32 %v1768, %v5214
        %v5299 = vmul.f32 %v1772, %v5182
        %v5300 = vmul.f32 %v1776, %v5246
        %v5301 = vmul.f32 %v1768, %v5215
        %v5302 = vmul.f32 %v1772, %v5183
        %v5303 = vmul.f32 %v1776, %v5247
        %v5304 = vmul.f32 %v1768, %v5216
        %v5305 = vmul.f32 %v1772, %v5184
        %v5306 = vmul.f32 %v1776, %v5248
        %v5307 = vmul.f32 %v1768, %v5217
        %v5308 = vmul.f32 %v1772, %v5185
        %v5309 = vmul.f32 %v1776, %v5249
        %v5310 = vmul.f32 %v1768, %v5218
        %v5311 = vmul.f32 %v1772, %v5186
        %v5312 = vmul.f32 %v1776, %v5250
        %v5313 = vmul.f32 %v1768, %v5219
        %v5314 = vmul.f32 %v1772, %v5187
        %v5315 = vmul.f32 %v1776, %v5251
        %v5316 = vmul.f32 %v1768, %v5220
        %v5317 = vmul.f32 %v1772, %v5188
        %v5318 = vmul.f32 %v1776, %v5252
        %v5319 = vmul.f32 %v1768, %v5221
        %v5320 = vmul.f32 %v1772, %v5189
        %v5321 = vmul.f32 %v1776, %v5253
        %v5322 = vmul.f32 %v1768, %v5222
        %v5323 = vmul.f32 %v1772, %v5190
        %v5324 = vmul.f32 %v1776, %v5254
        %v5325 = vmul.f32 %v1768, %v5223
        %v5326 = vmul.f32 %v1772, %v5191
        %v5327 = vmul.f32 %v1776, %v5255
        %v5328 = vmul.f32 %v1768, %v5224
        %v5329 = vmul.f32 %v1772, %v5192
        %v5330 = vmul.f32 %v1776, %v5256
        %v5331 = vmul.f32 %v1768, %v5225
        %v5332 = vmul.f32 %v1772, %v5193
        %v5333 = vmul.f32 %v1776, %v5257
        %v5334 = vmul.f32 %v1768, %v5226
        %v5335 = vmul.f32 %v1772, %v5194
        %v5336 = vmul.f32 %v1776, %v5258
        %v5337 = vmul.f32 %v1768, %v5227
        %v5338 = vmul.f32 %v1772, %v5195
        %v5339 = vmul.f32 %v1776, %v5259
        %v5340 = vmul.f32 %v1768, %v5228
        %v5341 = vmul.f32 %v1772, %v5196
        %v5342 = vmul.f32 %v1776, %v5260
        %v5343 = vmul.f32 %v1768, %v5229
        %v5344 = vmul.f32 %v1772, %v5197
        %v5345 = vmul.f32 %v1776, %v5261
        %v5346 = vmul.f32 %v1768, %v5230
        %v5347 = vmul.f32 %v1772, %v5198
        %v5348 = vmul.f32 %v1776, %v5262
        %v5349 = vmul.f32 %v1768, %v5231
        %v5350 = vmul.f32 %v1772, %v5199
        %v5351 = vmul.f32 %v1776, %v5263
        %v5352 = vmul.f32 %v1768, %v5232
        %v5353 = vmul.f32 %v1772, %v5200
        %v5354 = vmul.f32 %v1776, %v5264
        %v5355 = vmul.f32 %v1768, %v5233
        %v5356 = vmul.f32 %v1772, %v5201
        %v5357 = vmul.f32 %v1776, %v5265
        %v5358 = vmul.f32 %v1768, %v5234
        %v5359 = vmul.f32 %v1772, %v5202
        %v5360 = vmul.f32 %v1776, %v5266
        %v5361 = vmul.f32 %v1768, %v5235
        %v5362 = vmul.f32 %v1772, %v5203
        %v5363 = vmul.f32 %v1776, %v5267
        %v5364 = vadd.f32 %v4884, %v5268
        %v5365 = vadd.f32 %v4885, %v5269
        %v5366 = vadd.f32 %v4886, %v5270
        %v5367 = vadd.f32 %v4887, %v5271
        %v5368 = vadd.f32 %v4888, %v5272
        %v5369 = vadd.f32 %v4889, %v5273
        %v5370 = vadd.f32 %v4890, %v5274
        %v5371 = vadd.f32 %v4891, %v5275
        %v5372 = vadd.f32 %v4892, %v5276
        %v5373 = vadd.f32 %v4893, %v5277
        %v5374 = vadd.f32 %v4894, %v5278
        %v5375 = vadd.f32 %v4895, %v5279
        %v5376 = vadd.f32 %v4896, %v5280
        %v5377 = vadd.f32 %v4897, %v5281
        %v5378 = vadd.f32 %v4898, %v5282
        %v5379 = vadd.f32 %v4899, %v5283
        %v5380 = vadd.f32 %v4900, %v5284
        %v5381 = vadd.f32 %v4901, %v5285
        %v5382 = vadd.f32 %v4902, %v5286
        %v5383 = vadd.f32 %v4903, %v5287
        %v5384 = vadd.f32 %v4904, %v5288
        %v5385 = vadd.f32 %v4905, %v5289
        %v5386 = vadd.f32 %v4906, %v5290
        %v5387 = vadd.f32 %v4907, %v5291
        %v5388 = vadd.f32 %v4908, %v5292
        %v5389 = vadd.f32 %v4909, %v5293
        %v5390 = vadd.f32 %v4910, %v5294
        %v5391 = vadd.f32 %v4911, %v5295
        %v5392 = vadd.f32 %v4912, %v5296
        %v5393 = vadd.f32 %v4913, %v5297
        %v5394 = vadd.f32 %v4914, %v5298
        %v5395 = vadd.f32 %v4915, %v5299
        %v5396 = vadd.f32 %v4916, %v5300
        %v5397 = vadd.f32 %v4917, %v5301
        %v5398 = vadd.f32 %v4918, %v5302
        %v5399 = vadd.f32 %v4919, %v5303
        %v5400 = vadd.f32 %v4920, %v5304
        %v5401 = vadd.f32 %v4921, %v5305
        %v5402 = vadd.f32 %v4922, %v5306
        %v5403 = vadd.f32 %v4923, %v5307
        %v5404 = vadd.f32 %v4924, %v5308
        %v5405 = vadd.f32 %v4925, %v5309
        %v5406 = vadd.f32 %v4926, %v5310
        %v5407 = vadd.f32 %v4927, %v5311
        %v5408 = vadd.f32 %v4928, %v5312
        %v5409 = vadd.f32 %v4929, %v5313
        %v5410 = vadd.f32 %v4930, %v5314
        %v5411 = vadd.f32 %v4931, %v5315
        %v5412 = vadd.f32 %v4932, %v5316
        %v5413 = vadd.f32 %v4933, %v5317
        %v5414 = vadd.f32 %v4934, %v5318
        %v5415 = vadd.f32 %v4935, %v5319
        %v5416 = vadd.f32 %v4936, %v5320
        %v5417 = vadd.f32 %v4937, %v5321
        %v5418 = vadd.f32 %v4938, %v5322
        %v5419 = vadd.f32 %v4939, %v5323
        %v5420 = vadd.f32 %v4940, %v5324
        %v5421 = vadd.f32 %v4941, %v5325
        %v5422 = vadd.f32 %v4942, %v5326
        %v5423 = vadd.f32 %v4943, %v5327
        %v5424 = vadd.f32 %v4944, %v5328
        %v5425 = vadd.f32 %v4945, %v5329
        %v5426 = vadd.f32 %v4946, %v5330
        %v5427 = vadd.f32 %v4947, %v5331
        %v5428 = vadd.f32 %v4948, %v5332
        %v5429 = vadd.f32 %v4949, %v5333
        %v5430 = vadd.f32 %v4950, %v5334
        %v5431 = vadd.f32 %v4951, %v5335
        %v5432 = vadd.f32 %v4952, %v5336
        %v5433 = vadd.f32 %v4953, %v5337
        %v5434 = vadd.f32 %v4954, %v5338
        %v5435 = vadd.f32 %v4955, %v5339
        %v5436 = vadd.f32 %v4956, %v5340
        %v5437 = vadd.f32 %v4957, %v5341
        %v5438 = vadd.f32 %v4958, %v5342
        %v5439 = vadd.f32 %v4959, %v5343
        %v5440 = vadd.f32 %v4960, %v5344
        %v5441 = vadd.f32 %v4961, %v5345
        %v5442 = vadd.f32 %v4962, %v5346
        %v5443 = vadd.f32 %v4963, %v5347
        %v5444 = vadd.f32 %v4964, %v5348
        %v5445 = vadd.f32 %v4965, %v5349
        %v5446 = vadd.f32 %v4966, %v5350
        %v5447 = vadd.f32 %v4967, %v5351
        %v5448 = vadd.f32 %v4968, %v5352
        %v5449 = vadd.f32 %v4969, %v5353
        %v5450 = vadd.f32 %v4970, %v5354
        %v5451 = vadd.f32 %v4971, %v5355
        %v5452 = vadd.f32 %v4972, %v5356
        %v5453 = vadd.f32 %v4973, %v5357
        %v5454 = vadd.f32 %v4974, %v5358
        %v5455 = vadd.f32 %v4975, %v5359
        %v5456 = vadd.f32 %v4976, %v5360
        %v5457 = vadd.f32 %v4977, %v5361
        %v5458 = vadd.f32 %v4978, %v5362
        %v5459 = vadd.f32 %v4979, %v5363
        %5460 = vrot.lane.b32.xlu0 %v5364, 18
        %v5461 = vpop.permute.xlu0 %5460
        %5462 = vrot.lane.b32.xlu0 %v5367, 18
        %v5463 = vpop.permute.xlu0 %5462
        %5464 = vrot.lane.b32.xlu0 %v5370, 18
        %v5465 = vpop.permute.xlu0 %5464
        %5466 = vrot.lane.b32.xlu0 %v5373, 18
        %v5467 = vpop.permute.xlu0 %5466
        %5468 = vrot.lane.b32.xlu0 %v5376, 18
        %v5469 = vpop.permute.xlu0 %5468
        %5470 = vrot.lane.b32.xlu0 %v5379, 18
        %v5471 = vpop.permute.xlu0 %5470
        %5472 = vrot.lane.b32.xlu0 %v5382, 18
        %v5473 = vpop.permute.xlu0 %5472
        %5474 = vrot.lane.b32.xlu0 %v5385, 18
        %v5475 = vpop.permute.xlu0 %5474
        %5476 = vrot.lane.b32.xlu0 %v5388, 18
        %v5477 = vpop.permute.xlu0 %5476
        %5478 = vrot.lane.b32.xlu0 %v5391, 18
        %v5479 = vpop.permute.xlu0 %5478
        %5480 = vrot.lane.b32.xlu0 %v5394, 18
        %v5481 = vpop.permute.xlu0 %5480
        %5482 = vrot.lane.b32.xlu0 %v5397, 18
        %v5483 = vpop.permute.xlu0 %5482
        %5484 = vrot.lane.b32.xlu0 %v5400, 18
        %v5485 = vpop.permute.xlu0 %5484
        %5486 = vrot.lane.b32.xlu0 %v5403, 18
        %v5487 = vpop.permute.xlu0 %5486
        %5488 = vrot.lane.b32.xlu0 %v5406, 18
        %v5489 = vpop.permute.xlu0 %5488
        %5490 = vrot.lane.b32.xlu0 %v5409, 18
        %v5491 = vpop.permute.xlu0 %5490
        %5492 = vrot.lane.b32.xlu0 %v5412, 18
        %v5493 = vpop.permute.xlu0 %5492
        %5494 = vrot.lane.b32.xlu0 %v5415, 18
        %v5495 = vpop.permute.xlu0 %5494
        %5496 = vrot.lane.b32.xlu0 %v5418, 18
        %v5497 = vpop.permute.xlu0 %5496
        %5498 = vrot.lane.b32.xlu0 %v5421, 18
        %v5499 = vpop.permute.xlu0 %5498
        %5500 = vrot.lane.b32.xlu0 %v5424, 18
        %v5501 = vpop.permute.xlu0 %5500
        %5502 = vrot.lane.b32.xlu0 %v5427, 18
        %v5503 = vpop.permute.xlu0 %5502
        %5504 = vrot.lane.b32.xlu0 %v5430, 18
        %v5505 = vpop.permute.xlu0 %5504
        %5506 = vrot.lane.b32.xlu0 %v5433, 18
        %v5507 = vpop.permute.xlu0 %5506
        %5508 = vrot.lane.b32.xlu0 %v5436, 18
        %v5509 = vpop.permute.xlu0 %5508
        %5510 = vrot.lane.b32.xlu0 %v5439, 18
        %v5511 = vpop.permute.xlu0 %5510
        %5512 = vrot.lane.b32.xlu0 %v5442, 18
        %v5513 = vpop.permute.xlu0 %5512
        %5514 = vrot.lane.b32.xlu0 %v5445, 18
        %v5515 = vpop.permute.xlu0 %5514
        %5516 = vrot.lane.b32.xlu0 %v5448, 18
        %v5517 = vpop.permute.xlu0 %5516
        %5518 = vrot.lane.b32.xlu0 %v5451, 18
        %v5519 = vpop.permute.xlu0 %5518
        %5520 = vrot.lane.b32.xlu0 %v5454, 18
        %v5521 = vpop.permute.xlu0 %5520
        %5522 = vrot.lane.b32.xlu0 %v5457, 18
        %v5523 = vpop.permute.xlu0 %5522
        %5524 = vrot.lane.b32.xlu0 %v5365, 18
        %v5525 = vpop.permute.xlu0 %5524
        %5526 = vrot.lane.b32.xlu0 %v5368, 18
        %v5527 = vpop.permute.xlu0 %5526
        %5528 = vrot.lane.b32.xlu0 %v5371, 18
        %v5529 = vpop.permute.xlu0 %5528
        %5530 = vrot.lane.b32.xlu0 %v5374, 18
        %v5531 = vpop.permute.xlu0 %5530
        %5532 = vrot.lane.b32.xlu0 %v5377, 18
        %v5533 = vpop.permute.xlu0 %5532
        %5534 = vrot.lane.b32.xlu0 %v5380, 18
        %v5535 = vpop.permute.xlu0 %5534
        %5536 = vrot.lane.b32.xlu0 %v5383, 18
        %v5537 = vpop.permute.xlu0 %5536
        %5538 = vrot.lane.b32.xlu0 %v5386, 18
        %v5539 = vpop.permute.xlu0 %5538
        %5540 = vrot.lane.b32.xlu0 %v5389, 18
        %v5541 = vpop.permute.xlu0 %5540
        %5542 = vrot.lane.b32.xlu0 %v5392, 18
        %v5543 = vpop.permute.xlu0 %5542
        %5544 = vrot.lane.b32.xlu0 %v5395, 18
        %v5545 = vpop.permute.xlu0 %5544
        %5546 = vrot.lane.b32.xlu0 %v5398, 18
        %v5547 = vpop.permute.xlu0 %5546
        %5548 = vrot.lane.b32.xlu0 %v5401, 18
        %v5549 = vpop.permute.xlu0 %5548
        %5550 = vrot.lane.b32.xlu0 %v5404, 18
        %v5551 = vpop.permute.xlu0 %5550
        %5552 = vrot.lane.b32.xlu0 %v5407, 18
        %v5553 = vpop.permute.xlu0 %5552
        %5554 = vrot.lane.b32.xlu0 %v5410, 18
        %v5555 = vpop.permute.xlu0 %5554
        %5556 = vrot.lane.b32.xlu0 %v5413, 18
        %v5557 = vpop.permute.xlu0 %5556
        %5558 = vrot.lane.b32.xlu0 %v5416, 18
        %v5559 = vpop.permute.xlu0 %5558
        %5560 = vrot.lane.b32.xlu0 %v5419, 18
        %v5561 = vpop.permute.xlu0 %5560
        %5562 = vrot.lane.b32.xlu0 %v5422, 18
        %v5563 = vpop.permute.xlu0 %5562
        %5564 = vrot.lane.b32.xlu0 %v5425, 18
        %v5565 = vpop.permute.xlu0 %5564
        %5566 = vrot.lane.b32.xlu0 %v5428, 18
        %v5567 = vpop.permute.xlu0 %5566
        %5568 = vrot.lane.b32.xlu0 %v5431, 18
        %v5569 = vpop.permute.xlu0 %5568
        %5570 = vrot.lane.b32.xlu0 %v5434, 18
        %v5571 = vpop.permute.xlu0 %5570
        %5572 = vrot.lane.b32.xlu0 %v5437, 18
        %v5573 = vpop.permute.xlu0 %5572
        %5574 = vrot.lane.b32.xlu0 %v5440, 18
        %v5575 = vpop.permute.xlu0 %5574
        %5576 = vrot.lane.b32.xlu0 %v5443, 18
        %v5577 = vpop.permute.xlu0 %5576
        %5578 = vrot.lane.b32.xlu0 %v5446, 18
        %v5579 = vpop.permute.xlu0 %5578
        %5580 = vrot.lane.b32.xlu0 %v5449, 18
        %v5581 = vpop.permute.xlu0 %5580
        %5582 = vrot.lane.b32.xlu0 %v5452, 18
        %v5583 = vpop.permute.xlu0 %5582
        %5584 = vrot.lane.b32.xlu0 %v5455, 18
        %v5585 = vpop.permute.xlu0 %5584
        %5586 = vrot.lane.b32.xlu0 %v5458, 18
        %v5587 = vpop.permute.xlu0 %5586
        %5588 = vrot.lane.b32.xlu0 %v5366, 18
        %v5589 = vpop.permute.xlu0 %5588
        %5590 = vrot.lane.b32.xlu0 %v5369, 18
        %v5591 = vpop.permute.xlu0 %5590
        %5592 = vrot.lane.b32.xlu0 %v5372, 18
        %v5593 = vpop.permute.xlu0 %5592
        %5594 = vrot.lane.b32.xlu0 %v5375, 18
        %v5595 = vpop.permute.xlu0 %5594
        %5596 = vrot.lane.b32.xlu0 %v5378, 18
        %v5597 = vpop.permute.xlu0 %5596
        %5598 = vrot.lane.b32.xlu0 %v5381, 18
        %v5599 = vpop.permute.xlu0 %5598
        %5600 = vrot.lane.b32.xlu0 %v5384, 18
        %v5601 = vpop.permute.xlu0 %5600
        %5602 = vrot.lane.b32.xlu0 %v5387, 18
        %v5603 = vpop.permute.xlu0 %5602
        %5604 = vrot.lane.b32.xlu0 %v5390, 18
        %v5605 = vpop.permute.xlu0 %5604
        %5606 = vrot.lane.b32.xlu0 %v5393, 18
        %v5607 = vpop.permute.xlu0 %5606
        %5608 = vrot.lane.b32.xlu0 %v5396, 18
        %v5609 = vpop.permute.xlu0 %5608
        %5610 = vrot.lane.b32.xlu0 %v5399, 18
        %v5611 = vpop.permute.xlu0 %5610
        %5612 = vrot.lane.b32.xlu0 %v5402, 18
        %v5613 = vpop.permute.xlu0 %5612
        %5614 = vrot.lane.b32.xlu0 %v5405, 18
        %v5615 = vpop.permute.xlu0 %5614
        %5616 = vrot.lane.b32.xlu0 %v5408, 18
        %v5617 = vpop.permute.xlu0 %5616
        %5618 = vrot.lane.b32.xlu0 %v5411, 18
        %v5619 = vpop.permute.xlu0 %5618
        %5620 = vrot.lane.b32.xlu0 %v5414, 18
        %v5621 = vpop.permute.xlu0 %5620
        %5622 = vrot.lane.b32.xlu0 %v5417, 18
        %v5623 = vpop.permute.xlu0 %5622
        %5624 = vrot.lane.b32.xlu0 %v5420, 18
        %v5625 = vpop.permute.xlu0 %5624
        %5626 = vrot.lane.b32.xlu0 %v5423, 18
        %v5627 = vpop.permute.xlu0 %5626
        %5628 = vrot.lane.b32.xlu0 %v5426, 18
        %v5629 = vpop.permute.xlu0 %5628
        %5630 = vrot.lane.b32.xlu0 %v5429, 18
        %v5631 = vpop.permute.xlu0 %5630
        %5632 = vrot.lane.b32.xlu0 %v5432, 18
        %v5633 = vpop.permute.xlu0 %5632
        %5634 = vrot.lane.b32.xlu0 %v5435, 18
        %v5635 = vpop.permute.xlu0 %5634
        %5636 = vrot.lane.b32.xlu0 %v5438, 18
        %v5637 = vpop.permute.xlu0 %5636
        %5638 = vrot.lane.b32.xlu0 %v5441, 18
        %v5639 = vpop.permute.xlu0 %5638
        %5640 = vrot.lane.b32.xlu0 %v5444, 18
        %v5641 = vpop.permute.xlu0 %5640
        %5642 = vrot.lane.b32.xlu0 %v5447, 18
        %v5643 = vpop.permute.xlu0 %5642
        %5644 = vrot.lane.b32.xlu0 %v5450, 18
        %v5645 = vpop.permute.xlu0 %5644
        %5646 = vrot.lane.b32.xlu0 %v5453, 18
        %v5647 = vpop.permute.xlu0 %5646
        %5648 = vrot.lane.b32.xlu0 %v5456, 18
        %v5649 = vpop.permute.xlu0 %5648
        %5650 = vrot.lane.b32.xlu0 %v5459, 18
        %v5651 = vpop.permute.xlu0 %5650
        %v5652 = vsel %vm2164, %v5525, %v5589
        %v5653 = vsel %vm2164, %v5527, %v5591
        %v5654 = vsel %vm2164, %v5529, %v5593
        %v5655 = vsel %vm2164, %v5531, %v5595
        %v5656 = vsel %vm2164, %v5533, %v5597
        %v5657 = vsel %vm2164, %v5535, %v5599
        %v5658 = vsel %vm2164, %v5537, %v5601
        %v5659 = vsel %vm2164, %v5539, %v5603
        %v5660 = vsel %vm2164, %v5541, %v5605
        %v5661 = vsel %vm2164, %v5543, %v5607
        %v5662 = vsel %vm2164, %v5545, %v5609
        %v5663 = vsel %vm2164, %v5547, %v5611
        %v5664 = vsel %vm2164, %v5549, %v5613
        %v5665 = vsel %vm2164, %v5551, %v5615
        %v5666 = vsel %vm2164, %v5553, %v5617
        %v5667 = vsel %vm2164, %v5555, %v5619
        %v5668 = vsel %vm2164, %v5557, %v5621
        %v5669 = vsel %vm2164, %v5559, %v5623
        %v5670 = vsel %vm2164, %v5561, %v5625
        %v5671 = vsel %vm2164, %v5563, %v5627
        %v5672 = vsel %vm2164, %v5565, %v5629
        %v5673 = vsel %vm2164, %v5567, %v5631
        %v5674 = vsel %vm2164, %v5569, %v5633
        %v5675 = vsel %vm2164, %v5571, %v5635
        %v5676 = vsel %vm2164, %v5573, %v5637
        %v5677 = vsel %vm2164, %v5575, %v5639
        %v5678 = vsel %vm2164, %v5577, %v5641
        %v5679 = vsel %vm2164, %v5579, %v5643
        %v5680 = vsel %vm2164, %v5581, %v5645
        %v5681 = vsel %vm2164, %v5583, %v5647
        %v5682 = vsel %vm2164, %v5585, %v5649
        %v5683 = vsel %vm2164, %v5587, %v5651
        %v5684 = vsel %vm2164, %v5461, %v5525
        %v5685 = vsel %vm2164, %v5463, %v5527
        %v5686 = vsel %vm2164, %v5465, %v5529
        %v5687 = vsel %vm2164, %v5467, %v5531
        %v5688 = vsel %vm2164, %v5469, %v5533
        %v5689 = vsel %vm2164, %v5471, %v5535
        %v5690 = vsel %vm2164, %v5473, %v5537
        %v5691 = vsel %vm2164, %v5475, %v5539
        %v5692 = vsel %vm2164, %v5477, %v5541
        %v5693 = vsel %vm2164, %v5479, %v5543
        %v5694 = vsel %vm2164, %v5481, %v5545
        %v5695 = vsel %vm2164, %v5483, %v5547
        %v5696 = vsel %vm2164, %v5485, %v5549
        %v5697 = vsel %vm2164, %v5487, %v5551
        %v5698 = vsel %vm2164, %v5489, %v5553
        %v5699 = vsel %vm2164, %v5491, %v5555
        %v5700 = vsel %vm2164, %v5493, %v5557
        %v5701 = vsel %vm2164, %v5495, %v5559
        %v5702 = vsel %vm2164, %v5497, %v5561
        %v5703 = vsel %vm2164, %v5499, %v5563
        %v5704 = vsel %vm2164, %v5501, %v5565
        %v5705 = vsel %vm2164, %v5503, %v5567
        %v5706 = vsel %vm2164, %v5505, %v5569
        %v5707 = vsel %vm2164, %v5507, %v5571
        %v5708 = vsel %vm2164, %v5509, %v5573
        %v5709 = vsel %vm2164, %v5511, %v5575
        %v5710 = vsel %vm2164, %v5513, %v5577
        %v5711 = vsel %vm2164, %v5515, %v5579
        %v5712 = vsel %vm2164, %v5517, %v5581
        %v5713 = vsel %vm2164, %v5519, %v5583
        %v5714 = vsel %vm2164, %v5521, %v5585
        %v5715 = vsel %vm2164, %v5523, %v5587
        %v5716 = vsel %vm2164, %v5589, %v5461
        %v5717 = vsel %vm2164, %v5591, %v5463
        %v5718 = vsel %vm2164, %v5593, %v5465
        %v5719 = vsel %vm2164, %v5595, %v5467
        %v5720 = vsel %vm2164, %v5597, %v5469
        %v5721 = vsel %vm2164, %v5599, %v5471
        %v5722 = vsel %vm2164, %v5601, %v5473
        %v5723 = vsel %vm2164, %v5603, %v5475
        %v5724 = vsel %vm2164, %v5605, %v5477
        %v5725 = vsel %vm2164, %v5607, %v5479
        %v5726 = vsel %vm2164, %v5609, %v5481
        %v5727 = vsel %vm2164, %v5611, %v5483
        %v5728 = vsel %vm2164, %v5613, %v5485
        %v5729 = vsel %vm2164, %v5615, %v5487
        %v5730 = vsel %vm2164, %v5617, %v5489
        %v5731 = vsel %vm2164, %v5619, %v5491
        %v5732 = vsel %vm2164, %v5621, %v5493
        %v5733 = vsel %vm2164, %v5623, %v5495
        %v5734 = vsel %vm2164, %v5625, %v5497
        %v5735 = vsel %vm2164, %v5627, %v5499
        %v5736 = vsel %vm2164, %v5629, %v5501
        %v5737 = vsel %vm2164, %v5631, %v5503
        %v5738 = vsel %vm2164, %v5633, %v5505
        %v5739 = vsel %vm2164, %v5635, %v5507
        %v5740 = vsel %vm2164, %v5637, %v5509
        %v5741 = vsel %vm2164, %v5639, %v5511
        %v5742 = vsel %vm2164, %v5641, %v5513
        %v5743 = vsel %vm2164, %v5643, %v5515
        %v5744 = vsel %vm2164, %v5645, %v5517
        %v5745 = vsel %vm2164, %v5647, %v5519
        %v5746 = vsel %vm2164, %v5649, %v5521
        %v5747 = vsel %vm2164, %v5651, %v5523
        %v5748 = vmul.f32 %v2265, %v5716
        %v5749 = vmul.f32 %v2269, %v5684
        %v5750 = vmul.f32 %v2273, %v5652
        %v5751 = vmul.f32 %v2265, %v5717
        %v5752 = vmul.f32 %v2269, %v5685
        %v5753 = vmul.f32 %v2273, %v5653
        %v5754 = vmul.f32 %v2265, %v5718
        %v5755 = vmul.f32 %v2269, %v5686
        %v5756 = vmul.f32 %v2273, %v5654
        %v5757 = vmul.f32 %v2265, %v5719
        %v5758 = vmul.f32 %v2269, %v5687
        %v5759 = vmul.f32 %v2273, %v5655
        %v5760 = vmul.f32 %v2265, %v5720
        %v5761 = vmul.f32 %v2269, %v5688
        %v5762 = vmul.f32 %v2273, %v5656
        %v5763 = vmul.f32 %v2265, %v5721
        %v5764 = vmul.f32 %v2269, %v5689
        %v5765 = vmul.f32 %v2273, %v5657
        %v5766 = vmul.f32 %v2265, %v5722
        %v5767 = vmul.f32 %v2269, %v5690
        %v5768 = vmul.f32 %v2273, %v5658
        %v5769 = vmul.f32 %v2265, %v5723
        %v5770 = vmul.f32 %v2269, %v5691
        %v5771 = vmul.f32 %v2273, %v5659
        %v5772 = vmul.f32 %v2265, %v5724
        %v5773 = vmul.f32 %v2269, %v5692
        %v5774 = vmul.f32 %v2273, %v5660
        %v5775 = vmul.f32 %v2265, %v5725
        %v5776 = vmul.f32 %v2269, %v5693
        %v5777 = vmul.f32 %v2273, %v5661
        %v5778 = vmul.f32 %v2265, %v5726
        %v5779 = vmul.f32 %v2269, %v5694
        %v5780 = vmul.f32 %v2273, %v5662
        %v5781 = vmul.f32 %v2265, %v5727
        %v5782 = vmul.f32 %v2269, %v5695
        %v5783 = vmul.f32 %v2273, %v5663
        %v5784 = vmul.f32 %v2265, %v5728
        %v5785 = vmul.f32 %v2269, %v5696
        %v5786 = vmul.f32 %v2273, %v5664
        %v5787 = vmul.f32 %v2265, %v5729
        %v5788 = vmul.f32 %v2269, %v5697
        %v5789 = vmul.f32 %v2273, %v5665
        %v5790 = vmul.f32 %v2265, %v5730
        %v5791 = vmul.f32 %v2269, %v5698
        %v5792 = vmul.f32 %v2273, %v5666
        %v5793 = vmul.f32 %v2265, %v5731
        %v5794 = vmul.f32 %v2269, %v5699
        %v5795 = vmul.f32 %v2273, %v5667
        %v5796 = vmul.f32 %v2265, %v5732
        %v5797 = vmul.f32 %v2269, %v5700
        %v5798 = vmul.f32 %v2273, %v5668
        %v5799 = vmul.f32 %v2265, %v5733
        %v5800 = vmul.f32 %v2269, %v5701
        %v5801 = vmul.f32 %v2273, %v5669
        %v5802 = vmul.f32 %v2265, %v5734
        %v5803 = vmul.f32 %v2269, %v5702
        %v5804 = vmul.f32 %v2273, %v5670
        %v5805 = vmul.f32 %v2265, %v5735
        %v5806 = vmul.f32 %v2269, %v5703
        %v5807 = vmul.f32 %v2273, %v5671
        %v5808 = vmul.f32 %v2265, %v5736
        %v5809 = vmul.f32 %v2269, %v5704
        %v5810 = vmul.f32 %v2273, %v5672
        %v5811 = vmul.f32 %v2265, %v5737
        %v5812 = vmul.f32 %v2269, %v5705
        %v5813 = vmul.f32 %v2273, %v5673
        %v5814 = vmul.f32 %v2265, %v5738
        %v5815 = vmul.f32 %v2269, %v5706
        %v5816 = vmul.f32 %v2273, %v5674
        %v5817 = vmul.f32 %v2265, %v5739
        %v5818 = vmul.f32 %v2269, %v5707
        %v5819 = vmul.f32 %v2273, %v5675
        %v5820 = vmul.f32 %v2265, %v5740
        %v5821 = vmul.f32 %v2269, %v5708
        %v5822 = vmul.f32 %v2273, %v5676
        %v5823 = vmul.f32 %v2265, %v5741
        %v5824 = vmul.f32 %v2269, %v5709
        %v5825 = vmul.f32 %v2273, %v5677
        %v5826 = vmul.f32 %v2265, %v5742
        %v5827 = vmul.f32 %v2269, %v5710
        %v5828 = vmul.f32 %v2273, %v5678
        %v5829 = vmul.f32 %v2265, %v5743
        %v5830 = vmul.f32 %v2269, %v5711
        %v5831 = vmul.f32 %v2273, %v5679
        %v5832 = vmul.f32 %v2265, %v5744
        %v5833 = vmul.f32 %v2269, %v5712
        %v5834 = vmul.f32 %v2273, %v5680
        %v5835 = vmul.f32 %v2265, %v5745
        %v5836 = vmul.f32 %v2269, %v5713
        %v5837 = vmul.f32 %v2273, %v5681
        %v5838 = vmul.f32 %v2265, %v5746
        %v5839 = vmul.f32 %v2269, %v5714
        %v5840 = vmul.f32 %v2273, %v5682
        %v5841 = vmul.f32 %v2265, %v5747
        %v5842 = vmul.f32 %v2269, %v5715
        %v5843 = vmul.f32 %v2273, %v5683
        %v5844 = vadd.f32 %v5364, %v5748
        %v5845 = vadd.f32 %v5365, %v5749
        %v5846 = vadd.f32 %v5366, %v5750
        %v5847 = vadd.f32 %v5367, %v5751
        %v5848 = vadd.f32 %v5368, %v5752
        %v5849 = vadd.f32 %v5369, %v5753
        %v5850 = vadd.f32 %v5370, %v5754
        %v5851 = vadd.f32 %v5371, %v5755
        %v5852 = vadd.f32 %v5372, %v5756
        %v5853 = vadd.f32 %v5373, %v5757
        %v5854 = vadd.f32 %v5374, %v5758
        %v5855 = vadd.f32 %v5375, %v5759
        %v5856 = vadd.f32 %v5376, %v5760
        %v5857 = vadd.f32 %v5377, %v5761
        %v5858 = vadd.f32 %v5378, %v5762
        %v5859 = vadd.f32 %v5379, %v5763
        %v5860 = vadd.f32 %v5380, %v5764
        %v5861 = vadd.f32 %v5381, %v5765
        %v5862 = vadd.f32 %v5382, %v5766
        %v5863 = vadd.f32 %v5383, %v5767
        %v5864 = vadd.f32 %v5384, %v5768
        %v5865 = vadd.f32 %v5385, %v5769
        %v5866 = vadd.f32 %v5386, %v5770
        %v5867 = vadd.f32 %v5387, %v5771
        %v5868 = vadd.f32 %v5388, %v5772
        %v5869 = vadd.f32 %v5389, %v5773
        %v5870 = vadd.f32 %v5390, %v5774
        %v5871 = vadd.f32 %v5391, %v5775
        %v5872 = vadd.f32 %v5392, %v5776
        %v5873 = vadd.f32 %v5393, %v5777
        %v5874 = vadd.f32 %v5394, %v5778
        %v5875 = vadd.f32 %v5395, %v5779
        %v5876 = vadd.f32 %v5396, %v5780
        %v5877 = vadd.f32 %v5397, %v5781
        %v5878 = vadd.f32 %v5398, %v5782
        %v5879 = vadd.f32 %v5399, %v5783
        %v5880 = vadd.f32 %v5400, %v5784
        %v5881 = vadd.f32 %v5401, %v5785
        %v5882 = vadd.f32 %v5402, %v5786
        %v5883 = vadd.f32 %v5403, %v5787
        %v5884 = vadd.f32 %v5404, %v5788
        %v5885 = vadd.f32 %v5405, %v5789
        %v5886 = vadd.f32 %v5406, %v5790
        %v5887 = vadd.f32 %v5407, %v5791
        %v5888 = vadd.f32 %v5408, %v5792
        %v5889 = vadd.f32 %v5409, %v5793
        %v5890 = vadd.f32 %v5410, %v5794
        %v5891 = vadd.f32 %v5411, %v5795
        %v5892 = vadd.f32 %v5412, %v5796
        %v5893 = vadd.f32 %v5413, %v5797
        %v5894 = vadd.f32 %v5414, %v5798
        %v5895 = vadd.f32 %v5415, %v5799
        %v5896 = vadd.f32 %v5416, %v5800
        %v5897 = vadd.f32 %v5417, %v5801
        %v5898 = vadd.f32 %v5418, %v5802
        %v5899 = vadd.f32 %v5419, %v5803
        %v5900 = vadd.f32 %v5420, %v5804
        %v5901 = vadd.f32 %v5421, %v5805
        %v5902 = vadd.f32 %v5422, %v5806
        %v5903 = vadd.f32 %v5423, %v5807
        %v5904 = vadd.f32 %v5424, %v5808
        %v5905 = vadd.f32 %v5425, %v5809
        %v5906 = vadd.f32 %v5426, %v5810
        %v5907 = vadd.f32 %v5427, %v5811
        %v5908 = vadd.f32 %v5428, %v5812
        %v5909 = vadd.f32 %v5429, %v5813
        %v5910 = vadd.f32 %v5430, %v5814
        %v5911 = vadd.f32 %v5431, %v5815
        %v5912 = vadd.f32 %v5432, %v5816
        %v5913 = vadd.f32 %v5433, %v5817
        %v5914 = vadd.f32 %v5434, %v5818
        %v5915 = vadd.f32 %v5435, %v5819
        %v5916 = vadd.f32 %v5436, %v5820
        %v5917 = vadd.f32 %v5437, %v5821
        %v5918 = vadd.f32 %v5438, %v5822
        %v5919 = vadd.f32 %v5439, %v5823
        %v5920 = vadd.f32 %v5440, %v5824
        %v5921 = vadd.f32 %v5441, %v5825
        %v5922 = vadd.f32 %v5442, %v5826
        %v5923 = vadd.f32 %v5443, %v5827
        %v5924 = vadd.f32 %v5444, %v5828
        %v5925 = vadd.f32 %v5445, %v5829
        %v5926 = vadd.f32 %v5446, %v5830
        %v5927 = vadd.f32 %v5447, %v5831
        %v5928 = vadd.f32 %v5448, %v5832
        %v5929 = vadd.f32 %v5449, %v5833
        %v5930 = vadd.f32 %v5450, %v5834
        %v5931 = vadd.f32 %v5451, %v5835
        %v5932 = vadd.f32 %v5452, %v5836
        %v5933 = vadd.f32 %v5453, %v5837
        %v5934 = vadd.f32 %v5454, %v5838
        %v5935 = vadd.f32 %v5455, %v5839
        %v5936 = vadd.f32 %v5456, %v5840
        %v5937 = vadd.f32 %v5457, %v5841
        %v5938 = vadd.f32 %v5458, %v5842
        %v5939 = vadd.f32 %v5459, %v5843
        %5940 = vrot.lane.b32.xlu0 %v5364, 110
        %v5941 = vpop.permute.xlu0 %5940
        %5942 = vrot.lane.b32.xlu0 %v5367, 110
        %v5943 = vpop.permute.xlu0 %5942
        %5944 = vrot.lane.b32.xlu0 %v5370, 110
        %v5945 = vpop.permute.xlu0 %5944
        %5946 = vrot.lane.b32.xlu0 %v5373, 110
        %v5947 = vpop.permute.xlu0 %5946
        %5948 = vrot.lane.b32.xlu0 %v5376, 110
        %v5949 = vpop.permute.xlu0 %5948
        %5950 = vrot.lane.b32.xlu0 %v5379, 110
        %v5951 = vpop.permute.xlu0 %5950
        %5952 = vrot.lane.b32.xlu0 %v5382, 110
        %v5953 = vpop.permute.xlu0 %5952
        %5954 = vrot.lane.b32.xlu0 %v5385, 110
        %v5955 = vpop.permute.xlu0 %5954
        %5956 = vrot.lane.b32.xlu0 %v5388, 110
        %v5957 = vpop.permute.xlu0 %5956
        %5958 = vrot.lane.b32.xlu0 %v5391, 110
        %v5959 = vpop.permute.xlu0 %5958
        %5960 = vrot.lane.b32.xlu0 %v5394, 110
        %v5961 = vpop.permute.xlu0 %5960
        %5962 = vrot.lane.b32.xlu0 %v5397, 110
        %v5963 = vpop.permute.xlu0 %5962
        %5964 = vrot.lane.b32.xlu0 %v5400, 110
        %v5965 = vpop.permute.xlu0 %5964
        %5966 = vrot.lane.b32.xlu0 %v5403, 110
        %v5967 = vpop.permute.xlu0 %5966
        %5968 = vrot.lane.b32.xlu0 %v5406, 110
        %v5969 = vpop.permute.xlu0 %5968
        %5970 = vrot.lane.b32.xlu0 %v5409, 110
        %v5971 = vpop.permute.xlu0 %5970
        %5972 = vrot.lane.b32.xlu0 %v5412, 110
        %v5973 = vpop.permute.xlu0 %5972
        %5974 = vrot.lane.b32.xlu0 %v5415, 110
        %v5975 = vpop.permute.xlu0 %5974
        %5976 = vrot.lane.b32.xlu0 %v5418, 110
        %v5977 = vpop.permute.xlu0 %5976
        %5978 = vrot.lane.b32.xlu0 %v5421, 110
        %v5979 = vpop.permute.xlu0 %5978
        %5980 = vrot.lane.b32.xlu0 %v5424, 110
        %v5981 = vpop.permute.xlu0 %5980
        %5982 = vrot.lane.b32.xlu0 %v5427, 110
        %v5983 = vpop.permute.xlu0 %5982
        %5984 = vrot.lane.b32.xlu0 %v5430, 110
        %v5985 = vpop.permute.xlu0 %5984
        %5986 = vrot.lane.b32.xlu0 %v5433, 110
        %v5987 = vpop.permute.xlu0 %5986
        %5988 = vrot.lane.b32.xlu0 %v5436, 110
        %v5989 = vpop.permute.xlu0 %5988
        %5990 = vrot.lane.b32.xlu0 %v5439, 110
        %v5991 = vpop.permute.xlu0 %5990
        %5992 = vrot.lane.b32.xlu0 %v5442, 110
        %v5993 = vpop.permute.xlu0 %5992
        %5994 = vrot.lane.b32.xlu0 %v5445, 110
        %v5995 = vpop.permute.xlu0 %5994
        %5996 = vrot.lane.b32.xlu0 %v5448, 110
        %v5997 = vpop.permute.xlu0 %5996
        %5998 = vrot.lane.b32.xlu0 %v5451, 110
        %v5999 = vpop.permute.xlu0 %5998
        %6000 = vrot.lane.b32.xlu0 %v5454, 110
        %v6001 = vpop.permute.xlu0 %6000
        %6002 = vrot.lane.b32.xlu0 %v5457, 110
        %v6003 = vpop.permute.xlu0 %6002
        %6004 = vrot.lane.b32.xlu0 %v5365, 110
        %v6005 = vpop.permute.xlu0 %6004
        %6006 = vrot.lane.b32.xlu0 %v5368, 110
        %v6007 = vpop.permute.xlu0 %6006
        %6008 = vrot.lane.b32.xlu0 %v5371, 110
        %v6009 = vpop.permute.xlu0 %6008
        %6010 = vrot.lane.b32.xlu0 %v5374, 110
        %v6011 = vpop.permute.xlu0 %6010
        %6012 = vrot.lane.b32.xlu0 %v5377, 110
        %v6013 = vpop.permute.xlu0 %6012
        %6014 = vrot.lane.b32.xlu0 %v5380, 110
        %v6015 = vpop.permute.xlu0 %6014
        %6016 = vrot.lane.b32.xlu0 %v5383, 110
        %v6017 = vpop.permute.xlu0 %6016
        %6018 = vrot.lane.b32.xlu0 %v5386, 110
        %v6019 = vpop.permute.xlu0 %6018
        %6020 = vrot.lane.b32.xlu0 %v5389, 110
        %v6021 = vpop.permute.xlu0 %6020
        %6022 = vrot.lane.b32.xlu0 %v5392, 110
        %v6023 = vpop.permute.xlu0 %6022
        %6024 = vrot.lane.b32.xlu0 %v5395, 110
        %v6025 = vpop.permute.xlu0 %6024
        %6026 = vrot.lane.b32.xlu0 %v5398, 110
        %v6027 = vpop.permute.xlu0 %6026
        %6028 = vrot.lane.b32.xlu0 %v5401, 110
        %v6029 = vpop.permute.xlu0 %6028
        %6030 = vrot.lane.b32.xlu0 %v5404, 110
        %v6031 = vpop.permute.xlu0 %6030
        %6032 = vrot.lane.b32.xlu0 %v5407, 110
        %v6033 = vpop.permute.xlu0 %6032
        %6034 = vrot.lane.b32.xlu0 %v5410, 110
        %v6035 = vpop.permute.xlu0 %6034
        %6036 = vrot.lane.b32.xlu0 %v5413, 110
        %v6037 = vpop.permute.xlu0 %6036
        %6038 = vrot.lane.b32.xlu0 %v5416, 110
        %v6039 = vpop.permute.xlu0 %6038
        %6040 = vrot.lane.b32.xlu0 %v5419, 110
        %v6041 = vpop.permute.xlu0 %6040
        %6042 = vrot.lane.b32.xlu0 %v5422, 110
        %v6043 = vpop.permute.xlu0 %6042
        %6044 = vrot.lane.b32.xlu0 %v5425, 110
        %v6045 = vpop.permute.xlu0 %6044
        %6046 = vrot.lane.b32.xlu0 %v5428, 110
        %v6047 = vpop.permute.xlu0 %6046
        %6048 = vrot.lane.b32.xlu0 %v5431, 110
        %v6049 = vpop.permute.xlu0 %6048
        %6050 = vrot.lane.b32.xlu0 %v5434, 110
        %v6051 = vpop.permute.xlu0 %6050
        %6052 = vrot.lane.b32.xlu0 %v5437, 110
        %v6053 = vpop.permute.xlu0 %6052
        %6054 = vrot.lane.b32.xlu0 %v5440, 110
        %v6055 = vpop.permute.xlu0 %6054
        %6056 = vrot.lane.b32.xlu0 %v5443, 110
        %v6057 = vpop.permute.xlu0 %6056
        %6058 = vrot.lane.b32.xlu0 %v5446, 110
        %v6059 = vpop.permute.xlu0 %6058
        %6060 = vrot.lane.b32.xlu0 %v5449, 110
        %v6061 = vpop.permute.xlu0 %6060
        %6062 = vrot.lane.b32.xlu0 %v5452, 110
        %v6063 = vpop.permute.xlu0 %6062
        %6064 = vrot.lane.b32.xlu0 %v5455, 110
        %v6065 = vpop.permute.xlu0 %6064
        %6066 = vrot.lane.b32.xlu0 %v5458, 110
        %v6067 = vpop.permute.xlu0 %6066
        %6068 = vrot.lane.b32.xlu0 %v5366, 110
        %v6069 = vpop.permute.xlu0 %6068
        %6070 = vrot.lane.b32.xlu0 %v5369, 110
        %v6071 = vpop.permute.xlu0 %6070
        %6072 = vrot.lane.b32.xlu0 %v5372, 110
        %v6073 = vpop.permute.xlu0 %6072
        %6074 = vrot.lane.b32.xlu0 %v5375, 110
        %v6075 = vpop.permute.xlu0 %6074
        %6076 = vrot.lane.b32.xlu0 %v5378, 110
        %v6077 = vpop.permute.xlu0 %6076
        %6078 = vrot.lane.b32.xlu0 %v5381, 110
        %v6079 = vpop.permute.xlu0 %6078
        %6080 = vrot.lane.b32.xlu0 %v5384, 110
        %v6081 = vpop.permute.xlu0 %6080
        %6082 = vrot.lane.b32.xlu0 %v5387, 110
        %v6083 = vpop.permute.xlu0 %6082
        %6084 = vrot.lane.b32.xlu0 %v5390, 110
        %v6085 = vpop.permute.xlu0 %6084
        %6086 = vrot.lane.b32.xlu0 %v5393, 110
        %v6087 = vpop.permute.xlu0 %6086
        %6088 = vrot.lane.b32.xlu0 %v5396, 110
        %v6089 = vpop.permute.xlu0 %6088
        %6090 = vrot.lane.b32.xlu0 %v5399, 110
        %v6091 = vpop.permute.xlu0 %6090
        %6092 = vrot.lane.b32.xlu0 %v5402, 110
        %v6093 = vpop.permute.xlu0 %6092
        %6094 = vrot.lane.b32.xlu0 %v5405, 110
        %v6095 = vpop.permute.xlu0 %6094
        %6096 = vrot.lane.b32.xlu0 %v5408, 110
        %v6097 = vpop.permute.xlu0 %6096
        %6098 = vrot.lane.b32.xlu0 %v5411, 110
        %v6099 = vpop.permute.xlu0 %6098
        %6100 = vrot.lane.b32.xlu0 %v5414, 110
        %v6101 = vpop.permute.xlu0 %6100
        %6102 = vrot.lane.b32.xlu0 %v5417, 110
        %v6103 = vpop.permute.xlu0 %6102
        %6104 = vrot.lane.b32.xlu0 %v5420, 110
        %v6105 = vpop.permute.xlu0 %6104
        %6106 = vrot.lane.b32.xlu0 %v5423, 110
        %v6107 = vpop.permute.xlu0 %6106
        %6108 = vrot.lane.b32.xlu0 %v5426, 110
        %v6109 = vpop.permute.xlu0 %6108
        %6110 = vrot.lane.b32.xlu0 %v5429, 110
        %v6111 = vpop.permute.xlu0 %6110
        %6112 = vrot.lane.b32.xlu0 %v5432, 110
        %v6113 = vpop.permute.xlu0 %6112
        %6114 = vrot.lane.b32.xlu0 %v5435, 110
        %v6115 = vpop.permute.xlu0 %6114
        %6116 = vrot.lane.b32.xlu0 %v5438, 110
        %v6117 = vpop.permute.xlu0 %6116
        %6118 = vrot.lane.b32.xlu0 %v5441, 110
        %v6119 = vpop.permute.xlu0 %6118
        %6120 = vrot.lane.b32.xlu0 %v5444, 110
        %v6121 = vpop.permute.xlu0 %6120
        %6122 = vrot.lane.b32.xlu0 %v5447, 110
        %v6123 = vpop.permute.xlu0 %6122
        %6124 = vrot.lane.b32.xlu0 %v5450, 110
        %v6125 = vpop.permute.xlu0 %6124
        %6126 = vrot.lane.b32.xlu0 %v5453, 110
        %v6127 = vpop.permute.xlu0 %6126
        %6128 = vrot.lane.b32.xlu0 %v5456, 110
        %v6129 = vpop.permute.xlu0 %6128
        %6130 = vrot.lane.b32.xlu0 %v5459, 110
        %v6131 = vpop.permute.xlu0 %6130
        %v6132 = vsel %vm2661, %v6005, %v6069
        %v6133 = vsel %vm2661, %v6007, %v6071
        %v6134 = vsel %vm2661, %v6009, %v6073
        %v6135 = vsel %vm2661, %v6011, %v6075
        %v6136 = vsel %vm2661, %v6013, %v6077
        %v6137 = vsel %vm2661, %v6015, %v6079
        %v6138 = vsel %vm2661, %v6017, %v6081
        %v6139 = vsel %vm2661, %v6019, %v6083
        %v6140 = vsel %vm2661, %v6021, %v6085
        %v6141 = vsel %vm2661, %v6023, %v6087
        %v6142 = vsel %vm2661, %v6025, %v6089
        %v6143 = vsel %vm2661, %v6027, %v6091
        %v6144 = vsel %vm2661, %v6029, %v6093
        %v6145 = vsel %vm2661, %v6031, %v6095
        %v6146 = vsel %vm2661, %v6033, %v6097
        %v6147 = vsel %vm2661, %v6035, %v6099
        %v6148 = vsel %vm2661, %v6037, %v6101
        %v6149 = vsel %vm2661, %v6039, %v6103
        %v6150 = vsel %vm2661, %v6041, %v6105
        %v6151 = vsel %vm2661, %v6043, %v6107
        %v6152 = vsel %vm2661, %v6045, %v6109
        %v6153 = vsel %vm2661, %v6047, %v6111
        %v6154 = vsel %vm2661, %v6049, %v6113
        %v6155 = vsel %vm2661, %v6051, %v6115
        %v6156 = vsel %vm2661, %v6053, %v6117
        %v6157 = vsel %vm2661, %v6055, %v6119
        %v6158 = vsel %vm2661, %v6057, %v6121
        %v6159 = vsel %vm2661, %v6059, %v6123
        %v6160 = vsel %vm2661, %v6061, %v6125
        %v6161 = vsel %vm2661, %v6063, %v6127
        %v6162 = vsel %vm2661, %v6065, %v6129
        %v6163 = vsel %vm2661, %v6067, %v6131
        %v6164 = vsel %vm2661, %v5941, %v6005
        %v6165 = vsel %vm2661, %v5943, %v6007
        %v6166 = vsel %vm2661, %v5945, %v6009
        %v6167 = vsel %vm2661, %v5947, %v6011
        %v6168 = vsel %vm2661, %v5949, %v6013
        %v6169 = vsel %vm2661, %v5951, %v6015
        %v6170 = vsel %vm2661, %v5953, %v6017
        %v6171 = vsel %vm2661, %v5955, %v6019
        %v6172 = vsel %vm2661, %v5957, %v6021
        %v6173 = vsel %vm2661, %v5959, %v6023
        %v6174 = vsel %vm2661, %v5961, %v6025
        %v6175 = vsel %vm2661, %v5963, %v6027
        %v6176 = vsel %vm2661, %v5965, %v6029
        %v6177 = vsel %vm2661, %v5967, %v6031
        %v6178 = vsel %vm2661, %v5969, %v6033
        %v6179 = vsel %vm2661, %v5971, %v6035
        %v6180 = vsel %vm2661, %v5973, %v6037
        %v6181 = vsel %vm2661, %v5975, %v6039
        %v6182 = vsel %vm2661, %v5977, %v6041
        %v6183 = vsel %vm2661, %v5979, %v6043
        %v6184 = vsel %vm2661, %v5981, %v6045
        %v6185 = vsel %vm2661, %v5983, %v6047
        %v6186 = vsel %vm2661, %v5985, %v6049
        %v6187 = vsel %vm2661, %v5987, %v6051
        %v6188 = vsel %vm2661, %v5989, %v6053
        %v6189 = vsel %vm2661, %v5991, %v6055
        %v6190 = vsel %vm2661, %v5993, %v6057
        %v6191 = vsel %vm2661, %v5995, %v6059
        %v6192 = vsel %vm2661, %v5997, %v6061
        %v6193 = vsel %vm2661, %v5999, %v6063
        %v6194 = vsel %vm2661, %v6001, %v6065
        %v6195 = vsel %vm2661, %v6003, %v6067
        %v6196 = vsel %vm2661, %v6069, %v5941
        %v6197 = vsel %vm2661, %v6071, %v5943
        %v6198 = vsel %vm2661, %v6073, %v5945
        %v6199 = vsel %vm2661, %v6075, %v5947
        %v6200 = vsel %vm2661, %v6077, %v5949
        %v6201 = vsel %vm2661, %v6079, %v5951
        %v6202 = vsel %vm2661, %v6081, %v5953
        %v6203 = vsel %vm2661, %v6083, %v5955
        %v6204 = vsel %vm2661, %v6085, %v5957
        %v6205 = vsel %vm2661, %v6087, %v5959
        %v6206 = vsel %vm2661, %v6089, %v5961
        %v6207 = vsel %vm2661, %v6091, %v5963
        %v6208 = vsel %vm2661, %v6093, %v5965
        %v6209 = vsel %vm2661, %v6095, %v5967
        %v6210 = vsel %vm2661, %v6097, %v5969
        %v6211 = vsel %vm2661, %v6099, %v5971
        %v6212 = vsel %vm2661, %v6101, %v5973
        %v6213 = vsel %vm2661, %v6103, %v5975
        %v6214 = vsel %vm2661, %v6105, %v5977
        %v6215 = vsel %vm2661, %v6107, %v5979
        %v6216 = vsel %vm2661, %v6109, %v5981
        %v6217 = vsel %vm2661, %v6111, %v5983
        %v6218 = vsel %vm2661, %v6113, %v5985
        %v6219 = vsel %vm2661, %v6115, %v5987
        %v6220 = vsel %vm2661, %v6117, %v5989
        %v6221 = vsel %vm2661, %v6119, %v5991
        %v6222 = vsel %vm2661, %v6121, %v5993
        %v6223 = vsel %vm2661, %v6123, %v5995
        %v6224 = vsel %vm2661, %v6125, %v5997
        %v6225 = vsel %vm2661, %v6127, %v5999
        %v6226 = vsel %vm2661, %v6129, %v6001
        %v6227 = vsel %vm2661, %v6131, %v6003
        %v6228 = vmul.f32 %v2762, %v6164
        %v6229 = vmul.f32 %v2766, %v6132
        %v6230 = vmul.f32 %v2770, %v6196
        %v6231 = vmul.f32 %v2762, %v6165
        %v6232 = vmul.f32 %v2766, %v6133
        %v6233 = vmul.f32 %v2770, %v6197
        %v6234 = vmul.f32 %v2762, %v6166
        %v6235 = vmul.f32 %v2766, %v6134
        %v6236 = vmul.f32 %v2770, %v6198
        %v6237 = vmul.f32 %v2762, %v6167
        %v6238 = vmul.f32 %v2766, %v6135
        %v6239 = vmul.f32 %v2770, %v6199
        %v6240 = vmul.f32 %v2762, %v6168
        %v6241 = vmul.f32 %v2766, %v6136
        %v6242 = vmul.f32 %v2770, %v6200
        %v6243 = vmul.f32 %v2762, %v6169
        %v6244 = vmul.f32 %v2766, %v6137
        %v6245 = vmul.f32 %v2770, %v6201
        %v6246 = vmul.f32 %v2762, %v6170
        %v6247 = vmul.f32 %v2766, %v6138
        %v6248 = vmul.f32 %v2770, %v6202
        %v6249 = vmul.f32 %v2762, %v6171
        %v6250 = vmul.f32 %v2766, %v6139
        %v6251 = vmul.f32 %v2770, %v6203
        %v6252 = vmul.f32 %v2762, %v6172
        %v6253 = vmul.f32 %v2766, %v6140
        %v6254 = vmul.f32 %v2770, %v6204
        %v6255 = vmul.f32 %v2762, %v6173
        %v6256 = vmul.f32 %v2766, %v6141
        %v6257 = vmul.f32 %v2770, %v6205
        %v6258 = vmul.f32 %v2762, %v6174
        %v6259 = vmul.f32 %v2766, %v6142
        %v6260 = vmul.f32 %v2770, %v6206
        %v6261 = vmul.f32 %v2762, %v6175
        %v6262 = vmul.f32 %v2766, %v6143
        %v6263 = vmul.f32 %v2770, %v6207
        %v6264 = vmul.f32 %v2762, %v6176
        %v6265 = vmul.f32 %v2766, %v6144
        %v6266 = vmul.f32 %v2770, %v6208
        %v6267 = vmul.f32 %v2762, %v6177
        %v6268 = vmul.f32 %v2766, %v6145
        %v6269 = vmul.f32 %v2770, %v6209
        %v6270 = vmul.f32 %v2762, %v6178
        %v6271 = vmul.f32 %v2766, %v6146
        %v6272 = vmul.f32 %v2770, %v6210
        %v6273 = vmul.f32 %v2762, %v6179
        %v6274 = vmul.f32 %v2766, %v6147
        %v6275 = vmul.f32 %v2770, %v6211
        %v6276 = vmul.f32 %v2762, %v6180
        %v6277 = vmul.f32 %v2766, %v6148
        %v6278 = vmul.f32 %v2770, %v6212
        %v6279 = vmul.f32 %v2762, %v6181
        %v6280 = vmul.f32 %v2766, %v6149
        %v6281 = vmul.f32 %v2770, %v6213
        %v6282 = vmul.f32 %v2762, %v6182
        %v6283 = vmul.f32 %v2766, %v6150
        %v6284 = vmul.f32 %v2770, %v6214
        %v6285 = vmul.f32 %v2762, %v6183
        %v6286 = vmul.f32 %v2766, %v6151
        %v6287 = vmul.f32 %v2770, %v6215
        %v6288 = vmul.f32 %v2762, %v6184
        %v6289 = vmul.f32 %v2766, %v6152
        %v6290 = vmul.f32 %v2770, %v6216
        %v6291 = vmul.f32 %v2762, %v6185
        %v6292 = vmul.f32 %v2766, %v6153
        %v6293 = vmul.f32 %v2770, %v6217
        %v6294 = vmul.f32 %v2762, %v6186
        %v6295 = vmul.f32 %v2766, %v6154
        %v6296 = vmul.f32 %v2770, %v6218
        %v6297 = vmul.f32 %v2762, %v6187
        %v6298 = vmul.f32 %v2766, %v6155
        %v6299 = vmul.f32 %v2770, %v6219
        %v6300 = vmul.f32 %v2762, %v6188
        %v6301 = vmul.f32 %v2766, %v6156
        %v6302 = vmul.f32 %v2770, %v6220
        %v6303 = vmul.f32 %v2762, %v6189
        %v6304 = vmul.f32 %v2766, %v6157
        %v6305 = vmul.f32 %v2770, %v6221
        %v6306 = vmul.f32 %v2762, %v6190
        %v6307 = vmul.f32 %v2766, %v6158
        %v6308 = vmul.f32 %v2770, %v6222
        %v6309 = vmul.f32 %v2762, %v6191
        %v6310 = vmul.f32 %v2766, %v6159
        %v6311 = vmul.f32 %v2770, %v6223
        %v6312 = vmul.f32 %v2762, %v6192
        %v6313 = vmul.f32 %v2766, %v6160
        %v6314 = vmul.f32 %v2770, %v6224
        %v6315 = vmul.f32 %v2762, %v6193
        %v6316 = vmul.f32 %v2766, %v6161
        %v6317 = vmul.f32 %v2770, %v6225
        %v6318 = vmul.f32 %v2762, %v6194
        %v6319 = vmul.f32 %v2766, %v6162
        %v6320 = vmul.f32 %v2770, %v6226
        %v6321 = vmul.f32 %v2762, %v6195
        %v6322 = vmul.f32 %v2766, %v6163
        %v6323 = vmul.f32 %v2770, %v6227
        %v6324 = vadd.f32 %v5844, %v6228
        %v6325 = vadd.f32 %v5845, %v6229
        %v6326 = vadd.f32 %v5846, %v6230
        %v6327 = vadd.f32 %v5847, %v6231
        %v6328 = vadd.f32 %v5848, %v6232
        %v6329 = vadd.f32 %v5849, %v6233
        %v6330 = vadd.f32 %v5850, %v6234
        %v6331 = vadd.f32 %v5851, %v6235
        %v6332 = vadd.f32 %v5852, %v6236
        %v6333 = vadd.f32 %v5853, %v6237
        %v6334 = vadd.f32 %v5854, %v6238
        %v6335 = vadd.f32 %v5855, %v6239
        %v6336 = vadd.f32 %v5856, %v6240
        %v6337 = vadd.f32 %v5857, %v6241
        %v6338 = vadd.f32 %v5858, %v6242
        %v6339 = vadd.f32 %v5859, %v6243
        %v6340 = vadd.f32 %v5860, %v6244
        %v6341 = vadd.f32 %v5861, %v6245
        %v6342 = vadd.f32 %v5862, %v6246
        %v6343 = vadd.f32 %v5863, %v6247
        %v6344 = vadd.f32 %v5864, %v6248
        %v6345 = vadd.f32 %v5865, %v6249
        %v6346 = vadd.f32 %v5866, %v6250
        %v6347 = vadd.f32 %v5867, %v6251
        %v6348 = vadd.f32 %v5868, %v6252
        %v6349 = vadd.f32 %v5869, %v6253
        %v6350 = vadd.f32 %v5870, %v6254
        %v6351 = vadd.f32 %v5871, %v6255
        %v6352 = vadd.f32 %v5872, %v6256
        %v6353 = vadd.f32 %v5873, %v6257
        %v6354 = vadd.f32 %v5874, %v6258
        %v6355 = vadd.f32 %v5875, %v6259
        %v6356 = vadd.f32 %v5876, %v6260
        %v6357 = vadd.f32 %v5877, %v6261
        %v6358 = vadd.f32 %v5878, %v6262
        %v6359 = vadd.f32 %v5879, %v6263
        %v6360 = vadd.f32 %v5880, %v6264
        %v6361 = vadd.f32 %v5881, %v6265
        %v6362 = vadd.f32 %v5882, %v6266
        %v6363 = vadd.f32 %v5883, %v6267
        %v6364 = vadd.f32 %v5884, %v6268
        %v6365 = vadd.f32 %v5885, %v6269
        %v6366 = vadd.f32 %v5886, %v6270
        %v6367 = vadd.f32 %v5887, %v6271
        %v6368 = vadd.f32 %v5888, %v6272
        %v6369 = vadd.f32 %v5889, %v6273
        %v6370 = vadd.f32 %v5890, %v6274
        %v6371 = vadd.f32 %v5891, %v6275
        %v6372 = vadd.f32 %v5892, %v6276
        %v6373 = vadd.f32 %v5893, %v6277
        %v6374 = vadd.f32 %v5894, %v6278
        %v6375 = vadd.f32 %v5895, %v6279
        %v6376 = vadd.f32 %v5896, %v6280
        %v6377 = vadd.f32 %v5897, %v6281
        %v6378 = vadd.f32 %v5898, %v6282
        %v6379 = vadd.f32 %v5899, %v6283
        %v6380 = vadd.f32 %v5900, %v6284
        %v6381 = vadd.f32 %v5901, %v6285
        %v6382 = vadd.f32 %v5902, %v6286
        %v6383 = vadd.f32 %v5903, %v6287
        %v6384 = vadd.f32 %v5904, %v6288
        %v6385 = vadd.f32 %v5905, %v6289
        %v6386 = vadd.f32 %v5906, %v6290
        %v6387 = vadd.f32 %v5907, %v6291
        %v6388 = vadd.f32 %v5908, %v6292
        %v6389 = vadd.f32 %v5909, %v6293
        %v6390 = vadd.f32 %v5910, %v6294
        %v6391 = vadd.f32 %v5911, %v6295
        %v6392 = vadd.f32 %v5912, %v6296
        %v6393 = vadd.f32 %v5913, %v6297
        %v6394 = vadd.f32 %v5914, %v6298
        %v6395 = vadd.f32 %v5915, %v6299
        %v6396 = vadd.f32 %v5916, %v6300
        %v6397 = vadd.f32 %v5917, %v6301
        %v6398 = vadd.f32 %v5918, %v6302
        %v6399 = vadd.f32 %v5919, %v6303
        %v6400 = vadd.f32 %v5920, %v6304
        %v6401 = vadd.f32 %v5921, %v6305
        %v6402 = vadd.f32 %v5922, %v6306
        %v6403 = vadd.f32 %v5923, %v6307
        %v6404 = vadd.f32 %v5924, %v6308
        %v6405 = vadd.f32 %v5925, %v6309
        %v6406 = vadd.f32 %v5926, %v6310
        %v6407 = vadd.f32 %v5927, %v6311
        %v6408 = vadd.f32 %v5928, %v6312
        %v6409 = vadd.f32 %v5929, %v6313
        %v6410 = vadd.f32 %v5930, %v6314
        %v6411 = vadd.f32 %v5931, %v6315
        %v6412 = vadd.f32 %v5932, %v6316
        %v6413 = vadd.f32 %v5933, %v6317
        %v6414 = vadd.f32 %v5934, %v6318
        %v6415 = vadd.f32 %v5935, %v6319
        %v6416 = vadd.f32 %v5936, %v6320
        %v6417 = vadd.f32 %v5937, %v6321
        %v6418 = vadd.f32 %v5938, %v6322
        %v6419 = vadd.f32 %v5939, %v6323
        %v6420 = vmax.f32 %v6324, %v6330
        %v6421 = vmax.f32 %v6327, %v6333
        %v6422 = vmax.f32 %v6420, %v6336
        %v6423 = vmax.f32 %v6421, %v6339
        %v6424 = vmax.f32 %v6422, %v6342
        %v6425 = vmax.f32 %v6423, %v6345
        %v6426 = vmax.f32 %v6424, %v6348
        %v6427 = vmax.f32 %v6425, %v6351
        %v6428 = vmax.f32 %v6426, %v6354
        %v6429 = vmax.f32 %v6427, %v6357
        %v6430 = vmax.f32 %v6428, %v6360
        %v6431 = vmax.f32 %v6429, %v6363
        %v6432 = vmax.f32 %v6430, %v6366
        %v6433 = vmax.f32 %v6431, %v6369
        %v6434 = vmax.f32 %v6432, %v6372
        %v6435 = vmax.f32 %v6433, %v6375
        %v6436 = vmax.f32 %v6434, %v6378
        %v6437 = vmax.f32 %v6435, %v6381
        %v6438 = vmax.f32 %v6436, %v6384
        %v6439 = vmax.f32 %v6437, %v6387
        %v6440 = vmax.f32 %v6438, %v6390
        %v6441 = vmax.f32 %v6439, %v6393
        %v6442 = vmax.f32 %v6440, %v6396
        %v6443 = vmax.f32 %v6441, %v6399
        %v6444 = vmax.f32 %v6442, %v6402
        %v6445 = vmax.f32 %v6443, %v6405
        %v6446 = vmax.f32 %v6444, %v6408
        %v6447 = vmax.f32 %v6445, %v6411
        %v6448 = vmax.f32 %v6446, %v6414
        %v6449 = vmax.f32 %v6447, %v6417
        %v6450 = vmax.f32 %v6448, %v6449
        %v6451 = vrot.slane %v6450, 4
        %v6452 = vmax.f32 %v6450, %v6451
        %v6453 = vrot.slane %v6452, 2
        %v6454 = vmax.f32 %v6452, %v6453
        %v6455 = vrot.slane %v6454, 1
        %v6456 = vmax.f32 %v6454, %v6455
        %v6457 = vmax.f32 %v6325, %v6331
        %v6458 = vmax.f32 %v6328, %v6334
        %v6459 = vmax.f32 %v6457, %v6337
        %v6460 = vmax.f32 %v6458, %v6340
        %v6461 = vmax.f32 %v6459, %v6343
        %v6462 = vmax.f32 %v6460, %v6346
        %v6463 = vmax.f32 %v6461, %v6349
        %v6464 = vmax.f32 %v6462, %v6352
        %v6465 = vmax.f32 %v6463, %v6355
        %v6466 = vmax.f32 %v6464, %v6358
        %v6467 = vmax.f32 %v6465, %v6361
        %v6468 = vmax.f32 %v6466, %v6364
        %v6469 = vmax.f32 %v6467, %v6367
        %v6470 = vmax.f32 %v6468, %v6370
        %v6471 = vmax.f32 %v6469, %v6373
        %v6472 = vmax.f32 %v6470, %v6376
        %v6473 = vmax.f32 %v6471, %v6379
        %v6474 = vmax.f32 %v6472, %v6382
        %v6475 = vmax.f32 %v6473, %v6385
        %v6476 = vmax.f32 %v6474, %v6388
        %v6477 = vmax.f32 %v6475, %v6391
        %v6478 = vmax.f32 %v6476, %v6394
        %v6479 = vmax.f32 %v6477, %v6397
        %v6480 = vmax.f32 %v6478, %v6400
        %v6481 = vmax.f32 %v6479, %v6403
        %v6482 = vmax.f32 %v6480, %v6406
        %v6483 = vmax.f32 %v6481, %v6409
        %v6484 = vmax.f32 %v6482, %v6412
        %v6485 = vmax.f32 %v6483, %v6415
        %v6486 = vmax.f32 %v6484, %v6418
        %v6487 = vmax.f32 %v6485, %v6486
        %v6488 = vrot.slane %v6487, 4
        %v6489 = vmax.f32 %v6487, %v6488
        %v6490 = vrot.slane %v6489, 2
        %v6491 = vmax.f32 %v6489, %v6490
        %v6492 = vrot.slane %v6491, 1
        %v6493 = vmax.f32 %v6491, %v6492
        %v6494 = vmax.f32 %v6326, %v6332
        %v6495 = vmax.f32 %v6329, %v6335
        %v6496 = vmax.f32 %v6494, %v6338
        %v6497 = vmax.f32 %v6495, %v6341
        %v6498 = vmax.f32 %v6496, %v6344
        %v6499 = vmax.f32 %v6497, %v6347
        %v6500 = vmax.f32 %v6498, %v6350
        %v6501 = vmax.f32 %v6499, %v6353
        %v6502 = vmax.f32 %v6500, %v6356
        %v6503 = vmax.f32 %v6501, %v6359
        %v6504 = vmax.f32 %v6502, %v6362
        %v6505 = vmax.f32 %v6503, %v6365
        %v6506 = vmax.f32 %v6504, %v6368
        %v6507 = vmax.f32 %v6505, %v6371
        %v6508 = vmax.f32 %v6506, %v6374
        %v6509 = vmax.f32 %v6507, %v6377
        %v6510 = vmax.f32 %v6508, %v6380
        %v6511 = vmax.f32 %v6509, %v6383
        %v6512 = vmax.f32 %v6510, %v6386
        %v6513 = vmax.f32 %v6511, %v6389
        %v6514 = vmax.f32 %v6512, %v6392
        %v6515 = vmax.f32 %v6513, %v6395
        %v6516 = vmax.f32 %v6514, %v6398
        %v6517 = vmax.f32 %v6515, %v6401
        %v6518 = vmax.f32 %v6516, %v6404
        %v6519 = vmax.f32 %v6517, %v6407
        %v6520 = vmax.f32 %v6518, %v6410
        %v6521 = vmax.f32 %v6519, %v6413
        %v6522 = vmax.f32 %v6520, %v6416
        %v6523 = vmax.f32 %v6521, %v6419
        %v6524 = vmax.f32 %v6522, %v6523
        %v6525 = vrot.slane %v6524, 4
        %v6526 = vmax.f32 %v6524, %v6525
        %v6527 = vrot.slane %v6526, 2
        %v6528 = vmax.f32 %v6526, %v6527
        %v6529 = vrot.slane %v6528, 1
        %v6530 = vmax.f32 %v6528, %v6529
        %v6531 = vsub.f32 %v6324, %v6456
        %v6532 = vsub.f32 %v6325, %v6493
        %v6533 = vsub.f32 %v6326, %v6530
        %v6534 = vsub.f32 %v6327, %v6456
        %v6535 = vsub.f32 %v6328, %v6493
        %v6536 = vsub.f32 %v6329, %v6530
        %v6537 = vsub.f32 %v6330, %v6456
        %v6538 = vsub.f32 %v6331, %v6493
        %v6539 = vsub.f32 %v6332, %v6530
        %v6540 = vsub.f32 %v6333, %v6456
        %v6541 = vsub.f32 %v6334, %v6493
        %v6542 = vsub.f32 %v6335, %v6530
        %v6543 = vsub.f32 %v6336, %v6456
        %v6544 = vsub.f32 %v6337, %v6493
        %v6545 = vsub.f32 %v6338, %v6530
        %v6546 = vsub.f32 %v6339, %v6456
        %v6547 = vsub.f32 %v6340, %v6493
        %v6548 = vsub.f32 %v6341, %v6530
        %v6549 = vsub.f32 %v6342, %v6456
        %v6550 = vsub.f32 %v6343, %v6493
        %v6551 = vsub.f32 %v6344, %v6530
        %v6552 = vsub.f32 %v6345, %v6456
        %v6553 = vsub.f32 %v6346, %v6493
        %v6554 = vsub.f32 %v6347, %v6530
        %v6555 = vsub.f32 %v6348, %v6456
        %v6556 = vsub.f32 %v6349, %v6493
        %v6557 = vsub.f32 %v6350, %v6530
        %v6558 = vsub.f32 %v6351, %v6456
        %v6559 = vsub.f32 %v6352, %v6493
        %v6560 = vsub.f32 %v6353, %v6530
        %v6561 = vsub.f32 %v6354, %v6456
        %v6562 = vsub.f32 %v6355, %v6493
        %v6563 = vsub.f32 %v6356, %v6530
        %v6564 = vsub.f32 %v6357, %v6456
        %v6565 = vsub.f32 %v6358, %v6493
        %v6566 = vsub.f32 %v6359, %v6530
        %v6567 = vsub.f32 %v6360, %v6456
        %v6568 = vsub.f32 %v6361, %v6493
        %v6569 = vsub.f32 %v6362, %v6530
        %v6570 = vsub.f32 %v6363, %v6456
        %v6571 = vsub.f32 %v6364, %v6493
        %v6572 = vsub.f32 %v6365, %v6530
        %v6573 = vsub.f32 %v6366, %v6456
        %v6574 = vsub.f32 %v6367, %v6493
        %v6575 = vsub.f32 %v6368, %v6530
        %v6576 = vsub.f32 %v6369, %v6456
        %v6577 = vsub.f32 %v6370, %v6493
        %v6578 = vsub.f32 %v6371, %v6530
        %v6579 = vsub.f32 %v6372, %v6456
        %v6580 = vsub.f32 %v6373, %v6493
        %v6581 = vsub.f32 %v6374, %v6530
        %v6582 = vsub.f32 %v6375, %v6456
        %v6583 = vsub.f32 %v6376, %v6493
        %v6584 = vsub.f32 %v6377, %v6530
        %v6585 = vsub.f32 %v6378, %v6456
        %v6586 = vsub.f32 %v6379, %v6493
        %v6587 = vsub.f32 %v6380, %v6530
        %v6588 = vsub.f32 %v6381, %v6456
        %v6589 = vsub.f32 %v6382, %v6493
        %v6590 = vsub.f32 %v6383, %v6530
        %v6591 = vsub.f32 %v6384, %v6456
        %v6592 = vsub.f32 %v6385, %v6493
        %v6593 = vsub.f32 %v6386, %v6530
        %v6594 = vsub.f32 %v6387, %v6456
        %v6595 = vsub.f32 %v6388, %v6493
        %v6596 = vsub.f32 %v6389, %v6530
        %v6597 = vsub.f32 %v6390, %v6456
        %v6598 = vsub.f32 %v6391, %v6493
        %v6599 = vsub.f32 %v6392, %v6530
        %v6600 = vsub.f32 %v6393, %v6456
        %v6601 = vsub.f32 %v6394, %v6493
        %v6602 = vsub.f32 %v6395, %v6530
        %v6603 = vsub.f32 %v6396, %v6456
        %v6604 = vsub.f32 %v6397, %v6493
        %v6605 = vsub.f32 %v6398, %v6530
        %v6606 = vsub.f32 %v6399, %v6456
        %v6607 = vsub.f32 %v6400, %v6493
        %v6608 = vsub.f32 %v6401, %v6530
        %v6609 = vsub.f32 %v6402, %v6456
        %v6610 = vsub.f32 %v6403, %v6493
        %v6611 = vsub.f32 %v6404, %v6530
        %v6612 = vsub.f32 %v6405, %v6456
        %v6613 = vsub.f32 %v6406, %v6493
        %v6614 = vsub.f32 %v6407, %v6530
        %v6615 = vsub.f32 %v6408, %v6456
        %v6616 = vsub.f32 %v6409, %v6493
        %v6617 = vsub.f32 %v6410, %v6530
        %v6618 = vsub.f32 %v6411, %v6456
        %v6619 = vsub.f32 %v6412, %v6493
        %v6620 = vsub.f32 %v6413, %v6530
        %v6621 = vsub.f32 %v6414, %v6456
        %v6622 = vsub.f32 %v6415, %v6493
        %v6623 = vsub.f32 %v6416, %v6530
        %v6624 = vsub.f32 %v6417, %v6456
        %v6625 = vsub.f32 %v6418, %v6493
        %v6626 = vsub.f32 %v6419, %v6530
        %v6627 = vmul.f32 %v6531, 1.442695
        %v6628 = vpow.pop %v6627
        %v6629 = vmul.f32 %v6532, 1.442695
        %v6630 = vpow.pop %v6629
        %v6631 = vmul.f32 %v6533, 1.442695
        %v6632 = vpow.pop %v6631
        %v6633 = vmul.f32 %v6534, 1.442695
        %v6634 = vpow.pop %v6633
        %v6635 = vmul.f32 %v6535, 1.442695
        %v6636 = vpow.pop %v6635
        %v6637 = vmul.f32 %v6536, 1.442695
        %v6638 = vpow.pop %v6637
        %v6639 = vmul.f32 %v6537, 1.442695
        %v6640 = vpow.pop %v6639
        %v6641 = vmul.f32 %v6538, 1.442695
        %v6642 = vpow.pop %v6641
        %v6643 = vmul.f32 %v6539, 1.442695
        %v6644 = vpow.pop %v6643
        %v6645 = vmul.f32 %v6540, 1.442695
        %v6646 = vpow.pop %v6645
        %v6647 = vmul.f32 %v6541, 1.442695
        %v6648 = vpow.pop %v6647
        %v6649 = vmul.f32 %v6542, 1.442695
        %v6650 = vpow.pop %v6649
        %v6651 = vmul.f32 %v6543, 1.442695
        %v6652 = vpow.pop %v6651
        %v6653 = vmul.f32 %v6544, 1.442695
        %v6654 = vpow.pop %v6653
        %v6655 = vmul.f32 %v6545, 1.442695
        %v6656 = vpow.pop %v6655
        %v6657 = vmul.f32 %v6546, 1.442695
        %v6658 = vpow.pop %v6657
        %v6659 = vmul.f32 %v6547, 1.442695
        %v6660 = vpow.pop %v6659
        %v6661 = vmul.f32 %v6548, 1.442695
        %v6662 = vpow.pop %v6661
        %v6663 = vmul.f32 %v6549, 1.442695
        %v6664 = vpow.pop %v6663
        %v6665 = vmul.f32 %v6550, 1.442695
        %v6666 = vpow.pop %v6665
        %v6667 = vmul.f32 %v6551, 1.442695
        %v6668 = vpow.pop %v6667
        %v6669 = vmul.f32 %v6552, 1.442695
        %v6670 = vpow.pop %v6669
        %v6671 = vmul.f32 %v6553, 1.442695
        %v6672 = vpow.pop %v6671
        %v6673 = vmul.f32 %v6554, 1.442695
        %v6674 = vpow.pop %v6673
        %v6675 = vmul.f32 %v6555, 1.442695
        %v6676 = vpow.pop %v6675
        %v6677 = vmul.f32 %v6556, 1.442695
        %v6678 = vpow.pop %v6677
        %v6679 = vmul.f32 %v6557, 1.442695
        %v6680 = vpow.pop %v6679
        %v6681 = vmul.f32 %v6558, 1.442695
        %v6682 = vpow.pop %v6681
        %v6683 = vmul.f32 %v6559, 1.442695
        %v6684 = vpow.pop %v6683
        %v6685 = vmul.f32 %v6560, 1.442695
        %v6686 = vpow.pop %v6685
        %v6687 = vmul.f32 %v6561, 1.442695
        %v6688 = vpow.pop %v6687
        %v6689 = vmul.f32 %v6562, 1.442695
        %v6690 = vpow.pop %v6689
        %v6691 = vmul.f32 %v6563, 1.442695
        %v6692 = vpow.pop %v6691
        %v6693 = vmul.f32 %v6564, 1.442695
        %v6694 = vpow.pop %v6693
        %v6695 = vmul.f32 %v6565, 1.442695
        %v6696 = vpow.pop %v6695
        %v6697 = vmul.f32 %v6566, 1.442695
        %v6698 = vpow.pop %v6697
        %v6699 = vmul.f32 %v6567, 1.442695
        %v6700 = vpow.pop %v6699
        %v6701 = vmul.f32 %v6568, 1.442695
        %v6702 = vpow.pop %v6701
        %v6703 = vmul.f32 %v6569, 1.442695
        %v6704 = vpow.pop %v6703
        %v6705 = vmul.f32 %v6570, 1.442695
        %v6706 = vpow.pop %v6705
        %v6707 = vmul.f32 %v6571, 1.442695
        %v6708 = vpow.pop %v6707
        %v6709 = vmul.f32 %v6572, 1.442695
        %v6710 = vpow.pop %v6709
        %v6711 = vmul.f32 %v6573, 1.442695
        %v6712 = vpow.pop %v6711
        %v6713 = vmul.f32 %v6574, 1.442695
        %v6714 = vpow.pop %v6713
        %v6715 = vmul.f32 %v6575, 1.442695
        %v6716 = vpow.pop %v6715
        %v6717 = vmul.f32 %v6576, 1.442695
        %v6718 = vpow.pop %v6717
        %v6719 = vmul.f32 %v6577, 1.442695
        %v6720 = vpow.pop %v6719
        %v6721 = vmul.f32 %v6578, 1.442695
        %v6722 = vpow.pop %v6721
        %v6723 = vmul.f32 %v6579, 1.442695
        %v6724 = vpow.pop %v6723
        %v6725 = vmul.f32 %v6580, 1.442695
        %v6726 = vpow.pop %v6725
        %v6727 = vmul.f32 %v6581, 1.442695
        %v6728 = vpow.pop %v6727
        %v6729 = vmul.f32 %v6582, 1.442695
        %v6730 = vpow.pop %v6729
        %v6731 = vmul.f32 %v6583, 1.442695
        %v6732 = vpow.pop %v6731
        %v6733 = vmul.f32 %v6584, 1.442695
        %v6734 = vpow.pop %v6733
        %v6735 = vmul.f32 %v6585, 1.442695
        %v6736 = vpow.pop %v6735
        %v6737 = vmul.f32 %v6586, 1.442695
        %v6738 = vpow.pop %v6737
        %v6739 = vmul.f32 %v6587, 1.442695
        %v6740 = vpow.pop %v6739
        %v6741 = vmul.f32 %v6588, 1.442695
        %v6742 = vpow.pop %v6741
        %v6743 = vmul.f32 %v6589, 1.442695
        %v6744 = vpow.pop %v6743
        %v6745 = vmul.f32 %v6590, 1.442695
        %v6746 = vpow.pop %v6745
        %v6747 = vmul.f32 %v6591, 1.442695
        %v6748 = vpow.pop %v6747
        %v6749 = vmul.f32 %v6592, 1.442695
        %v6750 = vpow.pop %v6749
        %v6751 = vmul.f32 %v6593, 1.442695
        %v6752 = vpow.pop %v6751
        %v6753 = vmul.f32 %v6594, 1.442695
        %v6754 = vpow.pop %v6753
        %v6755 = vmul.f32 %v6595, 1.442695
        %v6756 = vpow.pop %v6755
        %v6757 = vmul.f32 %v6596, 1.442695
        %v6758 = vpow.pop %v6757
        %v6759 = vmul.f32 %v6597, 1.442695
        %v6760 = vpow.pop %v6759
        %v6761 = vmul.f32 %v6598, 1.442695
        %v6762 = vpow.pop %v6761
        %v6763 = vmul.f32 %v6599, 1.442695
        %v6764 = vpow.pop %v6763
        %v6765 = vmul.f32 %v6600, 1.442695
        %v6766 = vpow.pop %v6765
        %v6767 = vmul.f32 %v6601, 1.442695
        %v6768 = vpow.pop %v6767
        %v6769 = vmul.f32 %v6602, 1.442695
        %v6770 = vpow.pop %v6769
        %v6771 = vmul.f32 %v6603, 1.442695
        %v6772 = vpow.pop %v6771
        %v6773 = vmul.f32 %v6604, 1.442695
        %v6774 = vpow.pop %v6773
        %v6775 = vmul.f32 %v6605, 1.442695
        %v6776 = vpow.pop %v6775
        %v6777 = vmul.f32 %v6606, 1.442695
        %v6778 = vpow.pop %v6777
        %v6779 = vmul.f32 %v6607, 1.442695
        %v6780 = vpow.pop %v6779
        %v6781 = vmul.f32 %v6608, 1.442695
        %v6782 = vpow.pop %v6781
        %v6783 = vmul.f32 %v6609, 1.442695
        %v6784 = vpow.pop %v6783
        %v6785 = vmul.f32 %v6610, 1.442695
        %v6786 = vpow.pop %v6785
        %v6787 = vmul.f32 %v6611, 1.442695
        %v6788 = vpow.pop %v6787
        %v6789 = vmul.f32 %v6612, 1.442695
        %v6790 = vpow.pop %v6789
        %v6791 = vmul.f32 %v6613, 1.442695
        %v6792 = vpow.pop %v6791
        %v6793 = vmul.f32 %v6614, 1.442695
        %v6794 = vpow.pop %v6793
        %v6795 = vmul.f32 %v6615, 1.442695
        %v6796 = vpow.pop %v6795
        %v6797 = vmul.f32 %v6616, 1.442695
        %v6798 = vpow.pop %v6797
        %v6799 = vmul.f32 %v6617, 1.442695
        %v6800 = vpow.pop %v6799
        %v6801 = vmul.f32 %v6618, 1.442695
        %v6802 = vpow.pop %v6801
        %v6803 = vmul.f32 %v6619, 1.442695
        %v6804 = vpow.pop %v6803
        %v6805 = vmul.f32 %v6620, 1.442695
        %v6806 = vpow.pop %v6805
        %v6807 = vmul.f32 %v6621, 1.442695
        %v6808 = vpow.pop %v6807
        %v6809 = vmul.f32 %v6622, 1.442695
        %v6810 = vpow.pop %v6809
        %v6811 = vmul.f32 %v6623, 1.442695
        %v6812 = vpow.pop %v6811
        %v6813 = vmul.f32 %v6624, 1.442695
        %v6814 = vpow.pop %v6813
        %v6815 = vmul.f32 %v6625, 1.442695
        %v6816 = vpow.pop %v6815
        %v6817 = vmul.f32 %v6626, 1.442695
        %v6818 = vpow.pop %v6817
        %v6819 = vadd.f32 %v6628, %v6634
        %v6820 = vadd.f32 %v6819, %v6640
        %v6821 = vadd.f32 %v6820, %v6646
        %v6822 = vadd.f32 %v6821, %v6652
        %v6823 = vadd.f32 %v6822, %v6658
        %v6824 = vadd.f32 %v6823, %v6664
        %v6825 = vadd.f32 %v6824, %v6670
        %v6826 = vadd.f32 %v6825, %v6676
        %v6827 = vadd.f32 %v6826, %v6682
        %v6828 = vadd.f32 %v6827, %v6688
        %v6829 = vadd.f32 %v6828, %v6694
        %v6830 = vadd.f32 %v6829, %v6700
        %v6831 = vadd.f32 %v6830, %v6706
        %v6832 = vadd.f32 %v6831, %v6712
        %v6833 = vadd.f32 %v6832, %v6718
        %v6834 = vadd.f32 %v6833, %v6724
        %v6835 = vadd.f32 %v6834, %v6730
        %v6836 = vadd.f32 %v6835, %v6736
        %v6837 = vadd.f32 %v6836, %v6742
        %v6838 = vadd.f32 %v6837, %v6748
        %v6839 = vadd.f32 %v6838, %v6754
        %v6840 = vadd.f32 %v6839, %v6760
        %v6841 = vadd.f32 %v6840, %v6766
        %v6842 = vadd.f32 %v6841, %v6772
        %v6843 = vadd.f32 %v6842, %v6778
        %v6844 = vadd.f32 %v6843, %v6784
        %v6845 = vadd.f32 %v6844, %v6790
        %v6846 = vadd.f32 %v6845, %v6796
        %v6847 = vadd.f32 %v6846, %v6802
        %v6848 = vadd.f32 %v6847, %v6808
        %v6849 = vadd.f32 %v6848, %v6814
        %v6850 = vrot.slane %v6849, 4
        %v6851 = vadd.f32 %v6849, %v6850
        %v6852 = vrot.slane %v6851, 2
        %v6853 = vadd.f32 %v6851, %v6852
        %v6854 = vrot.slane %v6853, 1
        %v6855 = vadd.f32 %v6853, %v6854
        %v6856 = vadd.f32 %v6630, %v6636
        %v6857 = vadd.f32 %v6856, %v6642
        %v6858 = vadd.f32 %v6857, %v6648
        %v6859 = vadd.f32 %v6858, %v6654
        %v6860 = vadd.f32 %v6859, %v6660
        %v6861 = vadd.f32 %v6860, %v6666
        %v6862 = vadd.f32 %v6861, %v6672
        %v6863 = vadd.f32 %v6862, %v6678
        %v6864 = vadd.f32 %v6863, %v6684
        %v6865 = vadd.f32 %v6864, %v6690
        %v6866 = vadd.f32 %v6865, %v6696
        %v6867 = vadd.f32 %v6866, %v6702
        %v6868 = vadd.f32 %v6867, %v6708
        %v6869 = vadd.f32 %v6868, %v6714
        %v6870 = vadd.f32 %v6869, %v6720
        %v6871 = vadd.f32 %v6870, %v6726
        %v6872 = vadd.f32 %v6871, %v6732
        %v6873 = vadd.f32 %v6872, %v6738
        %v6874 = vadd.f32 %v6873, %v6744
        %v6875 = vadd.f32 %v6874, %v6750
        %v6876 = vadd.f32 %v6875, %v6756
        %v6877 = vadd.f32 %v6876, %v6762
        %v6878 = vadd.f32 %v6877, %v6768
        %v6879 = vadd.f32 %v6878, %v6774
        %v6880 = vadd.f32 %v6879, %v6780
        %v6881 = vadd.f32 %v6880, %v6786
        %v6882 = vadd.f32 %v6881, %v6792
        %v6883 = vadd.f32 %v6882, %v6798
        %v6884 = vadd.f32 %v6883, %v6804
        %v6885 = vadd.f32 %v6884, %v6810
        %v6886 = vadd.f32 %v6885, %v6816
        %v6887 = vrot.slane %v6886, 4
        %v6888 = vadd.f32 %v6886, %v6887
        %v6889 = vrot.slane %v6888, 2
        %v6890 = vadd.f32 %v6888, %v6889
        %v6891 = vrot.slane %v6890, 1
        %v6892 = vadd.f32 %v6890, %v6891
        %v6893 = vadd.f32 %v6632, %v6638
        %v6894 = vadd.f32 %v6893, %v6644
        %v6895 = vadd.f32 %v6894, %v6650
        %v6896 = vadd.f32 %v6895, %v6656
        %v6897 = vadd.f32 %v6896, %v6662
        %v6898 = vadd.f32 %v6897, %v6668
        %v6899 = vadd.f32 %v6898, %v6674
        %v6900 = vadd.f32 %v6899, %v6680
        %v6901 = vadd.f32 %v6900, %v6686
        %v6902 = vadd.f32 %v6901, %v6692
        %v6903 = vadd.f32 %v6902, %v6698
        %v6904 = vadd.f32 %v6903, %v6704
        %v6905 = vadd.f32 %v6904, %v6710
        %v6906 = vadd.f32 %v6905, %v6716
        %v6907 = vadd.f32 %v6906, %v6722
        %v6908 = vadd.f32 %v6907, %v6728
        %v6909 = vadd.f32 %v6908, %v6734
        %v6910 = vadd.f32 %v6909, %v6740
        %v6911 = vadd.f32 %v6910, %v6746
        %v6912 = vadd.f32 %v6911, %v6752
        %v6913 = vadd.f32 %v6912, %v6758
        %v6914 = vadd.f32 %v6913, %v6764
        %v6915 = vadd.f32 %v6914, %v6770
        %v6916 = vadd.f32 %v6915, %v6776
        %v6917 = vadd.f32 %v6916, %v6782
        %v6918 = vadd.f32 %v6917, %v6788
        %v6919 = vadd.f32 %v6918, %v6794
        %v6920 = vadd.f32 %v6919, %v6800
        %v6921 = vadd.f32 %v6920, %v6806
        %v6922 = vadd.f32 %v6921, %v6812
        %v6923 = vadd.f32 %v6922, %v6818
        %v6924 = vrot.slane %v6923, 4
        %v6925 = vadd.f32 %v6923, %v6924
        %v6926 = vrot.slane %v6925, 2
        %v6927 = vadd.f32 %v6925, %v6926
        %v6928 = vrot.slane %v6927, 1
        %v6929 = vadd.f32 %v6927, %v6928
        %v6930 = vrcp.pop %v6855
        %v6931 = vrcp.pop %v6892
        %v6932 = vrcp.pop %v6929
        %v6933 = vmul.f32 %v6628, %v6930
        %v6934 = vmul.f32 %v6630, %v6931
        %v6935 = vmul.f32 %v6632, %v6932
        %v6936 = vmul.f32 %v6634, %v6930
        %v6937 = vmul.f32 %v6636, %v6931
        %v6938 = vmul.f32 %v6638, %v6932
        %v6939 = vmul.f32 %v6640, %v6930
        %v6940 = vmul.f32 %v6642, %v6931
        %v6941 = vmul.f32 %v6644, %v6932
        %v6942 = vmul.f32 %v6646, %v6930
        %v6943 = vmul.f32 %v6648, %v6931
        %v6944 = vmul.f32 %v6650, %v6932
        %v6945 = vmul.f32 %v6652, %v6930
        %v6946 = vmul.f32 %v6654, %v6931
        %v6947 = vmul.f32 %v6656, %v6932
        %v6948 = vmul.f32 %v6658, %v6930
        %v6949 = vmul.f32 %v6660, %v6931
        %v6950 = vmul.f32 %v6662, %v6932
        %v6951 = vmul.f32 %v6664, %v6930
        %v6952 = vmul.f32 %v6666, %v6931
        %v6953 = vmul.f32 %v6668, %v6932
        %v6954 = vmul.f32 %v6670, %v6930
        %v6955 = vmul.f32 %v6672, %v6931
        %v6956 = vmul.f32 %v6674, %v6932
        %v6957 = vmul.f32 %v6676, %v6930
        %v6958 = vmul.f32 %v6678, %v6931
        %v6959 = vmul.f32 %v6680, %v6932
        %v6960 = vmul.f32 %v6682, %v6930
        %v6961 = vmul.f32 %v6684, %v6931
        %v6962 = vmul.f32 %v6686, %v6932
        %v6963 = vmul.f32 %v6688, %v6930
        %v6964 = vmul.f32 %v6690, %v6931
        %v6965 = vmul.f32 %v6692, %v6932
        %v6966 = vmul.f32 %v6694, %v6930
        %v6967 = vmul.f32 %v6696, %v6931
        %v6968 = vmul.f32 %v6698, %v6932
        %v6969 = vmul.f32 %v6700, %v6930
        %v6970 = vmul.f32 %v6702, %v6931
        %v6971 = vmul.f32 %v6704, %v6932
        %v6972 = vmul.f32 %v6706, %v6930
        %v6973 = vmul.f32 %v6708, %v6931
        %v6974 = vmul.f32 %v6710, %v6932
        %v6975 = vmul.f32 %v6712, %v6930
        %v6976 = vmul.f32 %v6714, %v6931
        %v6977 = vmul.f32 %v6716, %v6932
        %v6978 = vmul.f32 %v6718, %v6930
        %v6979 = vmul.f32 %v6720, %v6931
        %v6980 = vmul.f32 %v6722, %v6932
        %v6981 = vmul.f32 %v6724, %v6930
        %v6982 = vmul.f32 %v6726, %v6931
        %v6983 = vmul.f32 %v6728, %v6932
        %v6984 = vmul.f32 %v6730, %v6930
        %v6985 = vmul.f32 %v6732, %v6931
        %v6986 = vmul.f32 %v6734, %v6932
        %v6987 = vmul.f32 %v6736, %v6930
        %v6988 = vmul.f32 %v6738, %v6931
        %v6989 = vmul.f32 %v6740, %v6932
        %v6990 = vmul.f32 %v6742, %v6930
        %v6991 = vmul.f32 %v6744, %v6931
        %v6992 = vmul.f32 %v6746, %v6932
        %v6993 = vmul.f32 %v6748, %v6930
        %v6994 = vmul.f32 %v6750, %v6931
        %v6995 = vmul.f32 %v6752, %v6932
        %v6996 = vmul.f32 %v6754, %v6930
        %v6997 = vmul.f32 %v6756, %v6931
        %v6998 = vmul.f32 %v6758, %v6932
        %v6999 = vmul.f32 %v6760, %v6930
        %v7000 = vmul.f32 %v6762, %v6931
        %v7001 = vmul.f32 %v6764, %v6932
        %v7002 = vmul.f32 %v6766, %v6930
        %v7003 = vmul.f32 %v6768, %v6931
        %v7004 = vmul.f32 %v6770, %v6932
        %v7005 = vmul.f32 %v6772, %v6930
        %v7006 = vmul.f32 %v6774, %v6931
        %v7007 = vmul.f32 %v6776, %v6932
        %v7008 = vmul.f32 %v6778, %v6930
        %v7009 = vmul.f32 %v6780, %v6931
        %v7010 = vmul.f32 %v6782, %v6932
        %v7011 = vmul.f32 %v6784, %v6930
        %v7012 = vmul.f32 %v6786, %v6931
        %v7013 = vmul.f32 %v6788, %v6932
        %v7014 = vmul.f32 %v6790, %v6930
        %v7015 = vmul.f32 %v6792, %v6931
        %v7016 = vmul.f32 %v6794, %v6932
        %v7017 = vmul.f32 %v6796, %v6930
        %v7018 = vmul.f32 %v6798, %v6931
        %v7019 = vmul.f32 %v6800, %v6932
        %v7020 = vmul.f32 %v6802, %v6930
        %v7021 = vmul.f32 %v6804, %v6931
        %v7022 = vmul.f32 %v6806, %v6932
        %v7023 = vmul.f32 %v6808, %v6930
        %v7024 = vmul.f32 %v6810, %v6931
        %v7025 = vmul.f32 %v6812, %v6932
        %v7026 = vmul.f32 %v6814, %v6930
        %v7027 = vmul.f32 %v6816, %v6931
        %v7028 = vmul.f32 %v6818, %v6932
        %7029 = vst [vmem:[%s280 + $0x300] sm:$0xff] %v6933
        %7030 = vst [vmem:[%s280 + $0x308] sm:$0xff] %v6934
        %7031 = vst [vmem:[%s280 + $0x310] sm:$0xff] %v6935
        %7032 = vst [vmem:[%s280 + $0x318] sm:$0xff] %v6936
        %7033 = vst [vmem:[%s280 + $0x320] sm:$0xff] %v6937
        %7034 = vst [vmem:[%s280 + $0x328] sm:$0xff] %v6938
        %7035 = vst [vmem:[%s280 + $0x330] sm:$0xff] %v6939
        %7036 = vst [vmem:[%s280 + $0x338] sm:$0xff] %v6940
        %7037 = vst [vmem:[%s280 + $0x340] sm:$0xff] %v6941
        %7038 = vst [vmem:[%s280 + $0x348] sm:$0xff] %v6942
        %7039 = vst [vmem:[%s280 + $0x350] sm:$0xff] %v6943
        %7040 = vst [vmem:[%s280 + $0x358] sm:$0xff] %v6944
        %7041 = vst [vmem:[%s280 + $0x360] sm:$0xff] %v6945
        %7042 = vst [vmem:[%s280 + $0x368] sm:$0xff] %v6946
        %7043 = vst [vmem:[%s280 + $0x370] sm:$0xff] %v6947
        %7044 = vst [vmem:[%s280 + $0x378] sm:$0xff] %v6948
        %7045 = vst [vmem:[%s280 + $0x380] sm:$0xff] %v6949
        %7046 = vst [vmem:[%s280 + $0x388] sm:$0xff] %v6950
        %7047 = vst [vmem:[%s280 + $0x390] sm:$0xff] %v6951
        %7048 = vst [vmem:[%s280 + $0x398] sm:$0xff] %v6952
        %7049 = vst [vmem:[%s280 + $0x3a0] sm:$0xff] %v6953
        %7050 = vst [vmem:[%s280 + $0x3a8] sm:$0xff] %v6954
        %7051 = vst [vmem:[%s280 + $0x3b0] sm:$0xff] %v6955
        %7052 = vst [vmem:[%s280 + $0x3b8] sm:$0xff] %v6956
        %7053 = vst [vmem:[%s280 + $0x3c0] sm:$0xff] %v6957
        %7054 = vst [vmem:[%s280 + $0x3c8] sm:$0xff] %v6958
        %7055 = vst [vmem:[%s280 + $0x3d0] sm:$0xff] %v6959
        %7056 = vst [vmem:[%s280 + $0x3d8] sm:$0xff] %v6960
        %7057 = vst [vmem:[%s280 + $0x3e0] sm:$0xff] %v6961
        %7058 = vst [vmem:[%s280 + $0x3e8] sm:$0xff] %v6962
        %7059 = vst [vmem:[%s280 + $0x3f0] sm:$0xff] %v6963
        %7060 = vst [vmem:[%s280 + $0x3f8] sm:$0xff] %v6964
        %7061 = vst [vmem:[%s280 + $0x400] sm:$0xff] %v6965
        %7062 = vst [vmem:[%s280 + $0x408] sm:$0xff] %v6966
        %7063 = vst [vmem:[%s280 + $0x410] sm:$0xff] %v6967
        %7064 = vst [vmem:[%s280 + $0x418] sm:$0xff] %v6968
        %7065 = vst [vmem:[%s280 + $0x420] sm:$0xff] %v6969
        %7066 = vst [vmem:[%s280 + $0x428] sm:$0xff] %v6970
        %7067 = vst [vmem:[%s280 + $0x430] sm:$0xff] %v6971
        %7068 = vst [vmem:[%s280 + $0x438] sm:$0xff] %v6972
        %7069 = vst [vmem:[%s280 + $0x440] sm:$0xff] %v6973
        %7070 = vst [vmem:[%s280 + $0x448] sm:$0xff] %v6974
        %7071 = vst [vmem:[%s280 + $0x450] sm:$0xff] %v6975
        %7072 = vst [vmem:[%s280 + $0x458] sm:$0xff] %v6976
        %7073 = vst [vmem:[%s280 + $0x460] sm:$0xff] %v6977
        %7074 = vst [vmem:[%s280 + $0x468] sm:$0xff] %v6978
        %7075 = vst [vmem:[%s280 + $0x470] sm:$0xff] %v6979
        %7076 = vst [vmem:[%s280 + $0x478] sm:$0xff] %v6980
        %7077 = vst [vmem:[%s280 + $0x480] sm:$0xff] %v6981
        %7078 = vst [vmem:[%s280 + $0x488] sm:$0xff] %v6982
        %7079 = vst [vmem:[%s280 + $0x490] sm:$0xff] %v6983
        %7080 = vst [vmem:[%s280 + $0x498] sm:$0xff] %v6984
        %7081 = vst [vmem:[%s280 + $0x4a0] sm:$0xff] %v6985
        %7082 = vst [vmem:[%s280 + $0x4a8] sm:$0xff] %v6986
        %7083 = vst [vmem:[%s280 + $0x4b0] sm:$0xff] %v6987
        %7084 = vst [vmem:[%s280 + $0x4b8] sm:$0xff] %v6988
        %7085 = vst [vmem:[%s280 + $0x4c0] sm:$0xff] %v6989
        %7086 = vst [vmem:[%s280 + $0x4c8] sm:$0xff] %v6990
        %7087 = vst [vmem:[%s280 + $0x4d0] sm:$0xff] %v6991
        %7088 = vst [vmem:[%s280 + $0x4d8] sm:$0xff] %v6992
        %7089 = vst [vmem:[%s280 + $0x4e0] sm:$0xff] %v6993
        %7090 = vst [vmem:[%s280 + $0x4e8] sm:$0xff] %v6994
        %7091 = vst [vmem:[%s280 + $0x4f0] sm:$0xff] %v6995
        %7092 = vst [vmem:[%s280 + $0x4f8] sm:$0xff] %v6996
        %7093 = vst [vmem:[%s280 + $0x500] sm:$0xff] %v6997
        %7094 = vst [vmem:[%s280 + $0x508] sm:$0xff] %v6998
        %7095 = vst [vmem:[%s280 + $0x510] sm:$0xff] %v6999
        %7096 = vst [vmem:[%s280 + $0x518] sm:$0xff] %v7000
        %7097 = vst [vmem:[%s280 + $0x520] sm:$0xff] %v7001
        %7098 = vst [vmem:[%s280 + $0x528] sm:$0xff] %v7002
        %7099 = vst [vmem:[%s280 + $0x530] sm:$0xff] %v7003
        %7100 = vst [vmem:[%s280 + $0x538] sm:$0xff] %v7004
        %7101 = vst [vmem:[%s280 + $0x540] sm:$0xff] %v7005
        %7102 = vst [vmem:[%s280 + $0x548] sm:$0xff] %v7006
        %7103 = vst [vmem:[%s280 + $0x550] sm:$0xff] %v7007
        %7104 = vst [vmem:[%s280 + $0x558] sm:$0xff] %v7008
        %7105 = vst [vmem:[%s280 + $0x560] sm:$0xff] %v7009
        %7106 = vst [vmem:[%s280 + $0x568] sm:$0xff] %v7010
        %7107 = vst [vmem:[%s280 + $0x570] sm:$0xff] %v7011
        %7108 = vst [vmem:[%s280 + $0x578] sm:$0xff] %v7012
        %7109 = vst [vmem:[%s280 + $0x580] sm:$0xff] %v7013
        %7110 = vst [vmem:[%s280 + $0x588] sm:$0xff] %v7014
        %7111 = vst [vmem:[%s280 + $0x590] sm:$0xff] %v7015
        %7112 = vst [vmem:[%s280 + $0x598] sm:$0xff] %v7016
        %7113 = vst [vmem:[%s280 + $0x5a0] sm:$0xff] %v7017
        %7114 = vst [vmem:[%s280 + $0x5a8] sm:$0xff] %v7018
        %7115 = vst [vmem:[%s280 + $0x5b0] sm:$0xff] %v7019
        %7116 = vst [vmem:[%s280 + $0x5b8] sm:$0xff] %v7020
        %7117 = vst [vmem:[%s280 + $0x5c0] sm:$0xff] %v7021
        %7118 = vst [vmem:[%s280 + $0x5c8] sm:$0xff] %v7022
        %7119 = vst [vmem:[%s280 + $0x5d0] sm:$0xff] %v7023
        %7120 = vst [vmem:[%s280 + $0x5d8] sm:$0xff] %v7024
        %7121 = vst [vmem:[%s280 + $0x5e0] sm:$0xff] %v7025
        %7122 = vst [vmem:[%s280 + $0x5e8] sm:$0xff] %v7026
        %7123 = vst [vmem:[%s280 + $0x5f0] sm:$0xff] %v7027
        %7124 = vst [vmem:[%s280 + $0x5f8] sm:$0xff] %v7028
        %7125 = vmatprep.subr.mxu0 %v6979
        %7126 = vmatpush1.msra.mxu0 %v6978
        %7127 = vmatprep.subr.mxu0 %v6976
        %7128 = vmatpush1.msra.mxu0 %v6975
        %7129 = vmatprep.subr.mxu0 %v6973
        %7130 = vmatpush1.msra.mxu0 %v6972
        %7131 = vmatprep.subr.mxu0 %v6970
        %7132 = vmatpush1.msra.mxu0 %v6969
        %7133 = vmatprep.subr.mxu0 %v6967
        %7134 = vmatpush1.msra.mxu0 %v6966
        %7135 = vmatprep.subr.mxu0 %v6964
        %7136 = vmatpush1.msra.mxu0 %v6963
        %7137 = vmatprep.subr.mxu0 %v6961
        %7138 = vmatpush1.msra.mxu0 %v6960
        %7139 = vmatprep.subr.mxu0 %v6958
        %7140 = vmatpush1.msra.mxu0 %v6957
        %7141 = vmatprep.subr.mxu0 %v6955
        %7142 = vmatpush1.msra.mxu0 %v6954
        %7143 = vmatprep.subr.mxu0 %v6952
        %7144 = vmatpush1.msra.mxu0 %v6951
        %7145 = vmatprep.subr.mxu0 %v6949
        %7146 = vmatpush1.msra.mxu0 %v6948
        %7147 = vmatprep.subr.mxu0 %v6946
        %7148 = vmatpush1.msra.mxu0 %v6945
        %7149 = vmatprep.subr.mxu0 %v6943
        %7150 = vmatpush1.msra.mxu0 %v6942
        %7151 = vmatprep.subr.mxu0 %v6940
        %7152 = vmatpush1.msra.mxu0 %v6939
        %7153 = vmatprep.subr.mxu0 %v6937
        %7154 = vmatpush1.msra.mxu0 %v6936
        %7155 = vmatprep.subr.mxu0 %v6934
        %7156 = vmatpush1.msra.mxu0 %v6933
        %7157 = vmatprep.subr.mxu0 %v7027
        %7158 = vmatpush2.msra.mxu0 %v7026
        %7159 = vmatprep.subr.mxu0 %v7024
        %7160 = vmatpush2.msra.mxu0 %v7023
        %7161 = vmatprep.subr.mxu0 %v7021
        %7162 = vmatpush2.msra.mxu0 %v7020
        %7163 = vmatprep.subr.mxu0 %v7018
        %7164 = vmatpush2.msra.mxu0 %v7017
        %7165 = vmatprep.subr.mxu0 %v7015
        %7166 = vmatpush2.msra.mxu0 %v7014
        %7167 = vmatprep.subr.mxu0 %v7012
        %7168 = vmatpush2.msra.mxu0 %v7011
        %7169 = vmatprep.subr.mxu0 %v7009
        %7170 = vmatpush2.msra.mxu0 %v7008
        %7171 = vmatprep.subr.mxu0 %v7006
        %7172 = vmatpush2.msra.mxu0 %v7005
        %7173 = vmatprep.subr.mxu0 %v7003
        %7174 = vmatpush2.msra.mxu0 %v7002
        %7175 = vmatprep.subr.mxu0 %v7000
        %7176 = vmatpush2.msra.mxu0 %v6999
        %7177 = vmatprep.subr.mxu0 %v6997
        %7178 = vmatpush2.msra.mxu0 %v6996
        %7179 = vmatprep.subr.mxu0 %v6994
        %7180 = vmatpush2.msra.mxu0 %v6993
        %7181 = vmatprep.subr.mxu0 %v6991
        %7182 = vmatpush2.msra.mxu0 %v6990
        %7183 = vmatprep.subr.mxu0 %v6988
        %7184 = vmatpush2.msra.mxu0 %v6987
        %7185 = vmatprep.subr.mxu0 %v6985
        %7186 = vmatpush2.msra.mxu0 %v6984
        %7187 = vmatprep.subr.mxu0 %v6982
        %7188 = vmatpush2.msra.mxu0 %v6981
        %7189 = vmatprep.mubr.f32.mxu0 %v3847
        %7190 = vmatmul.mubr.f32.gmra.mxu0 %v3842
        %v7191 = vpop.f32.mrf.mxu0
        %v7192 = vadd.f32 0.0, %v7191
        %v7193 = vpop.f32.mrf.mxu0
        %v7194 = vadd.f32 0.0, %v7193
        %7195 = vdwg.mxu0
        %7196 = vmatprep.subr.mxu0 0.0
        %7197 = vmatpush1.msra.mxu0 %v6980
        %7198 = vmatprep.subr.mxu0 0.0
        %7199 = vmatpush1.msra.mxu0 %v6977
        %7200 = vmatprep.subr.mxu0 0.0
        %7201 = vmatpush1.msra.mxu0 %v6974
        %7202 = vmatprep.subr.mxu0 0.0
        %7203 = vmatpush1.msra.mxu0 %v6971
        %7204 = vmatprep.subr.mxu0 0.0
        %7205 = vmatpush1.msra.mxu0 %v6968
        %7206 = vmatprep.subr.mxu0 0.0
        %7207 = vmatpush1.msra.mxu0 %v6965
        %7208 = vmatprep.subr.mxu0 0.0
        %7209 = vmatpush1.msra.mxu0 %v6962
        %7210 = vmatprep.subr.mxu0 0.0
        %7211 = vmatpush1.msra.mxu0 %v6959
        %7212 = vmatprep.subr.mxu0 0.0
        %7213 = vmatpush1.msra.mxu0 %v6956
        %7214 = vmatprep.subr.mxu0 0.0
        %7215 = vmatpush1.msra.mxu0 %v6953
        %7216 = vmatprep.subr.mxu0 0.0
        %7217 = vmatpush1.msra.mxu0 %v6950
        %7218 = vmatprep.subr.mxu0 0.0
        %7219 = vmatpush1.msra.mxu0 %v6947
        %7220 = vmatprep.subr.mxu0 0.0
        %7221 = vmatpush1.msra.mxu0 %v6944
        %7222 = vmatprep.subr.mxu0 0.0
        %7223 = vmatpush1.msra.mxu0 %v6941
        %7224 = vmatprep.subr.mxu0 0.0
        %7225 = vmatpush1.msra.mxu0 %v6938
        %7226 = vmatprep.subr.mxu0 0.0
        %7227 = vmatpush1.msra.mxu0 %v6935
        %7228 = vmatprep.subr.mxu0 0.0
        %7229 = vmatpush2.msra.mxu0 %v7028
        %7230 = vmatprep.subr.mxu0 0.0
        %7231 = vmatpush2.msra.mxu0 %v7025
        %7232 = vmatprep.subr.mxu0 0.0
        %7233 = vmatpush2.msra.mxu0 %v7022
        %7234 = vmatprep.subr.mxu0 0.0
        %7235 = vmatpush2.msra.mxu0 %v7019
        %7236 = vmatprep.subr.mxu0 0.0
        %7237 = vmatpush2.msra.mxu0 %v7016
        %7238 = vmatprep.subr.mxu0 0.0
        %7239 = vmatpush2.msra.mxu0 %v7013
        %7240 = vmatprep.subr.mxu0 0.0
        %7241 = vmatpush2.msra.mxu0 %v7010
        %7242 = vmatprep.subr.mxu0 0.0
        %7243 = vmatpush2.msra.mxu0 %v7007
        %7244 = vmatprep.subr.mxu0 0.0
        %7245 = vmatpush2.msra.mxu0 %v7004
        %7246 = vmatprep.subr.mxu0 0.0
        %7247 = vmatpush2.msra.mxu0 %v7001
        %7248 = vmatprep.subr.mxu0 0.0
        %7249 = vmatpush2.msra.mxu0 %v6998
        %7250 = vmatprep.subr.mxu0 0.0
        %7251 = vmatpush2.msra.mxu0 %v6995
        %7252 = vmatprep.subr.mxu0 0.0
        %7253 = vmatpush2.msra.mxu0 %v6992
        %7254 = vmatprep.subr.mxu0 0.0
        %7255 = vmatpush2.msra.mxu0 %v6989
        %7256 = vmatprep.subr.mxu0 0.0
        %7257 = vmatpush2.msra.mxu0 %v6986
        %7258 = vmatprep.subr.mxu0 0.0
        %7259 = vmatpush2.msra.mxu0 %v6983
        %7260 = vmatprep.mubr.f32.mxu0 %v3847
        %7261 = vmatmul.mubr.f32.gmra.mxu0 %v3842
        %v7262 = vpop.f32.mrf.mxu0
        %v7263 = vadd.f32 0.0, %v7262
        %v7264 = vpop.f32.mrf.mxu0
        %7265 = vdwg.mxu0
        %v7269 = vrot.slane %v7192, 4
        %v7270 = vrot.slane %v7194, 4
        %v7271 = vrot.slane %v7263, 4
        %7275 = vst [vmem:[%s273] sm:$0xf0] %v7269
        %7276 = vst [vmem:[%s273 + $0x8] sm:$0xf0] %v7270
        %7277 = vst [vmem:[%s273 + $0x10] sm:$0xf0] %v7271
        %s7278 = sand.u32 %s109, 1
        %s7279 = scalar_lea.sflag [#allocation4], %s7278
        %s7280 = sand.u32 %s109, 1
        %s7281 = smul.addr %s7280, 24
        %s7282 = scalar_lea.vmem [#allocation8], %s7281
        %s7283 = sand.u32 %s135, 1
        %s7284 = scalar_lea.sflag [#allocation10], %s7283
        %s7285 = sand.u32 %s135, 1
        %s7286 = smul.addr %s7285, 1536
        %s7287 = scalar_lea.vmem [#allocation9], %s7286
        // Predicated region
        $region45: #{tpu_custom_call.1} parent=31 // pred_check
          %p7288 = pneg %p119
        $region46: #{tpu_custom_call.1} parent=31 // pred_check_branch
          %7290 = sbr.rel (%p7288) target = $region48
        $region47: #{tpu_custom_call.1} parent=31 // pred_region
          %s7292 = ssub.s32 384, 384
          %7293 = vsyncadd %s7279, %s7292
          %s7294 = smul.addr %s28, 3
          %s7295 = smul.addr %s7294, 128
          %s7296 = scalar_lea.hbm %s3, %s7295
          %s7298 = sshll.u32 %s7282, 4
          %s7299 = int_to_ptr.vmem [resolvable:$true] %s7298
          %7301 = dma.vmem_to_hbm [thread:$0]  %s7299, 384, %s7296, %s7279
        $region48: #{tpu_custom_call.1} parent=31 // pred_fallthru
          _
        // Predicated region
        $region49: #{tpu_custom_call.1} parent=31 // pred_check
          %p7302 = pneg %p145
        $region50: #{tpu_custom_call.1} parent=31 // pred_check_branch
          %7304 = sbr.rel (%p7302) target = $region52
        $region51: #{tpu_custom_call.1} parent=31 // pred_region
          %s7305 = smul.u32 64, %s28
          %s7307 = ssub.s32 24576, 24576
          %7308 = vsyncadd %s7284, %s7307
          %s7309 = smul.addr %s7305, 3
          %s7310 = smul.addr %s7309, 128
          %s7311 = scalar_lea.hbm %s4, %s7310
          %s7312 = sshll.u32 %s7287, 4
          %s7313 = int_to_ptr.vmem [resolvable:$true] %s7312
          %7318 = dma.vmem_to_hbm [thread:$0]  %s7313, 24576, %s7311, %s7284, 384, 384, 24
        $region52: #{tpu_custom_call.1} parent=31 // pred_fallthru
          _
      $region32: #{tpu_custom_call.1} parent=5 // pred_fallthru
        _
      %p7319 = scmp.le.s32.totalorder 2, %s23
      // Predicated region
      $region53: #{tpu_custom_call.1} parent=5 // pred_check
        %p7320 = pneg %p7319
      $region54: #{tpu_custom_call.1} parent=5 // pred_check_branch
        %7322 = sbr.rel (%p7320) target = $region56
      $region55: #{tpu_custom_call.1} parent=5 // pred_region
        %s7323 = ssub.s32 %s23, 2
        // Predicated region
        $region57: #{tpu_custom_call.1} parent=55 // pred_check
          %p7324 = pneg %p125
        $region58: #{tpu_custom_call.1} parent=55 // pred_check_branch
          %7326 = sbr.rel (%p7324) target = $region60
        $region59: #{tpu_custom_call.1} parent=55 // pred_region
          %s7327 = sand.u32 %s110, 1
          %s7328 = scalar_lea.sflag [#allocation4], %s7327
          %s7329 = sand.u32 %s110, 1
          %s7330 = smul.addr %s7329, 24
          %s7331 = scalar_lea.vmem [#allocation8], %s7330
          %7332 = dma.done %s7328, 384
        $region60: #{tpu_custom_call.1} parent=55 // pred_fallthru
          _
        // Predicated region
        $region61: #{tpu_custom_call.1} parent=55 // pred_check
          %p7333 = pneg %p151
        $region62: #{tpu_custom_call.1} parent=55 // pred_check_branch
          %7335 = sbr.rel (%p7333) target = $region64
        $region63: #{tpu_custom_call.1} parent=55 // pred_region
          %s7336 = sand.u32 %s136, 1
          %s7337 = scalar_lea.sflag [#allocation10], %s7336
          %s7338 = sand.u32 %s136, 1
          %s7339 = smul.addr %s7338, 1536
          %s7340 = scalar_lea.vmem [#allocation9], %s7339
          %7341 = dma.done %s7337, 24576
        $region64: #{tpu_custom_call.1} parent=55 // pred_fallthru
          _
      $region56: #{tpu_custom_call.1} parent=5 // pred_fallthru
        _
    $region6: #{tpu_custom_call.1} parent=1 // loop_footer
      %s27 = sadd.s32 1, %s23
    $region7: #{tpu_custom_call.1} parent=1 // loop_footer_branch
      %22 = sbr.rel target = $region3
    $region8: #{tpu_custom_call.1} parent=1 // loop_exit
      _
    %7342 = vsyncpa [#allocation3], 1
    %s7343 = scalar_lea.sflag [#allocation3], 1
    %7344 = vsyncpa %s7343, 1
    %7345 = vsyncpa [#allocation6], 1
    %s7346 = scalar_lea.sflag [#allocation6], 1
    %7347 = vsyncpa %s7346, 1
    %7348 = vsyncpa [#allocation4], 1
    %s7349 = scalar_lea.sflag [#allocation4], 1
    %7350 = vsyncpa %s7349, 1
    %7351 = vsyncpa [#allocation10], 1
    %s7352 = scalar_lea.sflag [#allocation10], 1
    %7353 = vsyncpa %s7352, 1

</llo_original>
